<compile_context>
chip_gen: v7x
topology: tpu7x:2x2x1
jax: 0.10.0
libtpu: 0.0.40
codegen_flags: <defaults>
</compile_context>

<pallas_src>
import functools

import jax
import jax.numpy as jnp
from jax.experimental import pallas as pl
from jax.experimental.pallas import tpu as pltpu


# ------------------------- in-kernel building blocks -------------------------

def _conv_pad1(act_hwc, w_ref, b_ref, pad_ref, ksize, stride, relu=True):
    """k x k conv, padding=1, stride in {1, 2}, via per-tap MXU accumulation.

    act_hwc : (H, W, Cin) f32 value (current activation)
    w_ref   : (k, k, Cin, Cout) bf16 ref (per-tap weights)
    b_ref   : (1, Cout) f32 ref
    pad_ref : (H+2, W+2, Cin) f32 VMEM scratch (zero padding buffer)
    returns : ((oh*ow, Cout) f32 value, oh, ow)
    """
    H, W, Cin = act_hwc.shape
    Cout = w_ref.shape[3]
    Hp, Wp = H + 2, W + 2
    oh = (Hp - ksize) // stride + 1
    ow = (Wp - ksize) // stride + 1

    # zero-padded copy of the activation, kept entirely in VMEM
    pad_ref[...] = jnp.zeros_like(pad_ref)
    pad_ref[1:1 + H, 1:1 + W, :] = act_hwc

    acc = jnp.zeros((oh * ow, Cout), jnp.float32) + b_ref[...]
    if stride == 1:
        for i in range(ksize):
            for j in range(ksize):
                patch = pad_ref[i:i + oh, j:j + ow, :].reshape(oh * ow, Cin)
                acc = acc + jnp.dot(patch.astype(jnp.bfloat16), w_ref[i, j],
                                    preferred_element_type=jnp.float32)
    else:  # stride == 2: space-to-depth phase view -> static slices per tap
        assert Hp % 2 == 0 and Wp % 2 == 0
        xp = pad_ref[...].reshape(Hp // 2, 2, Wp // 2, 2, Cin)
        for i in range(ksize):
            for j in range(ksize):
                di, r = divmod(i, 2)
                dj, s = divmod(j, 2)
                patch = xp[di:di + oh, r:r + 1, dj:dj + ow, s:s + 1, :]
                patch = patch.reshape(oh * ow, Cin)
                acc = acc + jnp.dot(patch.astype(jnp.bfloat16), w_ref[i, j],
                                    preferred_element_type=jnp.float32)
    if relu:
        acc = jnp.maximum(acc, 0.0)
    return acc, oh, ow


def _weight_regressor_kernel(x_ref, fus_w, fus_b, fe1_w, fe1_b, fe2_w, fe2_b,
                             fe3_w, fe3_b, fe4_w, fe4_b, w1, b1, w2, b2,
                             out_ref,
                             pad1, pad2, pad3, pad4, h1_scr,
                             *, H, W, input_dim, hidden_dim, in_channels):
    # ---------------- fusion: 1x1 conv + InstanceNorm2d + ReLU ----------------
    x = x_ref[0].reshape(H * W, 2 * input_dim)                       # (HW, 2C) f32
    y = jnp.dot(x.astype(jnp.bfloat16), fus_w[...],
                preferred_element_type=jnp.float32) + fus_b[...]     # (HW, C) f32
    # per-(sample, channel) biased mean/var over spatial, eps=1e-5, no affine
    mean = jnp.mean(y, axis=0, keepdims=True)
    var = jnp.mean(jnp.square(y - mean), axis=0, keepdims=True)
    y = jnp.maximum((y - mean) * jax.lax.rsqrt(var + 1e-5), 0.0)

    # ---------------- feature extractor (activations stay in VMEM) ------------
    a, oh, ow = _conv_pad1(y.reshape(H, W, input_dim), fe1_w, fe1_b, pad1, 3, 1)
    a, oh, ow = _conv_pad1(a.reshape(oh, ow, fe1_w.shape[3]), fe2_w, fe2_b, pad2, 4, 2)
    a, oh, ow = _conv_pad1(a.reshape(oh, ow, fe2_w.shape[3]), fe3_w, fe3_b, pad3, 4, 2)
    a, oh, ow = _conv_pad1(a.reshape(oh, ow, fe3_w.shape[3]), fe4_w, fe4_b, pad4, 4, 2)
    feat = a.astype(jnp.bfloat16)                                    # (1, hidden_dim)

    # ---------------- hyper-network head (rank == -1 branch) ------------------
    # h1 = feat @ w1 + b1 viewed as (in_channels, hidden_dim); built row-by-row
    # from lane slices of w1/b1 so everything stays a plain 2-D MXU GEMM.
    for i in range(in_channels):
        lo = i * hidden_dim
        h1_scr[i:i + 1, :] = (
            jnp.dot(feat, w1[:, lo:lo + hidden_dim],
                    preferred_element_type=jnp.float32)
            + b1[:, lo:lo + hidden_dim])
    h2 = jnp.dot(h1_scr[...].astype(jnp.bfloat16), w2[...],
                 preferred_element_type=jnp.float32) + b2[...]       # (in, out*k*k)
    out_ref[0] = h2


# ------------------------------- host wrapper --------------------------------

def weight_regressor_forward(prepared, w_image_codes, w_bar_codes,
                             hidden_dim, kernel_size, out_channels, in_channels):
    """Inputs are NCHW (PyTorch convention); returns (B, out, in, k, k)."""
    B, input_dim, H, W = w_image_codes.shape
    # The module architecture (three stride-2 convs feeding a hidden_dim head)
    # requires an 8x8 spatial input.
    assert H == 8 and W == 8, (H, W)

    p = prepared
    c1 = p["fe1_w"].shape[3]          # 64
    c2 = p["fe2_w"].shape[3]          # 64
    c3 = p["fe3_w"].shape[3]          # 64
    out_cols = p["w2"].shape[1]       # out_channels * k * k
    assert out_cols == out_channels * kernel_size * kernel_size

    # one-time glue: channel concat + NHWC layout (everything else is in-kernel)
    x = jnp.concatenate([w_image_codes, w_bar_codes], axis=1)        # (B, 2C, H, W)
    x = jnp.transpose(x, (0, 2, 3, 1))                               # (B, H, W, 2C)

    kernel_fn = functools.partial(
        _weight_regressor_kernel, H=H, W=W, input_dim=input_dim,
        hidden_dim=hidden_dim, in_channels=in_channels)

    i4 = lambda b: (0, 0, 0, 0)
    i2 = lambda b: (0, 0)

    out = pl.pallas_call(
        kernel_fn,
        out_shape=jax.ShapeDtypeStruct((B, in_channels, out_cols), jnp.float32),
        grid_spec=pltpu.PrefetchScalarGridSpec(
            num_scalar_prefetch=0,
            grid=(B,),
            in_specs=[
                pl.BlockSpec((1, H, W, 2 * input_dim), lambda b: (b, 0, 0, 0)),
                pl.BlockSpec(p["fusion_w"].shape, i2),
                pl.BlockSpec(p["fusion_b"].shape, i2),
                pl.BlockSpec(p["fe1_w"].shape, i4),
                pl.BlockSpec(p["fe1_b"].shape, i2),
                pl.BlockSpec(p["fe2_w"].shape, i4),
                pl.BlockSpec(p["fe2_b"].shape, i2),
                pl.BlockSpec(p["fe3_w"].shape, i4),
                pl.BlockSpec(p["fe3_b"].shape, i2),
                pl.BlockSpec(p["fe4_w"].shape, i4),
                pl.BlockSpec(p["fe4_b"].shape, i2),
                pl.BlockSpec(p["w1"].shape, i2),
                pl.BlockSpec(p["b1"].shape, i2),
                pl.BlockSpec(p["w2"].shape, i2),
                pl.BlockSpec(p["b2"].shape, i2),
            ],
            out_specs=pl.BlockSpec((1, in_channels, out_cols), lambda b: (b, 0, 0)),
            scratch_shapes=[
                pltpu.VMEM((H + 2, W + 2, input_dim), jnp.float32),        # fe1 pad
                pltpu.VMEM((H + 2, W + 2, c1), jnp.float32),               # fe2 pad
                pltpu.VMEM((H // 2 + 2, W // 2 + 2, c2), jnp.float32),     # fe3 pad
                pltpu.VMEM((H // 4 + 2, W // 4 + 2, c3), jnp.float32),     # fe4 pad
                pltpu.VMEM((in_channels, hidden_dim), jnp.float32),        # h1 rows
            ]),
        compiler_params=pltpu.CompilerParams(
            dimension_semantics=("parallel",)),
    )(x, p["fusion_w"], p["fusion_b"], p["fe1_w"], p["fe1_b"],
      p["fe2_w"], p["fe2_b"], p["fe3_w"], p["fe3_b"], p["fe4_w"], p["fe4_b"],
      p["w1"], p["b1"], p["w2"], p["b2"])

    # PyTorch: out1.view(bs, out_channels, in_channels, k, k) is a pure
    # reinterpretation of the contiguous (bs, in_channels, out*k*k) buffer —
    # this reshape reproduces exactly that relabelling.
    return out.reshape(B, out_channels, in_channels, kernel_size, kernel_size)


# --------------------------- parameters (synthetic) ---------------------------

def init_params(key, input_dim, hidden_dim, kernel_size, out_channels, in_channels):
    """Parameters in PyTorch layout ([O, I, kh, kw] conv weights, 1-D biases)."""
    ks = jax.random.split(key, 8)

    def conv_w(k, o, i, kh, kw):
        fan_in = i * kh * kw
        return jax.random.normal(k, (o, i, kh, kw), jnp.float32) * jnp.sqrt(2.0 / fan_in)

    def lin_w(k, i, o):  # kaiming_normal_-style (fan_in = i)
        return jax.random.normal(k, (i, o), jnp.float32) * jnp.sqrt(2.0 / i)

    return {
        "fusion_w": conv_w(ks[0], input_dim, 2 * input_dim, 1, 1),
        "fusion_b": jnp.zeros((input_dim,), jnp.float32),
        "fe1_w": conv_w(ks[1], 64, input_dim, 3, 3),
        "fe1_b": jnp.zeros((64,), jnp.float32),
        "fe2_w": conv_w(ks[2], 64, 64, 4, 4),
        "fe2_b": jnp.zeros((64,), jnp.float32),
        "fe3_w": conv_w(ks[3], 64, 64, 4, 4),
        "fe3_b": jnp.zeros((64,), jnp.float32),
        "fe4_w": conv_w(ks[4], hidden_dim, 64, 4, 4),
        "fe4_b": jnp.zeros((hidden_dim,), jnp.float32),
        # rank == -1 branch of WeightRegressor
        "w1": lin_w(ks[5], hidden_dim, in_channels * hidden_dim),
        "b1": jnp.zeros((in_channels * hidden_dim,), jnp.float32),
        "w2": lin_w(ks[6], hidden_dim, out_channels * kernel_size * kernel_size),
        "b2": jnp.zeros((out_channels * kernel_size * kernel_size,), jnp.float32),
    }


def prepare_params(params):
    """One-time conversion to kernel layout: bf16 MXU weights in per-tap
    (kh, kw, Cin, Cout) order, f32 (1, C) biases."""
    def conv_taps(w):                       # (O, I, kh, kw) -> (kh, kw, I, O)
        return jnp.transpose(w, (2, 3, 1, 0)).astype(jnp.bfloat16)

    def row(b):
        return b.reshape(1, -1).astype(jnp.float32)

    fw = params["fusion_w"]                 # (O, I, 1, 1)
    return {
        "fusion_w": fw.reshape(fw.shape[0], fw.shape[1]).T.astype(jnp.bfloat16),
        "fusion_b": row(params["fusion_b"]),
        "fe1_w": conv_taps(params["fe1_w"]), "fe1_b": row(params["fe1_b"]),
        "fe2_w": conv_taps(params["fe2_w"]), "fe2_b": row(params["fe2_b"]),
        "fe3_w": conv_taps(params["fe3_w"]), "fe3_b": row(params["fe3_b"]),
        "fe4_w": conv_taps(params["fe4_w"]), "fe4_b": row(params["fe4_b"]),
        "w1": params["w1"].astype(jnp.bfloat16), "b1": row(params["b1"]),
        "w2": params["w2"].astype(jnp.bfloat16), "b2": row(params["b2"]),
    }


# ----------------------------------- main -----------------------------------

if __name__ == "__main__":
    B, input_dim, H, W = 2, 16, 8, 8          # 8x8 -> three stride-2 convs -> 1x1
    hidden_dim, ksz, out_ch, in_ch = 32, 3, 8, 8

    key = jax.random.PRNGKey(0)
    k_params, k1, k2 = jax.random.split(key, 3)
    params = init_params(k_params, input_dim, hidden_dim, ksz, out_ch, in_ch)
    prepared = prepare_params(params)         # one-time layout/dtype conversion

    w_image_codes = jax.random.normal(k1, (B, input_dim, H, W), jnp.float32)
    w_bar_codes = jax.random.normal(k2, (B, input_dim, H, W), jnp.float32)

    fwd = jax.jit(functools.partial(
        weight_regressor_forward, hidden_dim=hidden_dim, kernel_size=ksz,
        out_channels=out_ch, in_channels=in_ch))

    kernel = fwd(prepared, w_image_codes, w_bar_codes)
    kernel = jax.block_until_ready(kernel)

    assert kernel.shape == (B, out_ch, in_ch, ksz, ksz), kernel.shape
    assert bool(jnp.all(jnp.isfinite(kernel)))
    print("KERNEL_OK")
</pallas_src>

<mosaic_0001>
module attributes {stable_mosaic.version = 11 : i64} {
  func.func @_weight_regressor_kernel(%arg0: i32, %arg1: memref<1x8x8x32xf32, #tpu.memory_space<vmem>>, %arg2: memref<32x16xbf16, #tpu.memory_space<vmem>>, %arg3: memref<1x16xf32, #tpu.memory_space<vmem>>, %arg4: memref<3x3x16x64xbf16, #tpu.memory_space<vmem>>, %arg5: memref<1x64xf32, #tpu.memory_space<vmem>>, %arg6: memref<4x4x64x64xbf16, #tpu.memory_space<vmem>>, %arg7: memref<1x64xf32, #tpu.memory_space<vmem>>, %arg8: memref<4x4x64x64xbf16, #tpu.memory_space<vmem>>, %arg9: memref<1x64xf32, #tpu.memory_space<vmem>>, %arg10: memref<4x4x64x32xbf16, #tpu.memory_space<vmem>>, %arg11: memref<1x32xf32, #tpu.memory_space<vmem>>, %arg12: memref<32x256xbf16, #tpu.memory_space<vmem>>, %arg13: memref<1x256xf32, #tpu.memory_space<vmem>>, %arg14: memref<32x72xbf16, #tpu.memory_space<vmem>>, %arg15: memref<1x72xf32, #tpu.memory_space<vmem>>, %arg16: memref<1x8x72xf32, #tpu.memory_space<vmem>>, %arg17: memref<10x10x16xf32, #tpu.memory_space<vmem>>, %arg18: memref<10x10x64xf32, #tpu.memory_space<vmem>>, %arg19: memref<6x6x64xf32, #tpu.memory_space<vmem>>, %arg20: memref<4x4x64xf32, #tpu.memory_space<vmem>>, %arg21: memref<8x32xf32, #tpu.memory_space<vmem>>) attributes {dimension_semantics = [#tpu.dimension_semantics<parallel>], iteration_bounds = array<i64: 2>, scalar_prefetch = 0 : i64, scratch_operands = 5 : i64, tpu.core_type = #tpu.core_type<tc>, window_params = [{transform_indices = @transform_0, window_bounds = array<i64: 1, 8, 8, 32>}, {pipeline_mode = #tpu.pipeline_mode<synchronous>, transform_indices = @transform_1, window_bounds = array<i64: 32, 16>}, {pipeline_mode = #tpu.pipeline_mode<synchronous>, transform_indices = @transform_2, window_bounds = array<i64: 1, 16>}, {pipeline_mode = #tpu.pipeline_mode<synchronous>, transform_indices = @transform_3, window_bounds = array<i64: 3, 3, 16, 64>}, {pipeline_mode = #tpu.pipeline_mode<synchronous>, transform_indices = @transform_4, window_bounds = array<i64: 1, 64>}, {pipeline_mode = #tpu.pipeline_mode<synchronous>, transform_indices = @transform_5, window_bounds = array<i64: 4, 4, 64, 64>}, {pipeline_mode = #tpu.pipeline_mode<synchronous>, transform_indices = @transform_6, window_bounds = array<i64: 1, 64>}, {pipeline_mode = #tpu.pipeline_mode<synchronous>, transform_indices = @transform_7, window_bounds = array<i64: 4, 4, 64, 64>}, {pipeline_mode = #tpu.pipeline_mode<synchronous>, transform_indices = @transform_8, window_bounds = array<i64: 1, 64>}, {pipeline_mode = #tpu.pipeline_mode<synchronous>, transform_indices = @transform_9, window_bounds = array<i64: 4, 4, 64, 32>}, {pipeline_mode = #tpu.pipeline_mode<synchronous>, transform_indices = @transform_10, window_bounds = array<i64: 1, 32>}, {pipeline_mode = #tpu.pipeline_mode<synchronous>, transform_indices = @transform_11, window_bounds = array<i64: 32, 256>}, {pipeline_mode = #tpu.pipeline_mode<synchronous>, transform_indices = @transform_12, window_bounds = array<i64: 1, 256>}, {pipeline_mode = #tpu.pipeline_mode<synchronous>, transform_indices = @transform_13, window_bounds = array<i64: 32, 72>}, {pipeline_mode = #tpu.pipeline_mode<synchronous>, transform_indices = @transform_14, window_bounds = array<i64: 1, 72>}, {transform_indices = @transform_15, window_bounds = array<i64: 1, 8, 72>}]} {
    %c0 = arith.constant 0 : index
    %c0_0 = arith.constant 0 : index
    %c0_1 = arith.constant 0 : index
    %c0_2 = arith.constant 0 : index
    %0 = vector.load %arg1[%c0, %c0_0, %c0_1, %c0_2] : memref<1x8x8x32xf32, #tpu.memory_space<vmem>>, vector<1x8x8x32xf32>
    %1 = vector.shape_cast %0 : vector<1x8x8x32xf32> to vector<8x8x32xf32>
    %2 = vector.shape_cast %1 : vector<8x8x32xf32> to vector<64x32xf32>
    %3 = arith.truncf %2 : vector<64x32xf32> to vector<64x32xbf16>
    %c0_3 = arith.constant 0 : index
    %c0_4 = arith.constant 0 : index
    %4 = vector.load %arg2[%c0_3, %c0_4] : memref<32x16xbf16, #tpu.memory_space<vmem>>, vector<32x16xbf16>
    %cst = arith.constant dense<0.000000e+00> : vector<64x16xf32>
    %5 = tpu.matmul %3, %4, %cst {dimension_numbers = #tpu.dot_dimension_numbers<[1], [0], [0], [1], [0, 0, 1, 1], [], []>} : vector<64x32xbf16>, vector<32x16xbf16>, vector<64x16xf32> -> vector<64x16xf32>
    %c0_5 = arith.constant 0 : index
    %c0_6 = arith.constant 0 : index
    %6 = vector.load %arg3[%c0_5, %c0_6] : memref<1x16xf32, #tpu.memory_space<vmem>>, vector<1x16xf32>
    %7 = vector.broadcast %6 : vector<1x16xf32> to vector<64x16xf32>
    %8 = arith.addf %5, %7 : vector<64x16xf32>
    %cst_7 = arith.constant dense<0.000000e+00> : vector<16xf32>
    %9 = vector.multi_reduction <add>, %8, %cst_7 [0] : vector<64x16xf32> to vector<16xf32>
    %10 = vector.shape_cast %9 : vector<16xf32> to vector<1x16xf32>
    %cst_8 = arith.constant 6.400000e+01 : f32
    %11 = vector.broadcast %cst_8 : f32 to vector<1x16xf32>
    %12 = arith.divf %10, %11 : vector<1x16xf32>
    %13 = vector.broadcast %12 : vector<1x16xf32> to vector<64x16xf32>
    %14 = arith.subf %8, %13 : vector<64x16xf32>
    %15 = arith.mulf %14, %14 : vector<64x16xf32>
    %cst_9 = arith.constant dense<0.000000e+00> : vector<16xf32>
    %16 = vector.multi_reduction <add>, %15, %cst_9 [0] : vector<64x16xf32> to vector<16xf32>
    %17 = vector.shape_cast %16 : vector<16xf32> to vector<1x16xf32>
    %cst_10 = arith.constant 6.400000e+01 : f32
    %18 = vector.broadcast %cst_10 : f32 to vector<1x16xf32>
    %19 = arith.divf %17, %18 : vector<1x16xf32>
    %20 = vector.broadcast %12 : vector<1x16xf32> to vector<64x16xf32>
    %21 = arith.subf %8, %20 : vector<64x16xf32>
    %cst_11 = arith.constant 9.99999974E-6 : f32
    %22 = vector.broadcast %cst_11 : f32 to vector<1x16xf32>
    %23 = arith.addf %19, %22 : vector<1x16xf32>
    %24 = math.rsqrt %23 : vector<1x16xf32>
    %25 = vector.broadcast %24 : vector<1x16xf32> to vector<64x16xf32>
    %26 = arith.mulf %21, %25 : vector<64x16xf32>
    %cst_12 = arith.constant 0.000000e+00 : f32
    %27 = vector.broadcast %cst_12 : f32 to vector<64x16xf32>
    %28 = arith.maximumf %26, %27 : vector<64x16xf32>
    %29 = vector.shape_cast %28 : vector<64x16xf32> to vector<8x8x16xf32>
    %cst_13 = arith.constant 0.000000e+00 : f32
    %30 = vector.broadcast %cst_13 : f32 to vector<10x10x16xf32>
    %c0_14 = arith.constant 0 : index
    %c0_15 = arith.constant 0 : index
    %c0_16 = arith.constant 0 : index
    %31 = vector.load %arg17[%c0_14, %c0_15, %c0_16] : memref<10x10x16xf32, #tpu.memory_space<vmem>>, vector<10x10x16xf32>
    tpu.vector_store %arg17[%c0_14, %c0_15, %c0_16], %30 {strides = array<i32>} : memref<10x10x16xf32, #tpu.memory_space<vmem>>, vector<10x10x16xf32>,
    %c1 = arith.constant 1 : index
    %c1_17 = arith.constant 1 : index
    %c0_18 = arith.constant 0 : index
    %32 = vector.load %arg17[%c1, %c1_17, %c0_18] : memref<10x10x16xf32, #tpu.memory_space<vmem>>, vector<8x8x16xf32>
    tpu.vector_store %arg17[%c1, %c1_17, %c0_18], %29 {strides = array<i32>} : memref<10x10x16xf32, #tpu.memory_space<vmem>>, vector<8x8x16xf32>,
    %cst_19 = arith.constant 0.000000e+00 : f32
    %33 = vector.broadcast %cst_19 : f32 to vector<64x64xf32>
    %c0_20 = arith.constant 0 : index
    %c0_21 = arith.constant 0 : index
    %34 = vector.load %arg5[%c0_20, %c0_21] : memref<1x64xf32, #tpu.memory_space<vmem>>, vector<1x64xf32>
    %35 = vector.broadcast %34 : vector<1x64xf32> to vector<64x64xf32>
    %36 = arith.addf %33, %35 : vector<64x64xf32>
    %c0_22 = arith.constant 0 : index
    %c0_23 = arith.constant 0 : index
    %c0_24 = arith.constant 0 : index
    %37 = vector.load %arg17[%c0_22, %c0_23, %c0_24] : memref<10x10x16xf32, #tpu.memory_space<vmem>>, vector<8x8x16xf32>
    %38 = vector.shape_cast %37 : vector<8x8x16xf32> to vector<64x16xf32>
    %39 = arith.truncf %38 : vector<64x16xf32> to vector<64x16xbf16>
    %c0_25 = arith.constant 0 : index
    %c0_26 = arith.constant 0 : index
    %c0_27 = arith.constant 0 : index
    %c0_28 = arith.constant 0 : index
    %40 = vector.load %arg4[%c0_25, %c0_26, %c0_27, %c0_28] : memref<3x3x16x64xbf16, #tpu.memory_space<vmem>>, vector<1x1x16x64xbf16>
    %41 = vector.shape_cast %40 : vector<1x1x16x64xbf16> to vector<16x64xbf16>
    %cst_29 = arith.constant dense<0.000000e+00> : vector<64x64xf32>
    %42 = tpu.matmul %39, %41, %cst_29 {dimension_numbers = #tpu.dot_dimension_numbers<[1], [0], [0], [1], [0, 0, 1, 1], [], []>} : vector<64x16xbf16>, vector<16x64xbf16>, vector<64x64xf32> -> vector<64x64xf32>
    %43 = arith.addf %36, %42 : vector<64x64xf32>
    %c0_30 = arith.constant 0 : index
    %c1_31 = arith.constant 1 : index
    %c0_32 = arith.constant 0 : index
    %44 = vector.load %arg17[%c0_30, %c1_31, %c0_32] : memref<10x10x16xf32, #tpu.memory_space<vmem>>, vector<8x8x16xf32>
    %45 = vector.shape_cast %44 : vector<8x8x16xf32> to vector<64x16xf32>
    %46 = arith.truncf %45 : vector<64x16xf32> to vector<64x16xbf16>
    %c0_33 = arith.constant 0 : index
    %c1_34 = arith.constant 1 : index
    %c0_35 = arith.constant 0 : index
    %c0_36 = arith.constant 0 : index
    %47 = vector.load %arg4[%c0_33, %c1_34, %c0_35, %c0_36] : memref<3x3x16x64xbf16, #tpu.memory_space<vmem>>, vector<1x1x16x64xbf16>
    %48 = vector.shape_cast %47 : vector<1x1x16x64xbf16> to vector<16x64xbf16>
    %cst_37 = arith.constant dense<0.000000e+00> : vector<64x64xf32>
    %49 = tpu.matmul %46, %48, %cst_37 {dimension_numbers = #tpu.dot_dimension_numbers<[1], [0], [0], [1], [0, 0, 1, 1], [], []>} : vector<64x16xbf16>, vector<16x64xbf16>, vector<64x64xf32> -> vector<64x64xf32>
    %50 = arith.addf %43, %49 : vector<64x64xf32>
    %c0_38 = arith.constant 0 : index
    %c2 = arith.constant 2 : index
    %c0_39 = arith.constant 0 : index
    %51 = vector.load %arg17[%c0_38, %c2, %c0_39] : memref<10x10x16xf32, #tpu.memory_space<vmem>>, vector<8x8x16xf32>
    %52 = vector.shape_cast %51 : vector<8x8x16xf32> to vector<64x16xf32>
    %53 = arith.truncf %52 : vector<64x16xf32> to vector<64x16xbf16>
    %c0_40 = arith.constant 0 : index
    %c2_41 = arith.constant 2 : index
    %c0_42 = arith.constant 0 : index
    %c0_43 = arith.constant 0 : index
    %54 = vector.load %arg4[%c0_40, %c2_41, %c0_42, %c0_43] : memref<3x3x16x64xbf16, #tpu.memory_space<vmem>>, vector<1x1x16x64xbf16>
    %55 = vector.shape_cast %54 : vector<1x1x16x64xbf16> to vector<16x64xbf16>
    %cst_44 = arith.constant dense<0.000000e+00> : vector<64x64xf32>
    %56 = tpu.matmul %53, %55, %cst_44 {dimension_numbers = #tpu.dot_dimension_numbers<[1], [0], [0], [1], [0, 0, 1, 1], [], []>} : vector<64x16xbf16>, vector<16x64xbf16>, vector<64x64xf32> -> vector<64x64xf32>
    %57 = arith.addf %50, %56 : vector<64x64xf32>
    %c1_45 = arith.constant 1 : index
    %c0_46 = arith.constant 0 : index
    %c0_47 = arith.constant 0 : index
    %58 = vector.load %arg17[%c1_45, %c0_46, %c0_47] : memref<10x10x16xf32, #tpu.memory_space<vmem>>, vector<8x8x16xf32>
    %59 = vector.shape_cast %58 : vector<8x8x16xf32> to vector<64x16xf32>
    %60 = arith.truncf %59 : vector<64x16xf32> to vector<64x16xbf16>
    %c1_48 = arith.constant 1 : index
    %c0_49 = arith.constant 0 : index
    %c0_50 = arith.constant 0 : index
    %c0_51 = arith.constant 0 : index
    %61 = vector.load %arg4[%c1_48, %c0_49, %c0_50, %c0_51] : memref<3x3x16x64xbf16, #tpu.memory_space<vmem>>, vector<1x1x16x64xbf16>
    %62 = vector.shape_cast %61 : vector<1x1x16x64xbf16> to vector<16x64xbf16>
    %cst_52 = arith.constant dense<0.000000e+00> : vector<64x64xf32>
    %63 = tpu.matmul %60, %62, %cst_52 {dimension_numbers = #tpu.dot_dimension_numbers<[1], [0], [0], [1], [0, 0, 1, 1], [], []>} : vector<64x16xbf16>, vector<16x64xbf16>, vector<64x64xf32> -> vector<64x64xf32>
    %64 = arith.addf %57, %63 : vector<64x64xf32>
    %c1_53 = arith.constant 1 : index
    %c1_54 = arith.constant 1 : index
    %c0_55 = arith.constant 0 : index
    %65 = vector.load %arg17[%c1_53, %c1_54, %c0_55] : memref<10x10x16xf32, #tpu.memory_space<vmem>>, vector<8x8x16xf32>
    %66 = vector.shape_cast %65 : vector<8x8x16xf32> to vector<64x16xf32>
    %67 = arith.truncf %66 : vector<64x16xf32> to vector<64x16xbf16>
    %c1_56 = arith.constant 1 : index
    %c1_57 = arith.constant 1 : index
    %c0_58 = arith.constant 0 : index
    %c0_59 = arith.constant 0 : index
    %68 = vector.load %arg4[%c1_56, %c1_57, %c0_58, %c0_59] : memref<3x3x16x64xbf16, #tpu.memory_space<vmem>>, vector<1x1x16x64xbf16>
    %69 = vector.shape_cast %68 : vector<1x1x16x64xbf16> to vector<16x64xbf16>
    %cst_60 = arith.constant dense<0.000000e+00> : vector<64x64xf32>
    %70 = tpu.matmul %67, %69, %cst_60 {dimension_numbers = #tpu.dot_dimension_numbers<[1], [0], [0], [1], [0, 0, 1, 1], [], []>} : vector<64x16xbf16>, vector<16x64xbf16>, vector<64x64xf32> -> vector<64x64xf32>
    %71 = arith.addf %64, %70 : vector<64x64xf32>
    %c1_61 = arith.constant 1 : index
    %c2_62 = arith.constant 2 : index
    %c0_63 = arith.constant 0 : index
    %72 = vector.load %arg17[%c1_61, %c2_62, %c0_63] : memref<10x10x16xf32, #tpu.memory_space<vmem>>, vector<8x8x16xf32>
    %73 = vector.shape_cast %72 : vector<8x8x16xf32> to vector<64x16xf32>
    %74 = arith.truncf %73 : vector<64x16xf32> to vector<64x16xbf16>
    %c1_64 = arith.constant 1 : index
    %c2_65 = arith.constant 2 : index
    %c0_66 = arith.constant 0 : index
    %c0_67 = arith.constant 0 : index
    %75 = vector.load %arg4[%c1_64, %c2_65, %c0_66, %c0_67] : memref<3x3x16x64xbf16, #tpu.memory_space<vmem>>, vector<1x1x16x64xbf16>
    %76 = vector.shape_cast %75 : vector<1x1x16x64xbf16> to vector<16x64xbf16>
    %cst_68 = arith.constant dense<0.000000e+00> : vector<64x64xf32>
    %77 = tpu.matmul %74, %76, %cst_68 {dimension_numbers = #tpu.dot_dimension_numbers<[1], [0], [0], [1], [0, 0, 1, 1], [], []>} : vector<64x16xbf16>, vector<16x64xbf16>, vector<64x64xf32> -> vector<64x64xf32>
    %78 = arith.addf %71, %77 : vector<64x64xf32>
    %c2_69 = arith.constant 2 : index
    %c0_70 = arith.constant 0 : index
    %c0_71 = arith.constant 0 : index
    %79 = vector.load %arg17[%c2_69, %c0_70, %c0_71] : memref<10x10x16xf32, #tpu.memory_space<vmem>>, vector<8x8x16xf32>
    %80 = vector.shape_cast %79 : vector<8x8x16xf32> to vector<64x16xf32>
    %81 = arith.truncf %80 : vector<64x16xf32> to vector<64x16xbf16>
    %c2_72 = arith.constant 2 : index
    %c0_73 = arith.constant 0 : index
    %c0_74 = arith.constant 0 : index
    %c0_75 = arith.constant 0 : index
    %82 = vector.load %arg4[%c2_72, %c0_73, %c0_74, %c0_75] : memref<3x3x16x64xbf16, #tpu.memory_space<vmem>>, vector<1x1x16x64xbf16>
    %83 = vector.shape_cast %82 : vector<1x1x16x64xbf16> to vector<16x64xbf16>
    %cst_76 = arith.constant dense<0.000000e+00> : vector<64x64xf32>
    %84 = tpu.matmul %81, %83, %cst_76 {dimension_numbers = #tpu.dot_dimension_numbers<[1], [0], [0], [1], [0, 0, 1, 1], [], []>} : vector<64x16xbf16>, vector<16x64xbf16>, vector<64x64xf32> -> vector<64x64xf32>
    %85 = arith.addf %78, %84 : vector<64x64xf32>
    %c2_77 = arith.constant 2 : index
    %c1_78 = arith.constant 1 : index
    %c0_79 = arith.constant 0 : index
    %86 = vector.load %arg17[%c2_77, %c1_78, %c0_79] : memref<10x10x16xf32, #tpu.memory_space<vmem>>, vector<8x8x16xf32>
    %87 = vector.shape_cast %86 : vector<8x8x16xf32> to vector<64x16xf32>
    %88 = arith.truncf %87 : vector<64x16xf32> to vector<64x16xbf16>
    %c2_80 = arith.constant 2 : index
    %c1_81 = arith.constant 1 : index
    %c0_82 = arith.constant 0 : index
    %c0_83 = arith.constant 0 : index
    %89 = vector.load %arg4[%c2_80, %c1_81, %c0_82, %c0_83] : memref<3x3x16x64xbf16, #tpu.memory_space<vmem>>, vector<1x1x16x64xbf16>
    %90 = vector.shape_cast %89 : vector<1x1x16x64xbf16> to vector<16x64xbf16>
    %cst_84 = arith.constant dense<0.000000e+00> : vector<64x64xf32>
    %91 = tpu.matmul %88, %90, %cst_84 {dimension_numbers = #tpu.dot_dimension_numbers<[1], [0], [0], [1], [0, 0, 1, 1], [], []>} : vector<64x16xbf16>, vector<16x64xbf16>, vector<64x64xf32> -> vector<64x64xf32>
    %92 = arith.addf %85, %91 : vector<64x64xf32>
    %c2_85 = arith.constant 2 : index
    %c2_86 = arith.constant 2 : index
    %c0_87 = arith.constant 0 : index
    %93 = vector.load %arg17[%c2_85, %c2_86, %c0_87] : memref<10x10x16xf32, #tpu.memory_space<vmem>>, vector<8x8x16xf32>
    %94 = vector.shape_cast %93 : vector<8x8x16xf32> to vector<64x16xf32>
    %95 = arith.truncf %94 : vector<64x16xf32> to vector<64x16xbf16>
    %c2_88 = arith.constant 2 : index
    %c2_89 = arith.constant 2 : index
    %c0_90 = arith.constant 0 : index
    %c0_91 = arith.constant 0 : index
    %96 = vector.load %arg4[%c2_88, %c2_89, %c0_90, %c0_91] : memref<3x3x16x64xbf16, #tpu.memory_space<vmem>>, vector<1x1x16x64xbf16>
    %97 = vector.shape_cast %96 : vector<1x1x16x64xbf16> to vector<16x64xbf16>
    %cst_92 = arith.constant dense<0.000000e+00> : vector<64x64xf32>
    %98 = tpu.matmul %95, %97, %cst_92 {dimension_numbers = #tpu.dot_dimension_numbers<[1], [0], [0], [1], [0, 0, 1, 1], [], []>} : vector<64x16xbf16>, vector<16x64xbf16>, vector<64x64xf32> -> vector<64x64xf32>
    %99 = arith.addf %92, %98 : vector<64x64xf32>
    %cst_93 = arith.constant 0.000000e+00 : f32
    %100 = vector.broadcast %cst_93 : f32 to vector<64x64xf32>
    %101 = arith.maximumf %99, %100 : vector<64x64xf32>
    %102 = vector.shape_cast %101 : vector<64x64xf32> to vector<8x8x64xf32>
    %cst_94 = arith.constant 0.000000e+00 : f32
    %103 = vector.broadcast %cst_94 : f32 to vector<10x10x64xf32>
    %c0_95 = arith.constant 0 : index
    %c0_96 = arith.constant 0 : index
    %c0_97 = arith.constant 0 : index
    %104 = vector.load %arg18[%c0_95, %c0_96, %c0_97] : memref<10x10x64xf32, #tpu.memory_space<vmem>>, vector<10x10x64xf32>
    tpu.vector_store %arg18[%c0_95, %c0_96, %c0_97], %103 {strides = array<i32>} : memref<10x10x64xf32, #tpu.memory_space<vmem>>, vector<10x10x64xf32>,
    %c1_98 = arith.constant 1 : index
    %c1_99 = arith.constant 1 : index
    %c0_100 = arith.constant 0 : index
    %105 = vector.load %arg18[%c1_98, %c1_99, %c0_100] : memref<10x10x64xf32, #tpu.memory_space<vmem>>, vector<8x8x64xf32>
    tpu.vector_store %arg18[%c1_98, %c1_99, %c0_100], %102 {strides = array<i32>} : memref<10x10x64xf32, #tpu.memory_space<vmem>>, vector<8x8x64xf32>,
    %cst_101 = arith.constant 0.000000e+00 : f32
    %106 = vector.broadcast %cst_101 : f32 to vector<16x64xf32>
    %c0_102 = arith.constant 0 : index
    %c0_103 = arith.constant 0 : index
    %107 = vector.load %arg7[%c0_102, %c0_103] : memref<1x64xf32, #tpu.memory_space<vmem>>, vector<1x64xf32>
    %108 = vector.broadcast %107 : vector<1x64xf32> to vector<16x64xf32>
    %109 = arith.addf %106, %108 : vector<16x64xf32>
    %c0_104 = arith.constant 0 : index
    %c0_105 = arith.constant 0 : index
    %c0_106 = arith.constant 0 : index
    %110 = vector.load %arg18[%c0_104, %c0_105, %c0_106] : memref<10x10x64xf32, #tpu.memory_space<vmem>>, vector<10x10x64xf32>
    %111 = vector.shape_cast %110 : vector<10x10x64xf32> to vector<5x2x5x2x64xf32>
    %112 = vector.extract_strided_slice %111 {offsets = [0, 0, 0, 0, 0], sizes = [4, 1, 4, 1, 64], strides = [1, 1, 1, 1, 1]} : vector<5x2x5x2x64xf32> to vector<4x1x4x1x64xf32>
    %113 = vector.shape_cast %112 : vector<4x1x4x1x64xf32> to vector<16x64xf32>
    %114 = arith.truncf %113 : vector<16x64xf32> to vector<16x64xbf16>
    %c0_107 = arith.constant 0 : index
    %c0_108 = arith.constant 0 : index
    %c0_109 = arith.constant 0 : index
    %c0_110 = arith.constant 0 : index
    %115 = vector.load %arg6[%c0_107, %c0_108, %c0_109, %c0_110] : memref<4x4x64x64xbf16, #tpu.memory_space<vmem>>, vector<1x1x64x64xbf16>
    %116 = vector.shape_cast %115 : vector<1x1x64x64xbf16> to vector<64x64xbf16>
    %cst_111 = arith.constant dense<0.000000e+00> : vector<16x64xf32>
    %117 = tpu.matmul %114, %116, %cst_111 {dimension_numbers = #tpu.dot_dimension_numbers<[1], [0], [0], [1], [0, 0, 1, 1], [], []>} : vector<16x64xbf16>, vector<64x64xbf16>, vector<16x64xf32> -> vector<16x64xf32>
    %118 = arith.addf %109, %117 : vector<16x64xf32>
    %119 = vector.extract_strided_slice %111 {offsets = [0, 0, 0, 1, 0], sizes = [4, 1, 4, 1, 64], strides = [1, 1, 1, 1, 1]} : vector<5x2x5x2x64xf32> to vector<4x1x4x1x64xf32>
    %120 = vector.shape_cast %119 : vector<4x1x4x1x64xf32> to vector<16x64xf32>
    %121 = arith.truncf %120 : vector<16x64xf32> to vector<16x64xbf16>
    %c0_112 = arith.constant 0 : index
    %c1_113 = arith.constant 1 : index
    %c0_114 = arith.constant 0 : index
    %c0_115 = arith.constant 0 : index
    %122 = vector.load %arg6[%c0_112, %c1_113, %c0_114, %c0_115] : memref<4x4x64x64xbf16, #tpu.memory_space<vmem>>, vector<1x1x64x64xbf16>
    %123 = vector.shape_cast %122 : vector<1x1x64x64xbf16> to vector<64x64xbf16>
    %cst_116 = arith.constant dense<0.000000e+00> : vector<16x64xf32>
    %124 = tpu.matmul %121, %123, %cst_116 {dimension_numbers = #tpu.dot_dimension_numbers<[1], [0], [0], [1], [0, 0, 1, 1], [], []>} : vector<16x64xbf16>, vector<64x64xbf16>, vector<16x64xf32> -> vector<16x64xf32>
    %125 = arith.addf %118, %124 : vector<16x64xf32>
    %126 = vector.extract_strided_slice %111 {offsets = [0, 0, 1, 0, 0], sizes = [4, 1, 4, 1, 64], strides = [1, 1, 1, 1, 1]} : vector<5x2x5x2x64xf32> to vector<4x1x4x1x64xf32>
    %127 = vector.shape_cast %126 : vector<4x1x4x1x64xf32> to vector<16x64xf32>
    %128 = arith.truncf %127 : vector<16x64xf32> to vector<16x64xbf16>
    %c0_117 = arith.constant 0 : index
    %c2_118 = arith.constant 2 : index
    %c0_119 = arith.constant 0 : index
    %c0_120 = arith.constant 0 : index
    %129 = vector.load %arg6[%c0_117, %c2_118, %c0_119, %c0_120] : memref<4x4x64x64xbf16, #tpu.memory_space<vmem>>, vector<1x1x64x64xbf16>
    %130 = vector.shape_cast %129 : vector<1x1x64x64xbf16> to vector<64x64xbf16>
    %cst_121 = arith.constant dense<0.000000e+00> : vector<16x64xf32>
    %131 = tpu.matmul %128, %130, %cst_121 {dimension_numbers = #tpu.dot_dimension_numbers<[1], [0], [0], [1], [0, 0, 1, 1], [], []>} : vector<16x64xbf16>, vector<64x64xbf16>, vector<16x64xf32> -> vector<16x64xf32>
    %132 = arith.addf %125, %131 : vector<16x64xf32>
    %133 = vector.extract_strided_slice %111 {offsets = [0, 0, 1, 1, 0], sizes = [4, 1, 4, 1, 64], strides = [1, 1, 1, 1, 1]} : vector<5x2x5x2x64xf32> to vector<4x1x4x1x64xf32>
    %134 = vector.shape_cast %133 : vector<4x1x4x1x64xf32> to vector<16x64xf32>
    %135 = arith.truncf %134 : vector<16x64xf32> to vector<16x64xbf16>
    %c0_122 = arith.constant 0 : index
    %c3 = arith.constant 3 : index
    %c0_123 = arith.constant 0 : index
    %c0_124 = arith.constant 0 : index
    %136 = vector.load %arg6[%c0_122, %c3, %c0_123, %c0_124] : memref<4x4x64x64xbf16, #tpu.memory_space<vmem>>, vector<1x1x64x64xbf16>
    %137 = vector.shape_cast %136 : vector<1x1x64x64xbf16> to vector<64x64xbf16>
    %cst_125 = arith.constant dense<0.000000e+00> : vector<16x64xf32>
    %138 = tpu.matmul %135, %137, %cst_125 {dimension_numbers = #tpu.dot_dimension_numbers<[1], [0], [0], [1], [0, 0, 1, 1], [], []>} : vector<16x64xbf16>, vector<64x64xbf16>, vector<16x64xf32> -> vector<16x64xf32>
    %139 = arith.addf %132, %138 : vector<16x64xf32>
    %140 = vector.extract_strided_slice %111 {offsets = [0, 1, 0, 0, 0], sizes = [4, 1, 4, 1, 64], strides = [1, 1, 1, 1, 1]} : vector<5x2x5x2x64xf32> to vector<4x1x4x1x64xf32>
    %141 = vector.shape_cast %140 : vector<4x1x4x1x64xf32> to vector<16x64xf32>
    %142 = arith.truncf %141 : vector<16x64xf32> to vector<16x64xbf16>
    %c1_126 = arith.constant 1 : index
    %c0_127 = arith.constant 0 : index
    %c0_128 = arith.constant 0 : index
    %c0_129 = arith.constant 0 : index
    %143 = vector.load %arg6[%c1_126, %c0_127, %c0_128, %c0_129] : memref<4x4x64x64xbf16, #tpu.memory_space<vmem>>, vector<1x1x64x64xbf16>
    %144 = vector.shape_cast %143 : vector<1x1x64x64xbf16> to vector<64x64xbf16>
    %cst_130 = arith.constant dense<0.000000e+00> : vector<16x64xf32>
    %145 = tpu.matmul %142, %144, %cst_130 {dimension_numbers = #tpu.dot_dimension_numbers<[1], [0], [0], [1], [0, 0, 1, 1], [], []>} : vector<16x64xbf16>, vector<64x64xbf16>, vector<16x64xf32> -> vector<16x64xf32>
    %146 = arith.addf %139, %145 : vector<16x64xf32>
    %147 = vector.extract_strided_slice %111 {offsets = [0, 1, 0, 1, 0], sizes = [4, 1, 4, 1, 64], strides = [1, 1, 1, 1, 1]} : vector<5x2x5x2x64xf32> to vector<4x1x4x1x64xf32>
    %148 = vector.shape_cast %147 : vector<4x1x4x1x64xf32> to vector<16x64xf32>
    %149 = arith.truncf %148 : vector<16x64xf32> to vector<16x64xbf16>
    %c1_131 = arith.constant 1 : index
    %c1_132 = arith.constant 1 : index
    %c0_133 = arith.constant 0 : index
    %c0_134 = arith.constant 0 : index
    %150 = vector.load %arg6[%c1_131, %c1_132, %c0_133, %c0_134] : memref<4x4x64x64xbf16, #tpu.memory_space<vmem>>, vector<1x1x64x64xbf16>
    %151 = vector.shape_cast %150 : vector<1x1x64x64xbf16> to vector<64x64xbf16>
    %cst_135 = arith.constant dense<0.000000e+00> : vector<16x64xf32>
    %152 = tpu.matmul %149, %151, %cst_135 {dimension_numbers = #tpu.dot_dimension_numbers<[1], [0], [0], [1], [0, 0, 1, 1], [], []>} : vector<16x64xbf16>, vector<64x64xbf16>, vector<16x64xf32> -> vector<16x64xf32>
    %153 = arith.addf %146, %152 : vector<16x64xf32>
    %154 = vector.extract_strided_slice %111 {offsets = [0, 1, 1, 0, 0], sizes = [4, 1, 4, 1, 64], strides = [1, 1, 1, 1, 1]} : vector<5x2x5x2x64xf32> to vector<4x1x4x1x64xf32>
    %155 = vector.shape_cast %154 : vector<4x1x4x1x64xf32> to vector<16x64xf32>
    %156 = arith.truncf %155 : vector<16x64xf32> to vector<16x64xbf16>
    %c1_136 = arith.constant 1 : index
    %c2_137 = arith.constant 2 : index
    %c0_138 = arith.constant 0 : index
    %c0_139 = arith.constant 0 : index
    %157 = vector.load %arg6[%c1_136, %c2_137, %c0_138, %c0_139] : memref<4x4x64x64xbf16, #tpu.memory_space<vmem>>, vector<1x1x64x64xbf16>
    %158 = vector.shape_cast %157 : vector<1x1x64x64xbf16> to vector<64x64xbf16>
    %cst_140 = arith.constant dense<0.000000e+00> : vector<16x64xf32>
    %159 = tpu.matmul %156, %158, %cst_140 {dimension_numbers = #tpu.dot_dimension_numbers<[1], [0], [0], [1], [0, 0, 1, 1], [], []>} : vector<16x64xbf16>, vector<64x64xbf16>, vector<16x64xf32> -> vector<16x64xf32>
    %160 = arith.addf %153, %159 : vector<16x64xf32>
    %161 = vector.extract_strided_slice %111 {offsets = [0, 1, 1, 1, 0], sizes = [4, 1, 4, 1, 64], strides = [1, 1, 1, 1, 1]} : vector<5x2x5x2x64xf32> to vector<4x1x4x1x64xf32>
    %162 = vector.shape_cast %161 : vector<4x1x4x1x64xf32> to vector<16x64xf32>
    %163 = arith.truncf %162 : vector<16x64xf32> to vector<16x64xbf16>
    %c1_141 = arith.constant 1 : index
    %c3_142 = arith.constant 3 : index
    %c0_143 = arith.constant 0 : index
    %c0_144 = arith.constant 0 : index
    %164 = vector.load %arg6[%c1_141, %c3_142, %c0_143, %c0_144] : memref<4x4x64x64xbf16, #tpu.memory_space<vmem>>, vector<1x1x64x64xbf16>
    %165 = vector.shape_cast %164 : vector<1x1x64x64xbf16> to vector<64x64xbf16>
    %cst_145 = arith.constant dense<0.000000e+00> : vector<16x64xf32>
    %166 = tpu.matmul %163, %165, %cst_145 {dimension_numbers = #tpu.dot_dimension_numbers<[1], [0], [0], [1], [0, 0, 1, 1], [], []>} : vector<16x64xbf16>, vector<64x64xbf16>, vector<16x64xf32> -> vector<16x64xf32>
    %167 = arith.addf %160, %166 : vector<16x64xf32>
    %168 = vector.extract_strided_slice %111 {offsets = [1, 0, 0, 0, 0], sizes = [4, 1, 4, 1, 64], strides = [1, 1, 1, 1, 1]} : vector<5x2x5x2x64xf32> to vector<4x1x4x1x64xf32>
    %169 = vector.shape_cast %168 : vector<4x1x4x1x64xf32> to vector<16x64xf32>
    %170 = arith.truncf %169 : vector<16x64xf32> to vector<16x64xbf16>
    %c2_146 = arith.constant 2 : index
    %c0_147 = arith.constant 0 : index
    %c0_148 = arith.constant 0 : index
    %c0_149 = arith.constant 0 : index
    %171 = vector.load %arg6[%c2_146, %c0_147, %c0_148, %c0_149] : memref<4x4x64x64xbf16, #tpu.memory_space<vmem>>, vector<1x1x64x64xbf16>
    %172 = vector.shape_cast %171 : vector<1x1x64x64xbf16> to vector<64x64xbf16>
    %cst_150 = arith.constant dense<0.000000e+00> : vector<16x64xf32>
    %173 = tpu.matmul %170, %172, %cst_150 {dimension_numbers = #tpu.dot_dimension_numbers<[1], [0], [0], [1], [0, 0, 1, 1], [], []>} : vector<16x64xbf16>, vector<64x64xbf16>, vector<16x64xf32> -> vector<16x64xf32>
    %174 = arith.addf %167, %173 : vector<16x64xf32>
    %175 = vector.extract_strided_slice %111 {offsets = [1, 0, 0, 1, 0], sizes = [4, 1, 4, 1, 64], strides = [1, 1, 1, 1, 1]} : vector<5x2x5x2x64xf32> to vector<4x1x4x1x64xf32>
    %176 = vector.shape_cast %175 : vector<4x1x4x1x64xf32> to vector<16x64xf32>
    %177 = arith.truncf %176 : vector<16x64xf32> to vector<16x64xbf16>
    %c2_151 = arith.constant 2 : index
    %c1_152 = arith.constant 1 : index
    %c0_153 = arith.constant 0 : index
    %c0_154 = arith.constant 0 : index
    %178 = vector.load %arg6[%c2_151, %c1_152, %c0_153, %c0_154] : memref<4x4x64x64xbf16, #tpu.memory_space<vmem>>, vector<1x1x64x64xbf16>
    %179 = vector.shape_cast %178 : vector<1x1x64x64xbf16> to vector<64x64xbf16>
    %cst_155 = arith.constant dense<0.000000e+00> : vector<16x64xf32>
    %180 = tpu.matmul %177, %179, %cst_155 {dimension_numbers = #tpu.dot_dimension_numbers<[1], [0], [0], [1], [0, 0, 1, 1], [], []>} : vector<16x64xbf16>, vector<64x64xbf16>, vector<16x64xf32> -> vector<16x64xf32>
    %181 = arith.addf %174, %180 : vector<16x64xf32>
    %182 = vector.extract_strided_slice %111 {offsets = [1, 0, 1, 0, 0], sizes = [4, 1, 4, 1, 64], strides = [1, 1, 1, 1, 1]} : vector<5x2x5x2x64xf32> to vector<4x1x4x1x64xf32>
    %183 = vector.shape_cast %182 : vector<4x1x4x1x64xf32> to vector<16x64xf32>
    %184 = arith.truncf %183 : vector<16x64xf32> to vector<16x64xbf16>
    %c2_156 = arith.constant 2 : index
    %c2_157 = arith.constant 2 : index
    %c0_158 = arith.constant 0 : index
    %c0_159 = arith.constant 0 : index
    %185 = vector.load %arg6[%c2_156, %c2_157, %c0_158, %c0_159] : memref<4x4x64x64xbf16, #tpu.memory_space<vmem>>, vector<1x1x64x64xbf16>
    %186 = vector.shape_cast %185 : vector<1x1x64x64xbf16> to vector<64x64xbf16>
    %cst_160 = arith.constant dense<0.000000e+00> : vector<16x64xf32>
    %187 = tpu.matmul %184, %186, %cst_160 {dimension_numbers = #tpu.dot_dimension_numbers<[1], [0], [0], [1], [0, 0, 1, 1], [], []>} : vector<16x64xbf16>, vector<64x64xbf16>, vector<16x64xf32> -> vector<16x64xf32>
    %188 = arith.addf %181, %187 : vector<16x64xf32>
    %189 = vector.extract_strided_slice %111 {offsets = [1, 0, 1, 1, 0], sizes = [4, 1, 4, 1, 64], strides = [1, 1, 1, 1, 1]} : vector<5x2x5x2x64xf32> to vector<4x1x4x1x64xf32>
    %190 = vector.shape_cast %189 : vector<4x1x4x1x64xf32> to vector<16x64xf32>
    %191 = arith.truncf %190 : vector<16x64xf32> to vector<16x64xbf16>
    %c2_161 = arith.constant 2 : index
    %c3_162 = arith.constant 3 : index
    %c0_163 = arith.constant 0 : index
    %c0_164 = arith.constant 0 : index
    %192 = vector.load %arg6[%c2_161, %c3_162, %c0_163, %c0_164] : memref<4x4x64x64xbf16, #tpu.memory_space<vmem>>, vector<1x1x64x64xbf16>
    %193 = vector.shape_cast %192 : vector<1x1x64x64xbf16> to vector<64x64xbf16>
    %cst_165 = arith.constant dense<0.000000e+00> : vector<16x64xf32>
    %194 = tpu.matmul %191, %193, %cst_165 {dimension_numbers = #tpu.dot_dimension_numbers<[1], [0], [0], [1], [0, 0, 1, 1], [], []>} : vector<16x64xbf16>, vector<64x64xbf16>, vector<16x64xf32> -> vector<16x64xf32>
    %195 = arith.addf %188, %194 : vector<16x64xf32>
    %196 = vector.extract_strided_slice %111 {offsets = [1, 1, 0, 0, 0], sizes = [4, 1, 4, 1, 64], strides = [1, 1, 1, 1, 1]} : vector<5x2x5x2x64xf32> to vector<4x1x4x1x64xf32>
    %197 = vector.shape_cast %196 : vector<4x1x4x1x64xf32> to vector<16x64xf32>
    %198 = arith.truncf %197 : vector<16x64xf32> to vector<16x64xbf16>
    %c3_166 = arith.constant 3 : index
    %c0_167 = arith.constant 0 : index
    %c0_168 = arith.constant 0 : index
    %c0_169 = arith.constant 0 : index
    %199 = vector.load %arg6[%c3_166, %c0_167, %c0_168, %c0_169] : memref<4x4x64x64xbf16, #tpu.memory_space<vmem>>, vector<1x1x64x64xbf16>
    %200 = vector.shape_cast %199 : vector<1x1x64x64xbf16> to vector<64x64xbf16>
    %cst_170 = arith.constant dense<0.000000e+00> : vector<16x64xf32>
    %201 = tpu.matmul %198, %200, %cst_170 {dimension_numbers = #tpu.dot_dimension_numbers<[1], [0], [0], [1], [0, 0, 1, 1], [], []>} : vector<16x64xbf16>, vector<64x64xbf16>, vector<16x64xf32> -> vector<16x64xf32>
    %202 = arith.addf %195, %201 : vector<16x64xf32>
    %203 = vector.extract_strided_slice %111 {offsets = [1, 1, 0, 1, 0], sizes = [4, 1, 4, 1, 64], strides = [1, 1, 1, 1, 1]} : vector<5x2x5x2x64xf32> to vector<4x1x4x1x64xf32>
    %204 = vector.shape_cast %203 : vector<4x1x4x1x64xf32> to vector<16x64xf32>
    %205 = arith.truncf %204 : vector<16x64xf32> to vector<16x64xbf16>
    %c3_171 = arith.constant 3 : index
    %c1_172 = arith.constant 1 : index
    %c0_173 = arith.constant 0 : index
    %c0_174 = arith.constant 0 : index
    %206 = vector.load %arg6[%c3_171, %c1_172, %c0_173, %c0_174] : memref<4x4x64x64xbf16, #tpu.memory_space<vmem>>, vector<1x1x64x64xbf16>
    %207 = vector.shape_cast %206 : vector<1x1x64x64xbf16> to vector<64x64xbf16>
    %cst_175 = arith.constant dense<0.000000e+00> : vector<16x64xf32>
    %208 = tpu.matmul %205, %207, %cst_175 {dimension_numbers = #tpu.dot_dimension_numbers<[1], [0], [0], [1], [0, 0, 1, 1], [], []>} : vector<16x64xbf16>, vector<64x64xbf16>, vector<16x64xf32> -> vector<16x64xf32>
    %209 = arith.addf %202, %208 : vector<16x64xf32>
    %210 = vector.extract_strided_slice %111 {offsets = [1, 1, 1, 0, 0], sizes = [4, 1, 4, 1, 64], strides = [1, 1, 1, 1, 1]} : vector<5x2x5x2x64xf32> to vector<4x1x4x1x64xf32>
    %211 = vector.shape_cast %210 : vector<4x1x4x1x64xf32> to vector<16x64xf32>
    %212 = arith.truncf %211 : vector<16x64xf32> to vector<16x64xbf16>
    %c3_176 = arith.constant 3 : index
    %c2_177 = arith.constant 2 : index
    %c0_178 = arith.constant 0 : index
    %c0_179 = arith.constant 0 : index
    %213 = vector.load %arg6[%c3_176, %c2_177, %c0_178, %c0_179] : memref<4x4x64x64xbf16, #tpu.memory_space<vmem>>, vector<1x1x64x64xbf16>
    %214 = vector.shape_cast %213 : vector<1x1x64x64xbf16> to vector<64x64xbf16>
    %cst_180 = arith.constant dense<0.000000e+00> : vector<16x64xf32>
    %215 = tpu.matmul %212, %214, %cst_180 {dimension_numbers = #tpu.dot_dimension_numbers<[1], [0], [0], [1], [0, 0, 1, 1], [], []>} : vector<16x64xbf16>, vector<64x64xbf16>, vector<16x64xf32> -> vector<16x64xf32>
    %216 = arith.addf %209, %215 : vector<16x64xf32>
    %217 = vector.extract_strided_slice %111 {offsets = [1, 1, 1, 1, 0], sizes = [4, 1, 4, 1, 64], strides = [1, 1, 1, 1, 1]} : vector<5x2x5x2x64xf32> to vector<4x1x4x1x64xf32>
    %218 = vector.shape_cast %217 : vector<4x1x4x1x64xf32> to vector<16x64xf32>
    %219 = arith.truncf %218 : vector<16x64xf32> to vector<16x64xbf16>
    %c3_181 = arith.constant 3 : index
    %c3_182 = arith.constant 3 : index
    %c0_183 = arith.constant 0 : index
    %c0_184 = arith.constant 0 : index
    %220 = vector.load %arg6[%c3_181, %c3_182, %c0_183, %c0_184] : memref<4x4x64x64xbf16, #tpu.memory_space<vmem>>, vector<1x1x64x64xbf16>
    %221 = vector.shape_cast %220 : vector<1x1x64x64xbf16> to vector<64x64xbf16>
    %cst_185 = arith.constant dense<0.000000e+00> : vector<16x64xf32>
    %222 = tpu.matmul %219, %221, %cst_185 {dimension_numbers = #tpu.dot_dimension_numbers<[1], [0], [0], [1], [0, 0, 1, 1], [], []>} : vector<16x64xbf16>, vector<64x64xbf16>, vector<16x64xf32> -> vector<16x64xf32>
    %223 = arith.addf %216, %222 : vector<16x64xf32>
    %cst_186 = arith.constant 0.000000e+00 : f32
    %224 = vector.broadcast %cst_186 : f32 to vector<16x64xf32>
    %225 = arith.maximumf %223, %224 : vector<16x64xf32>
    %226 = vector.shape_cast %225 : vector<16x64xf32> to vector<4x4x64xf32>
    %cst_187 = arith.constant 0.000000e+00 : f32
    %227 = vector.broadcast %cst_187 : f32 to vector<6x6x64xf32>
    %c0_188 = arith.constant 0 : index
    %c0_189 = arith.constant 0 : index
    %c0_190 = arith.constant 0 : index
    %228 = vector.load %arg19[%c0_188, %c0_189, %c0_190] : memref<6x6x64xf32, #tpu.memory_space<vmem>>, vector<6x6x64xf32>
    tpu.vector_store %arg19[%c0_188, %c0_189, %c0_190], %227 {strides = array<i32>} : memref<6x6x64xf32, #tpu.memory_space<vmem>>, vector<6x6x64xf32>,
    %c1_191 = arith.constant 1 : index
    %c1_192 = arith.constant 1 : index
    %c0_193 = arith.constant 0 : index
    %229 = vector.load %arg19[%c1_191, %c1_192, %c0_193] : memref<6x6x64xf32, #tpu.memory_space<vmem>>, vector<4x4x64xf32>
    tpu.vector_store %arg19[%c1_191, %c1_192, %c0_193], %226 {strides = array<i32>} : memref<6x6x64xf32, #tpu.memory_space<vmem>>, vector<4x4x64xf32>,
    %cst_194 = arith.constant 0.000000e+00 : f32
    %230 = vector.broadcast %cst_194 : f32 to vector<4x64xf32>
    %c0_195 = arith.constant 0 : index
    %c0_196 = arith.constant 0 : index
    %231 = vector.load %arg9[%c0_195, %c0_196] : memref<1x64xf32, #tpu.memory_space<vmem>>, vector<1x64xf32>
    %232 = vector.broadcast %231 : vector<1x64xf32> to vector<4x64xf32>
    %233 = arith.addf %230, %232 : vector<4x64xf32>
    %c0_197 = arith.constant 0 : index
    %c0_198 = arith.constant 0 : index
    %c0_199 = arith.constant 0 : index
    %234 = vector.load %arg19[%c0_197, %c0_198, %c0_199] : memref<6x6x64xf32, #tpu.memory_space<vmem>>, vector<6x6x64xf32>
    %235 = vector.shape_cast %234 : vector<6x6x64xf32> to vector<3x2x3x2x64xf32>
    %236 = vector.extract_strided_slice %235 {offsets = [0, 0, 0, 0, 0], sizes = [2, 1, 2, 1, 64], strides = [1, 1, 1, 1, 1]} : vector<3x2x3x2x64xf32> to vector<2x1x2x1x64xf32>
    %237 = vector.shape_cast %236 : vector<2x1x2x1x64xf32> to vector<4x64xf32>
    %238 = arith.truncf %237 : vector<4x64xf32> to vector<4x64xbf16>
    %c0_200 = arith.constant 0 : index
    %c0_201 = arith.constant 0 : index
    %c0_202 = arith.constant 0 : index
    %c0_203 = arith.constant 0 : index
    %239 = vector.load %arg8[%c0_200, %c0_201, %c0_202, %c0_203] : memref<4x4x64x64xbf16, #tpu.memory_space<vmem>>, vector<1x1x64x64xbf16>
    %240 = vector.shape_cast %239 : vector<1x1x64x64xbf16> to vector<64x64xbf16>
    %cst_204 = arith.constant dense<0.000000e+00> : vector<4x64xf32>
    %241 = tpu.matmul %238, %240, %cst_204 {dimension_numbers = #tpu.dot_dimension_numbers<[1], [0], [0], [1], [0, 0, 1, 1], [], []>} : vector<4x64xbf16>, vector<64x64xbf16>, vector<4x64xf32> -> vector<4x64xf32>
    %242 = arith.addf %233, %241 : vector<4x64xf32>
    %243 = vector.extract_strided_slice %235 {offsets = [0, 0, 0, 1, 0], sizes = [2, 1, 2, 1, 64], strides = [1, 1, 1, 1, 1]} : vector<3x2x3x2x64xf32> to vector<2x1x2x1x64xf32>
    %244 = vector.shape_cast %243 : vector<2x1x2x1x64xf32> to vector<4x64xf32>
    %245 = arith.truncf %244 : vector<4x64xf32> to vector<4x64xbf16>
    %c0_205 = arith.constant 0 : index
    %c1_206 = arith.constant 1 : index
    %c0_207 = arith.constant 0 : index
    %c0_208 = arith.constant 0 : index
    %246 = vector.load %arg8[%c0_205, %c1_206, %c0_207, %c0_208] : memref<4x4x64x64xbf16, #tpu.memory_space<vmem>>, vector<1x1x64x64xbf16>
    %247 = vector.shape_cast %246 : vector<1x1x64x64xbf16> to vector<64x64xbf16>
    %cst_209 = arith.constant dense<0.000000e+00> : vector<4x64xf32>
    %248 = tpu.matmul %245, %247, %cst_209 {dimension_numbers = #tpu.dot_dimension_numbers<[1], [0], [0], [1], [0, 0, 1, 1], [], []>} : vector<4x64xbf16>, vector<64x64xbf16>, vector<4x64xf32> -> vector<4x64xf32>
    %249 = arith.addf %242, %248 : vector<4x64xf32>
    %250 = vector.extract_strided_slice %235 {offsets = [0, 0, 1, 0, 0], sizes = [2, 1, 2, 1, 64], strides = [1, 1, 1, 1, 1]} : vector<3x2x3x2x64xf32> to vector<2x1x2x1x64xf32>
    %251 = vector.shape_cast %250 : vector<2x1x2x1x64xf32> to vector<4x64xf32>
    %252 = arith.truncf %251 : vector<4x64xf32> to vector<4x64xbf16>
    %c0_210 = arith.constant 0 : index
    %c2_211 = arith.constant 2 : index
    %c0_212 = arith.constant 0 : index
    %c0_213 = arith.constant 0 : index
    %253 = vector.load %arg8[%c0_210, %c2_211, %c0_212, %c0_213] : memref<4x4x64x64xbf16, #tpu.memory_space<vmem>>, vector<1x1x64x64xbf16>
    %254 = vector.shape_cast %253 : vector<1x1x64x64xbf16> to vector<64x64xbf16>
    %cst_214 = arith.constant dense<0.000000e+00> : vector<4x64xf32>
    %255 = tpu.matmul %252, %254, %cst_214 {dimension_numbers = #tpu.dot_dimension_numbers<[1], [0], [0], [1], [0, 0, 1, 1], [], []>} : vector<4x64xbf16>, vector<64x64xbf16>, vector<4x64xf32> -> vector<4x64xf32>
    %256 = arith.addf %249, %255 : vector<4x64xf32>
    %257 = vector.extract_strided_slice %235 {offsets = [0, 0, 1, 1, 0], sizes = [2, 1, 2, 1, 64], strides = [1, 1, 1, 1, 1]} : vector<3x2x3x2x64xf32> to vector<2x1x2x1x64xf32>
    %258 = vector.shape_cast %257 : vector<2x1x2x1x64xf32> to vector<4x64xf32>
    %259 = arith.truncf %258 : vector<4x64xf32> to vector<4x64xbf16>
    %c0_215 = arith.constant 0 : index
    %c3_216 = arith.constant 3 : index
    %c0_217 = arith.constant 0 : index
    %c0_218 = arith.constant 0 : index
    %260 = vector.load %arg8[%c0_215, %c3_216, %c0_217, %c0_218] : memref<4x4x64x64xbf16, #tpu.memory_space<vmem>>, vector<1x1x64x64xbf16>
    %261 = vector.shape_cast %260 : vector<1x1x64x64xbf16> to vector<64x64xbf16>
    %cst_219 = arith.constant dense<0.000000e+00> : vector<4x64xf32>
    %262 = tpu.matmul %259, %261, %cst_219 {dimension_numbers = #tpu.dot_dimension_numbers<[1], [0], [0], [1], [0, 0, 1, 1], [], []>} : vector<4x64xbf16>, vector<64x64xbf16>, vector<4x64xf32> -> vector<4x64xf32>
    %263 = arith.addf %256, %262 : vector<4x64xf32>
    %264 = vector.extract_strided_slice %235 {offsets = [0, 1, 0, 0, 0], sizes = [2, 1, 2, 1, 64], strides = [1, 1, 1, 1, 1]} : vector<3x2x3x2x64xf32> to vector<2x1x2x1x64xf32>
    %265 = vector.shape_cast %264 : vector<2x1x2x1x64xf32> to vector<4x64xf32>
    %266 = arith.truncf %265 : vector<4x64xf32> to vector<4x64xbf16>
    %c1_220 = arith.constant 1 : index
    %c0_221 = arith.constant 0 : index
    %c0_222 = arith.constant 0 : index
    %c0_223 = arith.constant 0 : index
    %267 = vector.load %arg8[%c1_220, %c0_221, %c0_222, %c0_223] : memref<4x4x64x64xbf16, #tpu.memory_space<vmem>>, vector<1x1x64x64xbf16>
    %268 = vector.shape_cast %267 : vector<1x1x64x64xbf16> to vector<64x64xbf16>
    %cst_224 = arith.constant dense<0.000000e+00> : vector<4x64xf32>
    %269 = tpu.matmul %266, %268, %cst_224 {dimension_numbers = #tpu.dot_dimension_numbers<[1], [0], [0], [1], [0, 0, 1, 1], [], []>} : vector<4x64xbf16>, vector<64x64xbf16>, vector<4x64xf32> -> vector<4x64xf32>
    %270 = arith.addf %263, %269 : vector<4x64xf32>
    %271 = vector.extract_strided_slice %235 {offsets = [0, 1, 0, 1, 0], sizes = [2, 1, 2, 1, 64], strides = [1, 1, 1, 1, 1]} : vector<3x2x3x2x64xf32> to vector<2x1x2x1x64xf32>
    %272 = vector.shape_cast %271 : vector<2x1x2x1x64xf32> to vector<4x64xf32>
    %273 = arith.truncf %272 : vector<4x64xf32> to vector<4x64xbf16>
    %c1_225 = arith.constant 1 : index
    %c1_226 = arith.constant 1 : index
    %c0_227 = arith.constant 0 : index
    %c0_228 = arith.constant 0 : index
    %274 = vector.load %arg8[%c1_225, %c1_226, %c0_227, %c0_228] : memref<4x4x64x64xbf16, #tpu.memory_space<vmem>>, vector<1x1x64x64xbf16>
    %275 = vector.shape_cast %274 : vector<1x1x64x64xbf16> to vector<64x64xbf16>
    %cst_229 = arith.constant dense<0.000000e+00> : vector<4x64xf32>
    %276 = tpu.matmul %273, %275, %cst_229 {dimension_numbers = #tpu.dot_dimension_numbers<[1], [0], [0], [1], [0, 0, 1, 1], [], []>} : vector<4x64xbf16>, vector<64x64xbf16>, vector<4x64xf32> -> vector<4x64xf32>
    %277 = arith.addf %270, %276 : vector<4x64xf32>
    %278 = vector.extract_strided_slice %235 {offsets = [0, 1, 1, 0, 0], sizes = [2, 1, 2, 1, 64], strides = [1, 1, 1, 1, 1]} : vector<3x2x3x2x64xf32> to vector<2x1x2x1x64xf32>
    %279 = vector.shape_cast %278 : vector<2x1x2x1x64xf32> to vector<4x64xf32>
    %280 = arith.truncf %279 : vector<4x64xf32> to vector<4x64xbf16>
    %c1_230 = arith.constant 1 : index
    %c2_231 = arith.constant 2 : index
    %c0_232 = arith.constant 0 : index
    %c0_233 = arith.constant 0 : index
    %281 = vector.load %arg8[%c1_230, %c2_231, %c0_232, %c0_233] : memref<4x4x64x64xbf16, #tpu.memory_space<vmem>>, vector<1x1x64x64xbf16>
    %282 = vector.shape_cast %281 : vector<1x1x64x64xbf16> to vector<64x64xbf16>
    %cst_234 = arith.constant dense<0.000000e+00> : vector<4x64xf32>
    %283 = tpu.matmul %280, %282, %cst_234 {dimension_numbers = #tpu.dot_dimension_numbers<[1], [0], [0], [1], [0, 0, 1, 1], [], []>} : vector<4x64xbf16>, vector<64x64xbf16>, vector<4x64xf32> -> vector<4x64xf32>
    %284 = arith.addf %277, %283 : vector<4x64xf32>
    %285 = vector.extract_strided_slice %235 {offsets = [0, 1, 1, 1, 0], sizes = [2, 1, 2, 1, 64], strides = [1, 1, 1, 1, 1]} : vector<3x2x3x2x64xf32> to vector<2x1x2x1x64xf32>
    %286 = vector.shape_cast %285 : vector<2x1x2x1x64xf32> to vector<4x64xf32>
    %287 = arith.truncf %286 : vector<4x64xf32> to vector<4x64xbf16>
    %c1_235 = arith.constant 1 : index
    %c3_236 = arith.constant 3 : index
    %c0_237 = arith.constant 0 : index
    %c0_238 = arith.constant 0 : index
    %288 = vector.load %arg8[%c1_235, %c3_236, %c0_237, %c0_238] : memref<4x4x64x64xbf16, #tpu.memory_space<vmem>>, vector<1x1x64x64xbf16>
    %289 = vector.shape_cast %288 : vector<1x1x64x64xbf16> to vector<64x64xbf16>
    %cst_239 = arith.constant dense<0.000000e+00> : vector<4x64xf32>
    %290 = tpu.matmul %287, %289, %cst_239 {dimension_numbers = #tpu.dot_dimension_numbers<[1], [0], [0], [1], [0, 0, 1, 1], [], []>} : vector<4x64xbf16>, vector<64x64xbf16>, vector<4x64xf32> -> vector<4x64xf32>
    %291 = arith.addf %284, %290 : vector<4x64xf32>
    %292 = vector.extract_strided_slice %235 {offsets = [1, 0, 0, 0, 0], sizes = [2, 1, 2, 1, 64], strides = [1, 1, 1, 1, 1]} : vector<3x2x3x2x64xf32> to vector<2x1x2x1x64xf32>
    %293 = vector.shape_cast %292 : vector<2x1x2x1x64xf32> to vector<4x64xf32>
    %294 = arith.truncf %293 : vector<4x64xf32> to vector<4x64xbf16>
    %c2_240 = arith.constant 2 : index
    %c0_241 = arith.constant 0 : index
    %c0_242 = arith.constant 0 : index
    %c0_243 = arith.constant 0 : index
    %295 = vector.load %arg8[%c2_240, %c0_241, %c0_242, %c0_243] : memref<4x4x64x64xbf16, #tpu.memory_space<vmem>>, vector<1x1x64x64xbf16>
    %296 = vector.shape_cast %295 : vector<1x1x64x64xbf16> to vector<64x64xbf16>
    %cst_244 = arith.constant dense<0.000000e+00> : vector<4x64xf32>
    %297 = tpu.matmul %294, %296, %cst_244 {dimension_numbers = #tpu.dot_dimension_numbers<[1], [0], [0], [1], [0, 0, 1, 1], [], []>} : vector<4x64xbf16>, vector<64x64xbf16>, vector<4x64xf32> -> vector<4x64xf32>
    %298 = arith.addf %291, %297 : vector<4x64xf32>
    %299 = vector.extract_strided_slice %235 {offsets = [1, 0, 0, 1, 0], sizes = [2, 1, 2, 1, 64], strides = [1, 1, 1, 1, 1]} : vector<3x2x3x2x64xf32> to vector<2x1x2x1x64xf32>
    %300 = vector.shape_cast %299 : vector<2x1x2x1x64xf32> to vector<4x64xf32>
    %301 = arith.truncf %300 : vector<4x64xf32> to vector<4x64xbf16>
    %c2_245 = arith.constant 2 : index
    %c1_246 = arith.constant 1 : index
    %c0_247 = arith.constant 0 : index
    %c0_248 = arith.constant 0 : index
    %302 = vector.load %arg8[%c2_245, %c1_246, %c0_247, %c0_248] : memref<4x4x64x64xbf16, #tpu.memory_space<vmem>>, vector<1x1x64x64xbf16>
    %303 = vector.shape_cast %302 : vector<1x1x64x64xbf16> to vector<64x64xbf16>
    %cst_249 = arith.constant dense<0.000000e+00> : vector<4x64xf32>
    %304 = tpu.matmul %301, %303, %cst_249 {dimension_numbers = #tpu.dot_dimension_numbers<[1], [0], [0], [1], [0, 0, 1, 1], [], []>} : vector<4x64xbf16>, vector<64x64xbf16>, vector<4x64xf32> -> vector<4x64xf32>
    %305 = arith.addf %298, %304 : vector<4x64xf32>
    %306 = vector.extract_strided_slice %235 {offsets = [1, 0, 1, 0, 0], sizes = [2, 1, 2, 1, 64], strides = [1, 1, 1, 1, 1]} : vector<3x2x3x2x64xf32> to vector<2x1x2x1x64xf32>
    %307 = vector.shape_cast %306 : vector<2x1x2x1x64xf32> to vector<4x64xf32>
    %308 = arith.truncf %307 : vector<4x64xf32> to vector<4x64xbf16>
    %c2_250 = arith.constant 2 : index
    %c2_251 = arith.constant 2 : index
    %c0_252 = arith.constant 0 : index
    %c0_253 = arith.constant 0 : index
    %309 = vector.load %arg8[%c2_250, %c2_251, %c0_252, %c0_253] : memref<4x4x64x64xbf16, #tpu.memory_space<vmem>>, vector<1x1x64x64xbf16>
    %310 = vector.shape_cast %309 : vector<1x1x64x64xbf16> to vector<64x64xbf16>
    %cst_254 = arith.constant dense<0.000000e+00> : vector<4x64xf32>
    %311 = tpu.matmul %308, %310, %cst_254 {dimension_numbers = #tpu.dot_dimension_numbers<[1], [0], [0], [1], [0, 0, 1, 1], [], []>} : vector<4x64xbf16>, vector<64x64xbf16>, vector<4x64xf32> -> vector<4x64xf32>
    %312 = arith.addf %305, %311 : vector<4x64xf32>
    %313 = vector.extract_strided_slice %235 {offsets = [1, 0, 1, 1, 0], sizes = [2, 1, 2, 1, 64], strides = [1, 1, 1, 1, 1]} : vector<3x2x3x2x64xf32> to vector<2x1x2x1x64xf32>
    %314 = vector.shape_cast %313 : vector<2x1x2x1x64xf32> to vector<4x64xf32>
    %315 = arith.truncf %314 : vector<4x64xf32> to vector<4x64xbf16>
    %c2_255 = arith.constant 2 : index
    %c3_256 = arith.constant 3 : index
    %c0_257 = arith.constant 0 : index
    %c0_258 = arith.constant 0 : index
    %316 = vector.load %arg8[%c2_255, %c3_256, %c0_257, %c0_258] : memref<4x4x64x64xbf16, #tpu.memory_space<vmem>>, vector<1x1x64x64xbf16>
    %317 = vector.shape_cast %316 : vector<1x1x64x64xbf16> to vector<64x64xbf16>
    %cst_259 = arith.constant dense<0.000000e+00> : vector<4x64xf32>
    %318 = tpu.matmul %315, %317, %cst_259 {dimension_numbers = #tpu.dot_dimension_numbers<[1], [0], [0], [1], [0, 0, 1, 1], [], []>} : vector<4x64xbf16>, vector<64x64xbf16>, vector<4x64xf32> -> vector<4x64xf32>
    %319 = arith.addf %312, %318 : vector<4x64xf32>
    %320 = vector.extract_strided_slice %235 {offsets = [1, 1, 0, 0, 0], sizes = [2, 1, 2, 1, 64], strides = [1, 1, 1, 1, 1]} : vector<3x2x3x2x64xf32> to vector<2x1x2x1x64xf32>
    %321 = vector.shape_cast %320 : vector<2x1x2x1x64xf32> to vector<4x64xf32>
    %322 = arith.truncf %321 : vector<4x64xf32> to vector<4x64xbf16>
    %c3_260 = arith.constant 3 : index
    %c0_261 = arith.constant 0 : index
    %c0_262 = arith.constant 0 : index
    %c0_263 = arith.constant 0 : index
    %323 = vector.load %arg8[%c3_260, %c0_261, %c0_262, %c0_263] : memref<4x4x64x64xbf16, #tpu.memory_space<vmem>>, vector<1x1x64x64xbf16>
    %324 = vector.shape_cast %323 : vector<1x1x64x64xbf16> to vector<64x64xbf16>
    %cst_264 = arith.constant dense<0.000000e+00> : vector<4x64xf32>
    %325 = tpu.matmul %322, %324, %cst_264 {dimension_numbers = #tpu.dot_dimension_numbers<[1], [0], [0], [1], [0, 0, 1, 1], [], []>} : vector<4x64xbf16>, vector<64x64xbf16>, vector<4x64xf32> -> vector<4x64xf32>
    %326 = arith.addf %319, %325 : vector<4x64xf32>
    %327 = vector.extract_strided_slice %235 {offsets = [1, 1, 0, 1, 0], sizes = [2, 1, 2, 1, 64], strides = [1, 1, 1, 1, 1]} : vector<3x2x3x2x64xf32> to vector<2x1x2x1x64xf32>
    %328 = vector.shape_cast %327 : vector<2x1x2x1x64xf32> to vector<4x64xf32>
    %329 = arith.truncf %328 : vector<4x64xf32> to vector<4x64xbf16>
    %c3_265 = arith.constant 3 : index
    %c1_266 = arith.constant 1 : index
    %c0_267 = arith.constant 0 : index
    %c0_268 = arith.constant 0 : index
    %330 = vector.load %arg8[%c3_265, %c1_266, %c0_267, %c0_268] : memref<4x4x64x64xbf16, #tpu.memory_space<vmem>>, vector<1x1x64x64xbf16>
    %331 = vector.shape_cast %330 : vector<1x1x64x64xbf16> to vector<64x64xbf16>
    %cst_269 = arith.constant dense<0.000000e+00> : vector<4x64xf32>
    %332 = tpu.matmul %329, %331, %cst_269 {dimension_numbers = #tpu.dot_dimension_numbers<[1], [0], [0], [1], [0, 0, 1, 1], [], []>} : vector<4x64xbf16>, vector<64x64xbf16>, vector<4x64xf32> -> vector<4x64xf32>
    %333 = arith.addf %326, %332 : vector<4x64xf32>
    %334 = vector.extract_strided_slice %235 {offsets = [1, 1, 1, 0, 0], sizes = [2, 1, 2, 1, 64], strides = [1, 1, 1, 1, 1]} : vector<3x2x3x2x64xf32> to vector<2x1x2x1x64xf32>
    %335 = vector.shape_cast %334 : vector<2x1x2x1x64xf32> to vector<4x64xf32>
    %336 = arith.truncf %335 : vector<4x64xf32> to vector<4x64xbf16>
    %c3_270 = arith.constant 3 : index
    %c2_271 = arith.constant 2 : index
    %c0_272 = arith.constant 0 : index
    %c0_273 = arith.constant 0 : index
    %337 = vector.load %arg8[%c3_270, %c2_271, %c0_272, %c0_273] : memref<4x4x64x64xbf16, #tpu.memory_space<vmem>>, vector<1x1x64x64xbf16>
    %338 = vector.shape_cast %337 : vector<1x1x64x64xbf16> to vector<64x64xbf16>
    %cst_274 = arith.constant dense<0.000000e+00> : vector<4x64xf32>
    %339 = tpu.matmul %336, %338, %cst_274 {dimension_numbers = #tpu.dot_dimension_numbers<[1], [0], [0], [1], [0, 0, 1, 1], [], []>} : vector<4x64xbf16>, vector<64x64xbf16>, vector<4x64xf32> -> vector<4x64xf32>
    %340 = arith.addf %333, %339 : vector<4x64xf32>
    %341 = vector.extract_strided_slice %235 {offsets = [1, 1, 1, 1, 0], sizes = [2, 1, 2, 1, 64], strides = [1, 1, 1, 1, 1]} : vector<3x2x3x2x64xf32> to vector<2x1x2x1x64xf32>
    %342 = vector.shape_cast %341 : vector<2x1x2x1x64xf32> to vector<4x64xf32>
    %343 = arith.truncf %342 : vector<4x64xf32> to vector<4x64xbf16>
    %c3_275 = arith.constant 3 : index
    %c3_276 = arith.constant 3 : index
    %c0_277 = arith.constant 0 : index
    %c0_278 = arith.constant 0 : index
    %344 = vector.load %arg8[%c3_275, %c3_276, %c0_277, %c0_278] : memref<4x4x64x64xbf16, #tpu.memory_space<vmem>>, vector<1x1x64x64xbf16>
    %345 = vector.shape_cast %344 : vector<1x1x64x64xbf16> to vector<64x64xbf16>
    %cst_279 = arith.constant dense<0.000000e+00> : vector<4x64xf32>
    %346 = tpu.matmul %343, %345, %cst_279 {dimension_numbers = #tpu.dot_dimension_numbers<[1], [0], [0], [1], [0, 0, 1, 1], [], []>} : vector<4x64xbf16>, vector<64x64xbf16>, vector<4x64xf32> -> vector<4x64xf32>
    %347 = arith.addf %340, %346 : vector<4x64xf32>
    %cst_280 = arith.constant 0.000000e+00 : f32
    %348 = vector.broadcast %cst_280 : f32 to vector<4x64xf32>
    %349 = arith.maximumf %347, %348 : vector<4x64xf32>
    %350 = vector.shape_cast %349 : vector<4x64xf32> to vector<2x2x64xf32>
    %cst_281 = arith.constant 0.000000e+00 : f32
    %351 = vector.broadcast %cst_281 : f32 to vector<4x4x64xf32>
    %c0_282 = arith.constant 0 : index
    %c0_283 = arith.constant 0 : index
    %c0_284 = arith.constant 0 : index
    %352 = vector.load %arg20[%c0_282, %c0_283, %c0_284] : memref<4x4x64xf32, #tpu.memory_space<vmem>>, vector<4x4x64xf32>
    tpu.vector_store %arg20[%c0_282, %c0_283, %c0_284], %351 {strides = array<i32>} : memref<4x4x64xf32, #tpu.memory_space<vmem>>, vector<4x4x64xf32>,
    %c1_285 = arith.constant 1 : index
    %c1_286 = arith.constant 1 : index
    %c0_287 = arith.constant 0 : index
    %353 = vector.load %arg20[%c1_285, %c1_286, %c0_287] : memref<4x4x64xf32, #tpu.memory_space<vmem>>, vector<2x2x64xf32>
    tpu.vector_store %arg20[%c1_285, %c1_286, %c0_287], %350 {strides = array<i32>} : memref<4x4x64xf32, #tpu.memory_space<vmem>>, vector<2x2x64xf32>,
    %cst_288 = arith.constant 0.000000e+00 : f32
    %354 = vector.broadcast %cst_288 : f32 to vector<1x32xf32>
    %c0_289 = arith.constant 0 : index
    %c0_290 = arith.constant 0 : index
    %355 = vector.load %arg11[%c0_289, %c0_290] : memref<1x32xf32, #tpu.memory_space<vmem>>, vector<1x32xf32>
    %356 = arith.addf %354, %355 : vector<1x32xf32>
    %c0_291 = arith.constant 0 : index
    %c0_292 = arith.constant 0 : index
    %c0_293 = arith.constant 0 : index
    %357 = vector.load %arg20[%c0_291, %c0_292, %c0_293] : memref<4x4x64xf32, #tpu.memory_space<vmem>>, vector<4x4x64xf32>
    %358 = vector.shape_cast %357 : vector<4x4x64xf32> to vector<2x2x2x2x64xf32>
    %359 = vector.extract_strided_slice %358 {offsets = [0, 0, 0, 0, 0], sizes = [1, 1, 1, 1, 64], strides = [1, 1, 1, 1, 1]} : vector<2x2x2x2x64xf32> to vector<1x1x1x1x64xf32>
    %360 = vector.shape_cast %359 : vector<1x1x1x1x64xf32> to vector<1x64xf32>
    %361 = arith.truncf %360 : vector<1x64xf32> to vector<1x64xbf16>
    %c0_294 = arith.constant 0 : index
    %c0_295 = arith.constant 0 : index
    %c0_296 = arith.constant 0 : index
    %c0_297 = arith.constant 0 : index
    %362 = vector.load %arg10[%c0_294, %c0_295, %c0_296, %c0_297] : memref<4x4x64x32xbf16, #tpu.memory_space<vmem>>, vector<1x1x64x32xbf16>
    %363 = vector.shape_cast %362 : vector<1x1x64x32xbf16> to vector<64x32xbf16>
    %cst_298 = arith.constant dense<0.000000e+00> : vector<1x32xf32>
    %364 = tpu.matmul %361, %363, %cst_298 {dimension_numbers = #tpu.dot_dimension_numbers<[1], [0], [0], [1], [0, 0, 1, 1], [], []>} : vector<1x64xbf16>, vector<64x32xbf16>, vector<1x32xf32> -> vector<1x32xf32>
    %365 = arith.addf %356, %364 : vector<1x32xf32>
    %366 = vector.extract_strided_slice %358 {offsets = [0, 0, 0, 1, 0], sizes = [1, 1, 1, 1, 64], strides = [1, 1, 1, 1, 1]} : vector<2x2x2x2x64xf32> to vector<1x1x1x1x64xf32>
    %367 = vector.shape_cast %366 : vector<1x1x1x1x64xf32> to vector<1x64xf32>
    %368 = arith.truncf %367 : vector<1x64xf32> to vector<1x64xbf16>
    %c0_299 = arith.constant 0 : index
    %c1_300 = arith.constant 1 : index
    %c0_301 = arith.constant 0 : index
    %c0_302 = arith.constant 0 : index
    %369 = vector.load %arg10[%c0_299, %c1_300, %c0_301, %c0_302] : memref<4x4x64x32xbf16, #tpu.memory_space<vmem>>, vector<1x1x64x32xbf16>
    %370 = vector.shape_cast %369 : vector<1x1x64x32xbf16> to vector<64x32xbf16>
    %cst_303 = arith.constant dense<0.000000e+00> : vector<1x32xf32>
    %371 = tpu.matmul %368, %370, %cst_303 {dimension_numbers = #tpu.dot_dimension_numbers<[1], [0], [0], [1], [0, 0, 1, 1], [], []>} : vector<1x64xbf16>, vector<64x32xbf16>, vector<1x32xf32> -> vector<1x32xf32>
    %372 = arith.addf %365, %371 : vector<1x32xf32>
    %373 = vector.extract_strided_slice %358 {offsets = [0, 0, 1, 0, 0], sizes = [1, 1, 1, 1, 64], strides = [1, 1, 1, 1, 1]} : vector<2x2x2x2x64xf32> to vector<1x1x1x1x64xf32>
    %374 = vector.shape_cast %373 : vector<1x1x1x1x64xf32> to vector<1x64xf32>
    %375 = arith.truncf %374 : vector<1x64xf32> to vector<1x64xbf16>
    %c0_304 = arith.constant 0 : index
    %c2_305 = arith.constant 2 : index
    %c0_306 = arith.constant 0 : index
    %c0_307 = arith.constant 0 : index
    %376 = vector.load %arg10[%c0_304, %c2_305, %c0_306, %c0_307] : memref<4x4x64x32xbf16, #tpu.memory_space<vmem>>, vector<1x1x64x32xbf16>
    %377 = vector.shape_cast %376 : vector<1x1x64x32xbf16> to vector<64x32xbf16>
    %cst_308 = arith.constant dense<0.000000e+00> : vector<1x32xf32>
    %378 = tpu.matmul %375, %377, %cst_308 {dimension_numbers = #tpu.dot_dimension_numbers<[1], [0], [0], [1], [0, 0, 1, 1], [], []>} : vector<1x64xbf16>, vector<64x32xbf16>, vector<1x32xf32> -> vector<1x32xf32>
    %379 = arith.addf %372, %378 : vector<1x32xf32>
    %380 = vector.extract_strided_slice %358 {offsets = [0, 0, 1, 1, 0], sizes = [1, 1, 1, 1, 64], strides = [1, 1, 1, 1, 1]} : vector<2x2x2x2x64xf32> to vector<1x1x1x1x64xf32>
    %381 = vector.shape_cast %380 : vector<1x1x1x1x64xf32> to vector<1x64xf32>
    %382 = arith.truncf %381 : vector<1x64xf32> to vector<1x64xbf16>
    %c0_309 = arith.constant 0 : index
    %c3_310 = arith.constant 3 : index
    %c0_311 = arith.constant 0 : index
    %c0_312 = arith.constant 0 : index
    %383 = vector.load %arg10[%c0_309, %c3_310, %c0_311, %c0_312] : memref<4x4x64x32xbf16, #tpu.memory_space<vmem>>, vector<1x1x64x32xbf16>
    %384 = vector.shape_cast %383 : vector<1x1x64x32xbf16> to vector<64x32xbf16>
    %cst_313 = arith.constant dense<0.000000e+00> : vector<1x32xf32>
    %385 = tpu.matmul %382, %384, %cst_313 {dimension_numbers = #tpu.dot_dimension_numbers<[1], [0], [0], [1], [0, 0, 1, 1], [], []>} : vector<1x64xbf16>, vector<64x32xbf16>, vector<1x32xf32> -> vector<1x32xf32>
    %386 = arith.addf %379, %385 : vector<1x32xf32>
    %387 = vector.extract_strided_slice %358 {offsets = [0, 1, 0, 0, 0], sizes = [1, 1, 1, 1, 64], strides = [1, 1, 1, 1, 1]} : vector<2x2x2x2x64xf32> to vector<1x1x1x1x64xf32>
    %388 = vector.shape_cast %387 : vector<1x1x1x1x64xf32> to vector<1x64xf32>
    %389 = arith.truncf %388 : vector<1x64xf32> to vector<1x64xbf16>
    %c1_314 = arith.constant 1 : index
    %c0_315 = arith.constant 0 : index
    %c0_316 = arith.constant 0 : index
    %c0_317 = arith.constant 0 : index
    %390 = vector.load %arg10[%c1_314, %c0_315, %c0_316, %c0_317] : memref<4x4x64x32xbf16, #tpu.memory_space<vmem>>, vector<1x1x64x32xbf16>
    %391 = vector.shape_cast %390 : vector<1x1x64x32xbf16> to vector<64x32xbf16>
    %cst_318 = arith.constant dense<0.000000e+00> : vector<1x32xf32>
    %392 = tpu.matmul %389, %391, %cst_318 {dimension_numbers = #tpu.dot_dimension_numbers<[1], [0], [0], [1], [0, 0, 1, 1], [], []>} : vector<1x64xbf16>, vector<64x32xbf16>, vector<1x32xf32> -> vector<1x32xf32>
    %393 = arith.addf %386, %392 : vector<1x32xf32>
    %394 = vector.extract_strided_slice %358 {offsets = [0, 1, 0, 1, 0], sizes = [1, 1, 1, 1, 64], strides = [1, 1, 1, 1, 1]} : vector<2x2x2x2x64xf32> to vector<1x1x1x1x64xf32>
    %395 = vector.shape_cast %394 : vector<1x1x1x1x64xf32> to vector<1x64xf32>
    %396 = arith.truncf %395 : vector<1x64xf32> to vector<1x64xbf16>
    %c1_319 = arith.constant 1 : index
    %c1_320 = arith.constant 1 : index
    %c0_321 = arith.constant 0 : index
    %c0_322 = arith.constant 0 : index
    %397 = vector.load %arg10[%c1_319, %c1_320, %c0_321, %c0_322] : memref<4x4x64x32xbf16, #tpu.memory_space<vmem>>, vector<1x1x64x32xbf16>
    %398 = vector.shape_cast %397 : vector<1x1x64x32xbf16> to vector<64x32xbf16>
    %cst_323 = arith.constant dense<0.000000e+00> : vector<1x32xf32>
    %399 = tpu.matmul %396, %398, %cst_323 {dimension_numbers = #tpu.dot_dimension_numbers<[1], [0], [0], [1], [0, 0, 1, 1], [], []>} : vector<1x64xbf16>, vector<64x32xbf16>, vector<1x32xf32> -> vector<1x32xf32>
    %400 = arith.addf %393, %399 : vector<1x32xf32>
    %401 = vector.extract_strided_slice %358 {offsets = [0, 1, 1, 0, 0], sizes = [1, 1, 1, 1, 64], strides = [1, 1, 1, 1, 1]} : vector<2x2x2x2x64xf32> to vector<1x1x1x1x64xf32>
    %402 = vector.shape_cast %401 : vector<1x1x1x1x64xf32> to vector<1x64xf32>
    %403 = arith.truncf %402 : vector<1x64xf32> to vector<1x64xbf16>
    %c1_324 = arith.constant 1 : index
    %c2_325 = arith.constant 2 : index
    %c0_326 = arith.constant 0 : index
    %c0_327 = arith.constant 0 : index
    %404 = vector.load %arg10[%c1_324, %c2_325, %c0_326, %c0_327] : memref<4x4x64x32xbf16, #tpu.memory_space<vmem>>, vector<1x1x64x32xbf16>
    %405 = vector.shape_cast %404 : vector<1x1x64x32xbf16> to vector<64x32xbf16>
    %cst_328 = arith.constant dense<0.000000e+00> : vector<1x32xf32>
    %406 = tpu.matmul %403, %405, %cst_328 {dimension_numbers = #tpu.dot_dimension_numbers<[1], [0], [0], [1], [0, 0, 1, 1], [], []>} : vector<1x64xbf16>, vector<64x32xbf16>, vector<1x32xf32> -> vector<1x32xf32>
    %407 = arith.addf %400, %406 : vector<1x32xf32>
    %408 = vector.extract_strided_slice %358 {offsets = [0, 1, 1, 1, 0], sizes = [1, 1, 1, 1, 64], strides = [1, 1, 1, 1, 1]} : vector<2x2x2x2x64xf32> to vector<1x1x1x1x64xf32>
    %409 = vector.shape_cast %408 : vector<1x1x1x1x64xf32> to vector<1x64xf32>
    %410 = arith.truncf %409 : vector<1x64xf32> to vector<1x64xbf16>
    %c1_329 = arith.constant 1 : index
    %c3_330 = arith.constant 3 : index
    %c0_331 = arith.constant 0 : index
    %c0_332 = arith.constant 0 : index
    %411 = vector.load %arg10[%c1_329, %c3_330, %c0_331, %c0_332] : memref<4x4x64x32xbf16, #tpu.memory_space<vmem>>, vector<1x1x64x32xbf16>
    %412 = vector.shape_cast %411 : vector<1x1x64x32xbf16> to vector<64x32xbf16>
    %cst_333 = arith.constant dense<0.000000e+00> : vector<1x32xf32>
    %413 = tpu.matmul %410, %412, %cst_333 {dimension_numbers = #tpu.dot_dimension_numbers<[1], [0], [0], [1], [0, 0, 1, 1], [], []>} : vector<1x64xbf16>, vector<64x32xbf16>, vector<1x32xf32> -> vector<1x32xf32>
    %414 = arith.addf %407, %413 : vector<1x32xf32>
    %415 = vector.extract_strided_slice %358 {offsets = [1, 0, 0, 0, 0], sizes = [1, 1, 1, 1, 64], strides = [1, 1, 1, 1, 1]} : vector<2x2x2x2x64xf32> to vector<1x1x1x1x64xf32>
    %416 = vector.shape_cast %415 : vector<1x1x1x1x64xf32> to vector<1x64xf32>
    %417 = arith.truncf %416 : vector<1x64xf32> to vector<1x64xbf16>
    %c2_334 = arith.constant 2 : index
    %c0_335 = arith.constant 0 : index
    %c0_336 = arith.constant 0 : index
    %c0_337 = arith.constant 0 : index
    %418 = vector.load %arg10[%c2_334, %c0_335, %c0_336, %c0_337] : memref<4x4x64x32xbf16, #tpu.memory_space<vmem>>, vector<1x1x64x32xbf16>
    %419 = vector.shape_cast %418 : vector<1x1x64x32xbf16> to vector<64x32xbf16>
    %cst_338 = arith.constant dense<0.000000e+00> : vector<1x32xf32>
    %420 = tpu.matmul %417, %419, %cst_338 {dimension_numbers = #tpu.dot_dimension_numbers<[1], [0], [0], [1], [0, 0, 1, 1], [], []>} : vector<1x64xbf16>, vector<64x32xbf16>, vector<1x32xf32> -> vector<1x32xf32>
    %421 = arith.addf %414, %420 : vector<1x32xf32>
    %422 = vector.extract_strided_slice %358 {offsets = [1, 0, 0, 1, 0], sizes = [1, 1, 1, 1, 64], strides = [1, 1, 1, 1, 1]} : vector<2x2x2x2x64xf32> to vector<1x1x1x1x64xf32>
    %423 = vector.shape_cast %422 : vector<1x1x1x1x64xf32> to vector<1x64xf32>
    %424 = arith.truncf %423 : vector<1x64xf32> to vector<1x64xbf16>
    %c2_339 = arith.constant 2 : index
    %c1_340 = arith.constant 1 : index
    %c0_341 = arith.constant 0 : index
    %c0_342 = arith.constant 0 : index
    %425 = vector.load %arg10[%c2_339, %c1_340, %c0_341, %c0_342] : memref<4x4x64x32xbf16, #tpu.memory_space<vmem>>, vector<1x1x64x32xbf16>
    %426 = vector.shape_cast %425 : vector<1x1x64x32xbf16> to vector<64x32xbf16>
    %cst_343 = arith.constant dense<0.000000e+00> : vector<1x32xf32>
    %427 = tpu.matmul %424, %426, %cst_343 {dimension_numbers = #tpu.dot_dimension_numbers<[1], [0], [0], [1], [0, 0, 1, 1], [], []>} : vector<1x64xbf16>, vector<64x32xbf16>, vector<1x32xf32> -> vector<1x32xf32>
    %428 = arith.addf %421, %427 : vector<1x32xf32>
    %429 = vector.extract_strided_slice %358 {offsets = [1, 0, 1, 0, 0], sizes = [1, 1, 1, 1, 64], strides = [1, 1, 1, 1, 1]} : vector<2x2x2x2x64xf32> to vector<1x1x1x1x64xf32>
    %430 = vector.shape_cast %429 : vector<1x1x1x1x64xf32> to vector<1x64xf32>
    %431 = arith.truncf %430 : vector<1x64xf32> to vector<1x64xbf16>
    %c2_344 = arith.constant 2 : index
    %c2_345 = arith.constant 2 : index
    %c0_346 = arith.constant 0 : index
    %c0_347 = arith.constant 0 : index
    %432 = vector.load %arg10[%c2_344, %c2_345, %c0_346, %c0_347] : memref<4x4x64x32xbf16, #tpu.memory_space<vmem>>, vector<1x1x64x32xbf16>
    %433 = vector.shape_cast %432 : vector<1x1x64x32xbf16> to vector<64x32xbf16>
    %cst_348 = arith.constant dense<0.000000e+00> : vector<1x32xf32>
    %434 = tpu.matmul %431, %433, %cst_348 {dimension_numbers = #tpu.dot_dimension_numbers<[1], [0], [0], [1], [0, 0, 1, 1], [], []>} : vector<1x64xbf16>, vector<64x32xbf16>, vector<1x32xf32> -> vector<1x32xf32>
    %435 = arith.addf %428, %434 : vector<1x32xf32>
    %436 = vector.extract_strided_slice %358 {offsets = [1, 0, 1, 1, 0], sizes = [1, 1, 1, 1, 64], strides = [1, 1, 1, 1, 1]} : vector<2x2x2x2x64xf32> to vector<1x1x1x1x64xf32>
    %437 = vector.shape_cast %436 : vector<1x1x1x1x64xf32> to vector<1x64xf32>
    %438 = arith.truncf %437 : vector<1x64xf32> to vector<1x64xbf16>
    %c2_349 = arith.constant 2 : index
    %c3_350 = arith.constant 3 : index
    %c0_351 = arith.constant 0 : index
    %c0_352 = arith.constant 0 : index
    %439 = vector.load %arg10[%c2_349, %c3_350, %c0_351, %c0_352] : memref<4x4x64x32xbf16, #tpu.memory_space<vmem>>, vector<1x1x64x32xbf16>
    %440 = vector.shape_cast %439 : vector<1x1x64x32xbf16> to vector<64x32xbf16>
    %cst_353 = arith.constant dense<0.000000e+00> : vector<1x32xf32>
    %441 = tpu.matmul %438, %440, %cst_353 {dimension_numbers = #tpu.dot_dimension_numbers<[1], [0], [0], [1], [0, 0, 1, 1], [], []>} : vector<1x64xbf16>, vector<64x32xbf16>, vector<1x32xf32> -> vector<1x32xf32>
    %442 = arith.addf %435, %441 : vector<1x32xf32>
    %443 = vector.extract_strided_slice %358 {offsets = [1, 1, 0, 0, 0], sizes = [1, 1, 1, 1, 64], strides = [1, 1, 1, 1, 1]} : vector<2x2x2x2x64xf32> to vector<1x1x1x1x64xf32>
    %444 = vector.shape_cast %443 : vector<1x1x1x1x64xf32> to vector<1x64xf32>
    %445 = arith.truncf %444 : vector<1x64xf32> to vector<1x64xbf16>
    %c3_354 = arith.constant 3 : index
    %c0_355 = arith.constant 0 : index
    %c0_356 = arith.constant 0 : index
    %c0_357 = arith.constant 0 : index
    %446 = vector.load %arg10[%c3_354, %c0_355, %c0_356, %c0_357] : memref<4x4x64x32xbf16, #tpu.memory_space<vmem>>, vector<1x1x64x32xbf16>
    %447 = vector.shape_cast %446 : vector<1x1x64x32xbf16> to vector<64x32xbf16>
    %cst_358 = arith.constant dense<0.000000e+00> : vector<1x32xf32>
    %448 = tpu.matmul %445, %447, %cst_358 {dimension_numbers = #tpu.dot_dimension_numbers<[1], [0], [0], [1], [0, 0, 1, 1], [], []>} : vector<1x64xbf16>, vector<64x32xbf16>, vector<1x32xf32> -> vector<1x32xf32>
    %449 = arith.addf %442, %448 : vector<1x32xf32>
    %450 = vector.extract_strided_slice %358 {offsets = [1, 1, 0, 1, 0], sizes = [1, 1, 1, 1, 64], strides = [1, 1, 1, 1, 1]} : vector<2x2x2x2x64xf32> to vector<1x1x1x1x64xf32>
    %451 = vector.shape_cast %450 : vector<1x1x1x1x64xf32> to vector<1x64xf32>
    %452 = arith.truncf %451 : vector<1x64xf32> to vector<1x64xbf16>
    %c3_359 = arith.constant 3 : index
    %c1_360 = arith.constant 1 : index
    %c0_361 = arith.constant 0 : index
    %c0_362 = arith.constant 0 : index
    %453 = vector.load %arg10[%c3_359, %c1_360, %c0_361, %c0_362] : memref<4x4x64x32xbf16, #tpu.memory_space<vmem>>, vector<1x1x64x32xbf16>
    %454 = vector.shape_cast %453 : vector<1x1x64x32xbf16> to vector<64x32xbf16>
    %cst_363 = arith.constant dense<0.000000e+00> : vector<1x32xf32>
    %455 = tpu.matmul %452, %454, %cst_363 {dimension_numbers = #tpu.dot_dimension_numbers<[1], [0], [0], [1], [0, 0, 1, 1], [], []>} : vector<1x64xbf16>, vector<64x32xbf16>, vector<1x32xf32> -> vector<1x32xf32>
    %456 = arith.addf %449, %455 : vector<1x32xf32>
    %457 = vector.extract_strided_slice %358 {offsets = [1, 1, 1, 0, 0], sizes = [1, 1, 1, 1, 64], strides = [1, 1, 1, 1, 1]} : vector<2x2x2x2x64xf32> to vector<1x1x1x1x64xf32>
    %458 = vector.shape_cast %457 : vector<1x1x1x1x64xf32> to vector<1x64xf32>
    %459 = arith.truncf %458 : vector<1x64xf32> to vector<1x64xbf16>
    %c3_364 = arith.constant 3 : index
    %c2_365 = arith.constant 2 : index
    %c0_366 = arith.constant 0 : index
    %c0_367 = arith.constant 0 : index
    %460 = vector.load %arg10[%c3_364, %c2_365, %c0_366, %c0_367] : memref<4x4x64x32xbf16, #tpu.memory_space<vmem>>, vector<1x1x64x32xbf16>
    %461 = vector.shape_cast %460 : vector<1x1x64x32xbf16> to vector<64x32xbf16>
    %cst_368 = arith.constant dense<0.000000e+00> : vector<1x32xf32>
    %462 = tpu.matmul %459, %461, %cst_368 {dimension_numbers = #tpu.dot_dimension_numbers<[1], [0], [0], [1], [0, 0, 1, 1], [], []>} : vector<1x64xbf16>, vector<64x32xbf16>, vector<1x32xf32> -> vector<1x32xf32>
    %463 = arith.addf %456, %462 : vector<1x32xf32>
    %464 = vector.extract_strided_slice %358 {offsets = [1, 1, 1, 1, 0], sizes = [1, 1, 1, 1, 64], strides = [1, 1, 1, 1, 1]} : vector<2x2x2x2x64xf32> to vector<1x1x1x1x64xf32>
    %465 = vector.shape_cast %464 : vector<1x1x1x1x64xf32> to vector<1x64xf32>
    %466 = arith.truncf %465 : vector<1x64xf32> to vector<1x64xbf16>
    %c3_369 = arith.constant 3 : index
    %c3_370 = arith.constant 3 : index
    %c0_371 = arith.constant 0 : index
    %c0_372 = arith.constant 0 : index
    %467 = vector.load %arg10[%c3_369, %c3_370, %c0_371, %c0_372] : memref<4x4x64x32xbf16, #tpu.memory_space<vmem>>, vector<1x1x64x32xbf16>
    %468 = vector.shape_cast %467 : vector<1x1x64x32xbf16> to vector<64x32xbf16>
    %cst_373 = arith.constant dense<0.000000e+00> : vector<1x32xf32>
    %469 = tpu.matmul %466, %468, %cst_373 {dimension_numbers = #tpu.dot_dimension_numbers<[1], [0], [0], [1], [0, 0, 1, 1], [], []>} : vector<1x64xbf16>, vector<64x32xbf16>, vector<1x32xf32> -> vector<1x32xf32>
    %470 = arith.addf %463, %469 : vector<1x32xf32>
    %cst_374 = arith.constant 0.000000e+00 : f32
    %471 = vector.broadcast %cst_374 : f32 to vector<1x32xf32>
    %472 = arith.maximumf %470, %471 : vector<1x32xf32>
    %473 = arith.truncf %472 : vector<1x32xf32> to vector<1x32xbf16>
    %c0_375 = arith.constant 0 : index
    %c0_376 = arith.constant 0 : index
    %474 = vector.load %arg12[%c0_375, %c0_376] : memref<32x256xbf16, #tpu.memory_space<vmem>>, vector<32x32xbf16>
    %cst_377 = arith.constant dense<0.000000e+00> : vector<1x32xf32>
    %475 = tpu.matmul %473, %474, %cst_377 {dimension_numbers = #tpu.dot_dimension_numbers<[1], [0], [0], [1], [0, 0, 1, 1], [], []>} : vector<1x32xbf16>, vector<32x32xbf16>, vector<1x32xf32> -> vector<1x32xf32>
    %c0_378 = arith.constant 0 : index
    %c0_379 = arith.constant 0 : index
    %476 = vector.load %arg13[%c0_378, %c0_379] : memref<1x256xf32, #tpu.memory_space<vmem>>, vector<1x32xf32>
    %477 = arith.addf %475, %476 : vector<1x32xf32>
    %c0_380 = arith.constant 0 : index
    %c0_381 = arith.constant 0 : index
    %478 = vector.load %arg21[%c0_380, %c0_381] : memref<8x32xf32, #tpu.memory_space<vmem>>, vector<1x32xf32>
    tpu.vector_store %arg21[%c0_380, %c0_381], %477 {strides = array<i32>} : memref<8x32xf32, #tpu.memory_space<vmem>>, vector<1x32xf32>,
    %c0_382 = arith.constant 0 : index
    %c32 = arith.constant 32 : index
    %479 = vector.load %arg12[%c0_382, %c32] : memref<32x256xbf16, #tpu.memory_space<vmem>>, vector<32x32xbf16>
    %cst_383 = arith.constant dense<0.000000e+00> : vector<1x32xf32>
    %480 = tpu.matmul %473, %479, %cst_383 {dimension_numbers = #tpu.dot_dimension_numbers<[1], [0], [0], [1], [0, 0, 1, 1], [], []>} : vector<1x32xbf16>, vector<32x32xbf16>, vector<1x32xf32> -> vector<1x32xf32>
    %c0_384 = arith.constant 0 : index
    %c32_385 = arith.constant 32 : index
    %481 = vector.load %arg13[%c0_384, %c32_385] : memref<1x256xf32, #tpu.memory_space<vmem>>, vector<1x32xf32>
    %482 = arith.addf %480, %481 : vector<1x32xf32>
    %c1_386 = arith.constant 1 : index
    %c0_387 = arith.constant 0 : index
    %483 = vector.load %arg21[%c1_386, %c0_387] : memref<8x32xf32, #tpu.memory_space<vmem>>, vector<1x32xf32>
    tpu.vector_store %arg21[%c1_386, %c0_387], %482 {strides = array<i32>} : memref<8x32xf32, #tpu.memory_space<vmem>>, vector<1x32xf32>,
    %c0_388 = arith.constant 0 : index
    %c64 = arith.constant 64 : index
    %484 = vector.load %arg12[%c0_388, %c64] : memref<32x256xbf16, #tpu.memory_space<vmem>>, vector<32x32xbf16>
    %cst_389 = arith.constant dense<0.000000e+00> : vector<1x32xf32>
    %485 = tpu.matmul %473, %484, %cst_389 {dimension_numbers = #tpu.dot_dimension_numbers<[1], [0], [0], [1], [0, 0, 1, 1], [], []>} : vector<1x32xbf16>, vector<32x32xbf16>, vector<1x32xf32> -> vector<1x32xf32>
    %c0_390 = arith.constant 0 : index
    %c64_391 = arith.constant 64 : index
    %486 = vector.load %arg13[%c0_390, %c64_391] : memref<1x256xf32, #tpu.memory_space<vmem>>, vector<1x32xf32>
    %487 = arith.addf %485, %486 : vector<1x32xf32>
    %c2_392 = arith.constant 2 : index
    %c0_393 = arith.constant 0 : index
    %488 = vector.load %arg21[%c2_392, %c0_393] : memref<8x32xf32, #tpu.memory_space<vmem>>, vector<1x32xf32>
    tpu.vector_store %arg21[%c2_392, %c0_393], %487 {strides = array<i32>} : memref<8x32xf32, #tpu.memory_space<vmem>>, vector<1x32xf32>,
    %c0_394 = arith.constant 0 : index
    %c96 = arith.constant 96 : index
    %489 = vector.load %arg12[%c0_394, %c96] : memref<32x256xbf16, #tpu.memory_space<vmem>>, vector<32x32xbf16>
    %cst_395 = arith.constant dense<0.000000e+00> : vector<1x32xf32>
    %490 = tpu.matmul %473, %489, %cst_395 {dimension_numbers = #tpu.dot_dimension_numbers<[1], [0], [0], [1], [0, 0, 1, 1], [], []>} : vector<1x32xbf16>, vector<32x32xbf16>, vector<1x32xf32> -> vector<1x32xf32>
    %c0_396 = arith.constant 0 : index
    %c96_397 = arith.constant 96 : index
    %491 = vector.load %arg13[%c0_396, %c96_397] : memref<1x256xf32, #tpu.memory_space<vmem>>, vector<1x32xf32>
    %492 = arith.addf %490, %491 : vector<1x32xf32>
    %c3_398 = arith.constant 3 : index
    %c0_399 = arith.constant 0 : index
    %493 = vector.load %arg21[%c3_398, %c0_399] : memref<8x32xf32, #tpu.memory_space<vmem>>, vector<1x32xf32>
    tpu.vector_store %arg21[%c3_398, %c0_399], %492 {strides = array<i32>} : memref<8x32xf32, #tpu.memory_space<vmem>>, vector<1x32xf32>,
    %c0_400 = arith.constant 0 : index
    %c128 = arith.constant 128 : index
    %494 = vector.load %arg12[%c0_400, %c128] : memref<32x256xbf16, #tpu.memory_space<vmem>>, vector<32x32xbf16>
    %cst_401 = arith.constant dense<0.000000e+00> : vector<1x32xf32>
    %495 = tpu.matmul %473, %494, %cst_401 {dimension_numbers = #tpu.dot_dimension_numbers<[1], [0], [0], [1], [0, 0, 1, 1], [], []>} : vector<1x32xbf16>, vector<32x32xbf16>, vector<1x32xf32> -> vector<1x32xf32>
    %c0_402 = arith.constant 0 : index
    %c128_403 = arith.constant 128 : index
    %496 = vector.load %arg13[%c0_402, %c128_403] : memref<1x256xf32, #tpu.memory_space<vmem>>, vector<1x32xf32>
    %497 = arith.addf %495, %496 : vector<1x32xf32>
    %c4 = arith.constant 4 : index
    %c0_404 = arith.constant 0 : index
    %498 = vector.load %arg21[%c4, %c0_404] : memref<8x32xf32, #tpu.memory_space<vmem>>, vector<1x32xf32>
    tpu.vector_store %arg21[%c4, %c0_404], %497 {strides = array<i32>} : memref<8x32xf32, #tpu.memory_space<vmem>>, vector<1x32xf32>,
    %c0_405 = arith.constant 0 : index
    %c160 = arith.constant 160 : index
    %499 = vector.load %arg12[%c0_405, %c160] : memref<32x256xbf16, #tpu.memory_space<vmem>>, vector<32x32xbf16>
    %cst_406 = arith.constant dense<0.000000e+00> : vector<1x32xf32>
    %500 = tpu.matmul %473, %499, %cst_406 {dimension_numbers = #tpu.dot_dimension_numbers<[1], [0], [0], [1], [0, 0, 1, 1], [], []>} : vector<1x32xbf16>, vector<32x32xbf16>, vector<1x32xf32> -> vector<1x32xf32>
    %c0_407 = arith.constant 0 : index
    %c160_408 = arith.constant 160 : index
    %501 = vector.load %arg13[%c0_407, %c160_408] : memref<1x256xf32, #tpu.memory_space<vmem>>, vector<1x32xf32>
    %502 = arith.addf %500, %501 : vector<1x32xf32>
    %c5 = arith.constant 5 : index
    %c0_409 = arith.constant 0 : index
    %503 = vector.load %arg21[%c5, %c0_409] : memref<8x32xf32, #tpu.memory_space<vmem>>, vector<1x32xf32>
    tpu.vector_store %arg21[%c5, %c0_409], %502 {strides = array<i32>} : memref<8x32xf32, #tpu.memory_space<vmem>>, vector<1x32xf32>,
    %c0_410 = arith.constant 0 : index
    %c192 = arith.constant 192 : index
    %504 = vector.load %arg12[%c0_410, %c192] : memref<32x256xbf16, #tpu.memory_space<vmem>>, vector<32x32xbf16>
    %cst_411 = arith.constant dense<0.000000e+00> : vector<1x32xf32>
    %505 = tpu.matmul %473, %504, %cst_411 {dimension_numbers = #tpu.dot_dimension_numbers<[1], [0], [0], [1], [0, 0, 1, 1], [], []>} : vector<1x32xbf16>, vector<32x32xbf16>, vector<1x32xf32> -> vector<1x32xf32>
    %c0_412 = arith.constant 0 : index
    %c192_413 = arith.constant 192 : index
    %506 = vector.load %arg13[%c0_412, %c192_413] : memref<1x256xf32, #tpu.memory_space<vmem>>, vector<1x32xf32>
    %507 = arith.addf %505, %506 : vector<1x32xf32>
    %c6 = arith.constant 6 : index
    %c0_414 = arith.constant 0 : index
    %508 = vector.load %arg21[%c6, %c0_414] : memref<8x32xf32, #tpu.memory_space<vmem>>, vector<1x32xf32>
    tpu.vector_store %arg21[%c6, %c0_414], %507 {strides = array<i32>} : memref<8x32xf32, #tpu.memory_space<vmem>>, vector<1x32xf32>,
    %c0_415 = arith.constant 0 : index
    %c224 = arith.constant 224 : index
    %509 = vector.load %arg12[%c0_415, %c224] : memref<32x256xbf16, #tpu.memory_space<vmem>>, vector<32x32xbf16>
    %cst_416 = arith.constant dense<0.000000e+00> : vector<1x32xf32>
    %510 = tpu.matmul %473, %509, %cst_416 {dimension_numbers = #tpu.dot_dimension_numbers<[1], [0], [0], [1], [0, 0, 1, 1], [], []>} : vector<1x32xbf16>, vector<32x32xbf16>, vector<1x32xf32> -> vector<1x32xf32>
    %c0_417 = arith.constant 0 : index
    %c224_418 = arith.constant 224 : index
    %511 = vector.load %arg13[%c0_417, %c224_418] : memref<1x256xf32, #tpu.memory_space<vmem>>, vector<1x32xf32>
    %512 = arith.addf %510, %511 : vector<1x32xf32>
    %c7 = arith.constant 7 : index
    %c0_419 = arith.constant 0 : index
    %513 = vector.load %arg21[%c7, %c0_419] : memref<8x32xf32, #tpu.memory_space<vmem>>, vector<1x32xf32>
    tpu.vector_store %arg21[%c7, %c0_419], %512 {strides = array<i32>} : memref<8x32xf32, #tpu.memory_space<vmem>>, vector<1x32xf32>,
    %c0_420 = arith.constant 0 : index
    %c0_421 = arith.constant 0 : index
    %514 = vector.load %arg21[%c0_420, %c0_421] : memref<8x32xf32, #tpu.memory_space<vmem>>, vector<8x32xf32>
    %515 = arith.truncf %514 : vector<8x32xf32> to vector<8x32xbf16>
    %c0_422 = arith.constant 0 : index
    %c0_423 = arith.constant 0 : index
    %516 = vector.load %arg14[%c0_422, %c0_423] : memref<32x72xbf16, #tpu.memory_space<vmem>>, vector<32x72xbf16>
    %cst_424 = arith.constant dense<0.000000e+00> : vector<8x72xf32>
    %517 = tpu.matmul %515, %516, %cst_424 {dimension_numbers = #tpu.dot_dimension_numbers<[1], [0], [0], [1], [0, 0, 1, 1], [], []>} : vector<8x32xbf16>, vector<32x72xbf16>, vector<8x72xf32> -> vector<8x72xf32>
    %c0_425 = arith.constant 0 : index
    %c0_426 = arith.constant 0 : index
    %518 = vector.load %arg15[%c0_425, %c0_426] : memref<1x72xf32, #tpu.memory_space<vmem>>, vector<1x72xf32>
    %519 = vector.broadcast %518 : vector<1x72xf32> to vector<8x72xf32>
    %520 = arith.addf %517, %519 : vector<8x72xf32>
    %c0_427 = arith.constant 0 : index
    %c0_428 = arith.constant 0 : index
    %c0_429 = arith.constant 0 : index
    %521 = vector.load %arg16[%c0_427, %c0_428, %c0_429] : memref<1x8x72xf32, #tpu.memory_space<vmem>>, vector<1x8x72xf32>
    %522 = vector.shape_cast %521 : vector<1x8x72xf32> to vector<8x72xf32>
    %523 = vector.shape_cast %520 : vector<8x72xf32> to vector<1x8x72xf32>
    tpu.vector_store %arg16[%c0_427, %c0_428, %c0_429], %523 {strides = array<i32>} : memref<1x8x72xf32, #tpu.memory_space<vmem>>, vector<1x8x72xf32>,
    return
  }
  func.func @transform_0(%arg0: i32) -> (i32, i32, i32, i32) {
    %c0_i32 = arith.constant 0 : i32
    %c0_i32_0 = arith.constant 0 : i32
    %c0_i32_1 = arith.constant 0 : i32
    %c0_i32_2 = arith.constant 0 : i32
    return %arg0, %c0_i32, %c0_i32_0, %c0_i32_1 : i32, i32, i32, i32
  }
  func.func @transform_1(%arg0: i32) -> (i32, i32) {
    %c0_i32 = arith.constant 0 : i32
    %c0_i32_0 = arith.constant 0 : i32
    %c0_i32_1 = arith.constant 0 : i32
    return %c0_i32, %c0_i32_0 : i32, i32
  }
  func.func @transform_2(%arg0: i32) -> (i32, i32) {
    %c0_i32 = arith.constant 0 : i32
    %c0_i32_0 = arith.constant 0 : i32
    %c0_i32_1 = arith.constant 0 : i32
    return %c0_i32, %c0_i32_0 : i32, i32
  }
  func.func @transform_3(%arg0: i32) -> (i32, i32, i32, i32) {
    %c0_i32 = arith.constant 0 : i32
    %c0_i32_0 = arith.constant 0 : i32
    %c0_i32_1 = arith.constant 0 : i32
    %c0_i32_2 = arith.constant 0 : i32
    %c0_i32_3 = arith.constant 0 : i32
    return %c0_i32, %c0_i32_0, %c0_i32_1, %c0_i32_2 : i32, i32, i32, i32
  }
  func.func @transform_4(%arg0: i32) -> (i32, i32) {
    %c0_i32 = arith.constant 0 : i32
    %c0_i32_0 = arith.constant 0 : i32
    %c0_i32_1 = arith.constant 0 : i32
    return %c0_i32, %c0_i32_0 : i32, i32
  }
  func.func @transform_5(%arg0: i32) -> (i32, i32, i32, i32) {
    %c0_i32 = arith.constant 0 : i32
    %c0_i32_0 = arith.constant 0 : i32
    %c0_i32_1 = arith.constant 0 : i32
    %c0_i32_2 = arith.constant 0 : i32
    %c0_i32_3 = arith.constant 0 : i32
    return %c0_i32, %c0_i32_0, %c0_i32_1, %c0_i32_2 : i32, i32, i32, i32
  }
  func.func @transform_6(%arg0: i32) -> (i32, i32) {
    %c0_i32 = arith.constant 0 : i32
    %c0_i32_0 = arith.constant 0 : i32
    %c0_i32_1 = arith.constant 0 : i32
    return %c0_i32, %c0_i32_0 : i32, i32
  }
  func.func @transform_7(%arg0: i32) -> (i32, i32, i32, i32) {
    %c0_i32 = arith.constant 0 : i32
    %c0_i32_0 = arith.constant 0 : i32
    %c0_i32_1 = arith.constant 0 : i32
    %c0_i32_2 = arith.constant 0 : i32
    %c0_i32_3 = arith.constant 0 : i32
    return %c0_i32, %c0_i32_0, %c0_i32_1, %c0_i32_2 : i32, i32, i32, i32
  }
  func.func @transform_8(%arg0: i32) -> (i32, i32) {
    %c0_i32 = arith.constant 0 : i32
    %c0_i32_0 = arith.constant 0 : i32
    %c0_i32_1 = arith.constant 0 : i32
    return %c0_i32, %c0_i32_0 : i32, i32
  }
  func.func @transform_9(%arg0: i32) -> (i32, i32, i32, i32) {
    %c0_i32 = arith.constant 0 : i32
    %c0_i32_0 = arith.constant 0 : i32
    %c0_i32_1 = arith.constant 0 : i32
    %c0_i32_2 = arith.constant 0 : i32
    %c0_i32_3 = arith.constant 0 : i32
    return %c0_i32, %c0_i32_0, %c0_i32_1, %c0_i32_2 : i32, i32, i32, i32
  }
  func.func @transform_10(%arg0: i32) -> (i32, i32) {
    %c0_i32 = arith.constant 0 : i32
    %c0_i32_0 = arith.constant 0 : i32
    %c0_i32_1 = arith.constant 0 : i32
    return %c0_i32, %c0_i32_0 : i32, i32
  }
  func.func @transform_11(%arg0: i32) -> (i32, i32) {
    %c0_i32 = arith.constant 0 : i32
    %c0_i32_0 = arith.constant 0 : i32
    %c0_i32_1 = arith.constant 0 : i32
    return %c0_i32, %c0_i32_0 : i32, i32
  }
  func.func @transform_12(%arg0: i32) -> (i32, i32) {
    %c0_i32 = arith.constant 0 : i32
    %c0_i32_0 = arith.constant 0 : i32
    %c0_i32_1 = arith.constant 0 : i32
    return %c0_i32, %c0_i32_0 : i32, i32
  }
  func.func @transform_13(%arg0: i32) -> (i32, i32) {
    %c0_i32 = arith.constant 0 : i32
    %c0_i32_0 = arith.constant 0 : i32
    %c0_i32_1 = arith.constant 0 : i32
    return %c0_i32, %c0_i32_0 : i32, i32
  }
  func.func @transform_14(%arg0: i32) -> (i32, i32) {
    %c0_i32 = arith.constant 0 : i32
    %c0_i32_0 = arith.constant 0 : i32
    %c0_i32_1 = arith.constant 0 : i32
    return %c0_i32, %c0_i32_0 : i32, i32
  }
  func.func @transform_15(%arg0: i32) -> (i32, i32, i32) {
    %c0_i32 = arith.constant 0 : i32
    %c0_i32_0 = arith.constant 0 : i32
    %c0_i32_1 = arith.constant 0 : i32
    return %arg0, %c0_i32, %c0_i32_0 : i32, i32, i32
  }
}

</mosaic_0001>

<llo_original>
// kernel: weight_regressor_forward.1
$region0: #{weight_regressor_forward.1}
  #allocation0 [shape = 'u32[]', space=smem, size = 0x4, offset = 0x4, fixed_abs, tag = 'smem constant byte address 0x4 - core index']
  #allocation1 [shape = 'u32[144,128]{1,0:T(1,128)}', space=vmem, size = 0x12000, scoped, tag = 'internal scratch']
  #allocation2 [shape = 'f32[10,10,16]{2,1,0:T(8,128)}', space=vmem, size = 0x14000, scoped, tag = 'scratch operand']
  #allocation3 [shape = 'f32[10,10,64]{2,1,0:T(8,128)}', space=vmem, size = 0x14000, scoped, tag = 'scratch operand']
  #allocation4 [shape = 'f32[6,6,64]{2,1,0:T(8,128)}', space=vmem, size = 0x6000, scoped, tag = 'scratch operand']
  #allocation5 [shape = 'f32[4,4,64]{2,1,0:T(4,128)}', space=vmem, size = 0x2000, scoped, tag = 'scratch operand']
  #allocation6 [shape = 'f32[8,32]{1,0:T(8,128)}', space=vmem, size = 0x1000, scoped, tag = 'scratch operand']
  %s0 = inlined_call_operand.vmem [shape: f32[2,8,8,32], index: 0, kind: input, shape index: {}]
  %s1 = inlined_call_operand.vmem [shape: bf16[32,16], index: 1, kind: input, shape index: {}]
  %s2 = inlined_call_operand.vmem [shape: f32[1,16], index: 2, kind: input, shape index: {}]
  %s3 = inlined_call_operand.vmem [shape: bf16[3,3,16,64], index: 3, kind: input, shape index: {}]
  %s4 = inlined_call_operand.vmem [shape: f32[1,64], index: 4, kind: input, shape index: {}]
  %s5 = inlined_call_operand.vmem [shape: bf16[4,4,64,64], index: 5, kind: input, shape index: {}]
  %s6 = inlined_call_operand.vmem [shape: f32[1,64], index: 6, kind: input, shape index: {}]
  %s7 = inlined_call_operand.vmem [shape: bf16[4,4,64,64], index: 7, kind: input, shape index: {}]
  %s8 = inlined_call_operand.vmem [shape: f32[1,64], index: 8, kind: input, shape index: {}]
  %s9 = inlined_call_operand.vmem [shape: bf16[4,4,64,32], index: 9, kind: input, shape index: {}]
  %s10 = inlined_call_operand.vmem [shape: f32[1,32], index: 10, kind: input, shape index: {}]
  %s11 = inlined_call_operand.vmem [shape: bf16[32,256], index: 11, kind: input, shape index: {}]
  %s12 = inlined_call_operand.vmem [shape: f32[1,256], index: 12, kind: input, shape index: {}]
  %s13 = inlined_call_operand.vmem [shape: bf16[32,72], index: 13, kind: input, shape index: {}]
  %s14 = inlined_call_operand.vmem [shape: f32[1,72], index: 14, kind: input, shape index: {}]
  %s15 = inlined_call_operand.vmem [shape: f32[2,8,72], index: 15, kind: output, shape index: {}]
  %s16 = sld [smem:[#allocation0]]
  $region93: #{weight_regressor_forward.1} parent=0
    _
  %s18 = ssub.s32 1, %s16
  %s19 = scalar_select 0, %s18, %s16
  loop: start=0, step=1, limit=4
  $region2: #{weight_regressor_forward.1} parent=0 // loop_pre_header
    _
  $region3: #{weight_regressor_forward.1} parent=0 // loop_header
    %s21 = sphi 0, %s25
    %p22 = scmp.ge.s32.totalorder %s21, 4
    %s31 = sphi 0, %s33
    %s34 = sphi 0, %s31
    %s35 = sphi 0, %s34
    %s51 = sphi 0, %s35
    %s55 = sphi 0, %s55
    %s57 = sphi 0, %s55
    %s58 = sphi 0, %s57
    %s72 = sphi 0, %s58
    %s76 = sphi 0, %s76
    %s78 = sphi 0, %s76
    %s79 = sphi 0, %s78
    %s93 = sphi 0, %s79
    %s97 = sphi 0, %s97
    %s99 = sphi 0, %s97
    %s100 = sphi 0, %s99
    %s114 = sphi 0, %s100
    %s118 = sphi 0, %s118
    %s120 = sphi 0, %s118
    %s121 = sphi 0, %s120
    %s135 = sphi 0, %s121
    %s139 = sphi 0, %s139
    %s141 = sphi 0, %s139
    %s142 = sphi 0, %s141
    %s156 = sphi 0, %s142
    %s160 = sphi 0, %s160
    %s162 = sphi 0, %s160
    %s163 = sphi 0, %s162
    %s177 = sphi 0, %s163
    %s181 = sphi 0, %s181
    %s183 = sphi 0, %s181
    %s184 = sphi 0, %s183
    %s198 = sphi 0, %s184
    %s202 = sphi 0, %s202
    %s204 = sphi 0, %s202
    %s205 = sphi 0, %s204
    %s219 = sphi 0, %s205
    %s223 = sphi 0, %s223
    %s225 = sphi 0, %s223
    %s226 = sphi 0, %s225
    %s240 = sphi 0, %s226
    %s244 = sphi 0, %s244
    %s246 = sphi 0, %s244
    %s247 = sphi 0, %s246
    %s261 = sphi 0, %s247
    %s265 = sphi 0, %s265
    %s267 = sphi 0, %s265
    %s268 = sphi 0, %s267
    %s282 = sphi 0, %s268
    %s286 = sphi 0, %s286
    %s288 = sphi 0, %s286
    %s289 = sphi 0, %s288
    %s303 = sphi 0, %s289
    %s307 = sphi 0, %s307
    %s309 = sphi 0, %s307
    %s310 = sphi 0, %s309
    %s324 = sphi 0, %s310
    %s328 = sphi 0, %s328
    %s330 = sphi 0, %s328
    %s331 = sphi 0, %s330
    %s345 = sphi 0, %s331
    %s351 = sphi 0, %s353
    %s354 = sphi 0, %s351
    %s355 = sphi 0, %s354
    %s371 = sphi 0, %s355
  $region4: #{weight_regressor_forward.1} parent=0 // loop_header_branch
    %24 = sbr.rel (%p22) target = $region8
  $region5: #{weight_regressor_forward.1} parent=0 // loop_body
    %s26 = ssub.s32 %s21, 1
    %s27 = ssub.s32 %s21, 2
    %s28 = sadd.s32 %s21, 1
    %s29 = ssub.s32 %s21, %s28
    %p30 = scmp.eq.s32.totalorder %s29, 0
    %s32 = sadd.s32 %s31, 1
    %s33 = scalar_select %p30, %s31, %s32
    %p36 = pneg %p30
    %p37 = scmp.eq.s32.totalorder %s21, 1
    %p38 = por %p36, %p37
    %p39 = scmp.ne.s32.totalorder %s31, %s34
    %p40 = scmp.eq.s32.totalorder %s21, 0
    %p41 = por %p39, %p40
    %p42 = scmp.ne.s32.totalorder %s31, %s34
    %p43 = scmp.eq.s32.totalorder %s26, 1
    %p44 = por %p42, %p43
    %p45 = scmp.ne.s32.totalorder %s34, %s35
    %p46 = scmp.eq.s32.totalorder %s26, 0
    %p47 = por %p45, %p46
    %p48 = scmp.ne.s32.totalorder %s34, %s35
    %p49 = scmp.eq.s32.totalorder %s27, 1
    %p50 = por %p48, %p49
    %p52 = scmp.ne.s32.totalorder %s35, %s51
    %p53 = scmp.eq.s32.totalorder %s27, 0
    %p54 = por %p52, %p53
    %s56 = sadd.s32 %s55, 1
    %p59 = scmp.eq.s32.totalorder %s21, 1
    %p60 = scmp.ne.s32.totalorder %s55, %s57
    %p61 = scmp.eq.s32.totalorder %s21, 0
    %p62 = por %p60, %p61
    %p63 = scmp.ne.s32.totalorder %s55, %s57
    %p64 = scmp.eq.s32.totalorder %s26, 1
    %p65 = por %p63, %p64
    %p66 = scmp.ne.s32.totalorder %s57, %s58
    %p67 = scmp.eq.s32.totalorder %s26, 0
    %p68 = por %p66, %p67
    %p69 = scmp.ne.s32.totalorder %s57, %s58
    %p70 = scmp.eq.s32.totalorder %s27, 1
    %p71 = por %p69, %p70
    %p73 = scmp.ne.s32.totalorder %s58, %s72
    %p74 = scmp.eq.s32.totalorder %s27, 0
    %p75 = por %p73, %p74
    %s77 = sadd.s32 %s76, 1
    %p80 = scmp.eq.s32.totalorder %s21, 1
    %p81 = scmp.ne.s32.totalorder %s76, %s78
    %p82 = scmp.eq.s32.totalorder %s21, 0
    %p83 = por %p81, %p82
    %p84 = scmp.ne.s32.totalorder %s76, %s78
    %p85 = scmp.eq.s32.totalorder %s26, 1
    %p86 = por %p84, %p85
    %p87 = scmp.ne.s32.totalorder %s78, %s79
    %p88 = scmp.eq.s32.totalorder %s26, 0
    %p89 = por %p87, %p88
    %p90 = scmp.ne.s32.totalorder %s78, %s79
    %p91 = scmp.eq.s32.totalorder %s27, 1
    %p92 = por %p90, %p91
    %p94 = scmp.ne.s32.totalorder %s79, %s93
    %p95 = scmp.eq.s32.totalorder %s27, 0
    %p96 = por %p94, %p95
    %s98 = sadd.s32 %s97, 1
    %p101 = scmp.eq.s32.totalorder %s21, 1
    %p102 = scmp.ne.s32.totalorder %s97, %s99
    %p103 = scmp.eq.s32.totalorder %s21, 0
    %p104 = por %p102, %p103
    %p105 = scmp.ne.s32.totalorder %s97, %s99
    %p106 = scmp.eq.s32.totalorder %s26, 1
    %p107 = por %p105, %p106
    %p108 = scmp.ne.s32.totalorder %s99, %s100
    %p109 = scmp.eq.s32.totalorder %s26, 0
    %p110 = por %p108, %p109
    %p111 = scmp.ne.s32.totalorder %s99, %s100
    %p112 = scmp.eq.s32.totalorder %s27, 1
    %p113 = por %p111, %p112
    %p115 = scmp.ne.s32.totalorder %s100, %s114
    %p116 = scmp.eq.s32.totalorder %s27, 0
    %p117 = por %p115, %p116
    %s119 = sadd.s32 %s118, 1
    %p122 = scmp.eq.s32.totalorder %s21, 1
    %p123 = scmp.ne.s32.totalorder %s118, %s120
    %p124 = scmp.eq.s32.totalorder %s21, 0
    %p125 = por %p123, %p124
    %p126 = scmp.ne.s32.totalorder %s118, %s120
    %p127 = scmp.eq.s32.totalorder %s26, 1
    %p128 = por %p126, %p127
    %p129 = scmp.ne.s32.totalorder %s120, %s121
    %p130 = scmp.eq.s32.totalorder %s26, 0
    %p131 = por %p129, %p130
    %p132 = scmp.ne.s32.totalorder %s120, %s121
    %p133 = scmp.eq.s32.totalorder %s27, 1
    %p134 = por %p132, %p133
    %p136 = scmp.ne.s32.totalorder %s121, %s135
    %p137 = scmp.eq.s32.totalorder %s27, 0
    %p138 = por %p136, %p137
    %s140 = sadd.s32 %s139, 1
    %p143 = scmp.eq.s32.totalorder %s21, 1
    %p144 = scmp.ne.s32.totalorder %s139, %s141
    %p145 = scmp.eq.s32.totalorder %s21, 0
    %p146 = por %p144, %p145
    %p147 = scmp.ne.s32.totalorder %s139, %s141
    %p148 = scmp.eq.s32.totalorder %s26, 1
    %p149 = por %p147, %p148
    %p150 = scmp.ne.s32.totalorder %s141, %s142
    %p151 = scmp.eq.s32.totalorder %s26, 0
    %p152 = por %p150, %p151
    %p153 = scmp.ne.s32.totalorder %s141, %s142
    %p154 = scmp.eq.s32.totalorder %s27, 1
    %p155 = por %p153, %p154
    %p157 = scmp.ne.s32.totalorder %s142, %s156
    %p158 = scmp.eq.s32.totalorder %s27, 0
    %p159 = por %p157, %p158
    %s161 = sadd.s32 %s160, 1
    %p164 = scmp.eq.s32.totalorder %s21, 1
    %p165 = scmp.ne.s32.totalorder %s160, %s162
    %p166 = scmp.eq.s32.totalorder %s21, 0
    %p167 = por %p165, %p166
    %p168 = scmp.ne.s32.totalorder %s160, %s162
    %p169 = scmp.eq.s32.totalorder %s26, 1
    %p170 = por %p168, %p169
    %p171 = scmp.ne.s32.totalorder %s162, %s163
    %p172 = scmp.eq.s32.totalorder %s26, 0
    %p173 = por %p171, %p172
    %p174 = scmp.ne.s32.totalorder %s162, %s163
    %p175 = scmp.eq.s32.totalorder %s27, 1
    %p176 = por %p174, %p175
    %p178 = scmp.ne.s32.totalorder %s163, %s177
    %p179 = scmp.eq.s32.totalorder %s27, 0
    %p180 = por %p178, %p179
    %s182 = sadd.s32 %s181, 1
    %p185 = scmp.eq.s32.totalorder %s21, 1
    %p186 = scmp.ne.s32.totalorder %s181, %s183
    %p187 = scmp.eq.s32.totalorder %s21, 0
    %p188 = por %p186, %p187
    %p189 = scmp.ne.s32.totalorder %s181, %s183
    %p190 = scmp.eq.s32.totalorder %s26, 1
    %p191 = por %p189, %p190
    %p192 = scmp.ne.s32.totalorder %s183, %s184
    %p193 = scmp.eq.s32.totalorder %s26, 0
    %p194 = por %p192, %p193
    %p195 = scmp.ne.s32.totalorder %s183, %s184
    %p196 = scmp.eq.s32.totalorder %s27, 1
    %p197 = por %p195, %p196
    %p199 = scmp.ne.s32.totalorder %s184, %s198
    %p200 = scmp.eq.s32.totalorder %s27, 0
    %p201 = por %p199, %p200
    %s203 = sadd.s32 %s202, 1
    %p206 = scmp.eq.s32.totalorder %s21, 1
    %p207 = scmp.ne.s32.totalorder %s202, %s204
    %p208 = scmp.eq.s32.totalorder %s21, 0
    %p209 = por %p207, %p208
    %p210 = scmp.ne.s32.totalorder %s202, %s204
    %p211 = scmp.eq.s32.totalorder %s26, 1
    %p212 = por %p210, %p211
    %p213 = scmp.ne.s32.totalorder %s204, %s205
    %p214 = scmp.eq.s32.totalorder %s26, 0
    %p215 = por %p213, %p214
    %p216 = scmp.ne.s32.totalorder %s204, %s205
    %p217 = scmp.eq.s32.totalorder %s27, 1
    %p218 = por %p216, %p217
    %p220 = scmp.ne.s32.totalorder %s205, %s219
    %p221 = scmp.eq.s32.totalorder %s27, 0
    %p222 = por %p220, %p221
    %s224 = sadd.s32 %s223, 1
    %p227 = scmp.eq.s32.totalorder %s21, 1
    %p228 = scmp.ne.s32.totalorder %s223, %s225
    %p229 = scmp.eq.s32.totalorder %s21, 0
    %p230 = por %p228, %p229
    %p231 = scmp.ne.s32.totalorder %s223, %s225
    %p232 = scmp.eq.s32.totalorder %s26, 1
    %p233 = por %p231, %p232
    %p234 = scmp.ne.s32.totalorder %s225, %s226
    %p235 = scmp.eq.s32.totalorder %s26, 0
    %p236 = por %p234, %p235
    %p237 = scmp.ne.s32.totalorder %s225, %s226
    %p238 = scmp.eq.s32.totalorder %s27, 1
    %p239 = por %p237, %p238
    %p241 = scmp.ne.s32.totalorder %s226, %s240
    %p242 = scmp.eq.s32.totalorder %s27, 0
    %p243 = por %p241, %p242
    %s245 = sadd.s32 %s244, 1
    %p248 = scmp.eq.s32.totalorder %s21, 1
    %p249 = scmp.ne.s32.totalorder %s244, %s246
    %p250 = scmp.eq.s32.totalorder %s21, 0
    %p251 = por %p249, %p250
    %p252 = scmp.ne.s32.totalorder %s244, %s246
    %p253 = scmp.eq.s32.totalorder %s26, 1
    %p254 = por %p252, %p253
    %p255 = scmp.ne.s32.totalorder %s246, %s247
    %p256 = scmp.eq.s32.totalorder %s26, 0
    %p257 = por %p255, %p256
    %p258 = scmp.ne.s32.totalorder %s246, %s247
    %p259 = scmp.eq.s32.totalorder %s27, 1
    %p260 = por %p258, %p259
    %p262 = scmp.ne.s32.totalorder %s247, %s261
    %p263 = scmp.eq.s32.totalorder %s27, 0
    %p264 = por %p262, %p263
    %s266 = sadd.s32 %s265, 1
    %p269 = scmp.eq.s32.totalorder %s21, 1
    %p270 = scmp.ne.s32.totalorder %s265, %s267
    %p271 = scmp.eq.s32.totalorder %s21, 0
    %p272 = por %p270, %p271
    %p273 = scmp.ne.s32.totalorder %s265, %s267
    %p274 = scmp.eq.s32.totalorder %s26, 1
    %p275 = por %p273, %p274
    %p276 = scmp.ne.s32.totalorder %s267, %s268
    %p277 = scmp.eq.s32.totalorder %s26, 0
    %p278 = por %p276, %p277
    %p279 = scmp.ne.s32.totalorder %s267, %s268
    %p280 = scmp.eq.s32.totalorder %s27, 1
    %p281 = por %p279, %p280
    %p283 = scmp.ne.s32.totalorder %s268, %s282
    %p284 = scmp.eq.s32.totalorder %s27, 0
    %p285 = por %p283, %p284
    %s287 = sadd.s32 %s286, 1
    %p290 = scmp.eq.s32.totalorder %s21, 1
    %p291 = scmp.ne.s32.totalorder %s286, %s288
    %p292 = scmp.eq.s32.totalorder %s21, 0
    %p293 = por %p291, %p292
    %p294 = scmp.ne.s32.totalorder %s286, %s288
    %p295 = scmp.eq.s32.totalorder %s26, 1
    %p296 = por %p294, %p295
    %p297 = scmp.ne.s32.totalorder %s288, %s289
    %p298 = scmp.eq.s32.totalorder %s26, 0
    %p299 = por %p297, %p298
    %p300 = scmp.ne.s32.totalorder %s288, %s289
    %p301 = scmp.eq.s32.totalorder %s27, 1
    %p302 = por %p300, %p301
    %p304 = scmp.ne.s32.totalorder %s289, %s303
    %p305 = scmp.eq.s32.totalorder %s27, 0
    %p306 = por %p304, %p305
    %s308 = sadd.s32 %s307, 1
    %p311 = scmp.eq.s32.totalorder %s21, 1
    %p312 = scmp.ne.s32.totalorder %s307, %s309
    %p313 = scmp.eq.s32.totalorder %s21, 0
    %p314 = por %p312, %p313
    %p315 = scmp.ne.s32.totalorder %s307, %s309
    %p316 = scmp.eq.s32.totalorder %s26, 1
    %p317 = por %p315, %p316
    %p318 = scmp.ne.s32.totalorder %s309, %s310
    %p319 = scmp.eq.s32.totalorder %s26, 0
    %p320 = por %p318, %p319
    %p321 = scmp.ne.s32.totalorder %s309, %s310
    %p322 = scmp.eq.s32.totalorder %s27, 1
    %p323 = por %p321, %p322
    %p325 = scmp.ne.s32.totalorder %s310, %s324
    %p326 = scmp.eq.s32.totalorder %s27, 0
    %p327 = por %p325, %p326
    %s329 = sadd.s32 %s328, 1
    %p332 = scmp.eq.s32.totalorder %s21, 1
    %p333 = scmp.ne.s32.totalorder %s328, %s330
    %p334 = scmp.eq.s32.totalorder %s21, 0
    %p335 = por %p333, %p334
    %p336 = scmp.ne.s32.totalorder %s328, %s330
    %p337 = scmp.eq.s32.totalorder %s26, 1
    %p338 = por %p336, %p337
    %p339 = scmp.ne.s32.totalorder %s330, %s331
    %p340 = scmp.eq.s32.totalorder %s26, 0
    %p341 = por %p339, %p340
    %p342 = scmp.ne.s32.totalorder %s330, %s331
    %p343 = scmp.eq.s32.totalorder %s27, 1
    %p344 = por %p342, %p343
    %p346 = scmp.ne.s32.totalorder %s331, %s345
    %p347 = scmp.eq.s32.totalorder %s27, 0
    %p348 = por %p346, %p347
    %s349 = ssub.s32 %s21, %s28
    %p350 = scmp.eq.s32.totalorder %s349, 0
    %s352 = sadd.s32 %s351, 1
    %s353 = scalar_select %p350, %s351, %s352
    %p356 = pneg %p350
    %p357 = scmp.eq.s32.totalorder %s21, 1
    %p358 = por %p356, %p357
    %p359 = scmp.ne.s32.totalorder %s351, %s354
    %p360 = scmp.eq.s32.totalorder %s21, 0
    %p361 = por %p359, %p360
    %p362 = scmp.ne.s32.totalorder %s351, %s354
    %p363 = scmp.eq.s32.totalorder %s26, 1
    %p364 = por %p362, %p363
    %p365 = scmp.ne.s32.totalorder %s354, %s355
    %p366 = scmp.eq.s32.totalorder %s26, 0
    %p367 = por %p365, %p366
    %p368 = scmp.ne.s32.totalorder %s354, %s355
    %p369 = scmp.eq.s32.totalorder %s27, 1
    %p370 = por %p368, %p369
    %p372 = scmp.ne.s32.totalorder %s355, %s371
    %p373 = scmp.eq.s32.totalorder %s27, 0
    %p374 = por %p372, %p373
    %p375 = scmp.le.s32.totalorder 1, %s21
    %p376 = scmp.lt.s32.totalorder %s21, 3
    %p377 = pnand %p375, %p376
    %p378 = pneg %p377
    // Predicated region
    $region9: #{weight_regressor_forward.1} parent=5 // pred_check
      _
    $region10: #{weight_regressor_forward.1} parent=5 // pred_check_branch
      %380 = sbr.rel (%p377) target = $region12
    $region11: #{weight_regressor_forward.1} parent=5 // pred_region
      %s381 = ssub.s32 %s21, 1
      // Predicated region
      $region13: #{weight_regressor_forward.1} parent=11 // pred_check
        %p382 = pneg %p68
      $region14: #{weight_regressor_forward.1} parent=11 // pred_check_branch
        %384 = sbr.rel (%p382) target = $region16
      $region15: #{weight_regressor_forward.1} parent=11 // pred_region
        _
      $region16: #{weight_regressor_forward.1} parent=11 // pred_fallthru
        _
      // Predicated region
      $region17: #{weight_regressor_forward.1} parent=11 // pred_check
        %p385 = pneg %p89
      $region18: #{weight_regressor_forward.1} parent=11 // pred_check_branch
        %387 = sbr.rel (%p385) target = $region20
      $region19: #{weight_regressor_forward.1} parent=11 // pred_region
        _
      $region20: #{weight_regressor_forward.1} parent=11 // pred_fallthru
        _
      // Predicated region
      $region21: #{weight_regressor_forward.1} parent=11 // pred_check
        %p388 = pneg %p110
      $region22: #{weight_regressor_forward.1} parent=11 // pred_check_branch
        %390 = sbr.rel (%p388) target = $region24
      $region23: #{weight_regressor_forward.1} parent=11 // pred_region
        _
      $region24: #{weight_regressor_forward.1} parent=11 // pred_fallthru
        _
      // Predicated region
      $region25: #{weight_regressor_forward.1} parent=11 // pred_check
        %p391 = pneg %p131
      $region26: #{weight_regressor_forward.1} parent=11 // pred_check_branch
        %393 = sbr.rel (%p391) target = $region28
      $region27: #{weight_regressor_forward.1} parent=11 // pred_region
        _
      $region28: #{weight_regressor_forward.1} parent=11 // pred_fallthru
        _
      // Predicated region
      $region29: #{weight_regressor_forward.1} parent=11 // pred_check
        %p394 = pneg %p152
      $region30: #{weight_regressor_forward.1} parent=11 // pred_check_branch
        %396 = sbr.rel (%p394) target = $region32
      $region31: #{weight_regressor_forward.1} parent=11 // pred_region
        _
      $region32: #{weight_regressor_forward.1} parent=11 // pred_fallthru
        _
      // Predicated region
      $region33: #{weight_regressor_forward.1} parent=11 // pred_check
        %p397 = pneg %p173
      $region34: #{weight_regressor_forward.1} parent=11 // pred_check_branch
        %399 = sbr.rel (%p397) target = $region36
      $region35: #{weight_regressor_forward.1} parent=11 // pred_region
        _
      $region36: #{weight_regressor_forward.1} parent=11 // pred_fallthru
        _
      // Predicated region
      $region37: #{weight_regressor_forward.1} parent=11 // pred_check
        %p400 = pneg %p194
      $region38: #{weight_regressor_forward.1} parent=11 // pred_check_branch
        %402 = sbr.rel (%p400) target = $region40
      $region39: #{weight_regressor_forward.1} parent=11 // pred_region
        _
      $region40: #{weight_regressor_forward.1} parent=11 // pred_fallthru
        _
      // Predicated region
      $region41: #{weight_regressor_forward.1} parent=11 // pred_check
        %p403 = pneg %p215
      $region42: #{weight_regressor_forward.1} parent=11 // pred_check_branch
        %405 = sbr.rel (%p403) target = $region44
      $region43: #{weight_regressor_forward.1} parent=11 // pred_region
        _
      $region44: #{weight_regressor_forward.1} parent=11 // pred_fallthru
        _
      // Predicated region
      $region45: #{weight_regressor_forward.1} parent=11 // pred_check
        %p406 = pneg %p236
      $region46: #{weight_regressor_forward.1} parent=11 // pred_check_branch
        %408 = sbr.rel (%p406) target = $region48
      $region47: #{weight_regressor_forward.1} parent=11 // pred_region
        _
      $region48: #{weight_regressor_forward.1} parent=11 // pred_fallthru
        _
      // Predicated region
      $region49: #{weight_regressor_forward.1} parent=11 // pred_check
        %p409 = pneg %p257
      $region50: #{weight_regressor_forward.1} parent=11 // pred_check_branch
        %411 = sbr.rel (%p409) target = $region52
      $region51: #{weight_regressor_forward.1} parent=11 // pred_region
        _
      $region52: #{weight_regressor_forward.1} parent=11 // pred_fallthru
        _
      // Predicated region
      $region53: #{weight_regressor_forward.1} parent=11 // pred_check
        %p412 = pneg %p278
      $region54: #{weight_regressor_forward.1} parent=11 // pred_check_branch
        %414 = sbr.rel (%p412) target = $region56
      $region55: #{weight_regressor_forward.1} parent=11 // pred_region
        _
      $region56: #{weight_regressor_forward.1} parent=11 // pred_fallthru
        _
      // Predicated region
      $region57: #{weight_regressor_forward.1} parent=11 // pred_check
        %p415 = pneg %p299
      $region58: #{weight_regressor_forward.1} parent=11 // pred_check_branch
        %417 = sbr.rel (%p415) target = $region60
      $region59: #{weight_regressor_forward.1} parent=11 // pred_region
        _
      $region60: #{weight_regressor_forward.1} parent=11 // pred_fallthru
        _
      // Predicated region
      $region61: #{weight_regressor_forward.1} parent=11 // pred_check
        %p418 = pneg %p320
      $region62: #{weight_regressor_forward.1} parent=11 // pred_check_branch
        %420 = sbr.rel (%p418) target = $region64
      $region63: #{weight_regressor_forward.1} parent=11 // pred_region
        _
      $region64: #{weight_regressor_forward.1} parent=11 // pred_fallthru
        _
      // Predicated region
      $region65: #{weight_regressor_forward.1} parent=11 // pred_check
        %p421 = pneg %p341
      $region66: #{weight_regressor_forward.1} parent=11 // pred_check_branch
        %423 = sbr.rel (%p421) target = $region68
      $region67: #{weight_regressor_forward.1} parent=11 // pred_region
        _
      $region68: #{weight_regressor_forward.1} parent=11 // pred_fallthru
        _
    $region12: #{weight_regressor_forward.1} parent=5 // pred_fallthru
      _
    %p424 = scmp.lt.s32.totalorder %s21, 2
    // Predicated region
    $region69: #{weight_regressor_forward.1} parent=5 // pred_check
      %p425 = pneg %p424
    $region70: #{weight_regressor_forward.1} parent=5 // pred_check_branch
      %427 = sbr.rel (%p425) target = $region72
    $region71: #{weight_regressor_forward.1} parent=5 // pred_region
      // Predicated region
      $region73: #{weight_regressor_forward.1} parent=71 // pred_check
        %p428 = pneg %p41
      $region74: #{weight_regressor_forward.1} parent=71 // pred_check_branch
        %430 = sbr.rel (%p428) target = $region76
      $region75: #{weight_regressor_forward.1} parent=71 // pred_region
        %p431 = scmp.lt.s32.totalorder %s21, 1
        %s432 = scalar_select %p431, %s21, 1
        %s433 = smul.addr %s432, 8
        %s434 = smul.addr %s433, 8
        %s435 = scalar_lea.vmem %s0, %s434
      $region76: #{weight_regressor_forward.1} parent=71 // pred_fallthru
        _
    $region72: #{weight_regressor_forward.1} parent=5 // pred_fallthru
      _
    %p436 = scmp.le.s32.totalorder 1, %s21
    %p437 = scmp.lt.s32.totalorder %s21, 3
    %p438 = pnand %p436, %p437
    %p439 = pneg %p438
    // Predicated region
    $region77: #{weight_regressor_forward.1} parent=5 // pred_check
      _
    $region78: #{weight_regressor_forward.1} parent=5 // pred_check_branch
      %441 = sbr.rel (%p438) target = $region80
    $region79: #{weight_regressor_forward.1} parent=5 // pred_region
      %s442 = ssub.s32 %s21, 1
      %p443 = scmp.lt.s32.totalorder %s26, 1
      %s444 = scalar_select %p443, %s26, 1
      %s445 = smul.addr %s444, 8
      %s446 = smul.addr %s445, 8
      %s447 = scalar_lea.vmem %s0, %s446
      %p448 = pneg %p47
      %p449 = pneg %p44
      %p450 = pneg %p68
      %p451 = pneg %p65
      %p452 = pneg %p89
      %p453 = pneg %p86
      %p454 = pneg %p110
      %p455 = pneg %p107
      %p456 = pneg %p131
      %p457 = pneg %p128
      %p458 = pneg %p152
      %p459 = pneg %p149
      %p460 = pneg %p173
      %p461 = pneg %p170
      %p462 = pneg %p194
      %p463 = pneg %p191
      %p464 = pneg %p215
      %p465 = pneg %p212
      %p466 = pneg %p236
      %p467 = pneg %p233
      %p468 = pneg %p257
      %p469 = pneg %p254
      %p470 = pneg %p278
      %p471 = pneg %p275
      %p472 = pneg %p299
      %p473 = pneg %p296
      %p474 = pneg %p320
      %p475 = pneg %p317
      %p476 = pneg %p341
      %p477 = pneg %p338
      %p478 = pneg %p367
      %p479 = pneg %p364
      %p480 = scmp.lt.s32.totalorder %s26, 1
      %s481 = scalar_select %p480, %s26, 1
      %s482 = smul.addr %s481, 8
      %s483 = scalar_lea.vmem %s15, %s482
      %p484 = scmp.lt.s32.totalorder %s26, 1
      %s485 = scalar_select %p484, %s26, 1
      %s486 = smul.addr %s485, 8
      %s487 = smul.addr %s486, 8
      %s488 = scalar_lea.vmem %s0, %s487
      %p489 = scmp.lt.s32.totalorder %s26, 1
      %s490 = scalar_select %p489, %s26, 1
      %s491 = smul.addr %s490, 8
      %s492 = scalar_lea.vmem %s15, %s491
      %v494 = vld [vmem:[%s488] sm:$0xff]
      %v495 = vld [vmem:[%s488 + $0x8] sm:$0xff]
      %v496 = vld [vmem:[%s488 + $0x10] sm:$0xff]
      %v497 = vld [vmem:[%s488 + $0x18] sm:$0xff]
      %v498 = vld [vmem:[%s488 + $0x20] sm:$0xff]
      %v499 = vld [vmem:[%s488 + $0x28] sm:$0xff]
      %v500 = vld [vmem:[%s488 + $0x30] sm:$0xff]
      %v501 = vld [vmem:[%s488 + $0x38] sm:$0xff]
      %v502 = vpack.c.bf16 %v495, %v494
      %v503 = vpack.c.bf16 %v497, %v496
      %v504 = vpack.c.bf16 %v499, %v498
      %v505 = vpack.c.bf16 %v501, %v500
      %v506 = vld [vmem:[%s1] sm:$0xf]
      %v507 = vld [vmem:[%s1 + $0x4] sm:$0xf]
      %v508 = vld [vmem:[%s1 + $0x8] sm:$0xf]
      %v509 = vld [vmem:[%s1 + $0xc] sm:$0xf]
      %v510 = vld [vmem:[%s2] sm:$0x1]
      %v512 = vlaneseq
      %v513 = vshrl.u32 %v512, 7
      %v514 = vsub.s32 0, %v513
      %v515 = vrot.slane %v510, %v514
      %v521 = vunpack.c.l.b16 %v506
      %v522 = vunpack.c.l.b16 %v507
      %v523 = vunpack.c.l.b16 %v508
      %v524 = vunpack.c.l.b16 %v509
      %v525 = vpack.c.b16 %v522, %v521
      %v526 = vpack.c.b16 %v524, %v523
      %vm529 = vcmask 261120
      %v531 = vsel %vm529, %v502, 0
      %v534 = vsel %vm529, %v503, 0
      %v537 = vsel %vm529, %v504, 0
      %v540 = vsel %vm529, %v505, 0
      %542 = vmatprep.subr.bf16.mxu0 0
      %543 = vmatpush1.bf16.msra.mxu0 %v525
      %544 = vmatprep.subr.bf16.mxu0 0
      %545 = vmatpush1.bf16.msra.mxu0 %v526
      %546 = vmatprep.subr.bf16.mxu0 0
      %547 = vmatpush1.bf16.msra.mxu0 0
      %548 = vmatprep.subr.bf16.mxu0 0
      %549 = vmatpush1.bf16.msra.mxu0 0
      %550 = vmatprep.subr.bf16.mxu0 0
      %551 = vmatpush1.bf16.msra.mxu0 0
      %552 = vmatprep.subr.bf16.mxu0 0
      %553 = vmatpush1.bf16.msra.mxu0 0
      %554 = vmatprep.subr.bf16.mxu0 0
      %555 = vmatpush1.bf16.msra.mxu0 0
      %556 = vmatprep.subr.bf16.mxu0 0
      %557 = vmatpush1.bf16.msra.mxu0 0
      %558 = vmatprep.subr.bf16.mxu0 0
      %559 = vmatpush1.bf16.msra.mxu0 0
      %560 = vmatprep.subr.bf16.mxu0 0
      %561 = vmatpush1.bf16.msra.mxu0 0
      %562 = vmatprep.subr.bf16.mxu0 0
      %563 = vmatpush1.bf16.msra.mxu0 0
      %564 = vmatprep.subr.bf16.mxu0 0
      %565 = vmatpush1.bf16.msra.mxu0 0
      %566 = vmatprep.subr.bf16.mxu0 0
      %567 = vmatpush1.bf16.msra.mxu0 0
      %568 = vmatprep.subr.bf16.mxu0 0
      %569 = vmatpush1.bf16.msra.mxu0 0
      %570 = vmatprep.subr.bf16.mxu0 0
      %571 = vmatpush1.bf16.msra.mxu0 0
      %572 = vmatprep.subr.bf16.mxu0 0
      %573 = vmatpush1.bf16.msra.mxu0 0
      %574 = vmatprep.mubr.bf16.mxu0 0
      %575 = vmatmul.mubr.bf16.gmra.mrb[0].mxu0 %v531
      %v576 = vpop.f32.mrb[0].mxu0
      %v577 = vadd.f32 %v515, %v576
      %v578 = vpop.f32.mrb[0].mxu0
      %v579 = vpop.f32.mrb[0].mxu0
      %v580 = vadd.f32 %v515, %v579
      %v581 = vpop.f32.mrb[0].mxu0
      %582 = vmatprep.mubr.bf16.mxu0 0
      %583 = vmatmul.mubr.bf16.gmra.mrb[0].mxu0 %v534
      %v584 = vpop.f32.mrb[0].mxu0
      %v585 = vadd.f32 %v515, %v584
      %v586 = vpop.f32.mrb[0].mxu0
      %v587 = vpop.f32.mrb[0].mxu0
      %v588 = vadd.f32 %v515, %v587
      %v589 = vpop.f32.mrb[0].mxu0
      %590 = vmatprep.mubr.bf16.mxu0 0
      %591 = vmatmul.mubr.bf16.gmra.mrb[0].mxu0 %v537
      %v592 = vpop.f32.mrb[0].mxu0
      %v593 = vadd.f32 %v515, %v592
      %v594 = vpop.f32.mrb[0].mxu0
      %v595 = vpop.f32.mrb[0].mxu0
      %v596 = vadd.f32 %v515, %v595
      %v597 = vpop.f32.mrb[0].mxu0
      %598 = vmatprep.mubr.bf16.mxu0 0
      %599 = vmatmul.mubr.bf16.gmra.mrb[0].mxu0 %v540
      %v600 = vpop.f32.mrb[0].mxu0
      %v601 = vadd.f32 %v515, %v600
      %v602 = vpop.f32.mrb[0].mxu0
      %v603 = vpop.f32.mrb[0].mxu0
      %v604 = vadd.f32 %v515, %v603
      %v605 = vpop.f32.mrb[0].mxu0
      %606 = vdwg.mxu0
      %vm607 = vcmask 130048
      %v608 = vsel %vm607, %v577, 0.0
      %v609 = vsel %vm607, %v580, 0.0
      %v610 = vadd.f32 %v608, %v609
      %v611 = vsel %vm607, %v585, 0.0
      %v612 = vadd.f32 %v610, %v611
      %v613 = vsel %vm607, %v588, 0.0
      %v614 = vadd.f32 %v612, %v613
      %v615 = vsel %vm607, %v593, 0.0
      %v616 = vadd.f32 %v614, %v615
      %v617 = vsel %vm607, %v596, 0.0
      %v618 = vadd.f32 %v616, %v617
      %v619 = vsel %vm607, %v601, 0.0
      %v620 = vadd.f32 %v618, %v619
      %v621 = vsel %vm607, %v604, 0.0
      %v622 = vadd.f32 %v620, %v621
      %v623 = vrot.slane %v622, 4
      %v624 = vadd.f32 %v622, %v623
      %v625 = vrot.slane %v624, 2
      %v626 = vadd.f32 %v624, %v625
      %v627 = vrot.slane %v626, 1
      %v628 = vadd.f32 %v626, %v627
      %v629 = vrcp.pop 64.0
      %v630 = vmul.f32 %v628, %v629
      %v631 = vsub.f32 %v577, %v630
      %v632 = vsub.f32 %v580, %v630
      %v633 = vsub.f32 %v585, %v630
      %v634 = vsub.f32 %v588, %v630
      %v635 = vsub.f32 %v593, %v630
      %v636 = vsub.f32 %v596, %v630
      %v637 = vsub.f32 %v601, %v630
      %v638 = vsub.f32 %v604, %v630
      %v639 = vmul.f32 %v631, %v631
      %v640 = vmul.f32 %v632, %v632
      %v641 = vmul.f32 %v633, %v633
      %v642 = vmul.f32 %v634, %v634
      %v643 = vmul.f32 %v635, %v635
      %v644 = vmul.f32 %v636, %v636
      %v645 = vmul.f32 %v637, %v637
      %v646 = vmul.f32 %v638, %v638
      %v647 = vsel %vm607, %v639, 0.0
      %v648 = vsel %vm607, %v640, 0.0
      %v649 = vadd.f32 %v647, %v648
      %v650 = vsel %vm607, %v641, 0.0
      %v651 = vadd.f32 %v649, %v650
      %v652 = vsel %vm607, %v642, 0.0
      %v653 = vadd.f32 %v651, %v652
      %v654 = vsel %vm607, %v643, 0.0
      %v655 = vadd.f32 %v653, %v654
      %v656 = vsel %vm607, %v644, 0.0
      %v657 = vadd.f32 %v655, %v656
      %v658 = vsel %vm607, %v645, 0.0
      %v659 = vadd.f32 %v657, %v658
      %v660 = vsel %vm607, %v646, 0.0
      %v661 = vadd.f32 %v659, %v660
      %v662 = vrot.slane %v661, 4
      %v663 = vadd.f32 %v661, %v662
      %v664 = vrot.slane %v663, 2
      %v665 = vadd.f32 %v663, %v664
      %v666 = vrot.slane %v665, 1
      %v667 = vadd.f32 %v665, %v666
      %v668 = vmul.f32 %v667, %v629
      %v669 = vadd.f32 %v668, 1e-05
      %v670 = vrsqrt.pop %v669
      %v671 = vmul.f32 %v631, %v670
      %v672 = vmul.f32 %v632, %v670
      %v673 = vmul.f32 %v633, %v670
      %v674 = vmul.f32 %v634, %v670
      %v675 = vmul.f32 %v635, %v670
      %v676 = vmul.f32 %v636, %v670
      %v677 = vmul.f32 %v637, %v670
      %v678 = vmul.f32 %v638, %v670
      %v679 = vmax.f32 %v671, 0.0
      %v680 = vmax.f32 %v672, 0.0
      %v681 = vmax.f32 %v673, 0.0
      %v682 = vmax.f32 %v674, 0.0
      %v683 = vmax.f32 %v675, 0.0
      %v684 = vmax.f32 %v676, 0.0
      %v685 = vmax.f32 %v677, 0.0
      %v686 = vmax.f32 %v678, 0.0
      %687 = vst.msk [vmem:[#allocation2] sm:$0xff] %vm607, 0.0
      %vm688 = vcmask 123904
      %689 = vst.msk [vmem:[#allocation2 + $0x8] sm:$0x3] %vm688, 0.0
      %690 = vst.msk [vmem:[#allocation2 + $0x10] sm:$0xff] %vm607, 0.0
      %691 = vst.msk [vmem:[#allocation2 + $0x18] sm:$0x3] %vm688, 0.0
      %692 = vst.msk [vmem:[#allocation2 + $0x20] sm:$0xff] %vm607, 0.0
      %693 = vst.msk [vmem:[#allocation2 + $0x28] sm:$0x3] %vm688, 0.0
      %694 = vst.msk [vmem:[#allocation2 + $0x30] sm:$0xff] %vm607, 0.0
      %695 = vst.msk [vmem:[#allocation2 + $0x38] sm:$0x3] %vm688, 0.0
      %696 = vst.msk [vmem:[#allocation2 + $0x40] sm:$0xff] %vm607, 0.0
      %697 = vst.msk [vmem:[#allocation2 + $0x48] sm:$0x3] %vm688, 0.0
      %698 = vst.msk [vmem:[#allocation2 + $0x50] sm:$0xff] %vm607, 0.0
      %699 = vst.msk [vmem:[#allocation2 + $0x58] sm:$0x3] %vm688, 0.0
      %700 = vst.msk [vmem:[#allocation2 + $0x60] sm:$0xff] %vm607, 0.0
      %701 = vst.msk [vmem:[#allocation2 + $0x68] sm:$0x3] %vm688, 0.0
      %702 = vst.msk [vmem:[#allocation2 + $0x70] sm:$0xff] %vm607, 0.0
      %703 = vst.msk [vmem:[#allocation2 + $0x78] sm:$0x3] %vm688, 0.0
      %704 = vst.msk [vmem:[#allocation2 + $0x80] sm:$0xff] %vm607, 0.0
      %705 = vst.msk [vmem:[#allocation2 + $0x88] sm:$0x3] %vm688, 0.0
      %706 = vst.msk [vmem:[#allocation2 + $0x90] sm:$0xff] %vm607, 0.0
      %707 = vst.msk [vmem:[#allocation2 + $0x98] sm:$0x3] %vm688, 0.0
      %s708 = scalar_lea.vmem [#allocation2], 16
      %709 = vst.msk [vmem:[%s708 + $0x1] sm:$0xff] %vm607, %v679
      %710 = vst.msk [vmem:[%s708 + $0x11] sm:$0xff] %vm607, %v680
      %711 = vst.msk [vmem:[%s708 + $0x21] sm:$0xff] %vm607, %v681
      %712 = vst.msk [vmem:[%s708 + $0x31] sm:$0xff] %vm607, %v682
      %713 = vst.msk [vmem:[%s708 + $0x41] sm:$0xff] %vm607, %v683
      %714 = vst.msk [vmem:[%s708 + $0x51] sm:$0xff] %vm607, %v684
      %715 = vst.msk [vmem:[%s708 + $0x61] sm:$0xff] %vm607, %v685
      %716 = vst.msk [vmem:[%s708 + $0x71] sm:$0xff] %vm607, %v686
      %v717 = vld [vmem:[%s4] sm:$0x1]
      %v719 = vlaneseq
      %v720 = vshrl.u32 %v719, 7
      %v721 = vsub.s32 0, %v720
      %v722 = vrot.slane %v717, %v721
      %v724 = vadd.f32 %v722, 0.0
      %v725 = vld [vmem:[#allocation2] sm:$0xff]
      %v726 = vld [vmem:[#allocation2 + $0x10] sm:$0xff]
      %v727 = vld [vmem:[#allocation2 + $0x20] sm:$0xff]
      %v728 = vld [vmem:[#allocation2 + $0x30] sm:$0xff]
      %v729 = vld [vmem:[#allocation2 + $0x40] sm:$0xff]
      %v730 = vld [vmem:[#allocation2 + $0x50] sm:$0xff]
      %v731 = vld [vmem:[#allocation2 + $0x60] sm:$0xff]
      %v732 = vld [vmem:[#allocation2 + $0x70] sm:$0xff]
      %v733 = vpack.c.bf16 %v726, %v725
      %v734 = vpack.c.bf16 %v728, %v727
      %v735 = vpack.c.bf16 %v730, %v729
      %v736 = vpack.c.bf16 %v732, %v731
      %v737 = vld [vmem:[%s3] sm:$0xf]
      %v738 = vld [vmem:[%s3 + $0x4] sm:$0xf]
      %v741 = vunpack.c.l.b16 %v737
      %v742 = vunpack.c.l.b16 %v738
      %v743 = vpack.c.b16 %v742, %v741
      %v746 = vsel %vm607, %v733, 0
      %v749 = vsel %vm607, %v734, 0
      %v752 = vsel %vm607, %v735, 0
      %v755 = vsel %vm607, %v736, 0
      %757 = vmatprep.subr.bf16.mxu0 0
      %758 = vmatpush1.bf16.msra.mxu0 %v743
      %759 = vmatprep.subr.bf16.mxu0 0
      %760 = vmatpush1.bf16.msra.mxu0 0
      %761 = vmatprep.subr.bf16.mxu0 0
      %762 = vmatpush1.bf16.msra.mxu0 0
      %763 = vmatprep.subr.bf16.mxu0 0
      %764 = vmatpush1.bf16.msra.mxu0 0
      %765 = vmatprep.subr.bf16.mxu0 0
      %766 = vmatpush1.bf16.msra.mxu0 0
      %767 = vmatprep.subr.bf16.mxu0 0
      %768 = vmatpush1.bf16.msra.mxu0 0
      %769 = vmatprep.subr.bf16.mxu0 0
      %770 = vmatpush1.bf16.msra.mxu0 0
      %771 = vmatprep.subr.bf16.mxu0 0
      %772 = vmatpush1.bf16.msra.mxu0 0
      %773 = vmatprep.subr.bf16.mxu0 0
      %774 = vmatpush1.bf16.msra.mxu0 0
      %775 = vmatprep.subr.bf16.mxu0 0
      %776 = vmatpush1.bf16.msra.mxu0 0
      %777 = vmatprep.subr.bf16.mxu0 0
      %778 = vmatpush1.bf16.msra.mxu0 0
      %779 = vmatprep.subr.bf16.mxu0 0
      %780 = vmatpush1.bf16.msra.mxu0 0
      %781 = vmatprep.subr.bf16.mxu0 0
      %782 = vmatpush1.bf16.msra.mxu0 0
      %783 = vmatprep.subr.bf16.mxu0 0
      %784 = vmatpush1.bf16.msra.mxu0 0
      %785 = vmatprep.subr.bf16.mxu0 0
      %786 = vmatpush1.bf16.msra.mxu0 0
      %787 = vmatprep.subr.bf16.mxu0 0
      %788 = vmatpush1.bf16.msra.mxu0 0
      %789 = vmatprep.mubr.bf16.mxu0 0
      %790 = vmatmul.mubr.bf16.gmra.mrb[0].mxu0 %v746
      %v791 = vpop.f32.mrb[0].mxu0
      %v792 = vadd.f32 0.0, %v791
      %v793 = vpop.f32.mrb[0].mxu0
      %v794 = vpop.f32.mrb[0].mxu0
      %v795 = vadd.f32 0.0, %v794
      %v796 = vpop.f32.mrb[0].mxu0
      %797 = vmatprep.mubr.bf16.mxu0 0
      %798 = vmatmul.mubr.bf16.gmra.mrb[0].mxu0 %v749
      %v799 = vpop.f32.mrb[0].mxu0
      %v800 = vadd.f32 0.0, %v799
      %v801 = vpop.f32.mrb[0].mxu0
      %v802 = vpop.f32.mrb[0].mxu0
      %v803 = vadd.f32 0.0, %v802
      %v804 = vpop.f32.mrb[0].mxu0
      %805 = vmatprep.mubr.bf16.mxu0 0
      %806 = vmatmul.mubr.bf16.gmra.mrb[0].mxu0 %v752
      %v807 = vpop.f32.mrb[0].mxu0
      %v808 = vadd.f32 0.0, %v807
      %v809 = vpop.f32.mrb[0].mxu0
      %v810 = vpop.f32.mrb[0].mxu0
      %v811 = vadd.f32 0.0, %v810
      %v812 = vpop.f32.mrb[0].mxu0
      %813 = vmatprep.mubr.bf16.mxu0 0
      %814 = vmatmul.mubr.bf16.gmra.mrb[0].mxu0 %v755
      %v815 = vpop.f32.mrb[0].mxu0
      %v816 = vadd.f32 0.0, %v815
      %v817 = vpop.f32.mrb[0].mxu0
      %v818 = vpop.f32.mrb[0].mxu0
      %v819 = vadd.f32 0.0, %v818
      %v820 = vpop.f32.mrb[0].mxu0
      %821 = vdwg.mxu0
      %v822 = vadd.f32 %v724, %v792
      %v823 = vadd.f32 %v724, %v795
      %v824 = vadd.f32 %v724, %v800
      %v825 = vadd.f32 %v724, %v803
      %v826 = vadd.f32 %v724, %v808
      %v827 = vadd.f32 %v724, %v811
      %v828 = vadd.f32 %v724, %v816
      %v829 = vadd.f32 %v724, %v819
      %v830 = vld [vmem:[#allocation2 + $0x1] sm:$0xff]
      %v831 = vld [vmem:[#allocation2 + $0x11] sm:$0xff]
      %v832 = vld [vmem:[#allocation2 + $0x21] sm:$0xff]
      %v833 = vld [vmem:[#allocation2 + $0x31] sm:$0xff]
      %v834 = vld [vmem:[#allocation2 + $0x41] sm:$0xff]
      %v835 = vld [vmem:[#allocation2 + $0x51] sm:$0xff]
      %v836 = vld [vmem:[#allocation2 + $0x61] sm:$0xff]
      %v837 = vld [vmem:[#allocation2 + $0x71] sm:$0xff]
      %v838 = vpack.c.bf16 %v831, %v830
      %v839 = vpack.c.bf16 %v833, %v832
      %v840 = vpack.c.bf16 %v835, %v834
      %v841 = vpack.c.bf16 %v837, %v836
      %s842 = scalar_lea.vmem %s3, 8
      %v843 = vld [vmem:[%s842] sm:$0xf]
      %v844 = vld [vmem:[%s842 + $0x4] sm:$0xf]
      %v847 = vunpack.c.l.b16 %v843
      %v848 = vunpack.c.l.b16 %v844
      %v849 = vpack.c.b16 %v848, %v847
      %v852 = vsel %vm607, %v838, 0
      %v855 = vsel %vm607, %v839, 0
      %v858 = vsel %vm607, %v840, 0
      %v861 = vsel %vm607, %v841, 0
      %863 = vmatprep.subr.bf16.mxu0 0
      %864 = vmatpush1.bf16.msra.mxu0 %v849
      %865 = vmatprep.subr.bf16.mxu0 0
      %866 = vmatpush1.bf16.msra.mxu0 0
      %867 = vmatprep.subr.bf16.mxu0 0
      %868 = vmatpush1.bf16.msra.mxu0 0
      %869 = vmatprep.subr.bf16.mxu0 0
      %870 = vmatpush1.bf16.msra.mxu0 0
      %871 = vmatprep.subr.bf16.mxu0 0
      %872 = vmatpush1.bf16.msra.mxu0 0
      %873 = vmatprep.subr.bf16.mxu0 0
      %874 = vmatpush1.bf16.msra.mxu0 0
      %875 = vmatprep.subr.bf16.mxu0 0
      %876 = vmatpush1.bf16.msra.mxu0 0
      %877 = vmatprep.subr.bf16.mxu0 0
      %878 = vmatpush1.bf16.msra.mxu0 0
      %879 = vmatprep.subr.bf16.mxu0 0
      %880 = vmatpush1.bf16.msra.mxu0 0
      %881 = vmatprep.subr.bf16.mxu0 0
      %882 = vmatpush1.bf16.msra.mxu0 0
      %883 = vmatprep.subr.bf16.mxu0 0
      %884 = vmatpush1.bf16.msra.mxu0 0
      %885 = vmatprep.subr.bf16.mxu0 0
      %886 = vmatpush1.bf16.msra.mxu0 0
      %887 = vmatprep.subr.bf16.mxu0 0
      %888 = vmatpush1.bf16.msra.mxu0 0
      %889 = vmatprep.subr.bf16.mxu0 0
      %890 = vmatpush1.bf16.msra.mxu0 0
      %891 = vmatprep.subr.bf16.mxu0 0
      %892 = vmatpush1.bf16.msra.mxu0 0
      %893 = vmatprep.subr.bf16.mxu0 0
      %894 = vmatpush1.bf16.msra.mxu0 0
      %895 = vmatprep.mubr.bf16.mxu0 0
      %896 = vmatmul.mubr.bf16.gmra.mrb[0].mxu0 %v852
      %v897 = vpop.f32.mrb[0].mxu0
      %v898 = vadd.f32 0.0, %v897
      %v899 = vpop.f32.mrb[0].mxu0
      %v900 = vpop.f32.mrb[0].mxu0
      %v901 = vadd.f32 0.0, %v900
      %v902 = vpop.f32.mrb[0].mxu0
      %903 = vmatprep.mubr.bf16.mxu0 0
      %904 = vmatmul.mubr.bf16.gmra.mrb[0].mxu0 %v855
      %v905 = vpop.f32.mrb[0].mxu0
      %v906 = vadd.f32 0.0, %v905
      %v907 = vpop.f32.mrb[0].mxu0
      %v908 = vpop.f32.mrb[0].mxu0
      %v909 = vadd.f32 0.0, %v908
      %v910 = vpop.f32.mrb[0].mxu0
      %911 = vmatprep.mubr.bf16.mxu0 0
      %912 = vmatmul.mubr.bf16.gmra.mrb[0].mxu0 %v858
      %v913 = vpop.f32.mrb[0].mxu0
      %v914 = vadd.f32 0.0, %v913
      %v915 = vpop.f32.mrb[0].mxu0
      %v916 = vpop.f32.mrb[0].mxu0
      %v917 = vadd.f32 0.0, %v916
      %v918 = vpop.f32.mrb[0].mxu0
      %919 = vmatprep.mubr.bf16.mxu0 0
      %920 = vmatmul.mubr.bf16.gmra.mrb[0].mxu0 %v861
      %v921 = vpop.f32.mrb[0].mxu0
      %v922 = vadd.f32 0.0, %v921
      %v923 = vpop.f32.mrb[0].mxu0
      %v924 = vpop.f32.mrb[0].mxu0
      %v925 = vadd.f32 0.0, %v924
      %v926 = vpop.f32.mrb[0].mxu0
      %927 = vdwg.mxu0
      %v928 = vadd.f32 %v822, %v898
      %v929 = vadd.f32 %v823, %v901
      %v930 = vadd.f32 %v824, %v906
      %v931 = vadd.f32 %v825, %v909
      %v932 = vadd.f32 %v826, %v914
      %v933 = vadd.f32 %v827, %v917
      %v934 = vadd.f32 %v828, %v922
      %v935 = vadd.f32 %v829, %v925
      %v936 = vld [vmem:[#allocation2 + $0x2] sm:$0xff]
      %v937 = vld [vmem:[#allocation2 + $0x12] sm:$0xff]
      %v938 = vld [vmem:[#allocation2 + $0x22] sm:$0xff]
      %v939 = vld [vmem:[#allocation2 + $0x32] sm:$0xff]
      %v940 = vld [vmem:[#allocation2 + $0x42] sm:$0xff]
      %v941 = vld [vmem:[#allocation2 + $0x52] sm:$0xff]
      %v942 = vld [vmem:[#allocation2 + $0x62] sm:$0xff]
      %v943 = vld [vmem:[#allocation2 + $0x72] sm:$0xff]
      %v944 = vpack.c.bf16 %v937, %v936
      %v945 = vpack.c.bf16 %v939, %v938
      %v946 = vpack.c.bf16 %v941, %v940
      %v947 = vpack.c.bf16 %v943, %v942
      %s948 = scalar_lea.vmem %s3, 16
      %v949 = vld [vmem:[%s948] sm:$0xf]
      %v950 = vld [vmem:[%s948 + $0x4] sm:$0xf]
      %v953 = vunpack.c.l.b16 %v949
      %v954 = vunpack.c.l.b16 %v950
      %v955 = vpack.c.b16 %v954, %v953
      %v958 = vsel %vm607, %v944, 0
      %v961 = vsel %vm607, %v945, 0
      %v964 = vsel %vm607, %v946, 0
      %v967 = vsel %vm607, %v947, 0
      %969 = vmatprep.subr.bf16.mxu0 0
      %970 = vmatpush1.bf16.msra.mxu0 %v955
      %971 = vmatprep.subr.bf16.mxu0 0
      %972 = vmatpush1.bf16.msra.mxu0 0
      %973 = vmatprep.subr.bf16.mxu0 0
      %974 = vmatpush1.bf16.msra.mxu0 0
      %975 = vmatprep.subr.bf16.mxu0 0
      %976 = vmatpush1.bf16.msra.mxu0 0
      %977 = vmatprep.subr.bf16.mxu0 0
      %978 = vmatpush1.bf16.msra.mxu0 0
      %979 = vmatprep.subr.bf16.mxu0 0
      %980 = vmatpush1.bf16.msra.mxu0 0
      %981 = vmatprep.subr.bf16.mxu0 0
      %982 = vmatpush1.bf16.msra.mxu0 0
      %983 = vmatprep.subr.bf16.mxu0 0
      %984 = vmatpush1.bf16.msra.mxu0 0
      %985 = vmatprep.subr.bf16.mxu0 0
      %986 = vmatpush1.bf16.msra.mxu0 0
      %987 = vmatprep.subr.bf16.mxu0 0
      %988 = vmatpush1.bf16.msra.mxu0 0
      %989 = vmatprep.subr.bf16.mxu0 0
      %990 = vmatpush1.bf16.msra.mxu0 0
      %991 = vmatprep.subr.bf16.mxu0 0
      %992 = vmatpush1.bf16.msra.mxu0 0
      %993 = vmatprep.subr.bf16.mxu0 0
      %994 = vmatpush1.bf16.msra.mxu0 0
      %995 = vmatprep.subr.bf16.mxu0 0
      %996 = vmatpush1.bf16.msra.mxu0 0
      %997 = vmatprep.subr.bf16.mxu0 0
      %998 = vmatpush1.bf16.msra.mxu0 0
      %999 = vmatprep.subr.bf16.mxu0 0
      %1000 = vmatpush1.bf16.msra.mxu0 0
      %1001 = vmatprep.mubr.bf16.mxu0 0
      %1002 = vmatmul.mubr.bf16.gmra.mrb[0].mxu0 %v958
      %v1003 = vpop.f32.mrb[0].mxu0
      %v1004 = vadd.f32 0.0, %v1003
      %v1005 = vpop.f32.mrb[0].mxu0
      %v1006 = vpop.f32.mrb[0].mxu0
      %v1007 = vadd.f32 0.0, %v1006
      %v1008 = vpop.f32.mrb[0].mxu0
      %1009 = vmatprep.mubr.bf16.mxu0 0
      %1010 = vmatmul.mubr.bf16.gmra.mrb[0].mxu0 %v961
      %v1011 = vpop.f32.mrb[0].mxu0
      %v1012 = vadd.f32 0.0, %v1011
      %v1013 = vpop.f32.mrb[0].mxu0
      %v1014 = vpop.f32.mrb[0].mxu0
      %v1015 = vadd.f32 0.0, %v1014
      %v1016 = vpop.f32.mrb[0].mxu0
      %1017 = vmatprep.mubr.bf16.mxu0 0
      %1018 = vmatmul.mubr.bf16.gmra.mrb[0].mxu0 %v964
      %v1019 = vpop.f32.mrb[0].mxu0
      %v1020 = vadd.f32 0.0, %v1019
      %v1021 = vpop.f32.mrb[0].mxu0
      %v1022 = vpop.f32.mrb[0].mxu0
      %v1023 = vadd.f32 0.0, %v1022
      %v1024 = vpop.f32.mrb[0].mxu0
      %1025 = vmatprep.mubr.bf16.mxu0 0
      %1026 = vmatmul.mubr.bf16.gmra.mrb[0].mxu0 %v967
      %v1027 = vpop.f32.mrb[0].mxu0
      %v1028 = vadd.f32 0.0, %v1027
      %v1029 = vpop.f32.mrb[0].mxu0
      %v1030 = vpop.f32.mrb[0].mxu0
      %v1031 = vadd.f32 0.0, %v1030
      %v1032 = vpop.f32.mrb[0].mxu0
      %1033 = vdwg.mxu0
      %v1034 = vadd.f32 %v928, %v1004
      %v1035 = vadd.f32 %v929, %v1007
      %v1036 = vadd.f32 %v930, %v1012
      %v1037 = vadd.f32 %v931, %v1015
      %v1038 = vadd.f32 %v932, %v1020
      %v1039 = vadd.f32 %v933, %v1023
      %v1040 = vadd.f32 %v934, %v1028
      %v1041 = vadd.f32 %v935, %v1031
      %v1042 = vld [vmem:[%s708] sm:$0xff]
      %v1043 = vld [vmem:[%s708 + $0x10] sm:$0xff]
      %v1044 = vld [vmem:[%s708 + $0x20] sm:$0xff]
      %v1045 = vld [vmem:[%s708 + $0x30] sm:$0xff]
      %v1046 = vld [vmem:[%s708 + $0x40] sm:$0xff]
      %v1047 = vld [vmem:[%s708 + $0x50] sm:$0xff]
      %v1048 = vld [vmem:[%s708 + $0x60] sm:$0xff]
      %v1049 = vld [vmem:[%s708 + $0x70] sm:$0xff]
      %v1050 = vpack.c.bf16 %v1043, %v1042
      %v1051 = vpack.c.bf16 %v1045, %v1044
      %v1052 = vpack.c.bf16 %v1047, %v1046
      %v1053 = vpack.c.bf16 %v1049, %v1048
      %s1054 = scalar_lea.vmem %s3, 24
      %v1055 = vld [vmem:[%s1054] sm:$0xf]
      %v1056 = vld [vmem:[%s1054 + $0x4] sm:$0xf]
      %v1059 = vunpack.c.l.b16 %v1055
      %v1060 = vunpack.c.l.b16 %v1056
      %v1061 = vpack.c.b16 %v1060, %v1059
      %v1064 = vsel %vm607, %v1050, 0
      %v1067 = vsel %vm607, %v1051, 0
      %v1070 = vsel %vm607, %v1052, 0
      %v1073 = vsel %vm607, %v1053, 0
      %1075 = vmatprep.subr.bf16.mxu0 0
      %1076 = vmatpush1.bf16.msra.mxu0 %v1061
      %1077 = vmatprep.subr.bf16.mxu0 0
      %1078 = vmatpush1.bf16.msra.mxu0 0
      %1079 = vmatprep.subr.bf16.mxu0 0
      %1080 = vmatpush1.bf16.msra.mxu0 0
      %1081 = vmatprep.subr.bf16.mxu0 0
      %1082 = vmatpush1.bf16.msra.mxu0 0
      %1083 = vmatprep.subr.bf16.mxu0 0
      %1084 = vmatpush1.bf16.msra.mxu0 0
      %1085 = vmatprep.subr.bf16.mxu0 0
      %1086 = vmatpush1.bf16.msra.mxu0 0
      %1087 = vmatprep.subr.bf16.mxu0 0
      %1088 = vmatpush1.bf16.msra.mxu0 0
      %1089 = vmatprep.subr.bf16.mxu0 0
      %1090 = vmatpush1.bf16.msra.mxu0 0
      %1091 = vmatprep.subr.bf16.mxu0 0
      %1092 = vmatpush1.bf16.msra.mxu0 0
      %1093 = vmatprep.subr.bf16.mxu0 0
      %1094 = vmatpush1.bf16.msra.mxu0 0
      %1095 = vmatprep.subr.bf16.mxu0 0
      %1096 = vmatpush1.bf16.msra.mxu0 0
      %1097 = vmatprep.subr.bf16.mxu0 0
      %1098 = vmatpush1.bf16.msra.mxu0 0
      %1099 = vmatprep.subr.bf16.mxu0 0
      %1100 = vmatpush1.bf16.msra.mxu0 0
      %1101 = vmatprep.subr.bf16.mxu0 0
      %1102 = vmatpush1.bf16.msra.mxu0 0
      %1103 = vmatprep.subr.bf16.mxu0 0
      %1104 = vmatpush1.bf16.msra.mxu0 0
      %1105 = vmatprep.subr.bf16.mxu0 0
      %1106 = vmatpush1.bf16.msra.mxu0 0
      %1107 = vmatprep.mubr.bf16.mxu0 0
      %1108 = vmatmul.mubr.bf16.gmra.mrb[0].mxu0 %v1064
      %v1109 = vpop.f32.mrb[0].mxu0
      %v1110 = vadd.f32 0.0, %v1109
      %v1111 = vpop.f32.mrb[0].mxu0
      %v1112 = vpop.f32.mrb[0].mxu0
      %v1113 = vadd.f32 0.0, %v1112
      %v1114 = vpop.f32.mrb[0].mxu0
      %1115 = vmatprep.mubr.bf16.mxu0 0
      %1116 = vmatmul.mubr.bf16.gmra.mrb[0].mxu0 %v1067
      %v1117 = vpop.f32.mrb[0].mxu0
      %v1118 = vadd.f32 0.0, %v1117
      %v1119 = vpop.f32.mrb[0].mxu0
      %v1120 = vpop.f32.mrb[0].mxu0
      %v1121 = vadd.f32 0.0, %v1120
      %v1122 = vpop.f32.mrb[0].mxu0
      %1123 = vmatprep.mubr.bf16.mxu0 0
      %1124 = vmatmul.mubr.bf16.gmra.mrb[0].mxu0 %v1070
      %v1125 = vpop.f32.mrb[0].mxu0
      %v1126 = vadd.f32 0.0, %v1125
      %v1127 = vpop.f32.mrb[0].mxu0
      %v1128 = vpop.f32.mrb[0].mxu0
      %v1129 = vadd.f32 0.0, %v1128
      %v1130 = vpop.f32.mrb[0].mxu0
      %1131 = vmatprep.mubr.bf16.mxu0 0
      %1132 = vmatmul.mubr.bf16.gmra.mrb[0].mxu0 %v1073
      %v1133 = vpop.f32.mrb[0].mxu0
      %v1134 = vadd.f32 0.0, %v1133
      %v1135 = vpop.f32.mrb[0].mxu0
      %v1136 = vpop.f32.mrb[0].mxu0
      %v1137 = vadd.f32 0.0, %v1136
      %v1138 = vpop.f32.mrb[0].mxu0
      %1139 = vdwg.mxu0
      %v1140 = vadd.f32 %v1034, %v1110
      %v1141 = vadd.f32 %v1035, %v1113
      %v1142 = vadd.f32 %v1036, %v1118
      %v1143 = vadd.f32 %v1037, %v1121
      %v1144 = vadd.f32 %v1038, %v1126
      %v1145 = vadd.f32 %v1039, %v1129
      %v1146 = vadd.f32 %v1040, %v1134
      %v1147 = vadd.f32 %v1041, %v1137
      %v1148 = vld [vmem:[%s708 + $0x1] sm:$0xff]
      %v1149 = vld [vmem:[%s708 + $0x11] sm:$0xff]
      %v1150 = vld [vmem:[%s708 + $0x21] sm:$0xff]
      %v1151 = vld [vmem:[%s708 + $0x31] sm:$0xff]
      %v1152 = vld [vmem:[%s708 + $0x41] sm:$0xff]
      %v1153 = vld [vmem:[%s708 + $0x51] sm:$0xff]
      %v1154 = vld [vmem:[%s708 + $0x61] sm:$0xff]
      %v1155 = vld [vmem:[%s708 + $0x71] sm:$0xff]
      %v1156 = vpack.c.bf16 %v1149, %v1148
      %v1157 = vpack.c.bf16 %v1151, %v1150
      %v1158 = vpack.c.bf16 %v1153, %v1152
      %v1159 = vpack.c.bf16 %v1155, %v1154
      %s1160 = scalar_lea.vmem %s3, 32
      %v1161 = vld [vmem:[%s1160] sm:$0xf]
      %v1162 = vld [vmem:[%s1160 + $0x4] sm:$0xf]
      %v1165 = vunpack.c.l.b16 %v1161
      %v1166 = vunpack.c.l.b16 %v1162
      %v1167 = vpack.c.b16 %v1166, %v1165
      %v1170 = vsel %vm607, %v1156, 0
      %v1173 = vsel %vm607, %v1157, 0
      %v1176 = vsel %vm607, %v1158, 0
      %v1179 = vsel %vm607, %v1159, 0
      %1181 = vmatprep.subr.bf16.mxu0 0
      %1182 = vmatpush1.bf16.msra.mxu0 %v1167
      %1183 = vmatprep.subr.bf16.mxu0 0
      %1184 = vmatpush1.bf16.msra.mxu0 0
      %1185 = vmatprep.subr.bf16.mxu0 0
      %1186 = vmatpush1.bf16.msra.mxu0 0
      %1187 = vmatprep.subr.bf16.mxu0 0
      %1188 = vmatpush1.bf16.msra.mxu0 0
      %1189 = vmatprep.subr.bf16.mxu0 0
      %1190 = vmatpush1.bf16.msra.mxu0 0
      %1191 = vmatprep.subr.bf16.mxu0 0
      %1192 = vmatpush1.bf16.msra.mxu0 0
      %1193 = vmatprep.subr.bf16.mxu0 0
      %1194 = vmatpush1.bf16.msra.mxu0 0
      %1195 = vmatprep.subr.bf16.mxu0 0
      %1196 = vmatpush1.bf16.msra.mxu0 0
      %1197 = vmatprep.subr.bf16.mxu0 0
      %1198 = vmatpush1.bf16.msra.mxu0 0
      %1199 = vmatprep.subr.bf16.mxu0 0
      %1200 = vmatpush1.bf16.msra.mxu0 0
      %1201 = vmatprep.subr.bf16.mxu0 0
      %1202 = vmatpush1.bf16.msra.mxu0 0
      %1203 = vmatprep.subr.bf16.mxu0 0
      %1204 = vmatpush1.bf16.msra.mxu0 0
      %1205 = vmatprep.subr.bf16.mxu0 0
      %1206 = vmatpush1.bf16.msra.mxu0 0
      %1207 = vmatprep.subr.bf16.mxu0 0
      %1208 = vmatpush1.bf16.msra.mxu0 0
      %1209 = vmatprep.subr.bf16.mxu0 0
      %1210 = vmatpush1.bf16.msra.mxu0 0
      %1211 = vmatprep.subr.bf16.mxu0 0
      %1212 = vmatpush1.bf16.msra.mxu0 0
      %1213 = vmatprep.mubr.bf16.mxu0 0
      %1214 = vmatmul.mubr.bf16.gmra.mrb[0].mxu0 %v1170
      %v1215 = vpop.f32.mrb[0].mxu0
      %v1216 = vadd.f32 0.0, %v1215
      %v1217 = vpop.f32.mrb[0].mxu0
      %v1218 = vpop.f32.mrb[0].mxu0
      %v1219 = vadd.f32 0.0, %v1218
      %v1220 = vpop.f32.mrb[0].mxu0
      %1221 = vmatprep.mubr.bf16.mxu0 0
      %1222 = vmatmul.mubr.bf16.gmra.mrb[0].mxu0 %v1173
      %v1223 = vpop.f32.mrb[0].mxu0
      %v1224 = vadd.f32 0.0, %v1223
      %v1225 = vpop.f32.mrb[0].mxu0
      %v1226 = vpop.f32.mrb[0].mxu0
      %v1227 = vadd.f32 0.0, %v1226
      %v1228 = vpop.f32.mrb[0].mxu0
      %1229 = vmatprep.mubr.bf16.mxu0 0
      %1230 = vmatmul.mubr.bf16.gmra.mrb[0].mxu0 %v1176
      %v1231 = vpop.f32.mrb[0].mxu0
      %v1232 = vadd.f32 0.0, %v1231
      %v1233 = vpop.f32.mrb[0].mxu0
      %v1234 = vpop.f32.mrb[0].mxu0
      %v1235 = vadd.f32 0.0, %v1234
      %v1236 = vpop.f32.mrb[0].mxu0
      %1237 = vmatprep.mubr.bf16.mxu0 0
      %1238 = vmatmul.mubr.bf16.gmra.mrb[0].mxu0 %v1179
      %v1239 = vpop.f32.mrb[0].mxu0
      %v1240 = vadd.f32 0.0, %v1239
      %v1241 = vpop.f32.mrb[0].mxu0
      %v1242 = vpop.f32.mrb[0].mxu0
      %v1243 = vadd.f32 0.0, %v1242
      %v1244 = vpop.f32.mrb[0].mxu0
      %1245 = vdwg.mxu0
      %v1246 = vadd.f32 %v1140, %v1216
      %v1247 = vadd.f32 %v1141, %v1219
      %v1248 = vadd.f32 %v1142, %v1224
      %v1249 = vadd.f32 %v1143, %v1227
      %v1250 = vadd.f32 %v1144, %v1232
      %v1251 = vadd.f32 %v1145, %v1235
      %v1252 = vadd.f32 %v1146, %v1240
      %v1253 = vadd.f32 %v1147, %v1243
      %v1254 = vld [vmem:[%s708 + $0x2] sm:$0xff]
      %v1255 = vld [vmem:[%s708 + $0x12] sm:$0xff]
      %v1256 = vld [vmem:[%s708 + $0x22] sm:$0xff]
      %v1257 = vld [vmem:[%s708 + $0x32] sm:$0xff]
      %v1258 = vld [vmem:[%s708 + $0x42] sm:$0xff]
      %v1259 = vld [vmem:[%s708 + $0x52] sm:$0xff]
      %v1260 = vld [vmem:[%s708 + $0x62] sm:$0xff]
      %v1261 = vld [vmem:[%s708 + $0x72] sm:$0xff]
      %v1262 = vpack.c.bf16 %v1255, %v1254
      %v1263 = vpack.c.bf16 %v1257, %v1256
      %v1264 = vpack.c.bf16 %v1259, %v1258
      %v1265 = vpack.c.bf16 %v1261, %v1260
      %s1266 = scalar_lea.vmem %s3, 40
      %v1267 = vld [vmem:[%s1266] sm:$0xf]
      %v1268 = vld [vmem:[%s1266 + $0x4] sm:$0xf]
      %v1271 = vunpack.c.l.b16 %v1267
      %v1272 = vunpack.c.l.b16 %v1268
      %v1273 = vpack.c.b16 %v1272, %v1271
      %v1276 = vsel %vm607, %v1262, 0
      %v1279 = vsel %vm607, %v1263, 0
      %v1282 = vsel %vm607, %v1264, 0
      %v1285 = vsel %vm607, %v1265, 0
      %1287 = vmatprep.subr.bf16.mxu0 0
      %1288 = vmatpush1.bf16.msra.mxu0 %v1273
      %1289 = vmatprep.subr.bf16.mxu0 0
      %1290 = vmatpush1.bf16.msra.mxu0 0
      %1291 = vmatprep.subr.bf16.mxu0 0
      %1292 = vmatpush1.bf16.msra.mxu0 0
      %1293 = vmatprep.subr.bf16.mxu0 0
      %1294 = vmatpush1.bf16.msra.mxu0 0
      %1295 = vmatprep.subr.bf16.mxu0 0
      %1296 = vmatpush1.bf16.msra.mxu0 0
      %1297 = vmatprep.subr.bf16.mxu0 0
      %1298 = vmatpush1.bf16.msra.mxu0 0
      %1299 = vmatprep.subr.bf16.mxu0 0
      %1300 = vmatpush1.bf16.msra.mxu0 0
      %1301 = vmatprep.subr.bf16.mxu0 0
      %1302 = vmatpush1.bf16.msra.mxu0 0
      %1303 = vmatprep.subr.bf16.mxu0 0
      %1304 = vmatpush1.bf16.msra.mxu0 0
      %1305 = vmatprep.subr.bf16.mxu0 0
      %1306 = vmatpush1.bf16.msra.mxu0 0
      %1307 = vmatprep.subr.bf16.mxu0 0
      %1308 = vmatpush1.bf16.msra.mxu0 0
      %1309 = vmatprep.subr.bf16.mxu0 0
      %1310 = vmatpush1.bf16.msra.mxu0 0
      %1311 = vmatprep.subr.bf16.mxu0 0
      %1312 = vmatpush1.bf16.msra.mxu0 0
      %1313 = vmatprep.subr.bf16.mxu0 0
      %1314 = vmatpush1.bf16.msra.mxu0 0
      %1315 = vmatprep.subr.bf16.mxu0 0
      %1316 = vmatpush1.bf16.msra.mxu0 0
      %1317 = vmatprep.subr.bf16.mxu0 0
      %1318 = vmatpush1.bf16.msra.mxu0 0
      %1319 = vmatprep.mubr.bf16.mxu0 0
      %1320 = vmatmul.mubr.bf16.gmra.mrb[0].mxu0 %v1276
      %v1321 = vpop.f32.mrb[0].mxu0
      %v1322 = vadd.f32 0.0, %v1321
      %v1323 = vpop.f32.mrb[0].mxu0
      %v1324 = vpop.f32.mrb[0].mxu0
      %v1325 = vadd.f32 0.0, %v1324
      %v1326 = vpop.f32.mrb[0].mxu0
      %1327 = vmatprep.mubr.bf16.mxu0 0
      %1328 = vmatmul.mubr.bf16.gmra.mrb[0].mxu0 %v1279
      %v1329 = vpop.f32.mrb[0].mxu0
      %v1330 = vadd.f32 0.0, %v1329
      %v1331 = vpop.f32.mrb[0].mxu0
      %v1332 = vpop.f32.mrb[0].mxu0
      %v1333 = vadd.f32 0.0, %v1332
      %v1334 = vpop.f32.mrb[0].mxu0
      %1335 = vmatprep.mubr.bf16.mxu0 0
      %1336 = vmatmul.mubr.bf16.gmra.mrb[0].mxu0 %v1282
      %v1337 = vpop.f32.mrb[0].mxu0
      %v1338 = vadd.f32 0.0, %v1337
      %v1339 = vpop.f32.mrb[0].mxu0
      %v1340 = vpop.f32.mrb[0].mxu0
      %v1341 = vadd.f32 0.0, %v1340
      %v1342 = vpop.f32.mrb[0].mxu0
      %1343 = vmatprep.mubr.bf16.mxu0 0
      %1344 = vmatmul.mubr.bf16.gmra.mrb[0].mxu0 %v1285
      %v1345 = vpop.f32.mrb[0].mxu0
      %v1346 = vadd.f32 0.0, %v1345
      %v1347 = vpop.f32.mrb[0].mxu0
      %v1348 = vpop.f32.mrb[0].mxu0
      %v1349 = vadd.f32 0.0, %v1348
      %v1350 = vpop.f32.mrb[0].mxu0
      %1351 = vdwg.mxu0
      %v1352 = vadd.f32 %v1246, %v1322
      %v1353 = vadd.f32 %v1247, %v1325
      %v1354 = vadd.f32 %v1248, %v1330
      %v1355 = vadd.f32 %v1249, %v1333
      %v1356 = vadd.f32 %v1250, %v1338
      %v1357 = vadd.f32 %v1251, %v1341
      %v1358 = vadd.f32 %v1252, %v1346
      %v1359 = vadd.f32 %v1253, %v1349
      %s1360 = scalar_lea.vmem [#allocation2], 32
      %v1361 = vld [vmem:[%s1360] sm:$0xff]
      %v1362 = vld [vmem:[%s1360 + $0x10] sm:$0xff]
      %v1363 = vld [vmem:[%s1360 + $0x20] sm:$0xff]
      %v1364 = vld [vmem:[%s1360 + $0x30] sm:$0xff]
      %v1365 = vld [vmem:[%s1360 + $0x40] sm:$0xff]
      %v1366 = vld [vmem:[%s1360 + $0x50] sm:$0xff]
      %v1367 = vld [vmem:[%s1360 + $0x60] sm:$0xff]
      %v1368 = vld [vmem:[%s1360 + $0x70] sm:$0xff]
      %v1369 = vpack.c.bf16 %v1362, %v1361
      %v1370 = vpack.c.bf16 %v1364, %v1363
      %v1371 = vpack.c.bf16 %v1366, %v1365
      %v1372 = vpack.c.bf16 %v1368, %v1367
      %s1373 = scalar_lea.vmem %s3, 48
      %v1374 = vld [vmem:[%s1373] sm:$0xf]
      %v1375 = vld [vmem:[%s1373 + $0x4] sm:$0xf]
      %v1378 = vunpack.c.l.b16 %v1374
      %v1379 = vunpack.c.l.b16 %v1375
      %v1380 = vpack.c.b16 %v1379, %v1378
      %v1383 = vsel %vm607, %v1369, 0
      %v1386 = vsel %vm607, %v1370, 0
      %v1389 = vsel %vm607, %v1371, 0
      %v1392 = vsel %vm607, %v1372, 0
      %1394 = vmatprep.subr.bf16.mxu0 0
      %1395 = vmatpush1.bf16.msra.mxu0 %v1380
      %1396 = vmatprep.subr.bf16.mxu0 0
      %1397 = vmatpush1.bf16.msra.mxu0 0
      %1398 = vmatprep.subr.bf16.mxu0 0
      %1399 = vmatpush1.bf16.msra.mxu0 0
      %1400 = vmatprep.subr.bf16.mxu0 0
      %1401 = vmatpush1.bf16.msra.mxu0 0
      %1402 = vmatprep.subr.bf16.mxu0 0
      %1403 = vmatpush1.bf16.msra.mxu0 0
      %1404 = vmatprep.subr.bf16.mxu0 0
      %1405 = vmatpush1.bf16.msra.mxu0 0
      %1406 = vmatprep.subr.bf16.mxu0 0
      %1407 = vmatpush1.bf16.msra.mxu0 0
      %1408 = vmatprep.subr.bf16.mxu0 0
      %1409 = vmatpush1.bf16.msra.mxu0 0
      %1410 = vmatprep.subr.bf16.mxu0 0
      %1411 = vmatpush1.bf16.msra.mxu0 0
      %1412 = vmatprep.subr.bf16.mxu0 0
      %1413 = vmatpush1.bf16.msra.mxu0 0
      %1414 = vmatprep.subr.bf16.mxu0 0
      %1415 = vmatpush1.bf16.msra.mxu0 0
      %1416 = vmatprep.subr.bf16.mxu0 0
      %1417 = vmatpush1.bf16.msra.mxu0 0
      %1418 = vmatprep.subr.bf16.mxu0 0
      %1419 = vmatpush1.bf16.msra.mxu0 0
      %1420 = vmatprep.subr.bf16.mxu0 0
      %1421 = vmatpush1.bf16.msra.mxu0 0
      %1422 = vmatprep.subr.bf16.mxu0 0
      %1423 = vmatpush1.bf16.msra.mxu0 0
      %1424 = vmatprep.subr.bf16.mxu0 0
      %1425 = vmatpush1.bf16.msra.mxu0 0
      %1426 = vmatprep.mubr.bf16.mxu0 0
      %1427 = vmatmul.mubr.bf16.gmra.mrb[0].mxu0 %v1383
      %v1428 = vpop.f32.mrb[0].mxu0
      %v1429 = vadd.f32 0.0, %v1428
      %v1430 = vpop.f32.mrb[0].mxu0
      %v1431 = vpop.f32.mrb[0].mxu0
      %v1432 = vadd.f32 0.0, %v1431
      %v1433 = vpop.f32.mrb[0].mxu0
      %1434 = vmatprep.mubr.bf16.mxu0 0
      %1435 = vmatmul.mubr.bf16.gmra.mrb[0].mxu0 %v1386
      %v1436 = vpop.f32.mrb[0].mxu0
      %v1437 = vadd.f32 0.0, %v1436
      %v1438 = vpop.f32.mrb[0].mxu0
      %v1439 = vpop.f32.mrb[0].mxu0
      %v1440 = vadd.f32 0.0, %v1439
      %v1441 = vpop.f32.mrb[0].mxu0
      %1442 = vmatprep.mubr.bf16.mxu0 0
      %1443 = vmatmul.mubr.bf16.gmra.mrb[0].mxu0 %v1389
      %v1444 = vpop.f32.mrb[0].mxu0
      %v1445 = vadd.f32 0.0, %v1444
      %v1446 = vpop.f32.mrb[0].mxu0
      %v1447 = vpop.f32.mrb[0].mxu0
      %v1448 = vadd.f32 0.0, %v1447
      %v1449 = vpop.f32.mrb[0].mxu0
      %1450 = vmatprep.mubr.bf16.mxu0 0
      %1451 = vmatmul.mubr.bf16.gmra.mrb[0].mxu0 %v1392
      %v1452 = vpop.f32.mrb[0].mxu0
      %v1453 = vadd.f32 0.0, %v1452
      %v1454 = vpop.f32.mrb[0].mxu0
      %v1455 = vpop.f32.mrb[0].mxu0
      %v1456 = vadd.f32 0.0, %v1455
      %v1457 = vpop.f32.mrb[0].mxu0
      %1458 = vdwg.mxu0
      %v1459 = vadd.f32 %v1352, %v1429
      %v1460 = vadd.f32 %v1353, %v1432
      %v1461 = vadd.f32 %v1354, %v1437
      %v1462 = vadd.f32 %v1355, %v1440
      %v1463 = vadd.f32 %v1356, %v1445
      %v1464 = vadd.f32 %v1357, %v1448
      %v1465 = vadd.f32 %v1358, %v1453
      %v1466 = vadd.f32 %v1359, %v1456
      %v1467 = vld [vmem:[%s1360 + $0x1] sm:$0xff]
      %v1468 = vld [vmem:[%s1360 + $0x11] sm:$0xff]
      %v1469 = vld [vmem:[%s1360 + $0x21] sm:$0xff]
      %v1470 = vld [vmem:[%s1360 + $0x31] sm:$0xff]
      %v1471 = vld [vmem:[%s1360 + $0x41] sm:$0xff]
      %v1472 = vld [vmem:[%s1360 + $0x51] sm:$0xff]
      %v1473 = vld [vmem:[%s1360 + $0x61] sm:$0xff]
      %v1474 = vld [vmem:[%s1360 + $0x71] sm:$0xff]
      %v1475 = vpack.c.bf16 %v1468, %v1467
      %v1476 = vpack.c.bf16 %v1470, %v1469
      %v1477 = vpack.c.bf16 %v1472, %v1471
      %v1478 = vpack.c.bf16 %v1474, %v1473
      %s1479 = scalar_lea.vmem %s3, 56
      %v1480 = vld [vmem:[%s1479] sm:$0xf]
      %v1481 = vld [vmem:[%s1479 + $0x4] sm:$0xf]
      %v1484 = vunpack.c.l.b16 %v1480
      %v1485 = vunpack.c.l.b16 %v1481
      %v1486 = vpack.c.b16 %v1485, %v1484
      %v1489 = vsel %vm607, %v1475, 0
      %v1492 = vsel %vm607, %v1476, 0
      %v1495 = vsel %vm607, %v1477, 0
      %v1498 = vsel %vm607, %v1478, 0
      %1500 = vmatprep.subr.bf16.mxu0 0
      %1501 = vmatpush1.bf16.msra.mxu0 %v1486
      %1502 = vmatprep.subr.bf16.mxu0 0
      %1503 = vmatpush1.bf16.msra.mxu0 0
      %1504 = vmatprep.subr.bf16.mxu0 0
      %1505 = vmatpush1.bf16.msra.mxu0 0
      %1506 = vmatprep.subr.bf16.mxu0 0
      %1507 = vmatpush1.bf16.msra.mxu0 0
      %1508 = vmatprep.subr.bf16.mxu0 0
      %1509 = vmatpush1.bf16.msra.mxu0 0
      %1510 = vmatprep.subr.bf16.mxu0 0
      %1511 = vmatpush1.bf16.msra.mxu0 0
      %1512 = vmatprep.subr.bf16.mxu0 0
      %1513 = vmatpush1.bf16.msra.mxu0 0
      %1514 = vmatprep.subr.bf16.mxu0 0
      %1515 = vmatpush1.bf16.msra.mxu0 0
      %1516 = vmatprep.subr.bf16.mxu0 0
      %1517 = vmatpush1.bf16.msra.mxu0 0
      %1518 = vmatprep.subr.bf16.mxu0 0
      %1519 = vmatpush1.bf16.msra.mxu0 0
      %1520 = vmatprep.subr.bf16.mxu0 0
      %1521 = vmatpush1.bf16.msra.mxu0 0
      %1522 = vmatprep.subr.bf16.mxu0 0
      %1523 = vmatpush1.bf16.msra.mxu0 0
      %1524 = vmatprep.subr.bf16.mxu0 0
      %1525 = vmatpush1.bf16.msra.mxu0 0
      %1526 = vmatprep.subr.bf16.mxu0 0
      %1527 = vmatpush1.bf16.msra.mxu0 0
      %1528 = vmatprep.subr.bf16.mxu0 0
      %1529 = vmatpush1.bf16.msra.mxu0 0
      %1530 = vmatprep.subr.bf16.mxu0 0
      %1531 = vmatpush1.bf16.msra.mxu0 0
      %1532 = vmatprep.mubr.bf16.mxu0 0
      %1533 = vmatmul.mubr.bf16.gmra.mrb[0].mxu0 %v1489
      %v1534 = vpop.f32.mrb[0].mxu0
      %v1535 = vadd.f32 0.0, %v1534
      %v1536 = vpop.f32.mrb[0].mxu0
      %v1537 = vpop.f32.mrb[0].mxu0
      %v1538 = vadd.f32 0.0, %v1537
      %v1539 = vpop.f32.mrb[0].mxu0
      %1540 = vmatprep.mubr.bf16.mxu0 0
      %1541 = vmatmul.mubr.bf16.gmra.mrb[0].mxu0 %v1492
      %v1542 = vpop.f32.mrb[0].mxu0
      %v1543 = vadd.f32 0.0, %v1542
      %v1544 = vpop.f32.mrb[0].mxu0
      %v1545 = vpop.f32.mrb[0].mxu0
      %v1546 = vadd.f32 0.0, %v1545
      %v1547 = vpop.f32.mrb[0].mxu0
      %1548 = vmatprep.mubr.bf16.mxu0 0
      %1549 = vmatmul.mubr.bf16.gmra.mrb[0].mxu0 %v1495
      %v1550 = vpop.f32.mrb[0].mxu0
      %v1551 = vadd.f32 0.0, %v1550
      %v1552 = vpop.f32.mrb[0].mxu0
      %v1553 = vpop.f32.mrb[0].mxu0
      %v1554 = vadd.f32 0.0, %v1553
      %v1555 = vpop.f32.mrb[0].mxu0
      %1556 = vmatprep.mubr.bf16.mxu0 0
      %1557 = vmatmul.mubr.bf16.gmra.mrb[0].mxu0 %v1498
      %v1558 = vpop.f32.mrb[0].mxu0
      %v1559 = vadd.f32 0.0, %v1558
      %v1560 = vpop.f32.mrb[0].mxu0
      %v1561 = vpop.f32.mrb[0].mxu0
      %v1562 = vadd.f32 0.0, %v1561
      %v1563 = vpop.f32.mrb[0].mxu0
      %1564 = vdwg.mxu0
      %v1565 = vadd.f32 %v1459, %v1535
      %v1566 = vadd.f32 %v1460, %v1538
      %v1567 = vadd.f32 %v1461, %v1543
      %v1568 = vadd.f32 %v1462, %v1546
      %v1569 = vadd.f32 %v1463, %v1551
      %v1570 = vadd.f32 %v1464, %v1554
      %v1571 = vadd.f32 %v1465, %v1559
      %v1572 = vadd.f32 %v1466, %v1562
      %v1573 = vld [vmem:[%s1360 + $0x2] sm:$0xff]
      %v1574 = vld [vmem:[%s1360 + $0x12] sm:$0xff]
      %v1575 = vld [vmem:[%s1360 + $0x22] sm:$0xff]
      %v1576 = vld [vmem:[%s1360 + $0x32] sm:$0xff]
      %v1577 = vld [vmem:[%s1360 + $0x42] sm:$0xff]
      %v1578 = vld [vmem:[%s1360 + $0x52] sm:$0xff]
      %v1579 = vld [vmem:[%s1360 + $0x62] sm:$0xff]
      %v1580 = vld [vmem:[%s1360 + $0x72] sm:$0xff]
      %v1581 = vpack.c.bf16 %v1574, %v1573
      %v1582 = vpack.c.bf16 %v1576, %v1575
      %v1583 = vpack.c.bf16 %v1578, %v1577
      %v1584 = vpack.c.bf16 %v1580, %v1579
      %s1585 = scalar_lea.vmem %s3, 64
      %v1586 = vld [vmem:[%s1585] sm:$0xf]
      %v1587 = vld [vmem:[%s1585 + $0x4] sm:$0xf]
      %v1590 = vunpack.c.l.b16 %v1586
      %v1591 = vunpack.c.l.b16 %v1587
      %v1592 = vpack.c.b16 %v1591, %v1590
      %v1595 = vsel %vm607, %v1581, 0
      %v1598 = vsel %vm607, %v1582, 0
      %v1601 = vsel %vm607, %v1583, 0
      %v1604 = vsel %vm607, %v1584, 0
      %1606 = vmatprep.subr.bf16.mxu0 0
      %1607 = vmatpush1.bf16.msra.mxu0 %v1592
      %1608 = vmatprep.subr.bf16.mxu0 0
      %1609 = vmatpush1.bf16.msra.mxu0 0
      %1610 = vmatprep.subr.bf16.mxu0 0
      %1611 = vmatpush1.bf16.msra.mxu0 0
      %1612 = vmatprep.subr.bf16.mxu0 0
      %1613 = vmatpush1.bf16.msra.mxu0 0
      %1614 = vmatprep.subr.bf16.mxu0 0
      %1615 = vmatpush1.bf16.msra.mxu0 0
      %1616 = vmatprep.subr.bf16.mxu0 0
      %1617 = vmatpush1.bf16.msra.mxu0 0
      %1618 = vmatprep.subr.bf16.mxu0 0
      %1619 = vmatpush1.bf16.msra.mxu0 0
      %1620 = vmatprep.subr.bf16.mxu0 0
      %1621 = vmatpush1.bf16.msra.mxu0 0
      %1622 = vmatprep.subr.bf16.mxu0 0
      %1623 = vmatpush1.bf16.msra.mxu0 0
      %1624 = vmatprep.subr.bf16.mxu0 0
      %1625 = vmatpush1.bf16.msra.mxu0 0
      %1626 = vmatprep.subr.bf16.mxu0 0
      %1627 = vmatpush1.bf16.msra.mxu0 0
      %1628 = vmatprep.subr.bf16.mxu0 0
      %1629 = vmatpush1.bf16.msra.mxu0 0
      %1630 = vmatprep.subr.bf16.mxu0 0
      %1631 = vmatpush1.bf16.msra.mxu0 0
      %1632 = vmatprep.subr.bf16.mxu0 0
      %1633 = vmatpush1.bf16.msra.mxu0 0
      %1634 = vmatprep.subr.bf16.mxu0 0
      %1635 = vmatpush1.bf16.msra.mxu0 0
      %1636 = vmatprep.subr.bf16.mxu0 0
      %1637 = vmatpush1.bf16.msra.mxu0 0
      %1638 = vmatprep.mubr.bf16.mxu0 0
      %1639 = vmatmul.mubr.bf16.gmra.mrb[0].mxu0 %v1595
      %v1640 = vpop.f32.mrb[0].mxu0
      %v1641 = vadd.f32 0.0, %v1640
      %v1642 = vpop.f32.mrb[0].mxu0
      %v1643 = vpop.f32.mrb[0].mxu0
      %v1644 = vadd.f32 0.0, %v1643
      %v1645 = vpop.f32.mrb[0].mxu0
      %1646 = vmatprep.mubr.bf16.mxu0 0
      %1647 = vmatmul.mubr.bf16.gmra.mrb[0].mxu0 %v1598
      %v1648 = vpop.f32.mrb[0].mxu0
      %v1649 = vadd.f32 0.0, %v1648
      %v1650 = vpop.f32.mrb[0].mxu0
      %v1651 = vpop.f32.mrb[0].mxu0
      %v1652 = vadd.f32 0.0, %v1651
      %v1653 = vpop.f32.mrb[0].mxu0
      %1654 = vmatprep.mubr.bf16.mxu0 0
      %1655 = vmatmul.mubr.bf16.gmra.mrb[0].mxu0 %v1601
      %v1656 = vpop.f32.mrb[0].mxu0
      %v1657 = vadd.f32 0.0, %v1656
      %v1658 = vpop.f32.mrb[0].mxu0
      %v1659 = vpop.f32.mrb[0].mxu0
      %v1660 = vadd.f32 0.0, %v1659
      %v1661 = vpop.f32.mrb[0].mxu0
      %1662 = vmatprep.mubr.bf16.mxu0 0
      %1663 = vmatmul.mubr.bf16.gmra.mrb[0].mxu0 %v1604
      %v1664 = vpop.f32.mrb[0].mxu0
      %v1665 = vadd.f32 0.0, %v1664
      %v1666 = vpop.f32.mrb[0].mxu0
      %v1667 = vpop.f32.mrb[0].mxu0
      %v1668 = vadd.f32 0.0, %v1667
      %v1669 = vpop.f32.mrb[0].mxu0
      %1670 = vdwg.mxu0
      %v1671 = vadd.f32 %v1565, %v1641
      %v1672 = vadd.f32 %v1566, %v1644
      %v1673 = vadd.f32 %v1567, %v1649
      %v1674 = vadd.f32 %v1568, %v1652
      %v1675 = vadd.f32 %v1569, %v1657
      %v1676 = vadd.f32 %v1570, %v1660
      %v1677 = vadd.f32 %v1571, %v1665
      %v1678 = vadd.f32 %v1572, %v1668
      %v1679 = vmax.f32 %v1671, 0.0
      %v1680 = vmax.f32 %v1672, 0.0
      %v1681 = vmax.f32 %v1673, 0.0
      %v1682 = vmax.f32 %v1674, 0.0
      %v1683 = vmax.f32 %v1675, 0.0
      %v1684 = vmax.f32 %v1676, 0.0
      %v1685 = vmax.f32 %v1677, 0.0
      %v1686 = vmax.f32 %v1678, 0.0
      %vm1687 = vcmask 523264
      %1688 = vst.msk [vmem:[#allocation3] sm:$0xff] %vm1687, 0.0
      %vm1689 = vcmask 517120
      %1690 = vst.msk [vmem:[#allocation3 + $0x8] sm:$0x3] %vm1689, 0.0
      %1691 = vst.msk [vmem:[#allocation3 + $0x10] sm:$0xff] %vm1687, 0.0
      %1692 = vst.msk [vmem:[#allocation3 + $0x18] sm:$0x3] %vm1689, 0.0
      %1693 = vst.msk [vmem:[#allocation3 + $0x20] sm:$0xff] %vm1687, 0.0
      %1694 = vst.msk [vmem:[#allocation3 + $0x28] sm:$0x3] %vm1689, 0.0
      %1695 = vst.msk [vmem:[#allocation3 + $0x30] sm:$0xff] %vm1687, 0.0
      %1696 = vst.msk [vmem:[#allocation3 + $0x38] sm:$0x3] %vm1689, 0.0
      %1697 = vst.msk [vmem:[#allocation3 + $0x40] sm:$0xff] %vm1687, 0.0
      %1698 = vst.msk [vmem:[#allocation3 + $0x48] sm:$0x3] %vm1689, 0.0
      %1699 = vst.msk [vmem:[#allocation3 + $0x50] sm:$0xff] %vm1687, 0.0
      %1700 = vst.msk [vmem:[#allocation3 + $0x58] sm:$0x3] %vm1689, 0.0
      %1701 = vst.msk [vmem:[#allocation3 + $0x60] sm:$0xff] %vm1687, 0.0
      %1702 = vst.msk [vmem:[#allocation3 + $0x68] sm:$0x3] %vm1689, 0.0
      %1703 = vst.msk [vmem:[#allocation3 + $0x70] sm:$0xff] %vm1687, 0.0
      %1704 = vst.msk [vmem:[#allocation3 + $0x78] sm:$0x3] %vm1689, 0.0
      %1705 = vst.msk [vmem:[#allocation3 + $0x80] sm:$0xff] %vm1687, 0.0
      %1706 = vst.msk [vmem:[#allocation3 + $0x88] sm:$0x3] %vm1689, 0.0
      %1707 = vst.msk [vmem:[#allocation3 + $0x90] sm:$0xff] %vm1687, 0.0
      %1708 = vst.msk [vmem:[#allocation3 + $0x98] sm:$0x3] %vm1689, 0.0
      %s1709 = scalar_lea.vmem [#allocation3], 16
      %1710 = vst.msk [vmem:[%s1709 + $0x1] sm:$0xff] %vm1687, %v1679
      %1711 = vst.msk [vmem:[%s1709 + $0x11] sm:$0xff] %vm1687, %v1680
      %1712 = vst.msk [vmem:[%s1709 + $0x21] sm:$0xff] %vm1687, %v1681
      %1713 = vst.msk [vmem:[%s1709 + $0x31] sm:$0xff] %vm1687, %v1682
      %1714 = vst.msk [vmem:[%s1709 + $0x41] sm:$0xff] %vm1687, %v1683
      %1715 = vst.msk [vmem:[%s1709 + $0x51] sm:$0xff] %vm1687, %v1684
      %1716 = vst.msk [vmem:[%s1709 + $0x61] sm:$0xff] %vm1687, %v1685
      %1717 = vst.msk [vmem:[%s1709 + $0x71] sm:$0xff] %vm1687, %v1686
      %v1718 = vld [vmem:[%s6] sm:$0x1]
      %v1720 = vlaneseq
      %v1721 = vshrl.u32 %v1720, 7
      %v1722 = vsub.s32 0, %v1721
      %v1723 = vrot.slane %v1718, %v1722
      %v1725 = vadd.f32 %v1723, 0.0
      %v1726 = vld [vmem:[#allocation3] sm:$0xff]
      %v1727 = vld [vmem:[#allocation3 + $0x8] sm:$0x3]
      %v1728 = vld [vmem:[#allocation3 + $0x10] sm:$0xff]
      %v1729 = vld [vmem:[#allocation3 + $0x18] sm:$0x3]
      %v1730 = vld [vmem:[#allocation3 + $0x20] sm:$0xff]
      %v1731 = vld [vmem:[#allocation3 + $0x28] sm:$0x3]
      %v1732 = vld [vmem:[#allocation3 + $0x30] sm:$0xff]
      %v1733 = vld [vmem:[#allocation3 + $0x38] sm:$0x3]
      %v1734 = vld [vmem:[#allocation3 + $0x40] sm:$0xff]
      %v1735 = vld [vmem:[#allocation3 + $0x48] sm:$0x3]
      %v1736 = vld [vmem:[#allocation3 + $0x50] sm:$0xff]
      %v1737 = vld [vmem:[#allocation3 + $0x58] sm:$0x3]
      %v1738 = vld [vmem:[#allocation3 + $0x60] sm:$0xff]
      %v1739 = vld [vmem:[#allocation3 + $0x68] sm:$0x3]
      %v1740 = vld [vmem:[#allocation3 + $0x70] sm:$0xff]
      %v1741 = vld [vmem:[#allocation3 + $0x78] sm:$0x3]
      %v1742 = vld [vmem:[#allocation3 + $0x80] sm:$0xff]
      %v1743 = vld [vmem:[#allocation3 + $0x88] sm:$0x3]
      %v1744 = vld [vmem:[#allocation3 + $0x90] sm:$0xff]
      %v1745 = vld [vmem:[#allocation3 + $0x98] sm:$0x3]
      %v1766 = vcombine.high %v1726, %v1726
      %v1768 = vunpack.c.l.s4 1983009808
      %v1769 = vunpack.c.0.s8 %v1768
      %v1770 = vlaneseq
      %v1771 = vshrl.u32 %v1770, 7
      %v1772 = vsub.s32 %v1769, %v1771
      %v1773 = vrot.slane %v1726, %v1772
      %v1775 = vunpack.c.l.s4 1983009808
      %v1776 = vunpack.c.0.s8 %v1775
      %v1777 = vlaneseq
      %v1778 = vshrl.u32 %v1777, 7
      %v1779 = vsub.s32 %v1776, %v1778
      %v1780 = vrot.slane %v1766, %v1779
      %v1781 = vcombine.high %v1773, %v1773
      %v1782 = vcombine.high %v1780, %v1780
      %v1784 = vunpack.c.l.s4 1983009808
      %v1785 = vunpack.c.0.s8 %v1784
      %v1786 = vlaneseq
      %v1787 = vshrl.u32 %v1786, 7
      %v1788 = vsub.s32 %v1785, %v1787
      %v1789 = vrot.slane %v1727, %v1788
      %v1790 = vcombine.high %v1728, %v1728
      %v1792 = vunpack.c.l.s4 1983009808
      %v1793 = vunpack.c.0.s8 %v1792
      %v1794 = vlaneseq
      %v1795 = vshrl.u32 %v1794, 7
      %v1796 = vsub.s32 %v1793, %v1795
      %v1797 = vrot.slane %v1728, %v1796
      %v1799 = vunpack.c.l.s4 1983009808
      %v1800 = vunpack.c.0.s8 %v1799
      %v1801 = vlaneseq
      %v1802 = vshrl.u32 %v1801, 7
      %v1803 = vsub.s32 %v1800, %v1802
      %v1804 = vrot.slane %v1790, %v1803
      %v1805 = vcombine.high %v1797, %v1797
      %v1806 = vcombine.high %v1804, %v1804
      %v1808 = vunpack.c.l.s4 1983009808
      %v1809 = vunpack.c.0.s8 %v1808
      %v1810 = vlaneseq
      %v1811 = vshrl.u32 %v1810, 7
      %v1812 = vsub.s32 %v1809, %v1811
      %v1813 = vrot.slane %v1729, %v1812
      %v1814 = vcombine.high %v1730, %v1730
      %v1816 = vunpack.c.l.s4 1983009808
      %v1817 = vunpack.c.0.s8 %v1816
      %v1818 = vlaneseq
      %v1819 = vshrl.u32 %v1818, 7
      %v1820 = vsub.s32 %v1817, %v1819
      %v1821 = vrot.slane %v1730, %v1820
      %v1823 = vunpack.c.l.s4 1983009808
      %v1824 = vunpack.c.0.s8 %v1823
      %v1825 = vlaneseq
      %v1826 = vshrl.u32 %v1825, 7
      %v1827 = vsub.s32 %v1824, %v1826
      %v1828 = vrot.slane %v1814, %v1827
      %v1829 = vcombine.high %v1821, %v1821
      %v1830 = vcombine.high %v1828, %v1828
      %v1832 = vunpack.c.l.s4 1983009808
      %v1833 = vunpack.c.0.s8 %v1832
      %v1834 = vlaneseq
      %v1835 = vshrl.u32 %v1834, 7
      %v1836 = vsub.s32 %v1833, %v1835
      %v1837 = vrot.slane %v1731, %v1836
      %v1838 = vcombine.high %v1732, %v1732
      %v1840 = vunpack.c.l.s4 1983009808
      %v1841 = vunpack.c.0.s8 %v1840
      %v1842 = vlaneseq
      %v1843 = vshrl.u32 %v1842, 7
      %v1844 = vsub.s32 %v1841, %v1843
      %v1845 = vrot.slane %v1732, %v1844
      %v1847 = vunpack.c.l.s4 1983009808
      %v1848 = vunpack.c.0.s8 %v1847
      %v1849 = vlaneseq
      %v1850 = vshrl.u32 %v1849, 7
      %v1851 = vsub.s32 %v1848, %v1850
      %v1852 = vrot.slane %v1838, %v1851
      %v1853 = vcombine.high %v1845, %v1845
      %v1854 = vcombine.high %v1852, %v1852
      %v1856 = vunpack.c.l.s4 1983009808
      %v1857 = vunpack.c.0.s8 %v1856
      %v1858 = vlaneseq
      %v1859 = vshrl.u32 %v1858, 7
      %v1860 = vsub.s32 %v1857, %v1859
      %v1861 = vrot.slane %v1733, %v1860
      %v1862 = vcombine.high %v1734, %v1734
      %v1864 = vunpack.c.l.s4 1983009808
      %v1865 = vunpack.c.0.s8 %v1864
      %v1866 = vlaneseq
      %v1867 = vshrl.u32 %v1866, 7
      %v1868 = vsub.s32 %v1865, %v1867
      %v1869 = vrot.slane %v1734, %v1868
      %v1871 = vunpack.c.l.s4 1983009808
      %v1872 = vunpack.c.0.s8 %v1871
      %v1873 = vlaneseq
      %v1874 = vshrl.u32 %v1873, 7
      %v1875 = vsub.s32 %v1872, %v1874
      %v1876 = vrot.slane %v1862, %v1875
      %v1877 = vcombine.high %v1869, %v1869
      %v1878 = vcombine.high %v1876, %v1876
      %v1880 = vunpack.c.l.s4 1983009808
      %v1881 = vunpack.c.0.s8 %v1880
      %v1882 = vlaneseq
      %v1883 = vshrl.u32 %v1882, 7
      %v1884 = vsub.s32 %v1881, %v1883
      %v1885 = vrot.slane %v1735, %v1884
      %v1886 = vcombine.high %v1736, %v1736
      %v1888 = vunpack.c.l.s4 1983009808
      %v1889 = vunpack.c.0.s8 %v1888
      %v1890 = vlaneseq
      %v1891 = vshrl.u32 %v1890, 7
      %v1892 = vsub.s32 %v1889, %v1891
      %v1893 = vrot.slane %v1736, %v1892
      %v1895 = vunpack.c.l.s4 1983009808
      %v1896 = vunpack.c.0.s8 %v1895
      %v1897 = vlaneseq
      %v1898 = vshrl.u32 %v1897, 7
      %v1899 = vsub.s32 %v1896, %v1898
      %v1900 = vrot.slane %v1886, %v1899
      %v1901 = vcombine.high %v1893, %v1893
      %v1902 = vcombine.high %v1900, %v1900
      %v1904 = vunpack.c.l.s4 1983009808
      %v1905 = vunpack.c.0.s8 %v1904
      %v1906 = vlaneseq
      %v1907 = vshrl.u32 %v1906, 7
      %v1908 = vsub.s32 %v1905, %v1907
      %v1909 = vrot.slane %v1737, %v1908
      %v1910 = vcombine.high %v1738, %v1738
      %v1912 = vunpack.c.l.s4 1983009808
      %v1913 = vunpack.c.0.s8 %v1912
      %v1914 = vlaneseq
      %v1915 = vshrl.u32 %v1914, 7
      %v1916 = vsub.s32 %v1913, %v1915
      %v1917 = vrot.slane %v1738, %v1916
      %v1919 = vunpack.c.l.s4 1983009808
      %v1920 = vunpack.c.0.s8 %v1919
      %v1921 = vlaneseq
      %v1922 = vshrl.u32 %v1921, 7
      %v1923 = vsub.s32 %v1920, %v1922
      %v1924 = vrot.slane %v1910, %v1923
      %v1925 = vcombine.high %v1917, %v1917
      %v1926 = vcombine.high %v1924, %v1924
      %v1928 = vunpack.c.l.s4 1983009808
      %v1929 = vunpack.c.0.s8 %v1928
      %v1930 = vlaneseq
      %v1931 = vshrl.u32 %v1930, 7
      %v1932 = vsub.s32 %v1929, %v1931
      %v1933 = vrot.slane %v1739, %v1932
      %v1934 = vcombine.high %v1740, %v1740
      %v1936 = vunpack.c.l.s4 1983009808
      %v1937 = vunpack.c.0.s8 %v1936
      %v1938 = vlaneseq
      %v1939 = vshrl.u32 %v1938, 7
      %v1940 = vsub.s32 %v1937, %v1939
      %v1941 = vrot.slane %v1740, %v1940
      %v1943 = vunpack.c.l.s4 1983009808
      %v1944 = vunpack.c.0.s8 %v1943
      %v1945 = vlaneseq
      %v1946 = vshrl.u32 %v1945, 7
      %v1947 = vsub.s32 %v1944, %v1946
      %v1948 = vrot.slane %v1934, %v1947
      %v1949 = vcombine.high %v1941, %v1941
      %v1950 = vcombine.high %v1948, %v1948
      %v1952 = vunpack.c.l.s4 1983009808
      %v1953 = vunpack.c.0.s8 %v1952
      %v1954 = vlaneseq
      %v1955 = vshrl.u32 %v1954, 7
      %v1956 = vsub.s32 %v1953, %v1955
      %v1957 = vrot.slane %v1741, %v1956
      %v1958 = vcombine.high %v1742, %v1742
      %v1960 = vunpack.c.l.s4 1983009808
      %v1961 = vunpack.c.0.s8 %v1960
      %v1962 = vlaneseq
      %v1963 = vshrl.u32 %v1962, 7
      %v1964 = vsub.s32 %v1961, %v1963
      %v1965 = vrot.slane %v1742, %v1964
      %v1967 = vunpack.c.l.s4 1983009808
      %v1968 = vunpack.c.0.s8 %v1967
      %v1969 = vlaneseq
      %v1970 = vshrl.u32 %v1969, 7
      %v1971 = vsub.s32 %v1968, %v1970
      %v1972 = vrot.slane %v1958, %v1971
      %v1973 = vcombine.high %v1965, %v1965
      %v1974 = vcombine.high %v1972, %v1972
      %v1976 = vunpack.c.l.s4 1983009808
      %v1977 = vunpack.c.0.s8 %v1976
      %v1978 = vlaneseq
      %v1979 = vshrl.u32 %v1978, 7
      %v1980 = vsub.s32 %v1977, %v1979
      %v1981 = vrot.slane %v1743, %v1980
      %v1982 = vcombine.high %v1744, %v1744
      %v1984 = vunpack.c.l.s4 1983009808
      %v1985 = vunpack.c.0.s8 %v1984
      %v1986 = vlaneseq
      %v1987 = vshrl.u32 %v1986, 7
      %v1988 = vsub.s32 %v1985, %v1987
      %v1989 = vrot.slane %v1744, %v1988
      %v1991 = vunpack.c.l.s4 1983009808
      %v1992 = vunpack.c.0.s8 %v1991
      %v1993 = vlaneseq
      %v1994 = vshrl.u32 %v1993, 7
      %v1995 = vsub.s32 %v1992, %v1994
      %v1996 = vrot.slane %v1982, %v1995
      %v1997 = vcombine.high %v1989, %v1989
      %v1998 = vcombine.high %v1996, %v1996
      %v2000 = vunpack.c.l.s4 1983009808
      %v2001 = vunpack.c.0.s8 %v2000
      %v2002 = vlaneseq
      %v2003 = vshrl.u32 %v2002, 7
      %v2004 = vsub.s32 %v2001, %v2003
      %v2005 = vrot.slane %v1745, %v2004
      %v2056 = vpack.c.bf16 %v1773, %v1773
      %v2057 = vpack.c.bf16 %v1781, %v1781
      %v2058 = vpack.c.bf16 %v1780, %v1780
      %v2059 = vpack.c.bf16 %v1782, %v1782
      %v2060 = vpack.c.bf16 %v1821, %v1821
      %v2061 = vpack.c.bf16 %v1829, %v1829
      %v2062 = vpack.c.bf16 %v1828, %v1828
      %v2063 = vpack.c.bf16 %v1830, %v1830
      %v2064 = vpack.c.bf16 %v1869, %v1869
      %v2065 = vpack.c.bf16 %v1877, %v1877
      %v2066 = vpack.c.bf16 %v1876, %v1876
      %v2067 = vpack.c.bf16 %v1878, %v1878
      %v2068 = vpack.c.bf16 %v1917, %v1917
      %v2069 = vpack.c.bf16 %v1925, %v1925
      %v2070 = vpack.c.bf16 %v1924, %v1924
      %v2071 = vpack.c.bf16 %v1926, %v1926
      %v2072 = vld [vmem:[%s5] sm:$0xf]
      %v2073 = vld [vmem:[%s5 + $0x4] sm:$0xf]
      %v2074 = vld [vmem:[%s5 + $0x8] sm:$0xf]
      %v2075 = vld [vmem:[%s5 + $0xc] sm:$0xf]
      %v2076 = vld [vmem:[%s5 + $0x10] sm:$0xf]
      %v2077 = vld [vmem:[%s5 + $0x14] sm:$0xf]
      %v2078 = vld [vmem:[%s5 + $0x18] sm:$0xf]
      %v2079 = vld [vmem:[%s5 + $0x1c] sm:$0xf]
      %v2096 = vunpack.c.l.b16 %v2056
      %v2097 = vunpack.c.l.b16 %v2057
      %v2098 = vunpack.c.l.b16 %v2058
      %v2099 = vunpack.c.l.b16 %v2059
      %v2100 = vunpack.c.l.b16 %v2060
      %v2101 = vunpack.c.l.b16 %v2061
      %v2102 = vunpack.c.l.b16 %v2062
      %v2103 = vunpack.c.l.b16 %v2063
      %v2104 = vunpack.c.l.b16 %v2064
      %v2105 = vunpack.c.l.b16 %v2065
      %v2106 = vunpack.c.l.b16 %v2066
      %v2107 = vunpack.c.l.b16 %v2067
      %v2108 = vunpack.c.l.b16 %v2068
      %v2109 = vunpack.c.l.b16 %v2069
      %v2110 = vunpack.c.l.b16 %v2070
      %v2111 = vunpack.c.l.b16 %v2071
      %v2112 = vrot.slane %v2097, 7
      %vm2113 = vcmask 1041409
      %v2114 = vsel %vm2113, %v2112, %v2096
      %v2115 = vrot.slane %v2098, 6
      %vm2116 = vcmask 1042434
      %v2117 = vsel %vm2116, %v2115, %v2114
      %v2118 = vrot.slane %v2099, 5
      %vm2119 = vcmask 1043459
      %v2120 = vsel %vm2119, %v2118, %v2117
      %v2121 = vrot.slane %v2100, 4
      %vm2122 = vcmask 1044484
      %v2123 = vsel %vm2122, %v2121, %v2120
      %v2124 = vrot.slane %v2101, 3
      %vm2125 = vcmask 1045509
      %v2126 = vsel %vm2125, %v2124, %v2123
      %v2127 = vrot.slane %v2102, 2
      %vm2128 = vcmask 1046534
      %v2129 = vsel %vm2128, %v2127, %v2126
      %v2130 = vrot.slane %v2103, 1
      %vm2131 = vcmask 1047559
      %v2132 = vsel %vm2131, %v2130, %v2129
      %v2133 = vrot.slane %v2105, 7
      %v2134 = vsel %vm2113, %v2133, %v2104
      %v2135 = vrot.slane %v2106, 6
      %v2136 = vsel %vm2116, %v2135, %v2134
      %v2137 = vrot.slane %v2107, 5
      %v2138 = vsel %vm2119, %v2137, %v2136
      %v2139 = vrot.slane %v2108, 4
      %v2140 = vsel %vm2122, %v2139, %v2138
      %v2141 = vrot.slane %v2109, 3
      %v2142 = vsel %vm2125, %v2141, %v2140
      %v2143 = vrot.slane %v2110, 2
      %v2144 = vsel %vm2128, %v2143, %v2142
      %v2145 = vrot.slane %v2111, 1
      %v2146 = vsel %vm2131, %v2145, %v2144
      %v2147 = vpack.c.b16 %v2146, %v2132
      %v2156 = vunpack.c.l.b16 %v2072
      %v2157 = vunpack.c.l.b16 %v2073
      %v2158 = vunpack.c.l.b16 %v2074
      %v2159 = vunpack.c.l.b16 %v2075
      %v2160 = vunpack.c.l.b16 %v2076
      %v2161 = vunpack.c.l.b16 %v2077
      %v2162 = vunpack.c.l.b16 %v2078
      %v2163 = vunpack.c.l.b16 %v2079
      %v2164 = vpack.c.b16 %v2157, %v2156
      %v2165 = vpack.c.b16 %v2159, %v2158
      %v2166 = vpack.c.b16 %v2161, %v2160
      %v2167 = vpack.c.b16 %v2163, %v2162
      %v2173 = vsel %vm1687, %v2147, 0
      %2175 = vmatprep.subr.bf16.mxu0 0
      %2176 = vmatpush1.bf16.msra.mxu0 %v2164
      %2177 = vmatprep.subr.bf16.mxu0 0
      %2178 = vmatpush1.bf16.msra.mxu0 %v2165
      %2179 = vmatprep.subr.bf16.mxu0 0
      %2180 = vmatpush1.bf16.msra.mxu0 %v2166
      %2181 = vmatprep.subr.bf16.mxu0 0
      %2182 = vmatpush1.bf16.msra.mxu0 %v2167
      %2183 = vmatprep.subr.bf16.mxu0 0
      %2184 = vmatpush1.bf16.msra.mxu0 0
      %2185 = vmatprep.subr.bf16.mxu0 0
      %2186 = vmatpush1.bf16.msra.mxu0 0
      %2187 = vmatprep.subr.bf16.mxu0 0
      %2188 = vmatpush1.bf16.msra.mxu0 0
      %2189 = vmatprep.subr.bf16.mxu0 0
      %2190 = vmatpush1.bf16.msra.mxu0 0
      %2191 = vmatprep.subr.bf16.mxu0 0
      %2192 = vmatpush1.bf16.msra.mxu0 0
      %2193 = vmatprep.subr.bf16.mxu0 0
      %2194 = vmatpush1.bf16.msra.mxu0 0
      %2195 = vmatprep.subr.bf16.mxu0 0
      %2196 = vmatpush1.bf16.msra.mxu0 0
      %2197 = vmatprep.subr.bf16.mxu0 0
      %2198 = vmatpush1.bf16.msra.mxu0 0
      %2199 = vmatprep.subr.bf16.mxu0 0
      %2200 = vmatpush1.bf16.msra.mxu0 0
      %2201 = vmatprep.subr.bf16.mxu0 0
      %2202 = vmatpush1.bf16.msra.mxu0 0
      %2203 = vmatprep.subr.bf16.mxu0 0
      %2204 = vmatpush1.bf16.msra.mxu0 0
      %2205 = vmatprep.subr.bf16.mxu0 0
      %2206 = vmatpush1.bf16.msra.mxu0 0
      %2207 = vmatprep.mubr.bf16.mxu0 0
      %2208 = vmatmul.mubr.bf16.gmra.mrb[0].mxu0 %v2173
      %v2209 = vpop.f32.mrb[0].mxu0
      %v2210 = vadd.f32 0.0, %v2209
      %v2211 = vpop.f32.mrb[0].mxu0
      %v2212 = vpop.f32.mrb[0].mxu0
      %v2213 = vadd.f32 0.0, %v2212
      %v2214 = vpop.f32.mrb[0].mxu0
      %2215 = vdwg.mxu0
      %v2216 = vadd.f32 %v1725, %v2210
      %v2217 = vadd.f32 %v1725, %v2213
      %s2218 = scalar_lea.vmem %s5, 32
      %v2219 = vld [vmem:[%s2218] sm:$0xf]
      %v2220 = vld [vmem:[%s2218 + $0x4] sm:$0xf]
      %v2221 = vld [vmem:[%s2218 + $0x8] sm:$0xf]
      %v2222 = vld [vmem:[%s2218 + $0xc] sm:$0xf]
      %v2223 = vld [vmem:[%s2218 + $0x10] sm:$0xf]
      %v2224 = vld [vmem:[%s2218 + $0x14] sm:$0xf]
      %v2225 = vld [vmem:[%s2218 + $0x18] sm:$0xf]
      %v2226 = vld [vmem:[%s2218 + $0x1c] sm:$0xf]
      %v2227 = vrot.slane %v2096, 1
      %v2228 = vsel %vm2113, %v2097, %v2227
      %v2229 = vrot.slane %v2098, 7
      %v2230 = vsel %vm2116, %v2229, %v2228
      %v2231 = vrot.slane %v2099, 6
      %v2232 = vsel %vm2119, %v2231, %v2230
      %v2233 = vrot.slane %v2100, 5
      %v2234 = vsel %vm2122, %v2233, %v2232
      %v2235 = vrot.slane %v2101, 4
      %v2236 = vsel %vm2125, %v2235, %v2234
      %v2237 = vrot.slane %v2102, 3
      %v2238 = vsel %vm2128, %v2237, %v2236
      %v2239 = vrot.slane %v2103, 2
      %v2240 = vsel %vm2131, %v2239, %v2238
      %v2241 = vrot.slane %v2104, 1
      %v2242 = vsel %vm2113, %v2105, %v2241
      %v2243 = vrot.slane %v2106, 7
      %v2244 = vsel %vm2116, %v2243, %v2242
      %v2245 = vrot.slane %v2107, 6
      %v2246 = vsel %vm2119, %v2245, %v2244
      %v2247 = vrot.slane %v2108, 5
      %v2248 = vsel %vm2122, %v2247, %v2246
      %v2249 = vrot.slane %v2109, 4
      %v2250 = vsel %vm2125, %v2249, %v2248
      %v2251 = vrot.slane %v2110, 3
      %v2252 = vsel %vm2128, %v2251, %v2250
      %v2253 = vrot.slane %v2111, 2
      %v2254 = vsel %vm2131, %v2253, %v2252
      %v2255 = vpack.c.b16 %v2254, %v2240
      %v2264 = vunpack.c.l.b16 %v2219
      %v2265 = vunpack.c.l.b16 %v2220
      %v2266 = vunpack.c.l.b16 %v2221
      %v2267 = vunpack.c.l.b16 %v2222
      %v2268 = vunpack.c.l.b16 %v2223
      %v2269 = vunpack.c.l.b16 %v2224
      %v2270 = vunpack.c.l.b16 %v2225
      %v2271 = vunpack.c.l.b16 %v2226
      %v2272 = vpack.c.b16 %v2265, %v2264
      %v2273 = vpack.c.b16 %v2267, %v2266
      %v2274 = vpack.c.b16 %v2269, %v2268
      %v2275 = vpack.c.b16 %v2271, %v2270
      %v2281 = vsel %vm1687, %v2255, 0
      %2283 = vmatprep.subr.bf16.mxu0 0
      %2284 = vmatpush1.bf16.msra.mxu0 %v2272
      %2285 = vmatprep.subr.bf16.mxu0 0
      %2286 = vmatpush1.bf16.msra.mxu0 %v2273
      %2287 = vmatprep.subr.bf16.mxu0 0
      %2288 = vmatpush1.bf16.msra.mxu0 %v2274
      %2289 = vmatprep.subr.bf16.mxu0 0
      %2290 = vmatpush1.bf16.msra.mxu0 %v2275
      %2291 = vmatprep.subr.bf16.mxu0 0
      %2292 = vmatpush1.bf16.msra.mxu0 0
      %2293 = vmatprep.subr.bf16.mxu0 0
      %2294 = vmatpush1.bf16.msra.mxu0 0
      %2295 = vmatprep.subr.bf16.mxu0 0
      %2296 = vmatpush1.bf16.msra.mxu0 0
      %2297 = vmatprep.subr.bf16.mxu0 0
      %2298 = vmatpush1.bf16.msra.mxu0 0
      %2299 = vmatprep.subr.bf16.mxu0 0
      %2300 = vmatpush1.bf16.msra.mxu0 0
      %2301 = vmatprep.subr.bf16.mxu0 0
      %2302 = vmatpush1.bf16.msra.mxu0 0
      %2303 = vmatprep.subr.bf16.mxu0 0
      %2304 = vmatpush1.bf16.msra.mxu0 0
      %2305 = vmatprep.subr.bf16.mxu0 0
      %2306 = vmatpush1.bf16.msra.mxu0 0
      %2307 = vmatprep.subr.bf16.mxu0 0
      %2308 = vmatpush1.bf16.msra.mxu0 0
      %2309 = vmatprep.subr.bf16.mxu0 0
      %2310 = vmatpush1.bf16.msra.mxu0 0
      %2311 = vmatprep.subr.bf16.mxu0 0
      %2312 = vmatpush1.bf16.msra.mxu0 0
      %2313 = vmatprep.subr.bf16.mxu0 0
      %2314 = vmatpush1.bf16.msra.mxu0 0
      %2315 = vmatprep.mubr.bf16.mxu0 0
      %2316 = vmatmul.mubr.bf16.gmra.mrb[0].mxu0 %v2281
      %v2317 = vpop.f32.mrb[0].mxu0
      %v2318 = vadd.f32 0.0, %v2317
      %v2319 = vpop.f32.mrb[0].mxu0
      %v2320 = vpop.f32.mrb[0].mxu0
      %v2321 = vadd.f32 0.0, %v2320
      %v2322 = vpop.f32.mrb[0].mxu0
      %2323 = vdwg.mxu0
      %v2324 = vadd.f32 %v2216, %v2318
      %v2325 = vadd.f32 %v2217, %v2321
      %v2326 = vpack.c.bf16 %v1789, %v1789
      %v2327 = vpack.c.bf16 %v1837, %v1837
      %v2328 = vpack.c.bf16 %v1885, %v1885
      %v2329 = vpack.c.bf16 %v1933, %v1933
      %s2330 = scalar_lea.vmem %s5, 64
      %v2331 = vld [vmem:[%s2330] sm:$0xf]
      %v2332 = vld [vmem:[%s2330 + $0x4] sm:$0xf]
      %v2333 = vld [vmem:[%s2330 + $0x8] sm:$0xf]
      %v2334 = vld [vmem:[%s2330 + $0xc] sm:$0xf]
      %v2335 = vld [vmem:[%s2330 + $0x10] sm:$0xf]
      %v2336 = vld [vmem:[%s2330 + $0x14] sm:$0xf]
      %v2337 = vld [vmem:[%s2330 + $0x18] sm:$0xf]
      %v2338 = vld [vmem:[%s2330 + $0x1c] sm:$0xf]
      %v2343 = vunpack.c.l.b16 %v2326
      %v2344 = vunpack.c.l.b16 %v2327
      %v2345 = vunpack.c.l.b16 %v2328
      %v2346 = vunpack.c.l.b16 %v2329
      %v2347 = vsel %vm2113, %v2229, %v2097
      %v2348 = vsel %vm2116, %v2231, %v2347
      %v2349 = vrot.slane %v2343, 5
      %v2350 = vsel %vm2119, %v2349, %v2348
      %v2351 = vsel %vm2122, %v2235, %v2350
      %v2352 = vsel %vm2125, %v2237, %v2351
      %v2353 = vsel %vm2128, %v2239, %v2352
      %v2354 = vrot.slane %v2344, 1
      %v2355 = vsel %vm2131, %v2354, %v2353
      %v2356 = vsel %vm2113, %v2243, %v2105
      %v2357 = vsel %vm2116, %v2245, %v2356
      %v2358 = vrot.slane %v2345, 5
      %v2359 = vsel %vm2119, %v2358, %v2357
      %v2360 = vsel %vm2122, %v2249, %v2359
      %v2361 = vsel %vm2125, %v2251, %v2360
      %v2362 = vsel %vm2128, %v2253, %v2361
      %v2363 = vrot.slane %v2346, 1
      %v2364 = vsel %vm2131, %v2363, %v2362
      %v2365 = vpack.c.b16 %v2364, %v2355
      %v2374 = vunpack.c.l.b16 %v2331
      %v2375 = vunpack.c.l.b16 %v2332
      %v2376 = vunpack.c.l.b16 %v2333
      %v2377 = vunpack.c.l.b16 %v2334
      %v2378 = vunpack.c.l.b16 %v2335
      %v2379 = vunpack.c.l.b16 %v2336
      %v2380 = vunpack.c.l.b16 %v2337
      %v2381 = vunpack.c.l.b16 %v2338
      %v2382 = vpack.c.b16 %v2375, %v2374
      %v2383 = vpack.c.b16 %v2377, %v2376
      %v2384 = vpack.c.b16 %v2379, %v2378
      %v2385 = vpack.c.b16 %v2381, %v2380
      %v2391 = vsel %vm1687, %v2365, 0
      %2393 = vmatprep.subr.bf16.mxu0 0
      %2394 = vmatpush1.bf16.msra.mxu0 %v2382
      %2395 = vmatprep.subr.bf16.mxu0 0
      %2396 = vmatpush1.bf16.msra.mxu0 %v2383
      %2397 = vmatprep.subr.bf16.mxu0 0
      %2398 = vmatpush1.bf16.msra.mxu0 %v2384
      %2399 = vmatprep.subr.bf16.mxu0 0
      %2400 = vmatpush1.bf16.msra.mxu0 %v2385
      %2401 = vmatprep.subr.bf16.mxu0 0
      %2402 = vmatpush1.bf16.msra.mxu0 0
      %2403 = vmatprep.subr.bf16.mxu0 0
      %2404 = vmatpush1.bf16.msra.mxu0 0
      %2405 = vmatprep.subr.bf16.mxu0 0
      %2406 = vmatpush1.bf16.msra.mxu0 0
      %2407 = vmatprep.subr.bf16.mxu0 0
      %2408 = vmatpush1.bf16.msra.mxu0 0
      %2409 = vmatprep.subr.bf16.mxu0 0
      %2410 = vmatpush1.bf16.msra.mxu0 0
      %2411 = vmatprep.subr.bf16.mxu0 0
      %2412 = vmatpush1.bf16.msra.mxu0 0
      %2413 = vmatprep.subr.bf16.mxu0 0
      %2414 = vmatpush1.bf16.msra.mxu0 0
      %2415 = vmatprep.subr.bf16.mxu0 0
      %2416 = vmatpush1.bf16.msra.mxu0 0
      %2417 = vmatprep.subr.bf16.mxu0 0
      %2418 = vmatpush1.bf16.msra.mxu0 0
      %2419 = vmatprep.subr.bf16.mxu0 0
      %2420 = vmatpush1.bf16.msra.mxu0 0
      %2421 = vmatprep.subr.bf16.mxu0 0
      %2422 = vmatpush1.bf16.msra.mxu0 0
      %2423 = vmatprep.subr.bf16.mxu0 0
      %2424 = vmatpush1.bf16.msra.mxu0 0
      %2425 = vmatprep.mubr.bf16.mxu0 0
      %2426 = vmatmul.mubr.bf16.gmra.mrb[0].mxu0 %v2391
      %v2427 = vpop.f32.mrb[0].mxu0
      %v2428 = vadd.f32 0.0, %v2427
      %v2429 = vpop.f32.mrb[0].mxu0
      %v2430 = vpop.f32.mrb[0].mxu0
      %v2431 = vadd.f32 0.0, %v2430
      %v2432 = vpop.f32.mrb[0].mxu0
      %2433 = vdwg.mxu0
      %v2434 = vadd.f32 %v2324, %v2428
      %v2435 = vadd.f32 %v2325, %v2431
      %s2436 = scalar_lea.vmem %s5, 96
      %v2437 = vld [vmem:[%s2436] sm:$0xf]
      %v2438 = vld [vmem:[%s2436 + $0x4] sm:$0xf]
      %v2439 = vld [vmem:[%s2436 + $0x8] sm:$0xf]
      %v2440 = vld [vmem:[%s2436 + $0xc] sm:$0xf]
      %v2441 = vld [vmem:[%s2436 + $0x10] sm:$0xf]
      %v2442 = vld [vmem:[%s2436 + $0x14] sm:$0xf]
      %v2443 = vld [vmem:[%s2436 + $0x18] sm:$0xf]
      %v2444 = vld [vmem:[%s2436 + $0x1c] sm:$0xf]
      %v2445 = vrot.slane %v2097, 1
      %v2446 = vsel %vm2113, %v2098, %v2445
      %v2447 = vrot.slane %v2099, 7
      %v2448 = vsel %vm2116, %v2447, %v2446
      %v2449 = vrot.slane %v2343, 6
      %v2450 = vsel %vm2119, %v2449, %v2448
      %v2451 = vrot.slane %v2101, 5
      %v2452 = vsel %vm2122, %v2451, %v2450
      %v2453 = vrot.slane %v2102, 4
      %v2454 = vsel %vm2125, %v2453, %v2452
      %v2455 = vrot.slane %v2103, 3
      %v2456 = vsel %vm2128, %v2455, %v2454
      %v2457 = vrot.slane %v2344, 2
      %v2458 = vsel %vm2131, %v2457, %v2456
      %v2459 = vrot.slane %v2105, 1
      %v2460 = vsel %vm2113, %v2106, %v2459
      %v2461 = vrot.slane %v2107, 7
      %v2462 = vsel %vm2116, %v2461, %v2460
      %v2463 = vrot.slane %v2345, 6
      %v2464 = vsel %vm2119, %v2463, %v2462
      %v2465 = vrot.slane %v2109, 5
      %v2466 = vsel %vm2122, %v2465, %v2464
      %v2467 = vrot.slane %v2110, 4
      %v2468 = vsel %vm2125, %v2467, %v2466
      %v2469 = vrot.slane %v2111, 3
      %v2470 = vsel %vm2128, %v2469, %v2468
      %v2471 = vrot.slane %v2346, 2
      %v2472 = vsel %vm2131, %v2471, %v2470
      %v2473 = vpack.c.b16 %v2472, %v2458
      %v2482 = vunpack.c.l.b16 %v2437
      %v2483 = vunpack.c.l.b16 %v2438
      %v2484 = vunpack.c.l.b16 %v2439
      %v2485 = vunpack.c.l.b16 %v2440
      %v2486 = vunpack.c.l.b16 %v2441
      %v2487 = vunpack.c.l.b16 %v2442
      %v2488 = vunpack.c.l.b16 %v2443
      %v2489 = vunpack.c.l.b16 %v2444
      %v2490 = vpack.c.b16 %v2483, %v2482
      %v2491 = vpack.c.b16 %v2485, %v2484
      %v2492 = vpack.c.b16 %v2487, %v2486
      %v2493 = vpack.c.b16 %v2489, %v2488
      %v2499 = vsel %vm1687, %v2473, 0
      %2501 = vmatprep.subr.bf16.mxu0 0
      %2502 = vmatpush1.bf16.msra.mxu0 %v2490
      %2503 = vmatprep.subr.bf16.mxu0 0
      %2504 = vmatpush1.bf16.msra.mxu0 %v2491
      %2505 = vmatprep.subr.bf16.mxu0 0
      %2506 = vmatpush1.bf16.msra.mxu0 %v2492
      %2507 = vmatprep.subr.bf16.mxu0 0
      %2508 = vmatpush1.bf16.msra.mxu0 %v2493
      %2509 = vmatprep.subr.bf16.mxu0 0
      %2510 = vmatpush1.bf16.msra.mxu0 0
      %2511 = vmatprep.subr.bf16.mxu0 0
      %2512 = vmatpush1.bf16.msra.mxu0 0
      %2513 = vmatprep.subr.bf16.mxu0 0
      %2514 = vmatpush1.bf16.msra.mxu0 0
      %2515 = vmatprep.subr.bf16.mxu0 0
      %2516 = vmatpush1.bf16.msra.mxu0 0
      %2517 = vmatprep.subr.bf16.mxu0 0
      %2518 = vmatpush1.bf16.msra.mxu0 0
      %2519 = vmatprep.subr.bf16.mxu0 0
      %2520 = vmatpush1.bf16.msra.mxu0 0
      %2521 = vmatprep.subr.bf16.mxu0 0
      %2522 = vmatpush1.bf16.msra.mxu0 0
      %2523 = vmatprep.subr.bf16.mxu0 0
      %2524 = vmatpush1.bf16.msra.mxu0 0
      %2525 = vmatprep.subr.bf16.mxu0 0
      %2526 = vmatpush1.bf16.msra.mxu0 0
      %2527 = vmatprep.subr.bf16.mxu0 0
      %2528 = vmatpush1.bf16.msra.mxu0 0
      %2529 = vmatprep.subr.bf16.mxu0 0
      %2530 = vmatpush1.bf16.msra.mxu0 0
      %2531 = vmatprep.subr.bf16.mxu0 0
      %2532 = vmatpush1.bf16.msra.mxu0 0
      %2533 = vmatprep.mubr.bf16.mxu0 0
      %2534 = vmatmul.mubr.bf16.gmra.mrb[0].mxu0 %v2499
      %v2535 = vpop.f32.mrb[0].mxu0
      %v2536 = vadd.f32 0.0, %v2535
      %v2537 = vpop.f32.mrb[0].mxu0
      %v2538 = vpop.f32.mrb[0].mxu0
      %v2539 = vadd.f32 0.0, %v2538
      %v2540 = vpop.f32.mrb[0].mxu0
      %2541 = vdwg.mxu0
      %v2542 = vadd.f32 %v2434, %v2536
      %v2543 = vadd.f32 %v2435, %v2539
      %v2544 = vpack.c.bf16 %v1797, %v1797
      %v2545 = vpack.c.bf16 %v1805, %v1805
      %v2546 = vpack.c.bf16 %v1804, %v1804
      %v2547 = vpack.c.bf16 %v1806, %v1806
      %v2548 = vpack.c.bf16 %v1845, %v1845
      %v2549 = vpack.c.bf16 %v1853, %v1853
      %v2550 = vpack.c.bf16 %v1852, %v1852
      %v2551 = vpack.c.bf16 %v1854, %v1854
      %v2552 = vpack.c.bf16 %v1893, %v1893
      %v2553 = vpack.c.bf16 %v1901, %v1901
      %v2554 = vpack.c.bf16 %v1900, %v1900
      %v2555 = vpack.c.bf16 %v1902, %v1902
      %v2556 = vpack.c.bf16 %v1941, %v1941
      %v2557 = vpack.c.bf16 %v1949, %v1949
      %v2558 = vpack.c.bf16 %v1948, %v1948
      %v2559 = vpack.c.bf16 %v1950, %v1950
      %s2560 = scalar_lea.vmem %s5, 128
      %v2561 = vld [vmem:[%s2560] sm:$0xf]
      %v2562 = vld [vmem:[%s2560 + $0x4] sm:$0xf]
      %v2563 = vld [vmem:[%s2560 + $0x8] sm:$0xf]
      %v2564 = vld [vmem:[%s2560 + $0xc] sm:$0xf]
      %v2565 = vld [vmem:[%s2560 + $0x10] sm:$0xf]
      %v2566 = vld [vmem:[%s2560 + $0x14] sm:$0xf]
      %v2567 = vld [vmem:[%s2560 + $0x18] sm:$0xf]
      %v2568 = vld [vmem:[%s2560 + $0x1c] sm:$0xf]
      %v2585 = vunpack.c.l.b16 %v2544
      %v2586 = vunpack.c.l.b16 %v2545
      %v2587 = vunpack.c.l.b16 %v2546
      %v2588 = vunpack.c.l.b16 %v2547
      %v2589 = vunpack.c.l.b16 %v2548
      %v2590 = vunpack.c.l.b16 %v2549
      %v2591 = vunpack.c.l.b16 %v2550
      %v2592 = vunpack.c.l.b16 %v2551
      %v2593 = vunpack.c.l.b16 %v2552
      %v2594 = vunpack.c.l.b16 %v2553
      %v2595 = vunpack.c.l.b16 %v2554
      %v2596 = vunpack.c.l.b16 %v2555
      %v2597 = vunpack.c.l.b16 %v2556
      %v2598 = vunpack.c.l.b16 %v2557
      %v2599 = vunpack.c.l.b16 %v2558
      %v2600 = vunpack.c.l.b16 %v2559
      %v2601 = vrot.slane %v2586, 7
      %v2602 = vsel %vm2113, %v2601, %v2585
      %v2603 = vrot.slane %v2587, 6
      %v2604 = vsel %vm2116, %v2603, %v2602
      %v2605 = vrot.slane %v2588, 5
      %v2606 = vsel %vm2119, %v2605, %v2604
      %v2607 = vrot.slane %v2589, 4
      %v2608 = vsel %vm2122, %v2607, %v2606
      %v2609 = vrot.slane %v2590, 3
      %v2610 = vsel %vm2125, %v2609, %v2608
      %v2611 = vrot.slane %v2591, 2
      %v2612 = vsel %vm2128, %v2611, %v2610
      %v2613 = vrot.slane %v2592, 1
      %v2614 = vsel %vm2131, %v2613, %v2612
      %v2615 = vrot.slane %v2594, 7
      %v2616 = vsel %vm2113, %v2615, %v2593
      %v2617 = vrot.slane %v2595, 6
      %v2618 = vsel %vm2116, %v2617, %v2616
      %v2619 = vrot.slane %v2596, 5
      %v2620 = vsel %vm2119, %v2619, %v2618
      %v2621 = vrot.slane %v2597, 4
      %v2622 = vsel %vm2122, %v2621, %v2620
      %v2623 = vrot.slane %v2598, 3
      %v2624 = vsel %vm2125, %v2623, %v2622
      %v2625 = vrot.slane %v2599, 2
      %v2626 = vsel %vm2128, %v2625, %v2624
      %v2627 = vrot.slane %v2600, 1
      %v2628 = vsel %vm2131, %v2627, %v2626
      %v2629 = vpack.c.b16 %v2628, %v2614
      %v2638 = vunpack.c.l.b16 %v2561
      %v2639 = vunpack.c.l.b16 %v2562
      %v2640 = vunpack.c.l.b16 %v2563
      %v2641 = vunpack.c.l.b16 %v2564
      %v2642 = vunpack.c.l.b16 %v2565
      %v2643 = vunpack.c.l.b16 %v2566
      %v2644 = vunpack.c.l.b16 %v2567
      %v2645 = vunpack.c.l.b16 %v2568
      %v2646 = vpack.c.b16 %v2639, %v2638
      %v2647 = vpack.c.b16 %v2641, %v2640
      %v2648 = vpack.c.b16 %v2643, %v2642
      %v2649 = vpack.c.b16 %v2645, %v2644
      %v2655 = vsel %vm1687, %v2629, 0
      %2657 = vmatprep.subr.bf16.mxu0 0
      %2658 = vmatpush1.bf16.msra.mxu0 %v2646
      %2659 = vmatprep.subr.bf16.mxu0 0
      %2660 = vmatpush1.bf16.msra.mxu0 %v2647
      %2661 = vmatprep.subr.bf16.mxu0 0
      %2662 = vmatpush1.bf16.msra.mxu0 %v2648
      %2663 = vmatprep.subr.bf16.mxu0 0
      %2664 = vmatpush1.bf16.msra.mxu0 %v2649
      %2665 = vmatprep.subr.bf16.mxu0 0
      %2666 = vmatpush1.bf16.msra.mxu0 0
      %2667 = vmatprep.subr.bf16.mxu0 0
      %2668 = vmatpush1.bf16.msra.mxu0 0
      %2669 = vmatprep.subr.bf16.mxu0 0
      %2670 = vmatpush1.bf16.msra.mxu0 0
      %2671 = vmatprep.subr.bf16.mxu0 0
      %2672 = vmatpush1.bf16.msra.mxu0 0
      %2673 = vmatprep.subr.bf16.mxu0 0
      %2674 = vmatpush1.bf16.msra.mxu0 0
      %2675 = vmatprep.subr.bf16.mxu0 0
      %2676 = vmatpush1.bf16.msra.mxu0 0
      %2677 = vmatprep.subr.bf16.mxu0 0
      %2678 = vmatpush1.bf16.msra.mxu0 0
      %2679 = vmatprep.subr.bf16.mxu0 0
      %2680 = vmatpush1.bf16.msra.mxu0 0
      %2681 = vmatprep.subr.bf16.mxu0 0
      %2682 = vmatpush1.bf16.msra.mxu0 0
      %2683 = vmatprep.subr.bf16.mxu0 0
      %2684 = vmatpush1.bf16.msra.mxu0 0
      %2685 = vmatprep.subr.bf16.mxu0 0
      %2686 = vmatpush1.bf16.msra.mxu0 0
      %2687 = vmatprep.subr.bf16.mxu0 0
      %2688 = vmatpush1.bf16.msra.mxu0 0
      %2689 = vmatprep.mubr.bf16.mxu0 0
      %2690 = vmatmul.mubr.bf16.gmra.mrb[0].mxu0 %v2655
      %v2691 = vpop.f32.mrb[0].mxu0
      %v2692 = vadd.f32 0.0, %v2691
      %v2693 = vpop.f32.mrb[0].mxu0
      %v2694 = vpop.f32.mrb[0].mxu0
      %v2695 = vadd.f32 0.0, %v2694
      %v2696 = vpop.f32.mrb[0].mxu0
      %2697 = vdwg.mxu0
      %v2698 = vadd.f32 %v2542, %v2692
      %v2699 = vadd.f32 %v2543, %v2695
      %s2700 = scalar_lea.vmem %s5, 160
      %v2701 = vld [vmem:[%s2700] sm:$0xf]
      %v2702 = vld [vmem:[%s2700 + $0x4] sm:$0xf]
      %v2703 = vld [vmem:[%s2700 + $0x8] sm:$0xf]
      %v2704 = vld [vmem:[%s2700 + $0xc] sm:$0xf]
      %v2705 = vld [vmem:[%s2700 + $0x10] sm:$0xf]
      %v2706 = vld [vmem:[%s2700 + $0x14] sm:$0xf]
      %v2707 = vld [vmem:[%s2700 + $0x18] sm:$0xf]
      %v2708 = vld [vmem:[%s2700 + $0x1c] sm:$0xf]
      %v2709 = vrot.slane %v2585, 1
      %v2710 = vsel %vm2113, %v2586, %v2709
      %v2711 = vrot.slane %v2587, 7
      %v2712 = vsel %vm2116, %v2711, %v2710
      %v2713 = vrot.slane %v2588, 6
      %v2714 = vsel %vm2119, %v2713, %v2712
      %v2715 = vrot.slane %v2589, 5
      %v2716 = vsel %vm2122, %v2715, %v2714
      %v2717 = vrot.slane %v2590, 4
      %v2718 = vsel %vm2125, %v2717, %v2716
      %v2719 = vrot.slane %v2591, 3
      %v2720 = vsel %vm2128, %v2719, %v2718
      %v2721 = vrot.slane %v2592, 2
      %v2722 = vsel %vm2131, %v2721, %v2720
      %v2723 = vrot.slane %v2593, 1
      %v2724 = vsel %vm2113, %v2594, %v2723
      %v2725 = vrot.slane %v2595, 7
      %v2726 = vsel %vm2116, %v2725, %v2724
      %v2727 = vrot.slane %v2596, 6
      %v2728 = vsel %vm2119, %v2727, %v2726
      %v2729 = vrot.slane %v2597, 5
      %v2730 = vsel %vm2122, %v2729, %v2728
      %v2731 = vrot.slane %v2598, 4
      %v2732 = vsel %vm2125, %v2731, %v2730
      %v2733 = vrot.slane %v2599, 3
      %v2734 = vsel %vm2128, %v2733, %v2732
      %v2735 = vrot.slane %v2600, 2
      %v2736 = vsel %vm2131, %v2735, %v2734
      %v2737 = vpack.c.b16 %v2736, %v2722
      %v2746 = vunpack.c.l.b16 %v2701
      %v2747 = vunpack.c.l.b16 %v2702
      %v2748 = vunpack.c.l.b16 %v2703
      %v2749 = vunpack.c.l.b16 %v2704
      %v2750 = vunpack.c.l.b16 %v2705
      %v2751 = vunpack.c.l.b16 %v2706
      %v2752 = vunpack.c.l.b16 %v2707
      %v2753 = vunpack.c.l.b16 %v2708
      %v2754 = vpack.c.b16 %v2747, %v2746
      %v2755 = vpack.c.b16 %v2749, %v2748
      %v2756 = vpack.c.b16 %v2751, %v2750
      %v2757 = vpack.c.b16 %v2753, %v2752
      %v2763 = vsel %vm1687, %v2737, 0
      %2765 = vmatprep.subr.bf16.mxu0 0
      %2766 = vmatpush1.bf16.msra.mxu0 %v2754
      %2767 = vmatprep.subr.bf16.mxu0 0
      %2768 = vmatpush1.bf16.msra.mxu0 %v2755
      %2769 = vmatprep.subr.bf16.mxu0 0
      %2770 = vmatpush1.bf16.msra.mxu0 %v2756
      %2771 = vmatprep.subr.bf16.mxu0 0
      %2772 = vmatpush1.bf16.msra.mxu0 %v2757
      %2773 = vmatprep.subr.bf16.mxu0 0
      %2774 = vmatpush1.bf16.msra.mxu0 0
      %2775 = vmatprep.subr.bf16.mxu0 0
      %2776 = vmatpush1.bf16.msra.mxu0 0
      %2777 = vmatprep.subr.bf16.mxu0 0
      %2778 = vmatpush1.bf16.msra.mxu0 0
      %2779 = vmatprep.subr.bf16.mxu0 0
      %2780 = vmatpush1.bf16.msra.mxu0 0
      %2781 = vmatprep.subr.bf16.mxu0 0
      %2782 = vmatpush1.bf16.msra.mxu0 0
      %2783 = vmatprep.subr.bf16.mxu0 0
      %2784 = vmatpush1.bf16.msra.mxu0 0
      %2785 = vmatprep.subr.bf16.mxu0 0
      %2786 = vmatpush1.bf16.msra.mxu0 0
      %2787 = vmatprep.subr.bf16.mxu0 0
      %2788 = vmatpush1.bf16.msra.mxu0 0
      %2789 = vmatprep.subr.bf16.mxu0 0
      %2790 = vmatpush1.bf16.msra.mxu0 0
      %2791 = vmatprep.subr.bf16.mxu0 0
      %2792 = vmatpush1.bf16.msra.mxu0 0
      %2793 = vmatprep.subr.bf16.mxu0 0
      %2794 = vmatpush1.bf16.msra.mxu0 0
      %2795 = vmatprep.subr.bf16.mxu0 0
      %2796 = vmatpush1.bf16.msra.mxu0 0
      %2797 = vmatprep.mubr.bf16.mxu0 0
      %2798 = vmatmul.mubr.bf16.gmra.mrb[0].mxu0 %v2763
      %v2799 = vpop.f32.mrb[0].mxu0
      %v2800 = vadd.f32 0.0, %v2799
      %v2801 = vpop.f32.mrb[0].mxu0
      %v2802 = vpop.f32.mrb[0].mxu0
      %v2803 = vadd.f32 0.0, %v2802
      %v2804 = vpop.f32.mrb[0].mxu0
      %2805 = vdwg.mxu0
      %v2806 = vadd.f32 %v2698, %v2800
      %v2807 = vadd.f32 %v2699, %v2803
      %v2808 = vpack.c.bf16 %v1813, %v1813
      %v2809 = vpack.c.bf16 %v1861, %v1861
      %v2810 = vpack.c.bf16 %v1909, %v1909
      %v2811 = vpack.c.bf16 %v1957, %v1957
      %s2812 = scalar_lea.vmem %s5, 192
      %v2813 = vld [vmem:[%s2812] sm:$0xf]
      %v2814 = vld [vmem:[%s2812 + $0x4] sm:$0xf]
      %v2815 = vld [vmem:[%s2812 + $0x8] sm:$0xf]
      %v2816 = vld [vmem:[%s2812 + $0xc] sm:$0xf]
      %v2817 = vld [vmem:[%s2812 + $0x10] sm:$0xf]
      %v2818 = vld [vmem:[%s2812 + $0x14] sm:$0xf]
      %v2819 = vld [vmem:[%s2812 + $0x18] sm:$0xf]
      %v2820 = vld [vmem:[%s2812 + $0x1c] sm:$0xf]
      %v2825 = vunpack.c.l.b16 %v2808
      %v2826 = vunpack.c.l.b16 %v2809
      %v2827 = vunpack.c.l.b16 %v2810
      %v2828 = vunpack.c.l.b16 %v2811
      %v2829 = vsel %vm2113, %v2711, %v2586
      %v2830 = vsel %vm2116, %v2713, %v2829
      %v2831 = vrot.slane %v2825, 5
      %v2832 = vsel %vm2119, %v2831, %v2830
      %v2833 = vsel %vm2122, %v2717, %v2832
      %v2834 = vsel %vm2125, %v2719, %v2833
      %v2835 = vsel %vm2128, %v2721, %v2834
      %v2836 = vrot.slane %v2826, 1
      %v2837 = vsel %vm2131, %v2836, %v2835
      %v2838 = vsel %vm2113, %v2725, %v2594
      %v2839 = vsel %vm2116, %v2727, %v2838
      %v2840 = vrot.slane %v2827, 5
      %v2841 = vsel %vm2119, %v2840, %v2839
      %v2842 = vsel %vm2122, %v2731, %v2841
      %v2843 = vsel %vm2125, %v2733, %v2842
      %v2844 = vsel %vm2128, %v2735, %v2843
      %v2845 = vrot.slane %v2828, 1
      %v2846 = vsel %vm2131, %v2845, %v2844
      %v2847 = vpack.c.b16 %v2846, %v2837
      %v2856 = vunpack.c.l.b16 %v2813
      %v2857 = vunpack.c.l.b16 %v2814
      %v2858 = vunpack.c.l.b16 %v2815
      %v2859 = vunpack.c.l.b16 %v2816
      %v2860 = vunpack.c.l.b16 %v2817
      %v2861 = vunpack.c.l.b16 %v2818
      %v2862 = vunpack.c.l.b16 %v2819
      %v2863 = vunpack.c.l.b16 %v2820
      %v2864 = vpack.c.b16 %v2857, %v2856
      %v2865 = vpack.c.b16 %v2859, %v2858
      %v2866 = vpack.c.b16 %v2861, %v2860
      %v2867 = vpack.c.b16 %v2863, %v2862
      %v2873 = vsel %vm1687, %v2847, 0
      %2875 = vmatprep.subr.bf16.mxu0 0
      %2876 = vmatpush1.bf16.msra.mxu0 %v2864
      %2877 = vmatprep.subr.bf16.mxu0 0
      %2878 = vmatpush1.bf16.msra.mxu0 %v2865
      %2879 = vmatprep.subr.bf16.mxu0 0
      %2880 = vmatpush1.bf16.msra.mxu0 %v2866
      %2881 = vmatprep.subr.bf16.mxu0 0
      %2882 = vmatpush1.bf16.msra.mxu0 %v2867
      %2883 = vmatprep.subr.bf16.mxu0 0
      %2884 = vmatpush1.bf16.msra.mxu0 0
      %2885 = vmatprep.subr.bf16.mxu0 0
      %2886 = vmatpush1.bf16.msra.mxu0 0
      %2887 = vmatprep.subr.bf16.mxu0 0
      %2888 = vmatpush1.bf16.msra.mxu0 0
      %2889 = vmatprep.subr.bf16.mxu0 0
      %2890 = vmatpush1.bf16.msra.mxu0 0
      %2891 = vmatprep.subr.bf16.mxu0 0
      %2892 = vmatpush1.bf16.msra.mxu0 0
      %2893 = vmatprep.subr.bf16.mxu0 0
      %2894 = vmatpush1.bf16.msra.mxu0 0
      %2895 = vmatprep.subr.bf16.mxu0 0
      %2896 = vmatpush1.bf16.msra.mxu0 0
      %2897 = vmatprep.subr.bf16.mxu0 0
      %2898 = vmatpush1.bf16.msra.mxu0 0
      %2899 = vmatprep.subr.bf16.mxu0 0
      %2900 = vmatpush1.bf16.msra.mxu0 0
      %2901 = vmatprep.subr.bf16.mxu0 0
      %2902 = vmatpush1.bf16.msra.mxu0 0
      %2903 = vmatprep.subr.bf16.mxu0 0
      %2904 = vmatpush1.bf16.msra.mxu0 0
      %2905 = vmatprep.subr.bf16.mxu0 0
      %2906 = vmatpush1.bf16.msra.mxu0 0
      %2907 = vmatprep.mubr.bf16.mxu0 0
      %2908 = vmatmul.mubr.bf16.gmra.mrb[0].mxu0 %v2873
      %v2909 = vpop.f32.mrb[0].mxu0
      %v2910 = vadd.f32 0.0, %v2909
      %v2911 = vpop.f32.mrb[0].mxu0
      %v2912 = vpop.f32.mrb[0].mxu0
      %v2913 = vadd.f32 0.0, %v2912
      %v2914 = vpop.f32.mrb[0].mxu0
      %2915 = vdwg.mxu0
      %v2916 = vadd.f32 %v2806, %v2910
      %v2917 = vadd.f32 %v2807, %v2913
      %s2918 = scalar_lea.vmem %s5, 224
      %v2919 = vld [vmem:[%s2918] sm:$0xf]
      %v2920 = vld [vmem:[%s2918 + $0x4] sm:$0xf]
      %v2921 = vld [vmem:[%s2918 + $0x8] sm:$0xf]
      %v2922 = vld [vmem:[%s2918 + $0xc] sm:$0xf]
      %v2923 = vld [vmem:[%s2918 + $0x10] sm:$0xf]
      %v2924 = vld [vmem:[%s2918 + $0x14] sm:$0xf]
      %v2925 = vld [vmem:[%s2918 + $0x18] sm:$0xf]
      %v2926 = vld [vmem:[%s2918 + $0x1c] sm:$0xf]
      %v2927 = vrot.slane %v2586, 1
      %v2928 = vsel %vm2113, %v2587, %v2927
      %v2929 = vrot.slane %v2588, 7
      %v2930 = vsel %vm2116, %v2929, %v2928
      %v2931 = vrot.slane %v2825, 6
      %v2932 = vsel %vm2119, %v2931, %v2930
      %v2933 = vrot.slane %v2590, 5
      %v2934 = vsel %vm2122, %v2933, %v2932
      %v2935 = vrot.slane %v2591, 4
      %v2936 = vsel %vm2125, %v2935, %v2934
      %v2937 = vrot.slane %v2592, 3
      %v2938 = vsel %vm2128, %v2937, %v2936
      %v2939 = vrot.slane %v2826, 2
      %v2940 = vsel %vm2131, %v2939, %v2938
      %v2941 = vrot.slane %v2594, 1
      %v2942 = vsel %vm2113, %v2595, %v2941
      %v2943 = vrot.slane %v2596, 7
      %v2944 = vsel %vm2116, %v2943, %v2942
      %v2945 = vrot.slane %v2827, 6
      %v2946 = vsel %vm2119, %v2945, %v2944
      %v2947 = vrot.slane %v2598, 5
      %v2948 = vsel %vm2122, %v2947, %v2946
      %v2949 = vrot.slane %v2599, 4
      %v2950 = vsel %vm2125, %v2949, %v2948
      %v2951 = vrot.slane %v2600, 3
      %v2952 = vsel %vm2128, %v2951, %v2950
      %v2953 = vrot.slane %v2828, 2
      %v2954 = vsel %vm2131, %v2953, %v2952
      %v2955 = vpack.c.b16 %v2954, %v2940
      %v2964 = vunpack.c.l.b16 %v2919
      %v2965 = vunpack.c.l.b16 %v2920
      %v2966 = vunpack.c.l.b16 %v2921
      %v2967 = vunpack.c.l.b16 %v2922
      %v2968 = vunpack.c.l.b16 %v2923
      %v2969 = vunpack.c.l.b16 %v2924
      %v2970 = vunpack.c.l.b16 %v2925
      %v2971 = vunpack.c.l.b16 %v2926
      %v2972 = vpack.c.b16 %v2965, %v2964
      %v2973 = vpack.c.b16 %v2967, %v2966
      %v2974 = vpack.c.b16 %v2969, %v2968
      %v2975 = vpack.c.b16 %v2971, %v2970
      %v2981 = vsel %vm1687, %v2955, 0
      %2983 = vmatprep.subr.bf16.mxu0 0
      %2984 = vmatpush1.bf16.msra.mxu0 %v2972
      %2985 = vmatprep.subr.bf16.mxu0 0
      %2986 = vmatpush1.bf16.msra.mxu0 %v2973
      %2987 = vmatprep.subr.bf16.mxu0 0
      %2988 = vmatpush1.bf16.msra.mxu0 %v2974
      %2989 = vmatprep.subr.bf16.mxu0 0
      %2990 = vmatpush1.bf16.msra.mxu0 %v2975
      %2991 = vmatprep.subr.bf16.mxu0 0
      %2992 = vmatpush1.bf16.msra.mxu0 0
      %2993 = vmatprep.subr.bf16.mxu0 0
      %2994 = vmatpush1.bf16.msra.mxu0 0
      %2995 = vmatprep.subr.bf16.mxu0 0
      %2996 = vmatpush1.bf16.msra.mxu0 0
      %2997 = vmatprep.subr.bf16.mxu0 0
      %2998 = vmatpush1.bf16.msra.mxu0 0
      %2999 = vmatprep.subr.bf16.mxu0 0
      %3000 = vmatpush1.bf16.msra.mxu0 0
      %3001 = vmatprep.subr.bf16.mxu0 0
      %3002 = vmatpush1.bf16.msra.mxu0 0
      %3003 = vmatprep.subr.bf16.mxu0 0
      %3004 = vmatpush1.bf16.msra.mxu0 0
      %3005 = vmatprep.subr.bf16.mxu0 0
      %3006 = vmatpush1.bf16.msra.mxu0 0
      %3007 = vmatprep.subr.bf16.mxu0 0
      %3008 = vmatpush1.bf16.msra.mxu0 0
      %3009 = vmatprep.subr.bf16.mxu0 0
      %3010 = vmatpush1.bf16.msra.mxu0 0
      %3011 = vmatprep.subr.bf16.mxu0 0
      %3012 = vmatpush1.bf16.msra.mxu0 0
      %3013 = vmatprep.subr.bf16.mxu0 0
      %3014 = vmatpush1.bf16.msra.mxu0 0
      %3015 = vmatprep.mubr.bf16.mxu0 0
      %3016 = vmatmul.mubr.bf16.gmra.mrb[0].mxu0 %v2981
      %v3017 = vpop.f32.mrb[0].mxu0
      %v3018 = vadd.f32 0.0, %v3017
      %v3019 = vpop.f32.mrb[0].mxu0
      %v3020 = vpop.f32.mrb[0].mxu0
      %v3021 = vadd.f32 0.0, %v3020
      %v3022 = vpop.f32.mrb[0].mxu0
      %3023 = vdwg.mxu0
      %v3024 = vadd.f32 %v2916, %v3018
      %v3025 = vadd.f32 %v2917, %v3021
      %v3026 = vpack.c.bf16 %v1965, %v1965
      %v3027 = vpack.c.bf16 %v1973, %v1973
      %v3028 = vpack.c.bf16 %v1972, %v1972
      %v3029 = vpack.c.bf16 %v1974, %v1974
      %s3030 = scalar_lea.vmem %s5, 256
      %v3031 = vld [vmem:[%s3030] sm:$0xf]
      %v3032 = vld [vmem:[%s3030 + $0x4] sm:$0xf]
      %v3033 = vld [vmem:[%s3030 + $0x8] sm:$0xf]
      %v3034 = vld [vmem:[%s3030 + $0xc] sm:$0xf]
      %v3035 = vld [vmem:[%s3030 + $0x10] sm:$0xf]
      %v3036 = vld [vmem:[%s3030 + $0x14] sm:$0xf]
      %v3037 = vld [vmem:[%s3030 + $0x18] sm:$0xf]
      %v3038 = vld [vmem:[%s3030 + $0x1c] sm:$0xf]
      %v3043 = vunpack.c.l.b16 %v3026
      %v3044 = vunpack.c.l.b16 %v3027
      %v3045 = vunpack.c.l.b16 %v3028
      %v3046 = vunpack.c.l.b16 %v3029
      %v3047 = vrot.slane %v2101, 7
      %v3048 = vsel %vm2113, %v3047, %v2100
      %v3049 = vrot.slane %v2102, 6
      %v3050 = vsel %vm2116, %v3049, %v3048
      %v3051 = vrot.slane %v2103, 5
      %v3052 = vsel %vm2119, %v3051, %v3050
      %v3053 = vrot.slane %v2104, 4
      %v3054 = vsel %vm2122, %v3053, %v3052
      %v3055 = vrot.slane %v2105, 3
      %v3056 = vsel %vm2125, %v3055, %v3054
      %v3057 = vrot.slane %v2106, 2
      %v3058 = vsel %vm2128, %v3057, %v3056
      %v3059 = vrot.slane %v2107, 1
      %v3060 = vsel %vm2131, %v3059, %v3058
      %v3061 = vrot.slane %v2109, 7
      %v3062 = vsel %vm2113, %v3061, %v2108
      %v3063 = vrot.slane %v2110, 6
      %v3064 = vsel %vm2116, %v3063, %v3062
      %v3065 = vrot.slane %v2111, 5
      %v3066 = vsel %vm2119, %v3065, %v3064
      %v3067 = vrot.slane %v3043, 4
      %v3068 = vsel %vm2122, %v3067, %v3066
      %v3069 = vrot.slane %v3044, 3
      %v3070 = vsel %vm2125, %v3069, %v3068
      %v3071 = vrot.slane %v3045, 2
      %v3072 = vsel %vm2128, %v3071, %v3070
      %v3073 = vrot.slane %v3046, 1
      %v3074 = vsel %vm2131, %v3073, %v3072
      %v3075 = vpack.c.b16 %v3074, %v3060
      %v3084 = vunpack.c.l.b16 %v3031
      %v3085 = vunpack.c.l.b16 %v3032
      %v3086 = vunpack.c.l.b16 %v3033
      %v3087 = vunpack.c.l.b16 %v3034
      %v3088 = vunpack.c.l.b16 %v3035
      %v3089 = vunpack.c.l.b16 %v3036
      %v3090 = vunpack.c.l.b16 %v3037
      %v3091 = vunpack.c.l.b16 %v3038
      %v3092 = vpack.c.b16 %v3085, %v3084
      %v3093 = vpack.c.b16 %v3087, %v3086
      %v3094 = vpack.c.b16 %v3089, %v3088
      %v3095 = vpack.c.b16 %v3091, %v3090
      %v3101 = vsel %vm1687, %v3075, 0
      %3103 = vmatprep.subr.bf16.mxu0 0
      %3104 = vmatpush1.bf16.msra.mxu0 %v3092
      %3105 = vmatprep.subr.bf16.mxu0 0
      %3106 = vmatpush1.bf16.msra.mxu0 %v3093
      %3107 = vmatprep.subr.bf16.mxu0 0
      %3108 = vmatpush1.bf16.msra.mxu0 %v3094
      %3109 = vmatprep.subr.bf16.mxu0 0
      %3110 = vmatpush1.bf16.msra.mxu0 %v3095
      %3111 = vmatprep.subr.bf16.mxu0 0
      %3112 = vmatpush1.bf16.msra.mxu0 0
      %3113 = vmatprep.subr.bf16.mxu0 0
      %3114 = vmatpush1.bf16.msra.mxu0 0
      %3115 = vmatprep.subr.bf16.mxu0 0
      %3116 = vmatpush1.bf16.msra.mxu0 0
      %3117 = vmatprep.subr.bf16.mxu0 0
      %3118 = vmatpush1.bf16.msra.mxu0 0
      %3119 = vmatprep.subr.bf16.mxu0 0
      %3120 = vmatpush1.bf16.msra.mxu0 0
      %3121 = vmatprep.subr.bf16.mxu0 0
      %3122 = vmatpush1.bf16.msra.mxu0 0
      %3123 = vmatprep.subr.bf16.mxu0 0
      %3124 = vmatpush1.bf16.msra.mxu0 0
      %3125 = vmatprep.subr.bf16.mxu0 0
      %3126 = vmatpush1.bf16.msra.mxu0 0
      %3127 = vmatprep.subr.bf16.mxu0 0
      %3128 = vmatpush1.bf16.msra.mxu0 0
      %3129 = vmatprep.subr.bf16.mxu0 0
      %3130 = vmatpush1.bf16.msra.mxu0 0
      %3131 = vmatprep.subr.bf16.mxu0 0
      %3132 = vmatpush1.bf16.msra.mxu0 0
      %3133 = vmatprep.subr.bf16.mxu0 0
      %3134 = vmatpush1.bf16.msra.mxu0 0
      %3135 = vmatprep.mubr.bf16.mxu0 0
      %3136 = vmatmul.mubr.bf16.gmra.mrb[0].mxu0 %v3101
      %v3137 = vpop.f32.mrb[0].mxu0
      %v3138 = vadd.f32 0.0, %v3137
      %v3139 = vpop.f32.mrb[0].mxu0
      %v3140 = vpop.f32.mrb[0].mxu0
      %v3141 = vadd.f32 0.0, %v3140
      %v3142 = vpop.f32.mrb[0].mxu0
      %3143 = vdwg.mxu0
      %v3144 = vadd.f32 %v3024, %v3138
      %v3145 = vadd.f32 %v3025, %v3141
      %s3146 = scalar_lea.vmem %s5, 288
      %v3147 = vld [vmem:[%s3146] sm:$0xf]
      %v3148 = vld [vmem:[%s3146 + $0x4] sm:$0xf]
      %v3149 = vld [vmem:[%s3146 + $0x8] sm:$0xf]
      %v3150 = vld [vmem:[%s3146 + $0xc] sm:$0xf]
      %v3151 = vld [vmem:[%s3146 + $0x10] sm:$0xf]
      %v3152 = vld [vmem:[%s3146 + $0x14] sm:$0xf]
      %v3153 = vld [vmem:[%s3146 + $0x18] sm:$0xf]
      %v3154 = vld [vmem:[%s3146 + $0x1c] sm:$0xf]
      %v3155 = vrot.slane %v2100, 1
      %v3156 = vsel %vm2113, %v2101, %v3155
      %v3157 = vrot.slane %v2102, 7
      %v3158 = vsel %vm2116, %v3157, %v3156
      %v3159 = vrot.slane %v2103, 6
      %v3160 = vsel %vm2119, %v3159, %v3158
      %v3161 = vrot.slane %v2104, 5
      %v3162 = vsel %vm2122, %v3161, %v3160
      %v3163 = vrot.slane %v2105, 4
      %v3164 = vsel %vm2125, %v3163, %v3162
      %v3165 = vrot.slane %v2106, 3
      %v3166 = vsel %vm2128, %v3165, %v3164
      %v3167 = vrot.slane %v2107, 2
      %v3168 = vsel %vm2131, %v3167, %v3166
      %v3169 = vrot.slane %v2108, 1
      %v3170 = vsel %vm2113, %v2109, %v3169
      %v3171 = vrot.slane %v2110, 7
      %v3172 = vsel %vm2116, %v3171, %v3170
      %v3173 = vrot.slane %v2111, 6
      %v3174 = vsel %vm2119, %v3173, %v3172
      %v3175 = vrot.slane %v3043, 5
      %v3176 = vsel %vm2122, %v3175, %v3174
      %v3177 = vrot.slane %v3044, 4
      %v3178 = vsel %vm2125, %v3177, %v3176
      %v3179 = vrot.slane %v3045, 3
      %v3180 = vsel %vm2128, %v3179, %v3178
      %v3181 = vrot.slane %v3046, 2
      %v3182 = vsel %vm2131, %v3181, %v3180
      %v3183 = vpack.c.b16 %v3182, %v3168
      %v3192 = vunpack.c.l.b16 %v3147
      %v3193 = vunpack.c.l.b16 %v3148
      %v3194 = vunpack.c.l.b16 %v3149
      %v3195 = vunpack.c.l.b16 %v3150
      %v3196 = vunpack.c.l.b16 %v3151
      %v3197 = vunpack.c.l.b16 %v3152
      %v3198 = vunpack.c.l.b16 %v3153
      %v3199 = vunpack.c.l.b16 %v3154
      %v3200 = vpack.c.b16 %v3193, %v3192
      %v3201 = vpack.c.b16 %v3195, %v3194
      %v3202 = vpack.c.b16 %v3197, %v3196
      %v3203 = vpack.c.b16 %v3199, %v3198
      %v3209 = vsel %vm1687, %v3183, 0
      %3211 = vmatprep.subr.bf16.mxu0 0
      %3212 = vmatpush1.bf16.msra.mxu0 %v3200
      %3213 = vmatprep.subr.bf16.mxu0 0
      %3214 = vmatpush1.bf16.msra.mxu0 %v3201
      %3215 = vmatprep.subr.bf16.mxu0 0
      %3216 = vmatpush1.bf16.msra.mxu0 %v3202
      %3217 = vmatprep.subr.bf16.mxu0 0
      %3218 = vmatpush1.bf16.msra.mxu0 %v3203
      %3219 = vmatprep.subr.bf16.mxu0 0
      %3220 = vmatpush1.bf16.msra.mxu0 0
      %3221 = vmatprep.subr.bf16.mxu0 0
      %3222 = vmatpush1.bf16.msra.mxu0 0
      %3223 = vmatprep.subr.bf16.mxu0 0
      %3224 = vmatpush1.bf16.msra.mxu0 0
      %3225 = vmatprep.subr.bf16.mxu0 0
      %3226 = vmatpush1.bf16.msra.mxu0 0
      %3227 = vmatprep.subr.bf16.mxu0 0
      %3228 = vmatpush1.bf16.msra.mxu0 0
      %3229 = vmatprep.subr.bf16.mxu0 0
      %3230 = vmatpush1.bf16.msra.mxu0 0
      %3231 = vmatprep.subr.bf16.mxu0 0
      %3232 = vmatpush1.bf16.msra.mxu0 0
      %3233 = vmatprep.subr.bf16.mxu0 0
      %3234 = vmatpush1.bf16.msra.mxu0 0
      %3235 = vmatprep.subr.bf16.mxu0 0
      %3236 = vmatpush1.bf16.msra.mxu0 0
      %3237 = vmatprep.subr.bf16.mxu0 0
      %3238 = vmatpush1.bf16.msra.mxu0 0
      %3239 = vmatprep.subr.bf16.mxu0 0
      %3240 = vmatpush1.bf16.msra.mxu0 0
      %3241 = vmatprep.subr.bf16.mxu0 0
      %3242 = vmatpush1.bf16.msra.mxu0 0
      %3243 = vmatprep.mubr.bf16.mxu0 0
      %3244 = vmatmul.mubr.bf16.gmra.mrb[0].mxu0 %v3209
      %v3245 = vpop.f32.mrb[0].mxu0
      %v3246 = vadd.f32 0.0, %v3245
      %v3247 = vpop.f32.mrb[0].mxu0
      %v3248 = vpop.f32.mrb[0].mxu0
      %v3249 = vadd.f32 0.0, %v3248
      %v3250 = vpop.f32.mrb[0].mxu0
      %3251 = vdwg.mxu0
      %v3252 = vadd.f32 %v3144, %v3246
      %v3253 = vadd.f32 %v3145, %v3249
      %v3254 = vpack.c.bf16 %v1981, %v1981
      %s3255 = scalar_lea.vmem %s5, 320
      %v3256 = vld [vmem:[%s3255] sm:$0xf]
      %v3257 = vld [vmem:[%s3255 + $0x4] sm:$0xf]
      %v3258 = vld [vmem:[%s3255 + $0x8] sm:$0xf]
      %v3259 = vld [vmem:[%s3255 + $0xc] sm:$0xf]
      %v3260 = vld [vmem:[%s3255 + $0x10] sm:$0xf]
      %v3261 = vld [vmem:[%s3255 + $0x14] sm:$0xf]
      %v3262 = vld [vmem:[%s3255 + $0x18] sm:$0xf]
      %v3263 = vld [vmem:[%s3255 + $0x1c] sm:$0xf]
      %v3265 = vunpack.c.l.b16 %v3254
      %v3266 = vsel %vm2113, %v3157, %v2101
      %v3267 = vsel %vm2116, %v3159, %v3266
      %v3268 = vrot.slane %v2344, 5
      %v3269 = vsel %vm2119, %v3268, %v3267
      %v3270 = vsel %vm2122, %v3163, %v3269
      %v3271 = vsel %vm2125, %v3165, %v3270
      %v3272 = vsel %vm2128, %v3167, %v3271
      %v3273 = vrot.slane %v2345, 1
      %v3274 = vsel %vm2131, %v3273, %v3272
      %v3275 = vsel %vm2113, %v3171, %v2109
      %v3276 = vsel %vm2116, %v3173, %v3275
      %v3277 = vrot.slane %v2346, 5
      %v3278 = vsel %vm2119, %v3277, %v3276
      %v3279 = vsel %vm2122, %v3177, %v3278
      %v3280 = vsel %vm2125, %v3179, %v3279
      %v3281 = vsel %vm2128, %v3181, %v3280
      %v3282 = vrot.slane %v3265, 1
      %v3283 = vsel %vm2131, %v3282, %v3281
      %v3284 = vpack.c.b16 %v3283, %v3274
      %v3293 = vunpack.c.l.b16 %v3256
      %v3294 = vunpack.c.l.b16 %v3257
      %v3295 = vunpack.c.l.b16 %v3258
      %v3296 = vunpack.c.l.b16 %v3259
      %v3297 = vunpack.c.l.b16 %v3260
      %v3298 = vunpack.c.l.b16 %v3261
      %v3299 = vunpack.c.l.b16 %v3262
      %v3300 = vunpack.c.l.b16 %v3263
      %v3301 = vpack.c.b16 %v3294, %v3293
      %v3302 = vpack.c.b16 %v3296, %v3295
      %v3303 = vpack.c.b16 %v3298, %v3297
      %v3304 = vpack.c.b16 %v3300, %v3299
      %v3310 = vsel %vm1687, %v3284, 0
      %3312 = vmatprep.subr.bf16.mxu0 0
      %3313 = vmatpush1.bf16.msra.mxu0 %v3301
      %3314 = vmatprep.subr.bf16.mxu0 0
      %3315 = vmatpush1.bf16.msra.mxu0 %v3302
      %3316 = vmatprep.subr.bf16.mxu0 0
      %3317 = vmatpush1.bf16.msra.mxu0 %v3303
      %3318 = vmatprep.subr.bf16.mxu0 0
      %3319 = vmatpush1.bf16.msra.mxu0 %v3304
      %3320 = vmatprep.subr.bf16.mxu0 0
      %3321 = vmatpush1.bf16.msra.mxu0 0
      %3322 = vmatprep.subr.bf16.mxu0 0
      %3323 = vmatpush1.bf16.msra.mxu0 0
      %3324 = vmatprep.subr.bf16.mxu0 0
      %3325 = vmatpush1.bf16.msra.mxu0 0
      %3326 = vmatprep.subr.bf16.mxu0 0
      %3327 = vmatpush1.bf16.msra.mxu0 0
      %3328 = vmatprep.subr.bf16.mxu0 0
      %3329 = vmatpush1.bf16.msra.mxu0 0
      %3330 = vmatprep.subr.bf16.mxu0 0
      %3331 = vmatpush1.bf16.msra.mxu0 0
      %3332 = vmatprep.subr.bf16.mxu0 0
      %3333 = vmatpush1.bf16.msra.mxu0 0
      %3334 = vmatprep.subr.bf16.mxu0 0
      %3335 = vmatpush1.bf16.msra.mxu0 0
      %3336 = vmatprep.subr.bf16.mxu0 0
      %3337 = vmatpush1.bf16.msra.mxu0 0
      %3338 = vmatprep.subr.bf16.mxu0 0
      %3339 = vmatpush1.bf16.msra.mxu0 0
      %3340 = vmatprep.subr.bf16.mxu0 0
      %3341 = vmatpush1.bf16.msra.mxu0 0
      %3342 = vmatprep.subr.bf16.mxu0 0
      %3343 = vmatpush1.bf16.msra.mxu0 0
      %3344 = vmatprep.mubr.bf16.mxu0 0
      %3345 = vmatmul.mubr.bf16.gmra.mrb[0].mxu0 %v3310
      %v3346 = vpop.f32.mrb[0].mxu0
      %v3347 = vadd.f32 0.0, %v3346
      %v3348 = vpop.f32.mrb[0].mxu0
      %v3349 = vpop.f32.mrb[0].mxu0
      %v3350 = vadd.f32 0.0, %v3349
      %v3351 = vpop.f32.mrb[0].mxu0
      %3352 = vdwg.mxu0
      %v3353 = vadd.f32 %v3252, %v3347
      %v3354 = vadd.f32 %v3253, %v3350
      %s3355 = scalar_lea.vmem %s5, 352
      %v3356 = vld [vmem:[%s3355] sm:$0xf]
      %v3357 = vld [vmem:[%s3355 + $0x4] sm:$0xf]
      %v3358 = vld [vmem:[%s3355 + $0x8] sm:$0xf]
      %v3359 = vld [vmem:[%s3355 + $0xc] sm:$0xf]
      %v3360 = vld [vmem:[%s3355 + $0x10] sm:$0xf]
      %v3361 = vld [vmem:[%s3355 + $0x14] sm:$0xf]
      %v3362 = vld [vmem:[%s3355 + $0x18] sm:$0xf]
      %v3363 = vld [vmem:[%s3355 + $0x1c] sm:$0xf]
      %v3364 = vrot.slane %v2101, 1
      %v3365 = vsel %vm2113, %v2102, %v3364
      %v3366 = vrot.slane %v2103, 7
      %v3367 = vsel %vm2116, %v3366, %v3365
      %v3368 = vrot.slane %v2344, 6
      %v3369 = vsel %vm2119, %v3368, %v3367
      %v3370 = vrot.slane %v2105, 5
      %v3371 = vsel %vm2122, %v3370, %v3369
      %v3372 = vrot.slane %v2106, 4
      %v3373 = vsel %vm2125, %v3372, %v3371
      %v3374 = vrot.slane %v2107, 3
      %v3375 = vsel %vm2128, %v3374, %v3373
      %v3376 = vrot.slane %v2345, 2
      %v3377 = vsel %vm2131, %v3376, %v3375
      %v3378 = vrot.slane %v2109, 1
      %v3379 = vsel %vm2113, %v2110, %v3378
      %v3380 = vrot.slane %v2111, 7
      %v3381 = vsel %vm2116, %v3380, %v3379
      %v3382 = vrot.slane %v2346, 6
      %v3383 = vsel %vm2119, %v3382, %v3381
      %v3384 = vrot.slane %v3044, 5
      %v3385 = vsel %vm2122, %v3384, %v3383
      %v3386 = vrot.slane %v3045, 4
      %v3387 = vsel %vm2125, %v3386, %v3385
      %v3388 = vrot.slane %v3046, 3
      %v3389 = vsel %vm2128, %v3388, %v3387
      %v3390 = vrot.slane %v3265, 2
      %v3391 = vsel %vm2131, %v3390, %v3389
      %v3392 = vpack.c.b16 %v3391, %v3377
      %v3401 = vunpack.c.l.b16 %v3356
      %v3402 = vunpack.c.l.b16 %v3357
      %v3403 = vunpack.c.l.b16 %v3358
      %v3404 = vunpack.c.l.b16 %v3359
      %v3405 = vunpack.c.l.b16 %v3360
      %v3406 = vunpack.c.l.b16 %v3361
      %v3407 = vunpack.c.l.b16 %v3362
      %v3408 = vunpack.c.l.b16 %v3363
      %v3409 = vpack.c.b16 %v3402, %v3401
      %v3410 = vpack.c.b16 %v3404, %v3403
      %v3411 = vpack.c.b16 %v3406, %v3405
      %v3412 = vpack.c.b16 %v3408, %v3407
      %v3418 = vsel %vm1687, %v3392, 0
      %3420 = vmatprep.subr.bf16.mxu0 0
      %3421 = vmatpush1.bf16.msra.mxu0 %v3409
      %3422 = vmatprep.subr.bf16.mxu0 0
      %3423 = vmatpush1.bf16.msra.mxu0 %v3410
      %3424 = vmatprep.subr.bf16.mxu0 0
      %3425 = vmatpush1.bf16.msra.mxu0 %v3411
      %3426 = vmatprep.subr.bf16.mxu0 0
      %3427 = vmatpush1.bf16.msra.mxu0 %v3412
      %3428 = vmatprep.subr.bf16.mxu0 0
      %3429 = vmatpush1.bf16.msra.mxu0 0
      %3430 = vmatprep.subr.bf16.mxu0 0
      %3431 = vmatpush1.bf16.msra.mxu0 0
      %3432 = vmatprep.subr.bf16.mxu0 0
      %3433 = vmatpush1.bf16.msra.mxu0 0
      %3434 = vmatprep.subr.bf16.mxu0 0
      %3435 = vmatpush1.bf16.msra.mxu0 0
      %3436 = vmatprep.subr.bf16.mxu0 0
      %3437 = vmatpush1.bf16.msra.mxu0 0
      %3438 = vmatprep.subr.bf16.mxu0 0
      %3439 = vmatpush1.bf16.msra.mxu0 0
      %3440 = vmatprep.subr.bf16.mxu0 0
      %3441 = vmatpush1.bf16.msra.mxu0 0
      %3442 = vmatprep.subr.bf16.mxu0 0
      %3443 = vmatpush1.bf16.msra.mxu0 0
      %3444 = vmatprep.subr.bf16.mxu0 0
      %3445 = vmatpush1.bf16.msra.mxu0 0
      %3446 = vmatprep.subr.bf16.mxu0 0
      %3447 = vmatpush1.bf16.msra.mxu0 0
      %3448 = vmatprep.subr.bf16.mxu0 0
      %3449 = vmatpush1.bf16.msra.mxu0 0
      %3450 = vmatprep.subr.bf16.mxu0 0
      %3451 = vmatpush1.bf16.msra.mxu0 0
      %3452 = vmatprep.mubr.bf16.mxu0 0
      %3453 = vmatmul.mubr.bf16.gmra.mrb[0].mxu0 %v3418
      %v3454 = vpop.f32.mrb[0].mxu0
      %v3455 = vadd.f32 0.0, %v3454
      %v3456 = vpop.f32.mrb[0].mxu0
      %v3457 = vpop.f32.mrb[0].mxu0
      %v3458 = vadd.f32 0.0, %v3457
      %v3459 = vpop.f32.mrb[0].mxu0
      %3460 = vdwg.mxu0
      %v3461 = vadd.f32 %v3353, %v3455
      %v3462 = vadd.f32 %v3354, %v3458
      %v3463 = vpack.c.bf16 %v1989, %v1989
      %v3464 = vpack.c.bf16 %v1997, %v1997
      %v3465 = vpack.c.bf16 %v1996, %v1996
      %v3466 = vpack.c.bf16 %v1998, %v1998
      %s3467 = scalar_lea.vmem %s5, 384
      %v3468 = vld [vmem:[%s3467] sm:$0xf]
      %v3469 = vld [vmem:[%s3467 + $0x4] sm:$0xf]
      %v3470 = vld [vmem:[%s3467 + $0x8] sm:$0xf]
      %v3471 = vld [vmem:[%s3467 + $0xc] sm:$0xf]
      %v3472 = vld [vmem:[%s3467 + $0x10] sm:$0xf]
      %v3473 = vld [vmem:[%s3467 + $0x14] sm:$0xf]
      %v3474 = vld [vmem:[%s3467 + $0x18] sm:$0xf]
      %v3475 = vld [vmem:[%s3467 + $0x1c] sm:$0xf]
      %v3480 = vunpack.c.l.b16 %v3463
      %v3481 = vunpack.c.l.b16 %v3464
      %v3482 = vunpack.c.l.b16 %v3465
      %v3483 = vunpack.c.l.b16 %v3466
      %v3484 = vrot.slane %v2590, 7
      %v3485 = vsel %vm2113, %v3484, %v2589
      %v3486 = vrot.slane %v2591, 6
      %v3487 = vsel %vm2116, %v3486, %v3485
      %v3488 = vrot.slane %v2592, 5
      %v3489 = vsel %vm2119, %v3488, %v3487
      %v3490 = vrot.slane %v2593, 4
      %v3491 = vsel %vm2122, %v3490, %v3489
      %v3492 = vrot.slane %v2594, 3
      %v3493 = vsel %vm2125, %v3492, %v3491
      %v3494 = vrot.slane %v2595, 2
      %v3495 = vsel %vm2128, %v3494, %v3493
      %v3496 = vrot.slane %v2596, 1
      %v3497 = vsel %vm2131, %v3496, %v3495
      %v3498 = vrot.slane %v2598, 7
      %v3499 = vsel %vm2113, %v3498, %v2597
      %v3500 = vrot.slane %v2599, 6
      %v3501 = vsel %vm2116, %v3500, %v3499
      %v3502 = vrot.slane %v2600, 5
      %v3503 = vsel %vm2119, %v3502, %v3501
      %v3504 = vrot.slane %v3480, 4
      %v3505 = vsel %vm2122, %v3504, %v3503
      %v3506 = vrot.slane %v3481, 3
      %v3507 = vsel %vm2125, %v3506, %v3505
      %v3508 = vrot.slane %v3482, 2
      %v3509 = vsel %vm2128, %v3508, %v3507
      %v3510 = vrot.slane %v3483, 1
      %v3511 = vsel %vm2131, %v3510, %v3509
      %v3512 = vpack.c.b16 %v3511, %v3497
      %v3521 = vunpack.c.l.b16 %v3468
      %v3522 = vunpack.c.l.b16 %v3469
      %v3523 = vunpack.c.l.b16 %v3470
      %v3524 = vunpack.c.l.b16 %v3471
      %v3525 = vunpack.c.l.b16 %v3472
      %v3526 = vunpack.c.l.b16 %v3473
      %v3527 = vunpack.c.l.b16 %v3474
      %v3528 = vunpack.c.l.b16 %v3475
      %v3529 = vpack.c.b16 %v3522, %v3521
      %v3530 = vpack.c.b16 %v3524, %v3523
      %v3531 = vpack.c.b16 %v3526, %v3525
      %v3532 = vpack.c.b16 %v3528, %v3527
      %v3538 = vsel %vm1687, %v3512, 0
      %3540 = vmatprep.subr.bf16.mxu0 0
      %3541 = vmatpush1.bf16.msra.mxu0 %v3529
      %3542 = vmatprep.subr.bf16.mxu0 0
      %3543 = vmatpush1.bf16.msra.mxu0 %v3530
      %3544 = vmatprep.subr.bf16.mxu0 0
      %3545 = vmatpush1.bf16.msra.mxu0 %v3531
      %3546 = vmatprep.subr.bf16.mxu0 0
      %3547 = vmatpush1.bf16.msra.mxu0 %v3532
      %3548 = vmatprep.subr.bf16.mxu0 0
      %3549 = vmatpush1.bf16.msra.mxu0 0
      %3550 = vmatprep.subr.bf16.mxu0 0
      %3551 = vmatpush1.bf16.msra.mxu0 0
      %3552 = vmatprep.subr.bf16.mxu0 0
      %3553 = vmatpush1.bf16.msra.mxu0 0
      %3554 = vmatprep.subr.bf16.mxu0 0
      %3555 = vmatpush1.bf16.msra.mxu0 0
      %3556 = vmatprep.subr.bf16.mxu0 0
      %3557 = vmatpush1.bf16.msra.mxu0 0
      %3558 = vmatprep.subr.bf16.mxu0 0
      %3559 = vmatpush1.bf16.msra.mxu0 0
      %3560 = vmatprep.subr.bf16.mxu0 0
      %3561 = vmatpush1.bf16.msra.mxu0 0
      %3562 = vmatprep.subr.bf16.mxu0 0
      %3563 = vmatpush1.bf16.msra.mxu0 0
      %3564 = vmatprep.subr.bf16.mxu0 0
      %3565 = vmatpush1.bf16.msra.mxu0 0
      %3566 = vmatprep.subr.bf16.mxu0 0
      %3567 = vmatpush1.bf16.msra.mxu0 0
      %3568 = vmatprep.subr.bf16.mxu0 0
      %3569 = vmatpush1.bf16.msra.mxu0 0
      %3570 = vmatprep.subr.bf16.mxu0 0
      %3571 = vmatpush1.bf16.msra.mxu0 0
      %3572 = vmatprep.mubr.bf16.mxu0 0
      %3573 = vmatmul.mubr.bf16.gmra.mrb[0].mxu0 %v3538
      %v3574 = vpop.f32.mrb[0].mxu0
      %v3575 = vadd.f32 0.0, %v3574
      %v3576 = vpop.f32.mrb[0].mxu0
      %v3577 = vpop.f32.mrb[0].mxu0
      %v3578 = vadd.f32 0.0, %v3577
      %v3579 = vpop.f32.mrb[0].mxu0
      %3580 = vdwg.mxu0
      %v3581 = vadd.f32 %v3461, %v3575
      %v3582 = vadd.f32 %v3462, %v3578
      %s3583 = scalar_lea.vmem %s5, 416
      %v3584 = vld [vmem:[%s3583] sm:$0xf]
      %v3585 = vld [vmem:[%s3583 + $0x4] sm:$0xf]
      %v3586 = vld [vmem:[%s3583 + $0x8] sm:$0xf]
      %v3587 = vld [vmem:[%s3583 + $0xc] sm:$0xf]
      %v3588 = vld [vmem:[%s3583 + $0x10] sm:$0xf]
      %v3589 = vld [vmem:[%s3583 + $0x14] sm:$0xf]
      %v3590 = vld [vmem:[%s3583 + $0x18] sm:$0xf]
      %v3591 = vld [vmem:[%s3583 + $0x1c] sm:$0xf]
      %v3592 = vrot.slane %v2589, 1
      %v3593 = vsel %vm2113, %v2590, %v3592
      %v3594 = vrot.slane %v2591, 7
      %v3595 = vsel %vm2116, %v3594, %v3593
      %v3596 = vrot.slane %v2592, 6
      %v3597 = vsel %vm2119, %v3596, %v3595
      %v3598 = vrot.slane %v2593, 5
      %v3599 = vsel %vm2122, %v3598, %v3597
      %v3600 = vrot.slane %v2594, 4
      %v3601 = vsel %vm2125, %v3600, %v3599
      %v3602 = vrot.slane %v2595, 3
      %v3603 = vsel %vm2128, %v3602, %v3601
      %v3604 = vrot.slane %v2596, 2
      %v3605 = vsel %vm2131, %v3604, %v3603
      %v3606 = vrot.slane %v2597, 1
      %v3607 = vsel %vm2113, %v2598, %v3606
      %v3608 = vrot.slane %v2599, 7
      %v3609 = vsel %vm2116, %v3608, %v3607
      %v3610 = vrot.slane %v2600, 6
      %v3611 = vsel %vm2119, %v3610, %v3609
      %v3612 = vrot.slane %v3480, 5
      %v3613 = vsel %vm2122, %v3612, %v3611
      %v3614 = vrot.slane %v3481, 4
      %v3615 = vsel %vm2125, %v3614, %v3613
      %v3616 = vrot.slane %v3482, 3
      %v3617 = vsel %vm2128, %v3616, %v3615
      %v3618 = vrot.slane %v3483, 2
      %v3619 = vsel %vm2131, %v3618, %v3617
      %v3620 = vpack.c.b16 %v3619, %v3605
      %v3629 = vunpack.c.l.b16 %v3584
      %v3630 = vunpack.c.l.b16 %v3585
      %v3631 = vunpack.c.l.b16 %v3586
      %v3632 = vunpack.c.l.b16 %v3587
      %v3633 = vunpack.c.l.b16 %v3588
      %v3634 = vunpack.c.l.b16 %v3589
      %v3635 = vunpack.c.l.b16 %v3590
      %v3636 = vunpack.c.l.b16 %v3591
      %v3637 = vpack.c.b16 %v3630, %v3629
      %v3638 = vpack.c.b16 %v3632, %v3631
      %v3639 = vpack.c.b16 %v3634, %v3633
      %v3640 = vpack.c.b16 %v3636, %v3635
      %v3646 = vsel %vm1687, %v3620, 0
      %3648 = vmatprep.subr.bf16.mxu0 0
      %3649 = vmatpush1.bf16.msra.mxu0 %v3637
      %3650 = vmatprep.subr.bf16.mxu0 0
      %3651 = vmatpush1.bf16.msra.mxu0 %v3638
      %3652 = vmatprep.subr.bf16.mxu0 0
      %3653 = vmatpush1.bf16.msra.mxu0 %v3639
      %3654 = vmatprep.subr.bf16.mxu0 0
      %3655 = vmatpush1.bf16.msra.mxu0 %v3640
      %3656 = vmatprep.subr.bf16.mxu0 0
      %3657 = vmatpush1.bf16.msra.mxu0 0
      %3658 = vmatprep.subr.bf16.mxu0 0
      %3659 = vmatpush1.bf16.msra.mxu0 0
      %3660 = vmatprep.subr.bf16.mxu0 0
      %3661 = vmatpush1.bf16.msra.mxu0 0
      %3662 = vmatprep.subr.bf16.mxu0 0
      %3663 = vmatpush1.bf16.msra.mxu0 0
      %3664 = vmatprep.subr.bf16.mxu0 0
      %3665 = vmatpush1.bf16.msra.mxu0 0
      %3666 = vmatprep.subr.bf16.mxu0 0
      %3667 = vmatpush1.bf16.msra.mxu0 0
      %3668 = vmatprep.subr.bf16.mxu0 0
      %3669 = vmatpush1.bf16.msra.mxu0 0
      %3670 = vmatprep.subr.bf16.mxu0 0
      %3671 = vmatpush1.bf16.msra.mxu0 0
      %3672 = vmatprep.subr.bf16.mxu0 0
      %3673 = vmatpush1.bf16.msra.mxu0 0
      %3674 = vmatprep.subr.bf16.mxu0 0
      %3675 = vmatpush1.bf16.msra.mxu0 0
      %3676 = vmatprep.subr.bf16.mxu0 0
      %3677 = vmatpush1.bf16.msra.mxu0 0
      %3678 = vmatprep.subr.bf16.mxu0 0
      %3679 = vmatpush1.bf16.msra.mxu0 0
      %3680 = vmatprep.mubr.bf16.mxu0 0
      %3681 = vmatmul.mubr.bf16.gmra.mrb[0].mxu0 %v3646
      %v3682 = vpop.f32.mrb[0].mxu0
      %v3683 = vadd.f32 0.0, %v3682
      %v3684 = vpop.f32.mrb[0].mxu0
      %v3685 = vpop.f32.mrb[0].mxu0
      %v3686 = vadd.f32 0.0, %v3685
      %v3687 = vpop.f32.mrb[0].mxu0
      %3688 = vdwg.mxu0
      %v3689 = vadd.f32 %v3581, %v3683
      %v3690 = vadd.f32 %v3582, %v3686
      %v3691 = vpack.c.bf16 %v2005, %v2005
      %s3692 = scalar_lea.vmem %s5, 448
      %v3693 = vld [vmem:[%s3692] sm:$0xf]
      %v3694 = vld [vmem:[%s3692 + $0x4] sm:$0xf]
      %v3695 = vld [vmem:[%s3692 + $0x8] sm:$0xf]
      %v3696 = vld [vmem:[%s3692 + $0xc] sm:$0xf]
      %v3697 = vld [vmem:[%s3692 + $0x10] sm:$0xf]
      %v3698 = vld [vmem:[%s3692 + $0x14] sm:$0xf]
      %v3699 = vld [vmem:[%s3692 + $0x18] sm:$0xf]
      %v3700 = vld [vmem:[%s3692 + $0x1c] sm:$0xf]
      %v3702 = vunpack.c.l.b16 %v3691
      %v3703 = vsel %vm2113, %v3594, %v2590
      %v3704 = vsel %vm2116, %v3596, %v3703
      %v3705 = vrot.slane %v2826, 5
      %v3706 = vsel %vm2119, %v3705, %v3704
      %v3707 = vsel %vm2122, %v3600, %v3706
      %v3708 = vsel %vm2125, %v3602, %v3707
      %v3709 = vsel %vm2128, %v3604, %v3708
      %v3710 = vrot.slane %v2827, 1
      %v3711 = vsel %vm2131, %v3710, %v3709
      %v3712 = vsel %vm2113, %v3608, %v2598
      %v3713 = vsel %vm2116, %v3610, %v3712
      %v3714 = vrot.slane %v2828, 5
      %v3715 = vsel %vm2119, %v3714, %v3713
      %v3716 = vsel %vm2122, %v3614, %v3715
      %v3717 = vsel %vm2125, %v3616, %v3716
      %v3718 = vsel %vm2128, %v3618, %v3717
      %v3719 = vrot.slane %v3702, 1
      %v3720 = vsel %vm2131, %v3719, %v3718
      %v3721 = vpack.c.b16 %v3720, %v3711
      %v3730 = vunpack.c.l.b16 %v3693
      %v3731 = vunpack.c.l.b16 %v3694
      %v3732 = vunpack.c.l.b16 %v3695
      %v3733 = vunpack.c.l.b16 %v3696
      %v3734 = vunpack.c.l.b16 %v3697
      %v3735 = vunpack.c.l.b16 %v3698
      %v3736 = vunpack.c.l.b16 %v3699
      %v3737 = vunpack.c.l.b16 %v3700
      %v3738 = vpack.c.b16 %v3731, %v3730
      %v3739 = vpack.c.b16 %v3733, %v3732
      %v3740 = vpack.c.b16 %v3735, %v3734
      %v3741 = vpack.c.b16 %v3737, %v3736
      %v3747 = vsel %vm1687, %v3721, 0
      %3749 = vmatprep.subr.bf16.mxu0 0
      %3750 = vmatpush1.bf16.msra.mxu0 %v3738
      %3751 = vmatprep.subr.bf16.mxu0 0
      %3752 = vmatpush1.bf16.msra.mxu0 %v3739
      %3753 = vmatprep.subr.bf16.mxu0 0
      %3754 = vmatpush1.bf16.msra.mxu0 %v3740
      %3755 = vmatprep.subr.bf16.mxu0 0
      %3756 = vmatpush1.bf16.msra.mxu0 %v3741
      %3757 = vmatprep.subr.bf16.mxu0 0
      %3758 = vmatpush1.bf16.msra.mxu0 0
      %3759 = vmatprep.subr.bf16.mxu0 0
      %3760 = vmatpush1.bf16.msra.mxu0 0
      %3761 = vmatprep.subr.bf16.mxu0 0
      %3762 = vmatpush1.bf16.msra.mxu0 0
      %3763 = vmatprep.subr.bf16.mxu0 0
      %3764 = vmatpush1.bf16.msra.mxu0 0
      %3765 = vmatprep.subr.bf16.mxu0 0
      %3766 = vmatpush1.bf16.msra.mxu0 0
      %3767 = vmatprep.subr.bf16.mxu0 0
      %3768 = vmatpush1.bf16.msra.mxu0 0
      %3769 = vmatprep.subr.bf16.mxu0 0
      %3770 = vmatpush1.bf16.msra.mxu0 0
      %3771 = vmatprep.subr.bf16.mxu0 0
      %3772 = vmatpush1.bf16.msra.mxu0 0
      %3773 = vmatprep.subr.bf16.mxu0 0
      %3774 = vmatpush1.bf16.msra.mxu0 0
      %3775 = vmatprep.subr.bf16.mxu0 0
      %3776 = vmatpush1.bf16.msra.mxu0 0
      %3777 = vmatprep.subr.bf16.mxu0 0
      %3778 = vmatpush1.bf16.msra.mxu0 0
      %3779 = vmatprep.subr.bf16.mxu0 0
      %3780 = vmatpush1.bf16.msra.mxu0 0
      %3781 = vmatprep.mubr.bf16.mxu0 0
      %3782 = vmatmul.mubr.bf16.gmra.mrb[0].mxu0 %v3747
      %v3783 = vpop.f32.mrb[0].mxu0
      %v3784 = vadd.f32 0.0, %v3783
      %v3785 = vpop.f32.mrb[0].mxu0
      %v3786 = vpop.f32.mrb[0].mxu0
      %v3787 = vadd.f32 0.0, %v3786
      %v3788 = vpop.f32.mrb[0].mxu0
      %3789 = vdwg.mxu0
      %v3790 = vadd.f32 %v3689, %v3784
      %v3791 = vadd.f32 %v3690, %v3787
      %s3792 = scalar_lea.vmem %s5, 480
      %v3793 = vld [vmem:[%s3792] sm:$0xf]
      %v3794 = vld [vmem:[%s3792 + $0x4] sm:$0xf]
      %v3795 = vld [vmem:[%s3792 + $0x8] sm:$0xf]
      %v3796 = vld [vmem:[%s3792 + $0xc] sm:$0xf]
      %v3797 = vld [vmem:[%s3792 + $0x10] sm:$0xf]
      %v3798 = vld [vmem:[%s3792 + $0x14] sm:$0xf]
      %v3799 = vld [vmem:[%s3792 + $0x18] sm:$0xf]
      %v3800 = vld [vmem:[%s3792 + $0x1c] sm:$0xf]
      %v3801 = vrot.slane %v2590, 1
      %v3802 = vsel %vm2113, %v2591, %v3801
      %v3803 = vrot.slane %v2592, 7
      %v3804 = vsel %vm2116, %v3803, %v3802
      %v3805 = vrot.slane %v2826, 6
      %v3806 = vsel %vm2119, %v3805, %v3804
      %v3807 = vrot.slane %v2594, 5
      %v3808 = vsel %vm2122, %v3807, %v3806
      %v3809 = vrot.slane %v2595, 4
      %v3810 = vsel %vm2125, %v3809, %v3808
      %v3811 = vrot.slane %v2596, 3
      %v3812 = vsel %vm2128, %v3811, %v3810
      %v3813 = vrot.slane %v2827, 2
      %v3814 = vsel %vm2131, %v3813, %v3812
      %v3815 = vrot.slane %v2598, 1
      %v3816 = vsel %vm2113, %v2599, %v3815
      %v3817 = vrot.slane %v2600, 7
      %v3818 = vsel %vm2116, %v3817, %v3816
      %v3819 = vrot.slane %v2828, 6
      %v3820 = vsel %vm2119, %v3819, %v3818
      %v3821 = vrot.slane %v3481, 5
      %v3822 = vsel %vm2122, %v3821, %v3820
      %v3823 = vrot.slane %v3482, 4
      %v3824 = vsel %vm2125, %v3823, %v3822
      %v3825 = vrot.slane %v3483, 3
      %v3826 = vsel %vm2128, %v3825, %v3824
      %v3827 = vrot.slane %v3702, 2
      %v3828 = vsel %vm2131, %v3827, %v3826
      %v3829 = vpack.c.b16 %v3828, %v3814
      %v3838 = vunpack.c.l.b16 %v3793
      %v3839 = vunpack.c.l.b16 %v3794
      %v3840 = vunpack.c.l.b16 %v3795
      %v3841 = vunpack.c.l.b16 %v3796
      %v3842 = vunpack.c.l.b16 %v3797
      %v3843 = vunpack.c.l.b16 %v3798
      %v3844 = vunpack.c.l.b16 %v3799
      %v3845 = vunpack.c.l.b16 %v3800
      %v3846 = vpack.c.b16 %v3839, %v3838
      %v3847 = vpack.c.b16 %v3841, %v3840
      %v3848 = vpack.c.b16 %v3843, %v3842
      %v3849 = vpack.c.b16 %v3845, %v3844
      %v3855 = vsel %vm1687, %v3829, 0
      %3857 = vmatprep.subr.bf16.mxu0 0
      %3858 = vmatpush1.bf16.msra.mxu0 %v3846
      %3859 = vmatprep.subr.bf16.mxu0 0
      %3860 = vmatpush1.bf16.msra.mxu0 %v3847
      %3861 = vmatprep.subr.bf16.mxu0 0
      %3862 = vmatpush1.bf16.msra.mxu0 %v3848
      %3863 = vmatprep.subr.bf16.mxu0 0
      %3864 = vmatpush1.bf16.msra.mxu0 %v3849
      %3865 = vmatprep.subr.bf16.mxu0 0
      %3866 = vmatpush1.bf16.msra.mxu0 0
      %3867 = vmatprep.subr.bf16.mxu0 0
      %3868 = vmatpush1.bf16.msra.mxu0 0
      %3869 = vmatprep.subr.bf16.mxu0 0
      %3870 = vmatpush1.bf16.msra.mxu0 0
      %3871 = vmatprep.subr.bf16.mxu0 0
      %3872 = vmatpush1.bf16.msra.mxu0 0
      %3873 = vmatprep.subr.bf16.mxu0 0
      %3874 = vmatpush1.bf16.msra.mxu0 0
      %3875 = vmatprep.subr.bf16.mxu0 0
      %3876 = vmatpush1.bf16.msra.mxu0 0
      %3877 = vmatprep.subr.bf16.mxu0 0
      %3878 = vmatpush1.bf16.msra.mxu0 0
      %3879 = vmatprep.subr.bf16.mxu0 0
      %3880 = vmatpush1.bf16.msra.mxu0 0
      %3881 = vmatprep.subr.bf16.mxu0 0
      %3882 = vmatpush1.bf16.msra.mxu0 0
      %3883 = vmatprep.subr.bf16.mxu0 0
      %3884 = vmatpush1.bf16.msra.mxu0 0
      %3885 = vmatprep.subr.bf16.mxu0 0
      %3886 = vmatpush1.bf16.msra.mxu0 0
      %3887 = vmatprep.subr.bf16.mxu0 0
      %3888 = vmatpush1.bf16.msra.mxu0 0
      %3889 = vmatprep.mubr.bf16.mxu0 0
      %3890 = vmatmul.mubr.bf16.gmra.mrb[0].mxu0 %v3855
      %v3891 = vpop.f32.mrb[0].mxu0
      %v3892 = vadd.f32 0.0, %v3891
      %v3893 = vpop.f32.mrb[0].mxu0
      %v3894 = vpop.f32.mrb[0].mxu0
      %v3895 = vadd.f32 0.0, %v3894
      %v3896 = vpop.f32.mrb[0].mxu0
      %3897 = vdwg.mxu0
      %v3898 = vadd.f32 %v3790, %v3892
      %v3899 = vadd.f32 %v3791, %v3895
      %v3900 = vmax.f32 %v3898, 0.0
      %v3901 = vmax.f32 %v3899, 0.0
      %v3904 = vcombine.high %v3900, %v3900
      %v3905 = vcombine.high %v3901, %v3901
      %vm3908 = vcmask 521216
      %3909 = vst.msk [vmem:[#allocation4] sm:$0x3f] %vm3908, 0.0
      %3910 = vst.msk [vmem:[#allocation4 + $0x8] sm:$0x3f] %vm3908, 0.0
      %3911 = vst.msk [vmem:[#allocation4 + $0x10] sm:$0x3f] %vm3908, 0.0
      %3912 = vst.msk [vmem:[#allocation4 + $0x18] sm:$0x3f] %vm3908, 0.0
      %3913 = vst.msk [vmem:[#allocation4 + $0x20] sm:$0x3f] %vm3908, 0.0
      %3914 = vst.msk [vmem:[#allocation4 + $0x28] sm:$0x3f] %vm3908, 0.0
      %s3915 = scalar_lea.vmem [#allocation4], 8
      %vm3916 = vcmask 519168
      %3917 = vst.msk [vmem:[%s3915 + $0x1] sm:$0xf] %vm3916, %v3900
      %3918 = vst.msk [vmem:[%s3915 + $0x9] sm:$0xf] %vm3916, %v3904
      %3919 = vst.msk [vmem:[%s3915 + $0x11] sm:$0xf] %vm3916, %v3901
      %3920 = vst.msk [vmem:[%s3915 + $0x19] sm:$0xf] %vm3916, %v3905
      %v3921 = vld [vmem:[%s8] sm:$0x1]
      %v3923 = vlaneseq
      %v3924 = vshrl.u32 %v3923, 7
      %v3925 = vsub.s32 0, %v3924
      %v3926 = vrot.slane %v3921, %v3925
      %v3928 = vadd.f32 %v3926, 0.0
      %v3929 = vld [vmem:[#allocation4] sm:$0x3f]
      %v3930 = vld [vmem:[#allocation4 + $0x8] sm:$0x3f]
      %v3931 = vld [vmem:[#allocation4 + $0x10] sm:$0x3f]
      %v3932 = vld [vmem:[#allocation4 + $0x18] sm:$0x3f]
      %v3933 = vld [vmem:[#allocation4 + $0x20] sm:$0x3f]
      %v3934 = vld [vmem:[#allocation4 + $0x28] sm:$0x3f]
      %v3941 = vcombine.high %v3929, %v3929
      %v3943 = vunpack.c.l.s4 1983009808
      %v3944 = vunpack.c.0.s8 %v3943
      %v3945 = vlaneseq
      %v3946 = vshrl.u32 %v3945, 7
      %v3947 = vsub.s32 %v3944, %v3946
      %v3948 = vrot.slane %v3929, %v3947
      %v3950 = vunpack.c.l.s4 1983009808
      %v3951 = vunpack.c.0.s8 %v3950
      %v3952 = vlaneseq
      %v3953 = vshrl.u32 %v3952, 7
      %v3954 = vsub.s32 %v3951, %v3953
      %v3955 = vrot.slane %v3941, %v3954
      %v3956 = vcombine.high %v3948, %v3948
      %v3957 = vcombine.high %v3930, %v3930
      %v3959 = vunpack.c.l.s4 1983009808
      %v3960 = vunpack.c.0.s8 %v3959
      %v3961 = vlaneseq
      %v3962 = vshrl.u32 %v3961, 7
      %v3963 = vsub.s32 %v3960, %v3962
      %v3964 = vrot.slane %v3930, %v3963
      %v3966 = vunpack.c.l.s4 1983009808
      %v3967 = vunpack.c.0.s8 %v3966
      %v3968 = vlaneseq
      %v3969 = vshrl.u32 %v3968, 7
      %v3970 = vsub.s32 %v3967, %v3969
      %v3971 = vrot.slane %v3957, %v3970
      %v3972 = vcombine.high %v3964, %v3964
      %v3973 = vcombine.high %v3931, %v3931
      %v3975 = vunpack.c.l.s4 1983009808
      %v3976 = vunpack.c.0.s8 %v3975
      %v3977 = vlaneseq
      %v3978 = vshrl.u32 %v3977, 7
      %v3979 = vsub.s32 %v3976, %v3978
      %v3980 = vrot.slane %v3931, %v3979
      %v3982 = vunpack.c.l.s4 1983009808
      %v3983 = vunpack.c.0.s8 %v3982
      %v3984 = vlaneseq
      %v3985 = vshrl.u32 %v3984, 7
      %v3986 = vsub.s32 %v3983, %v3985
      %v3987 = vrot.slane %v3973, %v3986
      %v3988 = vcombine.high %v3980, %v3980
      %v3989 = vcombine.high %v3932, %v3932
      %v3991 = vunpack.c.l.s4 1983009808
      %v3992 = vunpack.c.0.s8 %v3991
      %v3993 = vlaneseq
      %v3994 = vshrl.u32 %v3993, 7
      %v3995 = vsub.s32 %v3992, %v3994
      %v3996 = vrot.slane %v3932, %v3995
      %v3998 = vunpack.c.l.s4 1983009808
      %v3999 = vunpack.c.0.s8 %v3998
      %v4000 = vlaneseq
      %v4001 = vshrl.u32 %v4000, 7
      %v4002 = vsub.s32 %v3999, %v4001
      %v4003 = vrot.slane %v3989, %v4002
      %v4004 = vcombine.high %v3996, %v3996
      %v4005 = vcombine.high %v3933, %v3933
      %v4007 = vunpack.c.l.s4 1983009808
      %v4008 = vunpack.c.0.s8 %v4007
      %v4009 = vlaneseq
      %v4010 = vshrl.u32 %v4009, 7
      %v4011 = vsub.s32 %v4008, %v4010
      %v4012 = vrot.slane %v3933, %v4011
      %v4014 = vunpack.c.l.s4 1983009808
      %v4015 = vunpack.c.0.s8 %v4014
      %v4016 = vlaneseq
      %v4017 = vshrl.u32 %v4016, 7
      %v4018 = vsub.s32 %v4015, %v4017
      %v4019 = vrot.slane %v4005, %v4018
      %v4020 = vcombine.high %v4012, %v4012
      %v4021 = vcombine.high %v3934, %v3934
      %v4023 = vunpack.c.l.s4 1983009808
      %v4024 = vunpack.c.0.s8 %v4023
      %v4025 = vlaneseq
      %v4026 = vshrl.u32 %v4025, 7
      %v4027 = vsub.s32 %v4024, %v4026
      %v4028 = vrot.slane %v3934, %v4027
      %v4030 = vunpack.c.l.s4 1983009808
      %v4031 = vunpack.c.0.s8 %v4030
      %v4032 = vlaneseq
      %v4033 = vshrl.u32 %v4032, 7
      %v4034 = vsub.s32 %v4031, %v4033
      %v4035 = vrot.slane %v4021, %v4034
      %v4036 = vcombine.high %v4028, %v4028
      %v4055 = vpack.c.bf16 %v3948, %v3948
      %v4056 = vpack.c.bf16 %v3956, %v3956
      %v4057 = vpack.c.bf16 %v3980, %v3980
      %v4058 = vpack.c.bf16 %v3988, %v3988
      %v4059 = vld [vmem:[%s7] sm:$0xf]
      %v4060 = vld [vmem:[%s7 + $0x4] sm:$0xf]
      %v4061 = vld [vmem:[%s7 + $0x8] sm:$0xf]
      %v4062 = vld [vmem:[%s7 + $0xc] sm:$0xf]
      %v4063 = vld [vmem:[%s7 + $0x10] sm:$0xf]
      %v4064 = vld [vmem:[%s7 + $0x14] sm:$0xf]
      %v4065 = vld [vmem:[%s7 + $0x18] sm:$0xf]
      %v4066 = vld [vmem:[%s7 + $0x1c] sm:$0xf]
      %v4071 = vunpack.c.l.b16 %v4055
      %v4072 = vunpack.c.l.b16 %v4056
      %v4073 = vunpack.c.l.b16 %v4057
      %v4074 = vunpack.c.l.b16 %v4058
      %v4075 = vrot.slane %v4072, 7
      %v4076 = vsel %vm2113, %v4075, %v4071
      %v4077 = vrot.slane %v4073, 6
      %v4078 = vsel %vm2116, %v4077, %v4076
      %v4079 = vrot.slane %v4074, 5
      %v4080 = vsel %vm2119, %v4079, %v4078
      %v4081 = vpack.c.b16 %v4080, %v4080
      %v4090 = vunpack.c.l.b16 %v4059
      %v4091 = vunpack.c.l.b16 %v4060
      %v4092 = vunpack.c.l.b16 %v4061
      %v4093 = vunpack.c.l.b16 %v4062
      %v4094 = vunpack.c.l.b16 %v4063
      %v4095 = vunpack.c.l.b16 %v4064
      %v4096 = vunpack.c.l.b16 %v4065
      %v4097 = vunpack.c.l.b16 %v4066
      %v4098 = vpack.c.b16 %v4091, %v4090
      %v4099 = vpack.c.b16 %v4093, %v4092
      %v4100 = vpack.c.b16 %v4095, %v4094
      %v4101 = vpack.c.b16 %v4097, %v4096
      %v4107 = vsel %vm1687, %v4081, 0
      %4109 = vmatprep.subr.bf16.mxu0 0
      %4110 = vmatpush1.bf16.msra.mxu0 %v4098
      %4111 = vmatprep.subr.bf16.mxu0 0
      %4112 = vmatpush1.bf16.msra.mxu0 %v4099
      %4113 = vmatprep.subr.bf16.mxu0 0
      %4114 = vmatpush1.bf16.msra.mxu0 %v4100
      %4115 = vmatprep.subr.bf16.mxu0 0
      %4116 = vmatpush1.bf16.msra.mxu0 %v4101
      %4117 = vmatprep.subr.bf16.mxu0 0
      %4118 = vmatpush1.bf16.msra.mxu0 0
      %4119 = vmatprep.subr.bf16.mxu0 0
      %4120 = vmatpush1.bf16.msra.mxu0 0
      %4121 = vmatprep.subr.bf16.mxu0 0
      %4122 = vmatpush1.bf16.msra.mxu0 0
      %4123 = vmatprep.subr.bf16.mxu0 0
      %4124 = vmatpush1.bf16.msra.mxu0 0
      %4125 = vmatprep.subr.bf16.mxu0 0
      %4126 = vmatpush1.bf16.msra.mxu0 0
      %4127 = vmatprep.subr.bf16.mxu0 0
      %4128 = vmatpush1.bf16.msra.mxu0 0
      %4129 = vmatprep.subr.bf16.mxu0 0
      %4130 = vmatpush1.bf16.msra.mxu0 0
      %4131 = vmatprep.subr.bf16.mxu0 0
      %4132 = vmatpush1.bf16.msra.mxu0 0
      %4133 = vmatprep.subr.bf16.mxu0 0
      %4134 = vmatpush1.bf16.msra.mxu0 0
      %4135 = vmatprep.subr.bf16.mxu0 0
      %4136 = vmatpush1.bf16.msra.mxu0 0
      %4137 = vmatprep.subr.bf16.mxu0 0
      %4138 = vmatpush1.bf16.msra.mxu0 0
      %4139 = vmatprep.subr.bf16.mxu0 0
      %4140 = vmatpush1.bf16.msra.mxu0 0
      %4141 = vmatprep.mubr.bf16.mxu0 0
      %4142 = vmatmul.mubr.bf16.gmra.mrb[0].mxu0 %v4107
      %v4143 = vpop.f32.mrb[0].mxu0
      %v4144 = vadd.f32 0.0, %v4143
      %v4145 = vpop.f32.mrb[0].mxu0
      %v4146 = vpop.f32.mrb[0].mxu0
      %v4147 = vpop.f32.mrb[0].mxu0
      %4148 = vdwg.mxu0
      %v4149 = vadd.f32 %v3928, %v4144
      %s4150 = scalar_lea.vmem %s7, 32
      %v4151 = vld [vmem:[%s4150] sm:$0xf]
      %v4152 = vld [vmem:[%s4150 + $0x4] sm:$0xf]
      %v4153 = vld [vmem:[%s4150 + $0x8] sm:$0xf]
      %v4154 = vld [vmem:[%s4150 + $0xc] sm:$0xf]
      %v4155 = vld [vmem:[%s4150 + $0x10] sm:$0xf]
      %v4156 = vld [vmem:[%s4150 + $0x14] sm:$0xf]
      %v4157 = vld [vmem:[%s4150 + $0x18] sm:$0xf]
      %v4158 = vld [vmem:[%s4150 + $0x1c] sm:$0xf]
      %v4159 = vrot.slane %v4071, 1
      %v4160 = vsel %vm2113, %v4072, %v4159
      %v4161 = vrot.slane %v4073, 7
      %v4162 = vsel %vm2116, %v4161, %v4160
      %v4163 = vrot.slane %v4074, 6
      %v4164 = vsel %vm2119, %v4163, %v4162
      %v4165 = vpack.c.b16 %v4164, %v4164
      %v4174 = vunpack.c.l.b16 %v4151
      %v4175 = vunpack.c.l.b16 %v4152
      %v4176 = vunpack.c.l.b16 %v4153
      %v4177 = vunpack.c.l.b16 %v4154
      %v4178 = vunpack.c.l.b16 %v4155
      %v4179 = vunpack.c.l.b16 %v4156
      %v4180 = vunpack.c.l.b16 %v4157
      %v4181 = vunpack.c.l.b16 %v4158
      %v4182 = vpack.c.b16 %v4175, %v4174
      %v4183 = vpack.c.b16 %v4177, %v4176
      %v4184 = vpack.c.b16 %v4179, %v4178
      %v4185 = vpack.c.b16 %v4181, %v4180
      %v4191 = vsel %vm1687, %v4165, 0
      %4193 = vmatprep.subr.bf16.mxu0 0
      %4194 = vmatpush1.bf16.msra.mxu0 %v4182
      %4195 = vmatprep.subr.bf16.mxu0 0
      %4196 = vmatpush1.bf16.msra.mxu0 %v4183
      %4197 = vmatprep.subr.bf16.mxu0 0
      %4198 = vmatpush1.bf16.msra.mxu0 %v4184
      %4199 = vmatprep.subr.bf16.mxu0 0
      %4200 = vmatpush1.bf16.msra.mxu0 %v4185
      %4201 = vmatprep.subr.bf16.mxu0 0
      %4202 = vmatpush1.bf16.msra.mxu0 0
      %4203 = vmatprep.subr.bf16.mxu0 0
      %4204 = vmatpush1.bf16.msra.mxu0 0
      %4205 = vmatprep.subr.bf16.mxu0 0
      %4206 = vmatpush1.bf16.msra.mxu0 0
      %4207 = vmatprep.subr.bf16.mxu0 0
      %4208 = vmatpush1.bf16.msra.mxu0 0
      %4209 = vmatprep.subr.bf16.mxu0 0
      %4210 = vmatpush1.bf16.msra.mxu0 0
      %4211 = vmatprep.subr.bf16.mxu0 0
      %4212 = vmatpush1.bf16.msra.mxu0 0
      %4213 = vmatprep.subr.bf16.mxu0 0
      %4214 = vmatpush1.bf16.msra.mxu0 0
      %4215 = vmatprep.subr.bf16.mxu0 0
      %4216 = vmatpush1.bf16.msra.mxu0 0
      %4217 = vmatprep.subr.bf16.mxu0 0
      %4218 = vmatpush1.bf16.msra.mxu0 0
      %4219 = vmatprep.subr.bf16.mxu0 0
      %4220 = vmatpush1.bf16.msra.mxu0 0
      %4221 = vmatprep.subr.bf16.mxu0 0
      %4222 = vmatpush1.bf16.msra.mxu0 0
      %4223 = vmatprep.subr.bf16.mxu0 0
      %4224 = vmatpush1.bf16.msra.mxu0 0
      %4225 = vmatprep.mubr.bf16.mxu0 0
      %4226 = vmatmul.mubr.bf16.gmra.mrb[0].mxu0 %v4191
      %v4227 = vpop.f32.mrb[0].mxu0
      %v4228 = vadd.f32 0.0, %v4227
      %v4229 = vpop.f32.mrb[0].mxu0
      %v4230 = vpop.f32.mrb[0].mxu0
      %v4231 = vpop.f32.mrb[0].mxu0
      %4232 = vdwg.mxu0
      %v4233 = vadd.f32 %v4149, %v4228
      %v4234 = vpack.c.bf16 %v3955, %v3955
      %v4235 = vpack.c.bf16 %v3987, %v3987
      %s4236 = scalar_lea.vmem %s7, 64
      %v4237 = vld [vmem:[%s4236] sm:$0xf]
      %v4238 = vld [vmem:[%s4236 + $0x4] sm:$0xf]
      %v4239 = vld [vmem:[%s4236 + $0x8] sm:$0xf]
      %v4240 = vld [vmem:[%s4236 + $0xc] sm:$0xf]
      %v4241 = vld [vmem:[%s4236 + $0x10] sm:$0xf]
      %v4242 = vld [vmem:[%s4236 + $0x14] sm:$0xf]
      %v4243 = vld [vmem:[%s4236 + $0x18] sm:$0xf]
      %v4244 = vld [vmem:[%s4236 + $0x1c] sm:$0xf]
      %v4247 = vunpack.c.l.b16 %v4234
      %v4248 = vunpack.c.l.b16 %v4235
      %v4249 = vrot.slane %v4247, 7
      %v4250 = vsel %vm2113, %v4249, %v4072
      %v4251 = vsel %vm2116, %v4163, %v4250
      %v4252 = vrot.slane %v4248, 5
      %v4253 = vsel %vm2119, %v4252, %v4251
      %v4254 = vpack.c.b16 %v4253, %v4253
      %v4263 = vunpack.c.l.b16 %v4237
      %v4264 = vunpack.c.l.b16 %v4238
      %v4265 = vunpack.c.l.b16 %v4239
      %v4266 = vunpack.c.l.b16 %v4240
      %v4267 = vunpack.c.l.b16 %v4241
      %v4268 = vunpack.c.l.b16 %v4242
      %v4269 = vunpack.c.l.b16 %v4243
      %v4270 = vunpack.c.l.b16 %v4244
      %v4271 = vpack.c.b16 %v4264, %v4263
      %v4272 = vpack.c.b16 %v4266, %v4265
      %v4273 = vpack.c.b16 %v4268, %v4267
      %v4274 = vpack.c.b16 %v4270, %v4269
      %v4280 = vsel %vm1687, %v4254, 0
      %4282 = vmatprep.subr.bf16.mxu0 0
      %4283 = vmatpush1.bf16.msra.mxu0 %v4271
      %4284 = vmatprep.subr.bf16.mxu0 0
      %4285 = vmatpush1.bf16.msra.mxu0 %v4272
      %4286 = vmatprep.subr.bf16.mxu0 0
      %4287 = vmatpush1.bf16.msra.mxu0 %v4273
      %4288 = vmatprep.subr.bf16.mxu0 0
      %4289 = vmatpush1.bf16.msra.mxu0 %v4274
      %4290 = vmatprep.subr.bf16.mxu0 0
      %4291 = vmatpush1.bf16.msra.mxu0 0
      %4292 = vmatprep.subr.bf16.mxu0 0
      %4293 = vmatpush1.bf16.msra.mxu0 0
      %4294 = vmatprep.subr.bf16.mxu0 0
      %4295 = vmatpush1.bf16.msra.mxu0 0
      %4296 = vmatprep.subr.bf16.mxu0 0
      %4297 = vmatpush1.bf16.msra.mxu0 0
      %4298 = vmatprep.subr.bf16.mxu0 0
      %4299 = vmatpush1.bf16.msra.mxu0 0
      %4300 = vmatprep.subr.bf16.mxu0 0
      %4301 = vmatpush1.bf16.msra.mxu0 0
      %4302 = vmatprep.subr.bf16.mxu0 0
      %4303 = vmatpush1.bf16.msra.mxu0 0
      %4304 = vmatprep.subr.bf16.mxu0 0
      %4305 = vmatpush1.bf16.msra.mxu0 0
      %4306 = vmatprep.subr.bf16.mxu0 0
      %4307 = vmatpush1.bf16.msra.mxu0 0
      %4308 = vmatprep.subr.bf16.mxu0 0
      %4309 = vmatpush1.bf16.msra.mxu0 0
      %4310 = vmatprep.subr.bf16.mxu0 0
      %4311 = vmatpush1.bf16.msra.mxu0 0
      %4312 = vmatprep.subr.bf16.mxu0 0
      %4313 = vmatpush1.bf16.msra.mxu0 0
      %4314 = vmatprep.mubr.bf16.mxu0 0
      %4315 = vmatmul.mubr.bf16.gmra.mrb[0].mxu0 %v4280
      %v4316 = vpop.f32.mrb[0].mxu0
      %v4317 = vadd.f32 0.0, %v4316
      %v4318 = vpop.f32.mrb[0].mxu0
      %v4319 = vpop.f32.mrb[0].mxu0
      %v4320 = vpop.f32.mrb[0].mxu0
      %4321 = vdwg.mxu0
      %v4322 = vadd.f32 %v4233, %v4317
      %s4323 = scalar_lea.vmem %s7, 96
      %v4324 = vld [vmem:[%s4323] sm:$0xf]
      %v4325 = vld [vmem:[%s4323 + $0x4] sm:$0xf]
      %v4326 = vld [vmem:[%s4323 + $0x8] sm:$0xf]
      %v4327 = vld [vmem:[%s4323 + $0xc] sm:$0xf]
      %v4328 = vld [vmem:[%s4323 + $0x10] sm:$0xf]
      %v4329 = vld [vmem:[%s4323 + $0x14] sm:$0xf]
      %v4330 = vld [vmem:[%s4323 + $0x18] sm:$0xf]
      %v4331 = vld [vmem:[%s4323 + $0x1c] sm:$0xf]
      %v4332 = vrot.slane %v4072, 1
      %v4333 = vsel %vm2113, %v4247, %v4332
      %v4334 = vrot.slane %v4074, 7
      %v4335 = vsel %vm2116, %v4334, %v4333
      %v4336 = vrot.slane %v4248, 6
      %v4337 = vsel %vm2119, %v4336, %v4335
      %v4338 = vpack.c.b16 %v4337, %v4337
      %v4347 = vunpack.c.l.b16 %v4324
      %v4348 = vunpack.c.l.b16 %v4325
      %v4349 = vunpack.c.l.b16 %v4326
      %v4350 = vunpack.c.l.b16 %v4327
      %v4351 = vunpack.c.l.b16 %v4328
      %v4352 = vunpack.c.l.b16 %v4329
      %v4353 = vunpack.c.l.b16 %v4330
      %v4354 = vunpack.c.l.b16 %v4331
      %v4355 = vpack.c.b16 %v4348, %v4347
      %v4356 = vpack.c.b16 %v4350, %v4349
      %v4357 = vpack.c.b16 %v4352, %v4351
      %v4358 = vpack.c.b16 %v4354, %v4353
      %v4364 = vsel %vm1687, %v4338, 0
      %4366 = vmatprep.subr.bf16.mxu0 0
      %4367 = vmatpush1.bf16.msra.mxu0 %v4355
      %4368 = vmatprep.subr.bf16.mxu0 0
      %4369 = vmatpush1.bf16.msra.mxu0 %v4356
      %4370 = vmatprep.subr.bf16.mxu0 0
      %4371 = vmatpush1.bf16.msra.mxu0 %v4357
      %4372 = vmatprep.subr.bf16.mxu0 0
      %4373 = vmatpush1.bf16.msra.mxu0 %v4358
      %4374 = vmatprep.subr.bf16.mxu0 0
      %4375 = vmatpush1.bf16.msra.mxu0 0
      %4376 = vmatprep.subr.bf16.mxu0 0
      %4377 = vmatpush1.bf16.msra.mxu0 0
      %4378 = vmatprep.subr.bf16.mxu0 0
      %4379 = vmatpush1.bf16.msra.mxu0 0
      %4380 = vmatprep.subr.bf16.mxu0 0
      %4381 = vmatpush1.bf16.msra.mxu0 0
      %4382 = vmatprep.subr.bf16.mxu0 0
      %4383 = vmatpush1.bf16.msra.mxu0 0
      %4384 = vmatprep.subr.bf16.mxu0 0
      %4385 = vmatpush1.bf16.msra.mxu0 0
      %4386 = vmatprep.subr.bf16.mxu0 0
      %4387 = vmatpush1.bf16.msra.mxu0 0
      %4388 = vmatprep.subr.bf16.mxu0 0
      %4389 = vmatpush1.bf16.msra.mxu0 0
      %4390 = vmatprep.subr.bf16.mxu0 0
      %4391 = vmatpush1.bf16.msra.mxu0 0
      %4392 = vmatprep.subr.bf16.mxu0 0
      %4393 = vmatpush1.bf16.msra.mxu0 0
      %4394 = vmatprep.subr.bf16.mxu0 0
      %4395 = vmatpush1.bf16.msra.mxu0 0
      %4396 = vmatprep.subr.bf16.mxu0 0
      %4397 = vmatpush1.bf16.msra.mxu0 0
      %4398 = vmatprep.mubr.bf16.mxu0 0
      %4399 = vmatmul.mubr.bf16.gmra.mrb[0].mxu0 %v4364
      %v4400 = vpop.f32.mrb[0].mxu0
      %v4401 = vadd.f32 0.0, %v4400
      %v4402 = vpop.f32.mrb[0].mxu0
      %v4403 = vpop.f32.mrb[0].mxu0
      %v4404 = vpop.f32.mrb[0].mxu0
      %4405 = vdwg.mxu0
      %v4406 = vadd.f32 %v4322, %v4401
      %v4407 = vpack.c.bf16 %v3964, %v3964
      %v4408 = vpack.c.bf16 %v3972, %v3972
      %v4409 = vpack.c.bf16 %v3996, %v3996
      %v4410 = vpack.c.bf16 %v4004, %v4004
      %s4411 = scalar_lea.vmem %s7, 128
      %v4412 = vld [vmem:[%s4411] sm:$0xf]
      %v4413 = vld [vmem:[%s4411 + $0x4] sm:$0xf]
      %v4414 = vld [vmem:[%s4411 + $0x8] sm:$0xf]
      %v4415 = vld [vmem:[%s4411 + $0xc] sm:$0xf]
      %v4416 = vld [vmem:[%s4411 + $0x10] sm:$0xf]
      %v4417 = vld [vmem:[%s4411 + $0x14] sm:$0xf]
      %v4418 = vld [vmem:[%s4411 + $0x18] sm:$0xf]
      %v4419 = vld [vmem:[%s4411 + $0x1c] sm:$0xf]
      %v4424 = vunpack.c.l.b16 %v4407
      %v4425 = vunpack.c.l.b16 %v4408
      %v4426 = vunpack.c.l.b16 %v4409
      %v4427 = vunpack.c.l.b16 %v4410
      %v4428 = vrot.slane %v4425, 7
      %v4429 = vsel %vm2113, %v4428, %v4424
      %v4430 = vrot.slane %v4426, 6
      %v4431 = vsel %vm2116, %v4430, %v4429
      %v4432 = vrot.slane %v4427, 5
      %v4433 = vsel %vm2119, %v4432, %v4431
      %v4434 = vpack.c.b16 %v4433, %v4433
      %v4443 = vunpack.c.l.b16 %v4412
      %v4444 = vunpack.c.l.b16 %v4413
      %v4445 = vunpack.c.l.b16 %v4414
      %v4446 = vunpack.c.l.b16 %v4415
      %v4447 = vunpack.c.l.b16 %v4416
      %v4448 = vunpack.c.l.b16 %v4417
      %v4449 = vunpack.c.l.b16 %v4418
      %v4450 = vunpack.c.l.b16 %v4419
      %v4451 = vpack.c.b16 %v4444, %v4443
      %v4452 = vpack.c.b16 %v4446, %v4445
      %v4453 = vpack.c.b16 %v4448, %v4447
      %v4454 = vpack.c.b16 %v4450, %v4449
      %v4460 = vsel %vm1687, %v4434, 0
      %4462 = vmatprep.subr.bf16.mxu0 0
      %4463 = vmatpush1.bf16.msra.mxu0 %v4451
      %4464 = vmatprep.subr.bf16.mxu0 0
      %4465 = vmatpush1.bf16.msra.mxu0 %v4452
      %4466 = vmatprep.subr.bf16.mxu0 0
      %4467 = vmatpush1.bf16.msra.mxu0 %v4453
      %4468 = vmatprep.subr.bf16.mxu0 0
      %4469 = vmatpush1.bf16.msra.mxu0 %v4454
      %4470 = vmatprep.subr.bf16.mxu0 0
      %4471 = vmatpush1.bf16.msra.mxu0 0
      %4472 = vmatprep.subr.bf16.mxu0 0
      %4473 = vmatpush1.bf16.msra.mxu0 0
      %4474 = vmatprep.subr.bf16.mxu0 0
      %4475 = vmatpush1.bf16.msra.mxu0 0
      %4476 = vmatprep.subr.bf16.mxu0 0
      %4477 = vmatpush1.bf16.msra.mxu0 0
      %4478 = vmatprep.subr.bf16.mxu0 0
      %4479 = vmatpush1.bf16.msra.mxu0 0
      %4480 = vmatprep.subr.bf16.mxu0 0
      %4481 = vmatpush1.bf16.msra.mxu0 0
      %4482 = vmatprep.subr.bf16.mxu0 0
      %4483 = vmatpush1.bf16.msra.mxu0 0
      %4484 = vmatprep.subr.bf16.mxu0 0
      %4485 = vmatpush1.bf16.msra.mxu0 0
      %4486 = vmatprep.subr.bf16.mxu0 0
      %4487 = vmatpush1.bf16.msra.mxu0 0
      %4488 = vmatprep.subr.bf16.mxu0 0
      %4489 = vmatpush1.bf16.msra.mxu0 0
      %4490 = vmatprep.subr.bf16.mxu0 0
      %4491 = vmatpush1.bf16.msra.mxu0 0
      %4492 = vmatprep.subr.bf16.mxu0 0
      %4493 = vmatpush1.bf16.msra.mxu0 0
      %4494 = vmatprep.mubr.bf16.mxu0 0
      %4495 = vmatmul.mubr.bf16.gmra.mrb[0].mxu0 %v4460
      %v4496 = vpop.f32.mrb[0].mxu0
      %v4497 = vadd.f32 0.0, %v4496
      %v4498 = vpop.f32.mrb[0].mxu0
      %v4499 = vpop.f32.mrb[0].mxu0
      %v4500 = vpop.f32.mrb[0].mxu0
      %4501 = vdwg.mxu0
      %v4502 = vadd.f32 %v4406, %v4497
      %s4503 = scalar_lea.vmem %s7, 160
      %v4504 = vld [vmem:[%s4503] sm:$0xf]
      %v4505 = vld [vmem:[%s4503 + $0x4] sm:$0xf]
      %v4506 = vld [vmem:[%s4503 + $0x8] sm:$0xf]
      %v4507 = vld [vmem:[%s4503 + $0xc] sm:$0xf]
      %v4508 = vld [vmem:[%s4503 + $0x10] sm:$0xf]
      %v4509 = vld [vmem:[%s4503 + $0x14] sm:$0xf]
      %v4510 = vld [vmem:[%s4503 + $0x18] sm:$0xf]
      %v4511 = vld [vmem:[%s4503 + $0x1c] sm:$0xf]
      %v4512 = vrot.slane %v4424, 1
      %v4513 = vsel %vm2113, %v4425, %v4512
      %v4514 = vrot.slane %v4426, 7
      %v4515 = vsel %vm2116, %v4514, %v4513
      %v4516 = vrot.slane %v4427, 6
      %v4517 = vsel %vm2119, %v4516, %v4515
      %v4518 = vpack.c.b16 %v4517, %v4517
      %v4527 = vunpack.c.l.b16 %v4504
      %v4528 = vunpack.c.l.b16 %v4505
      %v4529 = vunpack.c.l.b16 %v4506
      %v4530 = vunpack.c.l.b16 %v4507
      %v4531 = vunpack.c.l.b16 %v4508
      %v4532 = vunpack.c.l.b16 %v4509
      %v4533 = vunpack.c.l.b16 %v4510
      %v4534 = vunpack.c.l.b16 %v4511
      %v4535 = vpack.c.b16 %v4528, %v4527
      %v4536 = vpack.c.b16 %v4530, %v4529
      %v4537 = vpack.c.b16 %v4532, %v4531
      %v4538 = vpack.c.b16 %v4534, %v4533
      %v4544 = vsel %vm1687, %v4518, 0
      %4546 = vmatprep.subr.bf16.mxu0 0
      %4547 = vmatpush1.bf16.msra.mxu0 %v4535
      %4548 = vmatprep.subr.bf16.mxu0 0
      %4549 = vmatpush1.bf16.msra.mxu0 %v4536
      %4550 = vmatprep.subr.bf16.mxu0 0
      %4551 = vmatpush1.bf16.msra.mxu0 %v4537
      %4552 = vmatprep.subr.bf16.mxu0 0
      %4553 = vmatpush1.bf16.msra.mxu0 %v4538
      %4554 = vmatprep.subr.bf16.mxu0 0
      %4555 = vmatpush1.bf16.msra.mxu0 0
      %4556 = vmatprep.subr.bf16.mxu0 0
      %4557 = vmatpush1.bf16.msra.mxu0 0
      %4558 = vmatprep.subr.bf16.mxu0 0
      %4559 = vmatpush1.bf16.msra.mxu0 0
      %4560 = vmatprep.subr.bf16.mxu0 0
      %4561 = vmatpush1.bf16.msra.mxu0 0
      %4562 = vmatprep.subr.bf16.mxu0 0
      %4563 = vmatpush1.bf16.msra.mxu0 0
      %4564 = vmatprep.subr.bf16.mxu0 0
      %4565 = vmatpush1.bf16.msra.mxu0 0
      %4566 = vmatprep.subr.bf16.mxu0 0
      %4567 = vmatpush1.bf16.msra.mxu0 0
      %4568 = vmatprep.subr.bf16.mxu0 0
      %4569 = vmatpush1.bf16.msra.mxu0 0
      %4570 = vmatprep.subr.bf16.mxu0 0
      %4571 = vmatpush1.bf16.msra.mxu0 0
      %4572 = vmatprep.subr.bf16.mxu0 0
      %4573 = vmatpush1.bf16.msra.mxu0 0
      %4574 = vmatprep.subr.bf16.mxu0 0
      %4575 = vmatpush1.bf16.msra.mxu0 0
      %4576 = vmatprep.subr.bf16.mxu0 0
      %4577 = vmatpush1.bf16.msra.mxu0 0
      %4578 = vmatprep.mubr.bf16.mxu0 0
      %4579 = vmatmul.mubr.bf16.gmra.mrb[0].mxu0 %v4544
      %v4580 = vpop.f32.mrb[0].mxu0
      %v4581 = vadd.f32 0.0, %v4580
      %v4582 = vpop.f32.mrb[0].mxu0
      %v4583 = vpop.f32.mrb[0].mxu0
      %v4584 = vpop.f32.mrb[0].mxu0
      %4585 = vdwg.mxu0
      %v4586 = vadd.f32 %v4502, %v4581
      %v4587 = vpack.c.bf16 %v3971, %v3971
      %v4588 = vpack.c.bf16 %v4003, %v4003
      %s4589 = scalar_lea.vmem %s7, 192
      %v4590 = vld [vmem:[%s4589] sm:$0xf]
      %v4591 = vld [vmem:[%s4589 + $0x4] sm:$0xf]
      %v4592 = vld [vmem:[%s4589 + $0x8] sm:$0xf]
      %v4593 = vld [vmem:[%s4589 + $0xc] sm:$0xf]
      %v4594 = vld [vmem:[%s4589 + $0x10] sm:$0xf]
      %v4595 = vld [vmem:[%s4589 + $0x14] sm:$0xf]
      %v4596 = vld [vmem:[%s4589 + $0x18] sm:$0xf]
      %v4597 = vld [vmem:[%s4589 + $0x1c] sm:$0xf]
      %v4600 = vunpack.c.l.b16 %v4587
      %v4601 = vunpack.c.l.b16 %v4588
      %v4602 = vrot.slane %v4600, 7
      %v4603 = vsel %vm2113, %v4602, %v4425
      %v4604 = vsel %vm2116, %v4516, %v4603
      %v4605 = vrot.slane %v4601, 5
      %v4606 = vsel %vm2119, %v4605, %v4604
      %v4607 = vpack.c.b16 %v4606, %v4606
      %v4616 = vunpack.c.l.b16 %v4590
      %v4617 = vunpack.c.l.b16 %v4591
      %v4618 = vunpack.c.l.b16 %v4592
      %v4619 = vunpack.c.l.b16 %v4593
      %v4620 = vunpack.c.l.b16 %v4594
      %v4621 = vunpack.c.l.b16 %v4595
      %v4622 = vunpack.c.l.b16 %v4596
      %v4623 = vunpack.c.l.b16 %v4597
      %v4624 = vpack.c.b16 %v4617, %v4616
      %v4625 = vpack.c.b16 %v4619, %v4618
      %v4626 = vpack.c.b16 %v4621, %v4620
      %v4627 = vpack.c.b16 %v4623, %v4622
      %v4633 = vsel %vm1687, %v4607, 0
      %4635 = vmatprep.subr.bf16.mxu0 0
      %4636 = vmatpush1.bf16.msra.mxu0 %v4624
      %4637 = vmatprep.subr.bf16.mxu0 0
      %4638 = vmatpush1.bf16.msra.mxu0 %v4625
      %4639 = vmatprep.subr.bf16.mxu0 0
      %4640 = vmatpush1.bf16.msra.mxu0 %v4626
      %4641 = vmatprep.subr.bf16.mxu0 0
      %4642 = vmatpush1.bf16.msra.mxu0 %v4627
      %4643 = vmatprep.subr.bf16.mxu0 0
      %4644 = vmatpush1.bf16.msra.mxu0 0
      %4645 = vmatprep.subr.bf16.mxu0 0
      %4646 = vmatpush1.bf16.msra.mxu0 0
      %4647 = vmatprep.subr.bf16.mxu0 0
      %4648 = vmatpush1.bf16.msra.mxu0 0
      %4649 = vmatprep.subr.bf16.mxu0 0
      %4650 = vmatpush1.bf16.msra.mxu0 0
      %4651 = vmatprep.subr.bf16.mxu0 0
      %4652 = vmatpush1.bf16.msra.mxu0 0
      %4653 = vmatprep.subr.bf16.mxu0 0
      %4654 = vmatpush1.bf16.msra.mxu0 0
      %4655 = vmatprep.subr.bf16.mxu0 0
      %4656 = vmatpush1.bf16.msra.mxu0 0
      %4657 = vmatprep.subr.bf16.mxu0 0
      %4658 = vmatpush1.bf16.msra.mxu0 0
      %4659 = vmatprep.subr.bf16.mxu0 0
      %4660 = vmatpush1.bf16.msra.mxu0 0
      %4661 = vmatprep.subr.bf16.mxu0 0
      %4662 = vmatpush1.bf16.msra.mxu0 0
      %4663 = vmatprep.subr.bf16.mxu0 0
      %4664 = vmatpush1.bf16.msra.mxu0 0
      %4665 = vmatprep.subr.bf16.mxu0 0
      %4666 = vmatpush1.bf16.msra.mxu0 0
      %4667 = vmatprep.mubr.bf16.mxu0 0
      %4668 = vmatmul.mubr.bf16.gmra.mrb[0].mxu0 %v4633
      %v4669 = vpop.f32.mrb[0].mxu0
      %v4670 = vadd.f32 0.0, %v4669
      %v4671 = vpop.f32.mrb[0].mxu0
      %v4672 = vpop.f32.mrb[0].mxu0
      %v4673 = vpop.f32.mrb[0].mxu0
      %4674 = vdwg.mxu0
      %v4675 = vadd.f32 %v4586, %v4670
      %s4676 = scalar_lea.vmem %s7, 224
      %v4677 = vld [vmem:[%s4676] sm:$0xf]
      %v4678 = vld [vmem:[%s4676 + $0x4] sm:$0xf]
      %v4679 = vld [vmem:[%s4676 + $0x8] sm:$0xf]
      %v4680 = vld [vmem:[%s4676 + $0xc] sm:$0xf]
      %v4681 = vld [vmem:[%s4676 + $0x10] sm:$0xf]
      %v4682 = vld [vmem:[%s4676 + $0x14] sm:$0xf]
      %v4683 = vld [vmem:[%s4676 + $0x18] sm:$0xf]
      %v4684 = vld [vmem:[%s4676 + $0x1c] sm:$0xf]
      %v4685 = vrot.slane %v4425, 1
      %v4686 = vsel %vm2113, %v4600, %v4685
      %v4687 = vrot.slane %v4427, 7
      %v4688 = vsel %vm2116, %v4687, %v4686
      %v4689 = vrot.slane %v4601, 6
      %v4690 = vsel %vm2119, %v4689, %v4688
      %v4691 = vpack.c.b16 %v4690, %v4690
      %v4700 = vunpack.c.l.b16 %v4677
      %v4701 = vunpack.c.l.b16 %v4678
      %v4702 = vunpack.c.l.b16 %v4679
      %v4703 = vunpack.c.l.b16 %v4680
      %v4704 = vunpack.c.l.b16 %v4681
      %v4705 = vunpack.c.l.b16 %v4682
      %v4706 = vunpack.c.l.b16 %v4683
      %v4707 = vunpack.c.l.b16 %v4684
      %v4708 = vpack.c.b16 %v4701, %v4700
      %v4709 = vpack.c.b16 %v4703, %v4702
      %v4710 = vpack.c.b16 %v4705, %v4704
      %v4711 = vpack.c.b16 %v4707, %v4706
      %v4717 = vsel %vm1687, %v4691, 0
      %4719 = vmatprep.subr.bf16.mxu0 0
      %4720 = vmatpush1.bf16.msra.mxu0 %v4708
      %4721 = vmatprep.subr.bf16.mxu0 0
      %4722 = vmatpush1.bf16.msra.mxu0 %v4709
      %4723 = vmatprep.subr.bf16.mxu0 0
      %4724 = vmatpush1.bf16.msra.mxu0 %v4710
      %4725 = vmatprep.subr.bf16.mxu0 0
      %4726 = vmatpush1.bf16.msra.mxu0 %v4711
      %4727 = vmatprep.subr.bf16.mxu0 0
      %4728 = vmatpush1.bf16.msra.mxu0 0
      %4729 = vmatprep.subr.bf16.mxu0 0
      %4730 = vmatpush1.bf16.msra.mxu0 0
      %4731 = vmatprep.subr.bf16.mxu0 0
      %4732 = vmatpush1.bf16.msra.mxu0 0
      %4733 = vmatprep.subr.bf16.mxu0 0
      %4734 = vmatpush1.bf16.msra.mxu0 0
      %4735 = vmatprep.subr.bf16.mxu0 0
      %4736 = vmatpush1.bf16.msra.mxu0 0
      %4737 = vmatprep.subr.bf16.mxu0 0
      %4738 = vmatpush1.bf16.msra.mxu0 0
      %4739 = vmatprep.subr.bf16.mxu0 0
      %4740 = vmatpush1.bf16.msra.mxu0 0
      %4741 = vmatprep.subr.bf16.mxu0 0
      %4742 = vmatpush1.bf16.msra.mxu0 0
      %4743 = vmatprep.subr.bf16.mxu0 0
      %4744 = vmatpush1.bf16.msra.mxu0 0
      %4745 = vmatprep.subr.bf16.mxu0 0
      %4746 = vmatpush1.bf16.msra.mxu0 0
      %4747 = vmatprep.subr.bf16.mxu0 0
      %4748 = vmatpush1.bf16.msra.mxu0 0
      %4749 = vmatprep.subr.bf16.mxu0 0
      %4750 = vmatpush1.bf16.msra.mxu0 0
      %4751 = vmatprep.mubr.bf16.mxu0 0
      %4752 = vmatmul.mubr.bf16.gmra.mrb[0].mxu0 %v4717
      %v4753 = vpop.f32.mrb[0].mxu0
      %v4754 = vadd.f32 0.0, %v4753
      %v4755 = vpop.f32.mrb[0].mxu0
      %v4756 = vpop.f32.mrb[0].mxu0
      %v4757 = vpop.f32.mrb[0].mxu0
      %4758 = vdwg.mxu0
      %v4759 = vadd.f32 %v4675, %v4754
      %v4760 = vpack.c.bf16 %v4012, %v4012
      %v4761 = vpack.c.bf16 %v4020, %v4020
      %s4762 = scalar_lea.vmem %s7, 256
      %v4763 = vld [vmem:[%s4762] sm:$0xf]
      %v4764 = vld [vmem:[%s4762 + $0x4] sm:$0xf]
      %v4765 = vld [vmem:[%s4762 + $0x8] sm:$0xf]
      %v4766 = vld [vmem:[%s4762 + $0xc] sm:$0xf]
      %v4767 = vld [vmem:[%s4762 + $0x10] sm:$0xf]
      %v4768 = vld [vmem:[%s4762 + $0x14] sm:$0xf]
      %v4769 = vld [vmem:[%s4762 + $0x18] sm:$0xf]
      %v4770 = vld [vmem:[%s4762 + $0x1c] sm:$0xf]
      %v4773 = vunpack.c.l.b16 %v4760
      %v4774 = vunpack.c.l.b16 %v4761
      %v4775 = vsel %vm2113, %v4334, %v4073
      %v4776 = vrot.slane %v4773, 6
      %v4777 = vsel %vm2116, %v4776, %v4775
      %v4778 = vrot.slane %v4774, 5
      %v4779 = vsel %vm2119, %v4778, %v4777
      %v4780 = vpack.c.b16 %v4779, %v4779
      %v4789 = vunpack.c.l.b16 %v4763
      %v4790 = vunpack.c.l.b16 %v4764
      %v4791 = vunpack.c.l.b16 %v4765
      %v4792 = vunpack.c.l.b16 %v4766
      %v4793 = vunpack.c.l.b16 %v4767
      %v4794 = vunpack.c.l.b16 %v4768
      %v4795 = vunpack.c.l.b16 %v4769
      %v4796 = vunpack.c.l.b16 %v4770
      %v4797 = vpack.c.b16 %v4790, %v4789
      %v4798 = vpack.c.b16 %v4792, %v4791
      %v4799 = vpack.c.b16 %v4794, %v4793
      %v4800 = vpack.c.b16 %v4796, %v4795
      %v4806 = vsel %vm1687, %v4780, 0
      %4808 = vmatprep.subr.bf16.mxu0 0
      %4809 = vmatpush1.bf16.msra.mxu0 %v4797
      %4810 = vmatprep.subr.bf16.mxu0 0
      %4811 = vmatpush1.bf16.msra.mxu0 %v4798
      %4812 = vmatprep.subr.bf16.mxu0 0
      %4813 = vmatpush1.bf16.msra.mxu0 %v4799
      %4814 = vmatprep.subr.bf16.mxu0 0
      %4815 = vmatpush1.bf16.msra.mxu0 %v4800
      %4816 = vmatprep.subr.bf16.mxu0 0
      %4817 = vmatpush1.bf16.msra.mxu0 0
      %4818 = vmatprep.subr.bf16.mxu0 0
      %4819 = vmatpush1.bf16.msra.mxu0 0
      %4820 = vmatprep.subr.bf16.mxu0 0
      %4821 = vmatpush1.bf16.msra.mxu0 0
      %4822 = vmatprep.subr.bf16.mxu0 0
      %4823 = vmatpush1.bf16.msra.mxu0 0
      %4824 = vmatprep.subr.bf16.mxu0 0
      %4825 = vmatpush1.bf16.msra.mxu0 0
      %4826 = vmatprep.subr.bf16.mxu0 0
      %4827 = vmatpush1.bf16.msra.mxu0 0
      %4828 = vmatprep.subr.bf16.mxu0 0
      %4829 = vmatpush1.bf16.msra.mxu0 0
      %4830 = vmatprep.subr.bf16.mxu0 0
      %4831 = vmatpush1.bf16.msra.mxu0 0
      %4832 = vmatprep.subr.bf16.mxu0 0
      %4833 = vmatpush1.bf16.msra.mxu0 0
      %4834 = vmatprep.subr.bf16.mxu0 0
      %4835 = vmatpush1.bf16.msra.mxu0 0
      %4836 = vmatprep.subr.bf16.mxu0 0
      %4837 = vmatpush1.bf16.msra.mxu0 0
      %4838 = vmatprep.subr.bf16.mxu0 0
      %4839 = vmatpush1.bf16.msra.mxu0 0
      %4840 = vmatprep.mubr.bf16.mxu0 0
      %4841 = vmatmul.mubr.bf16.gmra.mrb[0].mxu0 %v4806
      %v4842 = vpop.f32.mrb[0].mxu0
      %v4843 = vadd.f32 0.0, %v4842
      %v4844 = vpop.f32.mrb[0].mxu0
      %v4845 = vpop.f32.mrb[0].mxu0
      %v4846 = vpop.f32.mrb[0].mxu0
      %4847 = vdwg.mxu0
      %v4848 = vadd.f32 %v4759, %v4843
      %s4849 = scalar_lea.vmem %s7, 288
      %v4850 = vld [vmem:[%s4849] sm:$0xf]
      %v4851 = vld [vmem:[%s4849 + $0x4] sm:$0xf]
      %v4852 = vld [vmem:[%s4849 + $0x8] sm:$0xf]
      %v4853 = vld [vmem:[%s4849 + $0xc] sm:$0xf]
      %v4854 = vld [vmem:[%s4849 + $0x10] sm:$0xf]
      %v4855 = vld [vmem:[%s4849 + $0x14] sm:$0xf]
      %v4856 = vld [vmem:[%s4849 + $0x18] sm:$0xf]
      %v4857 = vld [vmem:[%s4849 + $0x1c] sm:$0xf]
      %v4858 = vrot.slane %v4073, 1
      %v4859 = vsel %vm2113, %v4074, %v4858
      %v4860 = vrot.slane %v4773, 7
      %v4861 = vsel %vm2116, %v4860, %v4859
      %v4862 = vrot.slane %v4774, 6
      %v4863 = vsel %vm2119, %v4862, %v4861
      %v4864 = vpack.c.b16 %v4863, %v4863
      %v4873 = vunpack.c.l.b16 %v4850
      %v4874 = vunpack.c.l.b16 %v4851
      %v4875 = vunpack.c.l.b16 %v4852
      %v4876 = vunpack.c.l.b16 %v4853
      %v4877 = vunpack.c.l.b16 %v4854
      %v4878 = vunpack.c.l.b16 %v4855
      %v4879 = vunpack.c.l.b16 %v4856
      %v4880 = vunpack.c.l.b16 %v4857
      %v4881 = vpack.c.b16 %v4874, %v4873
      %v4882 = vpack.c.b16 %v4876, %v4875
      %v4883 = vpack.c.b16 %v4878, %v4877
      %v4884 = vpack.c.b16 %v4880, %v4879
      %v4890 = vsel %vm1687, %v4864, 0
      %4892 = vmatprep.subr.bf16.mxu0 0
      %4893 = vmatpush1.bf16.msra.mxu0 %v4881
      %4894 = vmatprep.subr.bf16.mxu0 0
      %4895 = vmatpush1.bf16.msra.mxu0 %v4882
      %4896 = vmatprep.subr.bf16.mxu0 0
      %4897 = vmatpush1.bf16.msra.mxu0 %v4883
      %4898 = vmatprep.subr.bf16.mxu0 0
      %4899 = vmatpush1.bf16.msra.mxu0 %v4884
      %4900 = vmatprep.subr.bf16.mxu0 0
      %4901 = vmatpush1.bf16.msra.mxu0 0
      %4902 = vmatprep.subr.bf16.mxu0 0
      %4903 = vmatpush1.bf16.msra.mxu0 0
      %4904 = vmatprep.subr.bf16.mxu0 0
      %4905 = vmatpush1.bf16.msra.mxu0 0
      %4906 = vmatprep.subr.bf16.mxu0 0
      %4907 = vmatpush1.bf16.msra.mxu0 0
      %4908 = vmatprep.subr.bf16.mxu0 0
      %4909 = vmatpush1.bf16.msra.mxu0 0
      %4910 = vmatprep.subr.bf16.mxu0 0
      %4911 = vmatpush1.bf16.msra.mxu0 0
      %4912 = vmatprep.subr.bf16.mxu0 0
      %4913 = vmatpush1.bf16.msra.mxu0 0
      %4914 = vmatprep.subr.bf16.mxu0 0
      %4915 = vmatpush1.bf16.msra.mxu0 0
      %4916 = vmatprep.subr.bf16.mxu0 0
      %4917 = vmatpush1.bf16.msra.mxu0 0
      %4918 = vmatprep.subr.bf16.mxu0 0
      %4919 = vmatpush1.bf16.msra.mxu0 0
      %4920 = vmatprep.subr.bf16.mxu0 0
      %4921 = vmatpush1.bf16.msra.mxu0 0
      %4922 = vmatprep.subr.bf16.mxu0 0
      %4923 = vmatpush1.bf16.msra.mxu0 0
      %4924 = vmatprep.mubr.bf16.mxu0 0
      %4925 = vmatmul.mubr.bf16.gmra.mrb[0].mxu0 %v4890
      %v4926 = vpop.f32.mrb[0].mxu0
      %v4927 = vadd.f32 0.0, %v4926
      %v4928 = vpop.f32.mrb[0].mxu0
      %v4929 = vpop.f32.mrb[0].mxu0
      %v4930 = vpop.f32.mrb[0].mxu0
      %4931 = vdwg.mxu0
      %v4932 = vadd.f32 %v4848, %v4927
      %v4933 = vpack.c.bf16 %v4019, %v4019
      %s4934 = scalar_lea.vmem %s7, 320
      %v4935 = vld [vmem:[%s4934] sm:$0xf]
      %v4936 = vld [vmem:[%s4934 + $0x4] sm:$0xf]
      %v4937 = vld [vmem:[%s4934 + $0x8] sm:$0xf]
      %v4938 = vld [vmem:[%s4934 + $0xc] sm:$0xf]
      %v4939 = vld [vmem:[%s4934 + $0x10] sm:$0xf]
      %v4940 = vld [vmem:[%s4934 + $0x14] sm:$0xf]
      %v4941 = vld [vmem:[%s4934 + $0x18] sm:$0xf]
      %v4942 = vld [vmem:[%s4934 + $0x1c] sm:$0xf]
      %v4944 = vunpack.c.l.b16 %v4933
      %v4945 = vrot.slane %v4248, 7
      %v4946 = vsel %vm2113, %v4945, %v4074
      %v4947 = vsel %vm2116, %v4862, %v4946
      %v4948 = vrot.slane %v4944, 5
      %v4949 = vsel %vm2119, %v4948, %v4947
      %v4950 = vpack.c.b16 %v4949, %v4949
      %v4959 = vunpack.c.l.b16 %v4935
      %v4960 = vunpack.c.l.b16 %v4936
      %v4961 = vunpack.c.l.b16 %v4937
      %v4962 = vunpack.c.l.b16 %v4938
      %v4963 = vunpack.c.l.b16 %v4939
      %v4964 = vunpack.c.l.b16 %v4940
      %v4965 = vunpack.c.l.b16 %v4941
      %v4966 = vunpack.c.l.b16 %v4942
      %v4967 = vpack.c.b16 %v4960, %v4959
      %v4968 = vpack.c.b16 %v4962, %v4961
      %v4969 = vpack.c.b16 %v4964, %v4963
      %v4970 = vpack.c.b16 %v4966, %v4965
      %v4976 = vsel %vm1687, %v4950, 0
      %4978 = vmatprep.subr.bf16.mxu0 0
      %4979 = vmatpush1.bf16.msra.mxu0 %v4967
      %4980 = vmatprep.subr.bf16.mxu0 0
      %4981 = vmatpush1.bf16.msra.mxu0 %v4968
      %4982 = vmatprep.subr.bf16.mxu0 0
      %4983 = vmatpush1.bf16.msra.mxu0 %v4969
      %4984 = vmatprep.subr.bf16.mxu0 0
      %4985 = vmatpush1.bf16.msra.mxu0 %v4970
      %4986 = vmatprep.subr.bf16.mxu0 0
      %4987 = vmatpush1.bf16.msra.mxu0 0
      %4988 = vmatprep.subr.bf16.mxu0 0
      %4989 = vmatpush1.bf16.msra.mxu0 0
      %4990 = vmatprep.subr.bf16.mxu0 0
      %4991 = vmatpush1.bf16.msra.mxu0 0
      %4992 = vmatprep.subr.bf16.mxu0 0
      %4993 = vmatpush1.bf16.msra.mxu0 0
      %4994 = vmatprep.subr.bf16.mxu0 0
      %4995 = vmatpush1.bf16.msra.mxu0 0
      %4996 = vmatprep.subr.bf16.mxu0 0
      %4997 = vmatpush1.bf16.msra.mxu0 0
      %4998 = vmatprep.subr.bf16.mxu0 0
      %4999 = vmatpush1.bf16.msra.mxu0 0
      %5000 = vmatprep.subr.bf16.mxu0 0
      %5001 = vmatpush1.bf16.msra.mxu0 0
      %5002 = vmatprep.subr.bf16.mxu0 0
      %5003 = vmatpush1.bf16.msra.mxu0 0
      %5004 = vmatprep.subr.bf16.mxu0 0
      %5005 = vmatpush1.bf16.msra.mxu0 0
      %5006 = vmatprep.subr.bf16.mxu0 0
      %5007 = vmatpush1.bf16.msra.mxu0 0
      %5008 = vmatprep.subr.bf16.mxu0 0
      %5009 = vmatpush1.bf16.msra.mxu0 0
      %5010 = vmatprep.mubr.bf16.mxu0 0
      %5011 = vmatmul.mubr.bf16.gmra.mrb[0].mxu0 %v4976
      %v5012 = vpop.f32.mrb[0].mxu0
      %v5013 = vadd.f32 0.0, %v5012
      %v5014 = vpop.f32.mrb[0].mxu0
      %v5015 = vpop.f32.mrb[0].mxu0
      %v5016 = vpop.f32.mrb[0].mxu0
      %5017 = vdwg.mxu0
      %v5018 = vadd.f32 %v4932, %v5013
      %s5019 = scalar_lea.vmem %s7, 352
      %v5020 = vld [vmem:[%s5019] sm:$0xf]
      %v5021 = vld [vmem:[%s5019 + $0x4] sm:$0xf]
      %v5022 = vld [vmem:[%s5019 + $0x8] sm:$0xf]
      %v5023 = vld [vmem:[%s5019 + $0xc] sm:$0xf]
      %v5024 = vld [vmem:[%s5019 + $0x10] sm:$0xf]
      %v5025 = vld [vmem:[%s5019 + $0x14] sm:$0xf]
      %v5026 = vld [vmem:[%s5019 + $0x18] sm:$0xf]
      %v5027 = vld [vmem:[%s5019 + $0x1c] sm:$0xf]
      %v5028 = vrot.slane %v4074, 1
      %v5029 = vsel %vm2113, %v4248, %v5028
      %v5030 = vrot.slane %v4774, 7
      %v5031 = vsel %vm2116, %v5030, %v5029
      %v5032 = vrot.slane %v4944, 6
      %v5033 = vsel %vm2119, %v5032, %v5031
      %v5034 = vpack.c.b16 %v5033, %v5033
      %v5043 = vunpack.c.l.b16 %v5020
      %v5044 = vunpack.c.l.b16 %v5021
      %v5045 = vunpack.c.l.b16 %v5022
      %v5046 = vunpack.c.l.b16 %v5023
      %v5047 = vunpack.c.l.b16 %v5024
      %v5048 = vunpack.c.l.b16 %v5025
      %v5049 = vunpack.c.l.b16 %v5026
      %v5050 = vunpack.c.l.b16 %v5027
      %v5051 = vpack.c.b16 %v5044, %v5043
      %v5052 = vpack.c.b16 %v5046, %v5045
      %v5053 = vpack.c.b16 %v5048, %v5047
      %v5054 = vpack.c.b16 %v5050, %v5049
      %v5060 = vsel %vm1687, %v5034, 0
      %5062 = vmatprep.subr.bf16.mxu0 0
      %5063 = vmatpush1.bf16.msra.mxu0 %v5051
      %5064 = vmatprep.subr.bf16.mxu0 0
      %5065 = vmatpush1.bf16.msra.mxu0 %v5052
      %5066 = vmatprep.subr.bf16.mxu0 0
      %5067 = vmatpush1.bf16.msra.mxu0 %v5053
      %5068 = vmatprep.subr.bf16.mxu0 0
      %5069 = vmatpush1.bf16.msra.mxu0 %v5054
      %5070 = vmatprep.subr.bf16.mxu0 0
      %5071 = vmatpush1.bf16.msra.mxu0 0
      %5072 = vmatprep.subr.bf16.mxu0 0
      %5073 = vmatpush1.bf16.msra.mxu0 0
      %5074 = vmatprep.subr.bf16.mxu0 0
      %5075 = vmatpush1.bf16.msra.mxu0 0
      %5076 = vmatprep.subr.bf16.mxu0 0
      %5077 = vmatpush1.bf16.msra.mxu0 0
      %5078 = vmatprep.subr.bf16.mxu0 0
      %5079 = vmatpush1.bf16.msra.mxu0 0
      %5080 = vmatprep.subr.bf16.mxu0 0
      %5081 = vmatpush1.bf16.msra.mxu0 0
      %5082 = vmatprep.subr.bf16.mxu0 0
      %5083 = vmatpush1.bf16.msra.mxu0 0
      %5084 = vmatprep.subr.bf16.mxu0 0
      %5085 = vmatpush1.bf16.msra.mxu0 0
      %5086 = vmatprep.subr.bf16.mxu0 0
      %5087 = vmatpush1.bf16.msra.mxu0 0
      %5088 = vmatprep.subr.bf16.mxu0 0
      %5089 = vmatpush1.bf16.msra.mxu0 0
      %5090 = vmatprep.subr.bf16.mxu0 0
      %5091 = vmatpush1.bf16.msra.mxu0 0
      %5092 = vmatprep.subr.bf16.mxu0 0
      %5093 = vmatpush1.bf16.msra.mxu0 0
      %5094 = vmatprep.mubr.bf16.mxu0 0
      %5095 = vmatmul.mubr.bf16.gmra.mrb[0].mxu0 %v5060
      %v5096 = vpop.f32.mrb[0].mxu0
      %v5097 = vadd.f32 0.0, %v5096
      %v5098 = vpop.f32.mrb[0].mxu0
      %v5099 = vpop.f32.mrb[0].mxu0
      %v5100 = vpop.f32.mrb[0].mxu0
      %5101 = vdwg.mxu0
      %v5102 = vadd.f32 %v5018, %v5097
      %v5103 = vpack.c.bf16 %v4028, %v4028
      %v5104 = vpack.c.bf16 %v4036, %v4036
      %s5105 = scalar_lea.vmem %s7, 384
      %v5106 = vld [vmem:[%s5105] sm:$0xf]
      %v5107 = vld [vmem:[%s5105 + $0x4] sm:$0xf]
      %v5108 = vld [vmem:[%s5105 + $0x8] sm:$0xf]
      %v5109 = vld [vmem:[%s5105 + $0xc] sm:$0xf]
      %v5110 = vld [vmem:[%s5105 + $0x10] sm:$0xf]
      %v5111 = vld [vmem:[%s5105 + $0x14] sm:$0xf]
      %v5112 = vld [vmem:[%s5105 + $0x18] sm:$0xf]
      %v5113 = vld [vmem:[%s5105 + $0x1c] sm:$0xf]
      %v5116 = vunpack.c.l.b16 %v5103
      %v5117 = vunpack.c.l.b16 %v5104
      %v5118 = vsel %vm2113, %v4687, %v4426
      %v5119 = vrot.slane %v5116, 6
      %v5120 = vsel %vm2116, %v5119, %v5118
      %v5121 = vrot.slane %v5117, 5
      %v5122 = vsel %vm2119, %v5121, %v5120
      %v5123 = vpack.c.b16 %v5122, %v5122
      %v5132 = vunpack.c.l.b16 %v5106
      %v5133 = vunpack.c.l.b16 %v5107
      %v5134 = vunpack.c.l.b16 %v5108
      %v5135 = vunpack.c.l.b16 %v5109
      %v5136 = vunpack.c.l.b16 %v5110
      %v5137 = vunpack.c.l.b16 %v5111
      %v5138 = vunpack.c.l.b16 %v5112
      %v5139 = vunpack.c.l.b16 %v5113
      %v5140 = vpack.c.b16 %v5133, %v5132
      %v5141 = vpack.c.b16 %v5135, %v5134
      %v5142 = vpack.c.b16 %v5137, %v5136
      %v5143 = vpack.c.b16 %v5139, %v5138
      %v5149 = vsel %vm1687, %v5123, 0
      %5151 = vmatprep.subr.bf16.mxu0 0
      %5152 = vmatpush1.bf16.msra.mxu0 %v5140
      %5153 = vmatprep.subr.bf16.mxu0 0
      %5154 = vmatpush1.bf16.msra.mxu0 %v5141
      %5155 = vmatprep.subr.bf16.mxu0 0
      %5156 = vmatpush1.bf16.msra.mxu0 %v5142
      %5157 = vmatprep.subr.bf16.mxu0 0
      %5158 = vmatpush1.bf16.msra.mxu0 %v5143
      %5159 = vmatprep.subr.bf16.mxu0 0
      %5160 = vmatpush1.bf16.msra.mxu0 0
      %5161 = vmatprep.subr.bf16.mxu0 0
      %5162 = vmatpush1.bf16.msra.mxu0 0
      %5163 = vmatprep.subr.bf16.mxu0 0
      %5164 = vmatpush1.bf16.msra.mxu0 0
      %5165 = vmatprep.subr.bf16.mxu0 0
      %5166 = vmatpush1.bf16.msra.mxu0 0
      %5167 = vmatprep.subr.bf16.mxu0 0
      %5168 = vmatpush1.bf16.msra.mxu0 0
      %5169 = vmatprep.subr.bf16.mxu0 0
      %5170 = vmatpush1.bf16.msra.mxu0 0
      %5171 = vmatprep.subr.bf16.mxu0 0
      %5172 = vmatpush1.bf16.msra.mxu0 0
      %5173 = vmatprep.subr.bf16.mxu0 0
      %5174 = vmatpush1.bf16.msra.mxu0 0
      %5175 = vmatprep.subr.bf16.mxu0 0
      %5176 = vmatpush1.bf16.msra.mxu0 0
      %5177 = vmatprep.subr.bf16.mxu0 0
      %5178 = vmatpush1.bf16.msra.mxu0 0
      %5179 = vmatprep.subr.bf16.mxu0 0
      %5180 = vmatpush1.bf16.msra.mxu0 0
      %5181 = vmatprep.subr.bf16.mxu0 0
      %5182 = vmatpush1.bf16.msra.mxu0 0
      %5183 = vmatprep.mubr.bf16.mxu0 0
      %5184 = vmatmul.mubr.bf16.gmra.mrb[0].mxu0 %v5149
      %v5185 = vpop.f32.mrb[0].mxu0
      %v5186 = vadd.f32 0.0, %v5185
      %v5187 = vpop.f32.mrb[0].mxu0
      %v5188 = vpop.f32.mrb[0].mxu0
      %v5189 = vpop.f32.mrb[0].mxu0
      %5190 = vdwg.mxu0
      %v5191 = vadd.f32 %v5102, %v5186
      %s5192 = scalar_lea.vmem %s7, 416
      %v5193 = vld [vmem:[%s5192] sm:$0xf]
      %v5194 = vld [vmem:[%s5192 + $0x4] sm:$0xf]
      %v5195 = vld [vmem:[%s5192 + $0x8] sm:$0xf]
      %v5196 = vld [vmem:[%s5192 + $0xc] sm:$0xf]
      %v5197 = vld [vmem:[%s5192 + $0x10] sm:$0xf]
      %v5198 = vld [vmem:[%s5192 + $0x14] sm:$0xf]
      %v5199 = vld [vmem:[%s5192 + $0x18] sm:$0xf]
      %v5200 = vld [vmem:[%s5192 + $0x1c] sm:$0xf]
      %v5201 = vrot.slane %v4426, 1
      %v5202 = vsel %vm2113, %v4427, %v5201
      %v5203 = vrot.slane %v5116, 7
      %v5204 = vsel %vm2116, %v5203, %v5202
      %v5205 = vrot.slane %v5117, 6
      %v5206 = vsel %vm2119, %v5205, %v5204
      %v5207 = vpack.c.b16 %v5206, %v5206
      %v5216 = vunpack.c.l.b16 %v5193
      %v5217 = vunpack.c.l.b16 %v5194
      %v5218 = vunpack.c.l.b16 %v5195
      %v5219 = vunpack.c.l.b16 %v5196
      %v5220 = vunpack.c.l.b16 %v5197
      %v5221 = vunpack.c.l.b16 %v5198
      %v5222 = vunpack.c.l.b16 %v5199
      %v5223 = vunpack.c.l.b16 %v5200
      %v5224 = vpack.c.b16 %v5217, %v5216
      %v5225 = vpack.c.b16 %v5219, %v5218
      %v5226 = vpack.c.b16 %v5221, %v5220
      %v5227 = vpack.c.b16 %v5223, %v5222
      %v5233 = vsel %vm1687, %v5207, 0
      %5235 = vmatprep.subr.bf16.mxu0 0
      %5236 = vmatpush1.bf16.msra.mxu0 %v5224
      %5237 = vmatprep.subr.bf16.mxu0 0
      %5238 = vmatpush1.bf16.msra.mxu0 %v5225
      %5239 = vmatprep.subr.bf16.mxu0 0
      %5240 = vmatpush1.bf16.msra.mxu0 %v5226
      %5241 = vmatprep.subr.bf16.mxu0 0
      %5242 = vmatpush1.bf16.msra.mxu0 %v5227
      %5243 = vmatprep.subr.bf16.mxu0 0
      %5244 = vmatpush1.bf16.msra.mxu0 0
      %5245 = vmatprep.subr.bf16.mxu0 0
      %5246 = vmatpush1.bf16.msra.mxu0 0
      %5247 = vmatprep.subr.bf16.mxu0 0
      %5248 = vmatpush1.bf16.msra.mxu0 0
      %5249 = vmatprep.subr.bf16.mxu0 0
      %5250 = vmatpush1.bf16.msra.mxu0 0
      %5251 = vmatprep.subr.bf16.mxu0 0
      %5252 = vmatpush1.bf16.msra.mxu0 0
      %5253 = vmatprep.subr.bf16.mxu0 0
      %5254 = vmatpush1.bf16.msra.mxu0 0
      %5255 = vmatprep.subr.bf16.mxu0 0
      %5256 = vmatpush1.bf16.msra.mxu0 0
      %5257 = vmatprep.subr.bf16.mxu0 0
      %5258 = vmatpush1.bf16.msra.mxu0 0
      %5259 = vmatprep.subr.bf16.mxu0 0
      %5260 = vmatpush1.bf16.msra.mxu0 0
      %5261 = vmatprep.subr.bf16.mxu0 0
      %5262 = vmatpush1.bf16.msra.mxu0 0
      %5263 = vmatprep.subr.bf16.mxu0 0
      %5264 = vmatpush1.bf16.msra.mxu0 0
      %5265 = vmatprep.subr.bf16.mxu0 0
      %5266 = vmatpush1.bf16.msra.mxu0 0
      %5267 = vmatprep.mubr.bf16.mxu0 0
      %5268 = vmatmul.mubr.bf16.gmra.mrb[0].mxu0 %v5233
      %v5269 = vpop.f32.mrb[0].mxu0
      %v5270 = vadd.f32 0.0, %v5269
      %v5271 = vpop.f32.mrb[0].mxu0
      %v5272 = vpop.f32.mrb[0].mxu0
      %v5273 = vpop.f32.mrb[0].mxu0
      %5274 = vdwg.mxu0
      %v5275 = vadd.f32 %v5191, %v5270
      %v5276 = vpack.c.bf16 %v4035, %v4035
      %s5277 = scalar_lea.vmem %s7, 448
      %v5278 = vld [vmem:[%s5277] sm:$0xf]
      %v5279 = vld [vmem:[%s5277 + $0x4] sm:$0xf]
      %v5280 = vld [vmem:[%s5277 + $0x8] sm:$0xf]
      %v5281 = vld [vmem:[%s5277 + $0xc] sm:$0xf]
      %v5282 = vld [vmem:[%s5277 + $0x10] sm:$0xf]
      %v5283 = vld [vmem:[%s5277 + $0x14] sm:$0xf]
      %v5284 = vld [vmem:[%s5277 + $0x18] sm:$0xf]
      %v5285 = vld [vmem:[%s5277 + $0x1c] sm:$0xf]
      %v5287 = vunpack.c.l.b16 %v5276
      %v5288 = vrot.slane %v4601, 7
      %v5289 = vsel %vm2113, %v5288, %v4427
      %v5290 = vsel %vm2116, %v5205, %v5289
      %v5291 = vrot.slane %v5287, 5
      %v5292 = vsel %vm2119, %v5291, %v5290
      %v5293 = vpack.c.b16 %v5292, %v5292
      %v5302 = vunpack.c.l.b16 %v5278
      %v5303 = vunpack.c.l.b16 %v5279
      %v5304 = vunpack.c.l.b16 %v5280
      %v5305 = vunpack.c.l.b16 %v5281
      %v5306 = vunpack.c.l.b16 %v5282
      %v5307 = vunpack.c.l.b16 %v5283
      %v5308 = vunpack.c.l.b16 %v5284
      %v5309 = vunpack.c.l.b16 %v5285
      %v5310 = vpack.c.b16 %v5303, %v5302
      %v5311 = vpack.c.b16 %v5305, %v5304
      %v5312 = vpack.c.b16 %v5307, %v5306
      %v5313 = vpack.c.b16 %v5309, %v5308
      %v5319 = vsel %vm1687, %v5293, 0
      %5321 = vmatprep.subr.bf16.mxu0 0
      %5322 = vmatpush1.bf16.msra.mxu0 %v5310
      %5323 = vmatprep.subr.bf16.mxu0 0
      %5324 = vmatpush1.bf16.msra.mxu0 %v5311
      %5325 = vmatprep.subr.bf16.mxu0 0
      %5326 = vmatpush1.bf16.msra.mxu0 %v5312
      %5327 = vmatprep.subr.bf16.mxu0 0
      %5328 = vmatpush1.bf16.msra.mxu0 %v5313
      %5329 = vmatprep.subr.bf16.mxu0 0
      %5330 = vmatpush1.bf16.msra.mxu0 0
      %5331 = vmatprep.subr.bf16.mxu0 0
      %5332 = vmatpush1.bf16.msra.mxu0 0
      %5333 = vmatprep.subr.bf16.mxu0 0
      %5334 = vmatpush1.bf16.msra.mxu0 0
      %5335 = vmatprep.subr.bf16.mxu0 0
      %5336 = vmatpush1.bf16.msra.mxu0 0
      %5337 = vmatprep.subr.bf16.mxu0 0
      %5338 = vmatpush1.bf16.msra.mxu0 0
      %5339 = vmatprep.subr.bf16.mxu0 0
      %5340 = vmatpush1.bf16.msra.mxu0 0
      %5341 = vmatprep.subr.bf16.mxu0 0
      %5342 = vmatpush1.bf16.msra.mxu0 0
      %5343 = vmatprep.subr.bf16.mxu0 0
      %5344 = vmatpush1.bf16.msra.mxu0 0
      %5345 = vmatprep.subr.bf16.mxu0 0
      %5346 = vmatpush1.bf16.msra.mxu0 0
      %5347 = vmatprep.subr.bf16.mxu0 0
      %5348 = vmatpush1.bf16.msra.mxu0 0
      %5349 = vmatprep.subr.bf16.mxu0 0
      %5350 = vmatpush1.bf16.msra.mxu0 0
      %5351 = vmatprep.subr.bf16.mxu0 0
      %5352 = vmatpush1.bf16.msra.mxu0 0
      %5353 = vmatprep.mubr.bf16.mxu0 0
      %5354 = vmatmul.mubr.bf16.gmra.mrb[0].mxu0 %v5319
      %v5355 = vpop.f32.mrb[0].mxu0
      %v5356 = vadd.f32 0.0, %v5355
      %v5357 = vpop.f32.mrb[0].mxu0
      %v5358 = vpop.f32.mrb[0].mxu0
      %v5359 = vpop.f32.mrb[0].mxu0
      %5360 = vdwg.mxu0
      %v5361 = vadd.f32 %v5275, %v5356
      %s5362 = scalar_lea.vmem %s7, 480
      %v5363 = vld [vmem:[%s5362] sm:$0xf]
      %v5364 = vld [vmem:[%s5362 + $0x4] sm:$0xf]
      %v5365 = vld [vmem:[%s5362 + $0x8] sm:$0xf]
      %v5366 = vld [vmem:[%s5362 + $0xc] sm:$0xf]
      %v5367 = vld [vmem:[%s5362 + $0x10] sm:$0xf]
      %v5368 = vld [vmem:[%s5362 + $0x14] sm:$0xf]
      %v5369 = vld [vmem:[%s5362 + $0x18] sm:$0xf]
      %v5370 = vld [vmem:[%s5362 + $0x1c] sm:$0xf]
      %v5371 = vrot.slane %v4427, 1
      %v5372 = vsel %vm2113, %v4601, %v5371
      %v5373 = vrot.slane %v5117, 7
      %v5374 = vsel %vm2116, %v5373, %v5372
      %v5375 = vrot.slane %v5287, 6
      %v5376 = vsel %vm2119, %v5375, %v5374
      %v5377 = vpack.c.b16 %v5376, %v5376
      %v5386 = vunpack.c.l.b16 %v5363
      %v5387 = vunpack.c.l.b16 %v5364
      %v5388 = vunpack.c.l.b16 %v5365
      %v5389 = vunpack.c.l.b16 %v5366
      %v5390 = vunpack.c.l.b16 %v5367
      %v5391 = vunpack.c.l.b16 %v5368
      %v5392 = vunpack.c.l.b16 %v5369
      %v5393 = vunpack.c.l.b16 %v5370
      %v5394 = vpack.c.b16 %v5387, %v5386
      %v5395 = vpack.c.b16 %v5389, %v5388
      %v5396 = vpack.c.b16 %v5391, %v5390
      %v5397 = vpack.c.b16 %v5393, %v5392
      %v5403 = vsel %vm1687, %v5377, 0
      %5405 = vmatprep.subr.bf16.mxu0 0
      %5406 = vmatpush1.bf16.msra.mxu0 %v5394
      %5407 = vmatprep.subr.bf16.mxu0 0
      %5408 = vmatpush1.bf16.msra.mxu0 %v5395
      %5409 = vmatprep.subr.bf16.mxu0 0
      %5410 = vmatpush1.bf16.msra.mxu0 %v5396
      %5411 = vmatprep.subr.bf16.mxu0 0
      %5412 = vmatpush1.bf16.msra.mxu0 %v5397
      %5413 = vmatprep.subr.bf16.mxu0 0
      %5414 = vmatpush1.bf16.msra.mxu0 0
      %5415 = vmatprep.subr.bf16.mxu0 0
      %5416 = vmatpush1.bf16.msra.mxu0 0
      %5417 = vmatprep.subr.bf16.mxu0 0
      %5418 = vmatpush1.bf16.msra.mxu0 0
      %5419 = vmatprep.subr.bf16.mxu0 0
      %5420 = vmatpush1.bf16.msra.mxu0 0
      %5421 = vmatprep.subr.bf16.mxu0 0
      %5422 = vmatpush1.bf16.msra.mxu0 0
      %5423 = vmatprep.subr.bf16.mxu0 0
      %5424 = vmatpush1.bf16.msra.mxu0 0
      %5425 = vmatprep.subr.bf16.mxu0 0
      %5426 = vmatpush1.bf16.msra.mxu0 0
      %5427 = vmatprep.subr.bf16.mxu0 0
      %5428 = vmatpush1.bf16.msra.mxu0 0
      %5429 = vmatprep.subr.bf16.mxu0 0
      %5430 = vmatpush1.bf16.msra.mxu0 0
      %5431 = vmatprep.subr.bf16.mxu0 0
      %5432 = vmatpush1.bf16.msra.mxu0 0
      %5433 = vmatprep.subr.bf16.mxu0 0
      %5434 = vmatpush1.bf16.msra.mxu0 0
      %5435 = vmatprep.subr.bf16.mxu0 0
      %5436 = vmatpush1.bf16.msra.mxu0 0
      %5437 = vmatprep.mubr.bf16.mxu0 0
      %5438 = vmatmul.mubr.bf16.gmra.mrb[0].mxu0 %v5403
      %v5439 = vpop.f32.mrb[0].mxu0
      %v5440 = vadd.f32 0.0, %v5439
      %v5441 = vpop.f32.mrb[0].mxu0
      %v5442 = vpop.f32.mrb[0].mxu0
      %v5443 = vpop.f32.mrb[0].mxu0
      %5444 = vdwg.mxu0
      %v5445 = vadd.f32 %v5361, %v5440
      %v5446 = vmax.f32 %v5445, 0.0
      %v5449 = vunpack.c.l.s4 1983009808
      %v5450 = vunpack.c.0.s8 %v5449
      %v5451 = vlaneseq
      %v5452 = vshrl.u32 %v5451, 7
      %v5453 = vsub.s32 %v5450, %v5452
      %v5454 = vrot.slane %v5446, %v5453
      %v5455 = vcombine.high %v5454, %v5454
      %5458 = vst.msk [vmem:[#allocation5] sm:$0xf] %vm3916, 0.0
      %5459 = vst.msk [vmem:[#allocation5 + $0x4] sm:$0xf] %vm3916, 0.0
      %5460 = vst.msk [vmem:[#allocation5 + $0x8] sm:$0xf] %vm3916, 0.0
      %5461 = vst.msk [vmem:[#allocation5 + $0xc] sm:$0xf] %vm3916, 0.0
      %s5462 = scalar_lea.vmem [#allocation5], 4
      %5463 = vst.msk [vmem:[%s5462 + $0x1] sm:$0x3] %vm1689, %v5454
      %5464 = vst.msk [vmem:[%s5462 + $0x5] sm:$0x3] %vm1689, %v5455
      %v5465 = vld [vmem:[%s10] sm:$0x1]
      %v5466 = vadd.f32 %v5465, 0.0
      %v5467 = vld [vmem:[#allocation5] sm:$0xf]
      %v5468 = vld [vmem:[#allocation5 + $0x4] sm:$0xf]
      %v5469 = vld [vmem:[#allocation5 + $0x8] sm:$0xf]
      %v5470 = vld [vmem:[#allocation5 + $0xc] sm:$0xf]
      %v5471 = vpack.c.bf16 %v5467, %v5467
      %v5472 = vld [vmem:[%s9] sm:$0xf]
      %v5473 = vld [vmem:[%s9 + $0x4] sm:$0xf]
      %v5474 = vld [vmem:[%s9 + $0x8] sm:$0xf]
      %v5475 = vld [vmem:[%s9 + $0xc] sm:$0xf]
      %v5476 = vld [vmem:[%s9 + $0x10] sm:$0xf]
      %v5477 = vld [vmem:[%s9 + $0x14] sm:$0xf]
      %v5478 = vld [vmem:[%s9 + $0x18] sm:$0xf]
      %v5479 = vld [vmem:[%s9 + $0x1c] sm:$0xf]
      %v5488 = vunpack.c.l.b16 %v5472
      %v5489 = vunpack.c.l.b16 %v5473
      %v5490 = vunpack.c.l.b16 %v5474
      %v5491 = vunpack.c.l.b16 %v5475
      %v5492 = vunpack.c.l.b16 %v5476
      %v5493 = vunpack.c.l.b16 %v5477
      %v5494 = vunpack.c.l.b16 %v5478
      %v5495 = vunpack.c.l.b16 %v5479
      %v5496 = vpack.c.b16 %v5489, %v5488
      %v5497 = vpack.c.b16 %v5491, %v5490
      %v5498 = vpack.c.b16 %v5493, %v5492
      %v5499 = vpack.c.b16 %v5495, %v5494
      %v5505 = vsel %vm1687, %v5471, 0
      %5507 = vmatprep.subr.bf16.mxu0 0
      %5508 = vmatpush1.bf16.msra.mxu0 %v5496
      %5509 = vmatprep.subr.bf16.mxu0 0
      %5510 = vmatpush1.bf16.msra.mxu0 %v5497
      %5511 = vmatprep.subr.bf16.mxu0 0
      %5512 = vmatpush1.bf16.msra.mxu0 %v5498
      %5513 = vmatprep.subr.bf16.mxu0 0
      %5514 = vmatpush1.bf16.msra.mxu0 %v5499
      %5515 = vmatprep.subr.bf16.mxu0 0
      %5516 = vmatpush1.bf16.msra.mxu0 0
      %5517 = vmatprep.subr.bf16.mxu0 0
      %5518 = vmatpush1.bf16.msra.mxu0 0
      %5519 = vmatprep.subr.bf16.mxu0 0
      %5520 = vmatpush1.bf16.msra.mxu0 0
      %5521 = vmatprep.subr.bf16.mxu0 0
      %5522 = vmatpush1.bf16.msra.mxu0 0
      %5523 = vmatprep.subr.bf16.mxu0 0
      %5524 = vmatpush1.bf16.msra.mxu0 0
      %5525 = vmatprep.subr.bf16.mxu0 0
      %5526 = vmatpush1.bf16.msra.mxu0 0
      %5527 = vmatprep.subr.bf16.mxu0 0
      %5528 = vmatpush1.bf16.msra.mxu0 0
      %5529 = vmatprep.subr.bf16.mxu0 0
      %5530 = vmatpush1.bf16.msra.mxu0 0
      %5531 = vmatprep.subr.bf16.mxu0 0
      %5532 = vmatpush1.bf16.msra.mxu0 0
      %5533 = vmatprep.subr.bf16.mxu0 0
      %5534 = vmatpush1.bf16.msra.mxu0 0
      %5535 = vmatprep.subr.bf16.mxu0 0
      %5536 = vmatpush1.bf16.msra.mxu0 0
      %5537 = vmatprep.subr.bf16.mxu0 0
      %5538 = vmatpush1.bf16.msra.mxu0 0
      %5539 = vmatprep.mubr.bf16.mxu0 0
      %5540 = vmatmul.mubr.bf16.gmra.mrb[0].mxu0 %v5505
      %v5541 = vpop.f32.mrb[0].mxu0
      %v5542 = vadd.f32 0.0, %v5541
      %v5543 = vpop.f32.mrb[0].mxu0
      %v5544 = vpop.f32.mrb[0].mxu0
      %v5545 = vpop.f32.mrb[0].mxu0
      %5546 = vdwg.mxu0
      %v5547 = vadd.f32 %v5466, %v5542
      %s5548 = scalar_lea.vmem %s9, 32
      %v5549 = vld [vmem:[%s5548] sm:$0xf]
      %v5550 = vld [vmem:[%s5548 + $0x4] sm:$0xf]
      %v5551 = vld [vmem:[%s5548 + $0x8] sm:$0xf]
      %v5552 = vld [vmem:[%s5548 + $0xc] sm:$0xf]
      %v5553 = vld [vmem:[%s5548 + $0x10] sm:$0xf]
      %v5554 = vld [vmem:[%s5548 + $0x14] sm:$0xf]
      %v5555 = vld [vmem:[%s5548 + $0x18] sm:$0xf]
      %v5556 = vld [vmem:[%s5548 + $0x1c] sm:$0xf]
      %v5557 = vshrl.u32 %v5471, 16
      %v5567 = vunpack.c.l.b16 %v5549
      %v5568 = vunpack.c.l.b16 %v5550
      %v5569 = vunpack.c.l.b16 %v5551
      %v5570 = vunpack.c.l.b16 %v5552
      %v5571 = vunpack.c.l.b16 %v5553
      %v5572 = vunpack.c.l.b16 %v5554
      %v5573 = vunpack.c.l.b16 %v5555
      %v5574 = vunpack.c.l.b16 %v5556
      %v5575 = vpack.c.b16 %v5568, %v5567
      %v5576 = vpack.c.b16 %v5570, %v5569
      %v5577 = vpack.c.b16 %v5572, %v5571
      %v5578 = vpack.c.b16 %v5574, %v5573
      %v5584 = vsel %vm1687, %v5557, 0
      %5586 = vmatprep.subr.bf16.mxu0 0
      %5587 = vmatpush1.bf16.msra.mxu0 %v5575
      %5588 = vmatprep.subr.bf16.mxu0 0
      %5589 = vmatpush1.bf16.msra.mxu0 %v5576
      %5590 = vmatprep.subr.bf16.mxu0 0
      %5591 = vmatpush1.bf16.msra.mxu0 %v5577
      %5592 = vmatprep.subr.bf16.mxu0 0
      %5593 = vmatpush1.bf16.msra.mxu0 %v5578
      %5594 = vmatprep.subr.bf16.mxu0 0
      %5595 = vmatpush1.bf16.msra.mxu0 0
      %5596 = vmatprep.subr.bf16.mxu0 0
      %5597 = vmatpush1.bf16.msra.mxu0 0
      %5598 = vmatprep.subr.bf16.mxu0 0
      %5599 = vmatpush1.bf16.msra.mxu0 0
      %5600 = vmatprep.subr.bf16.mxu0 0
      %5601 = vmatpush1.bf16.msra.mxu0 0
      %5602 = vmatprep.subr.bf16.mxu0 0
      %5603 = vmatpush1.bf16.msra.mxu0 0
      %5604 = vmatprep.subr.bf16.mxu0 0
      %5605 = vmatpush1.bf16.msra.mxu0 0
      %5606 = vmatprep.subr.bf16.mxu0 0
      %5607 = vmatpush1.bf16.msra.mxu0 0
      %5608 = vmatprep.subr.bf16.mxu0 0
      %5609 = vmatpush1.bf16.msra.mxu0 0
      %5610 = vmatprep.subr.bf16.mxu0 0
      %5611 = vmatpush1.bf16.msra.mxu0 0
      %5612 = vmatprep.subr.bf16.mxu0 0
      %5613 = vmatpush1.bf16.msra.mxu0 0
      %5614 = vmatprep.subr.bf16.mxu0 0
      %5615 = vmatpush1.bf16.msra.mxu0 0
      %5616 = vmatprep.subr.bf16.mxu0 0
      %5617 = vmatpush1.bf16.msra.mxu0 0
      %5618 = vmatprep.mubr.bf16.mxu0 0
      %5619 = vmatmul.mubr.bf16.gmra.mrb[0].mxu0 %v5584
      %v5620 = vpop.f32.mrb[0].mxu0
      %v5621 = vadd.f32 0.0, %v5620
      %v5622 = vpop.f32.mrb[0].mxu0
      %v5623 = vpop.f32.mrb[0].mxu0
      %v5624 = vpop.f32.mrb[0].mxu0
      %5625 = vdwg.mxu0
      %v5626 = vadd.f32 %v5547, %v5621
      %s5627 = scalar_lea.vmem %s9, 64
      %v5628 = vld [vmem:[%s5627] sm:$0xf]
      %v5629 = vld [vmem:[%s5627 + $0x4] sm:$0xf]
      %v5630 = vld [vmem:[%s5627 + $0x8] sm:$0xf]
      %v5631 = vld [vmem:[%s5627 + $0xc] sm:$0xf]
      %v5632 = vld [vmem:[%s5627 + $0x10] sm:$0xf]
      %v5633 = vld [vmem:[%s5627 + $0x14] sm:$0xf]
      %v5634 = vld [vmem:[%s5627 + $0x18] sm:$0xf]
      %v5635 = vld [vmem:[%s5627 + $0x1c] sm:$0xf]
      %v5637 = vrot.slane %v5471, 1
      %v5646 = vunpack.c.l.b16 %v5628
      %v5647 = vunpack.c.l.b16 %v5629
      %v5648 = vunpack.c.l.b16 %v5630
      %v5649 = vunpack.c.l.b16 %v5631
      %v5650 = vunpack.c.l.b16 %v5632
      %v5651 = vunpack.c.l.b16 %v5633
      %v5652 = vunpack.c.l.b16 %v5634
      %v5653 = vunpack.c.l.b16 %v5635
      %v5654 = vpack.c.b16 %v5647, %v5646
      %v5655 = vpack.c.b16 %v5649, %v5648
      %v5656 = vpack.c.b16 %v5651, %v5650
      %v5657 = vpack.c.b16 %v5653, %v5652
      %v5663 = vsel %vm1687, %v5637, 0
      %5665 = vmatprep.subr.bf16.mxu0 0
      %5666 = vmatpush1.bf16.msra.mxu0 %v5654
      %5667 = vmatprep.subr.bf16.mxu0 0
      %5668 = vmatpush1.bf16.msra.mxu0 %v5655
      %5669 = vmatprep.subr.bf16.mxu0 0
      %5670 = vmatpush1.bf16.msra.mxu0 %v5656
      %5671 = vmatprep.subr.bf16.mxu0 0
      %5672 = vmatpush1.bf16.msra.mxu0 %v5657
      %5673 = vmatprep.subr.bf16.mxu0 0
      %5674 = vmatpush1.bf16.msra.mxu0 0
      %5675 = vmatprep.subr.bf16.mxu0 0
      %5676 = vmatpush1.bf16.msra.mxu0 0
      %5677 = vmatprep.subr.bf16.mxu0 0
      %5678 = vmatpush1.bf16.msra.mxu0 0
      %5679 = vmatprep.subr.bf16.mxu0 0
      %5680 = vmatpush1.bf16.msra.mxu0 0
      %5681 = vmatprep.subr.bf16.mxu0 0
      %5682 = vmatpush1.bf16.msra.mxu0 0
      %5683 = vmatprep.subr.bf16.mxu0 0
      %5684 = vmatpush1.bf16.msra.mxu0 0
      %5685 = vmatprep.subr.bf16.mxu0 0
      %5686 = vmatpush1.bf16.msra.mxu0 0
      %5687 = vmatprep.subr.bf16.mxu0 0
      %5688 = vmatpush1.bf16.msra.mxu0 0
      %5689 = vmatprep.subr.bf16.mxu0 0
      %5690 = vmatpush1.bf16.msra.mxu0 0
      %5691 = vmatprep.subr.bf16.mxu0 0
      %5692 = vmatpush1.bf16.msra.mxu0 0
      %5693 = vmatprep.subr.bf16.mxu0 0
      %5694 = vmatpush1.bf16.msra.mxu0 0
      %5695 = vmatprep.subr.bf16.mxu0 0
      %5696 = vmatpush1.bf16.msra.mxu0 0
      %5697 = vmatprep.mubr.bf16.mxu0 0
      %5698 = vmatmul.mubr.bf16.gmra.mrb[0].mxu0 %v5663
      %v5699 = vpop.f32.mrb[0].mxu0
      %v5700 = vadd.f32 0.0, %v5699
      %v5701 = vpop.f32.mrb[0].mxu0
      %v5702 = vpop.f32.mrb[0].mxu0
      %v5703 = vpop.f32.mrb[0].mxu0
      %5704 = vdwg.mxu0
      %v5705 = vadd.f32 %v5626, %v5700
      %s5706 = scalar_lea.vmem %s9, 96
      %v5707 = vld [vmem:[%s5706] sm:$0xf]
      %v5708 = vld [vmem:[%s5706 + $0x4] sm:$0xf]
      %v5709 = vld [vmem:[%s5706 + $0x8] sm:$0xf]
      %v5710 = vld [vmem:[%s5706 + $0xc] sm:$0xf]
      %v5711 = vld [vmem:[%s5706 + $0x10] sm:$0xf]
      %v5712 = vld [vmem:[%s5706 + $0x14] sm:$0xf]
      %v5713 = vld [vmem:[%s5706 + $0x18] sm:$0xf]
      %v5714 = vld [vmem:[%s5706 + $0x1c] sm:$0xf]
      %v5715 = vrot.slane %v5557, 1
      %v5724 = vunpack.c.l.b16 %v5707
      %v5725 = vunpack.c.l.b16 %v5708
      %v5726 = vunpack.c.l.b16 %v5709
      %v5727 = vunpack.c.l.b16 %v5710
      %v5728 = vunpack.c.l.b16 %v5711
      %v5729 = vunpack.c.l.b16 %v5712
      %v5730 = vunpack.c.l.b16 %v5713
      %v5731 = vunpack.c.l.b16 %v5714
      %v5732 = vpack.c.b16 %v5725, %v5724
      %v5733 = vpack.c.b16 %v5727, %v5726
      %v5734 = vpack.c.b16 %v5729, %v5728
      %v5735 = vpack.c.b16 %v5731, %v5730
      %v5741 = vsel %vm1687, %v5715, 0
      %5743 = vmatprep.subr.bf16.mxu0 0
      %5744 = vmatpush1.bf16.msra.mxu0 %v5732
      %5745 = vmatprep.subr.bf16.mxu0 0
      %5746 = vmatpush1.bf16.msra.mxu0 %v5733
      %5747 = vmatprep.subr.bf16.mxu0 0
      %5748 = vmatpush1.bf16.msra.mxu0 %v5734
      %5749 = vmatprep.subr.bf16.mxu0 0
      %5750 = vmatpush1.bf16.msra.mxu0 %v5735
      %5751 = vmatprep.subr.bf16.mxu0 0
      %5752 = vmatpush1.bf16.msra.mxu0 0
      %5753 = vmatprep.subr.bf16.mxu0 0
      %5754 = vmatpush1.bf16.msra.mxu0 0
      %5755 = vmatprep.subr.bf16.mxu0 0
      %5756 = vmatpush1.bf16.msra.mxu0 0
      %5757 = vmatprep.subr.bf16.mxu0 0
      %5758 = vmatpush1.bf16.msra.mxu0 0
      %5759 = vmatprep.subr.bf16.mxu0 0
      %5760 = vmatpush1.bf16.msra.mxu0 0
      %5761 = vmatprep.subr.bf16.mxu0 0
      %5762 = vmatpush1.bf16.msra.mxu0 0
      %5763 = vmatprep.subr.bf16.mxu0 0
      %5764 = vmatpush1.bf16.msra.mxu0 0
      %5765 = vmatprep.subr.bf16.mxu0 0
      %5766 = vmatpush1.bf16.msra.mxu0 0
      %5767 = vmatprep.subr.bf16.mxu0 0
      %5768 = vmatpush1.bf16.msra.mxu0 0
      %5769 = vmatprep.subr.bf16.mxu0 0
      %5770 = vmatpush1.bf16.msra.mxu0 0
      %5771 = vmatprep.subr.bf16.mxu0 0
      %5772 = vmatpush1.bf16.msra.mxu0 0
      %5773 = vmatprep.subr.bf16.mxu0 0
      %5774 = vmatpush1.bf16.msra.mxu0 0
      %5775 = vmatprep.mubr.bf16.mxu0 0
      %5776 = vmatmul.mubr.bf16.gmra.mrb[0].mxu0 %v5741
      %v5777 = vpop.f32.mrb[0].mxu0
      %v5778 = vadd.f32 0.0, %v5777
      %v5779 = vpop.f32.mrb[0].mxu0
      %v5780 = vpop.f32.mrb[0].mxu0
      %v5781 = vpop.f32.mrb[0].mxu0
      %5782 = vdwg.mxu0
      %v5783 = vadd.f32 %v5705, %v5778
      %v5784 = vpack.c.bf16 %v5468, %v5468
      %s5785 = scalar_lea.vmem %s9, 128
      %v5786 = vld [vmem:[%s5785] sm:$0xf]
      %v5787 = vld [vmem:[%s5785 + $0x4] sm:$0xf]
      %v5788 = vld [vmem:[%s5785 + $0x8] sm:$0xf]
      %v5789 = vld [vmem:[%s5785 + $0xc] sm:$0xf]
      %v5790 = vld [vmem:[%s5785 + $0x10] sm:$0xf]
      %v5791 = vld [vmem:[%s5785 + $0x14] sm:$0xf]
      %v5792 = vld [vmem:[%s5785 + $0x18] sm:$0xf]
      %v5793 = vld [vmem:[%s5785 + $0x1c] sm:$0xf]
      %v5802 = vunpack.c.l.b16 %v5786
      %v5803 = vunpack.c.l.b16 %v5787
      %v5804 = vunpack.c.l.b16 %v5788
      %v5805 = vunpack.c.l.b16 %v5789
      %v5806 = vunpack.c.l.b16 %v5790
      %v5807 = vunpack.c.l.b16 %v5791
      %v5808 = vunpack.c.l.b16 %v5792
      %v5809 = vunpack.c.l.b16 %v5793
      %v5810 = vpack.c.b16 %v5803, %v5802
      %v5811 = vpack.c.b16 %v5805, %v5804
      %v5812 = vpack.c.b16 %v5807, %v5806
      %v5813 = vpack.c.b16 %v5809, %v5808
      %v5819 = vsel %vm1687, %v5784, 0
      %5821 = vmatprep.subr.bf16.mxu0 0
      %5822 = vmatpush1.bf16.msra.mxu0 %v5810
      %5823 = vmatprep.subr.bf16.mxu0 0
      %5824 = vmatpush1.bf16.msra.mxu0 %v5811
      %5825 = vmatprep.subr.bf16.mxu0 0
      %5826 = vmatpush1.bf16.msra.mxu0 %v5812
      %5827 = vmatprep.subr.bf16.mxu0 0
      %5828 = vmatpush1.bf16.msra.mxu0 %v5813
      %5829 = vmatprep.subr.bf16.mxu0 0
      %5830 = vmatpush1.bf16.msra.mxu0 0
      %5831 = vmatprep.subr.bf16.mxu0 0
      %5832 = vmatpush1.bf16.msra.mxu0 0
      %5833 = vmatprep.subr.bf16.mxu0 0
      %5834 = vmatpush1.bf16.msra.mxu0 0
      %5835 = vmatprep.subr.bf16.mxu0 0
      %5836 = vmatpush1.bf16.msra.mxu0 0
      %5837 = vmatprep.subr.bf16.mxu0 0
      %5838 = vmatpush1.bf16.msra.mxu0 0
      %5839 = vmatprep.subr.bf16.mxu0 0
      %5840 = vmatpush1.bf16.msra.mxu0 0
      %5841 = vmatprep.subr.bf16.mxu0 0
      %5842 = vmatpush1.bf16.msra.mxu0 0
      %5843 = vmatprep.subr.bf16.mxu0 0
      %5844 = vmatpush1.bf16.msra.mxu0 0
      %5845 = vmatprep.subr.bf16.mxu0 0
      %5846 = vmatpush1.bf16.msra.mxu0 0
      %5847 = vmatprep.subr.bf16.mxu0 0
      %5848 = vmatpush1.bf16.msra.mxu0 0
      %5849 = vmatprep.subr.bf16.mxu0 0
      %5850 = vmatpush1.bf16.msra.mxu0 0
      %5851 = vmatprep.subr.bf16.mxu0 0
      %5852 = vmatpush1.bf16.msra.mxu0 0
      %5853 = vmatprep.mubr.bf16.mxu0 0
      %5854 = vmatmul.mubr.bf16.gmra.mrb[0].mxu0 %v5819
      %v5855 = vpop.f32.mrb[0].mxu0
      %v5856 = vadd.f32 0.0, %v5855
      %v5857 = vpop.f32.mrb[0].mxu0
      %v5858 = vpop.f32.mrb[0].mxu0
      %v5859 = vpop.f32.mrb[0].mxu0
      %5860 = vdwg.mxu0
      %v5861 = vadd.f32 %v5783, %v5856
      %s5862 = scalar_lea.vmem %s9, 160
      %v5863 = vld [vmem:[%s5862] sm:$0xf]
      %v5864 = vld [vmem:[%s5862 + $0x4] sm:$0xf]
      %v5865 = vld [vmem:[%s5862 + $0x8] sm:$0xf]
      %v5866 = vld [vmem:[%s5862 + $0xc] sm:$0xf]
      %v5867 = vld [vmem:[%s5862 + $0x10] sm:$0xf]
      %v5868 = vld [vmem:[%s5862 + $0x14] sm:$0xf]
      %v5869 = vld [vmem:[%s5862 + $0x18] sm:$0xf]
      %v5870 = vld [vmem:[%s5862 + $0x1c] sm:$0xf]
      %v5871 = vshrl.u32 %v5784, 16
      %v5881 = vunpack.c.l.b16 %v5863
      %v5882 = vunpack.c.l.b16 %v5864
      %v5883 = vunpack.c.l.b16 %v5865
      %v5884 = vunpack.c.l.b16 %v5866
      %v5885 = vunpack.c.l.b16 %v5867
      %v5886 = vunpack.c.l.b16 %v5868
      %v5887 = vunpack.c.l.b16 %v5869
      %v5888 = vunpack.c.l.b16 %v5870
      %v5889 = vpack.c.b16 %v5882, %v5881
      %v5890 = vpack.c.b16 %v5884, %v5883
      %v5891 = vpack.c.b16 %v5886, %v5885
      %v5892 = vpack.c.b16 %v5888, %v5887
      %v5898 = vsel %vm1687, %v5871, 0
      %5900 = vmatprep.subr.bf16.mxu0 0
      %5901 = vmatpush1.bf16.msra.mxu0 %v5889
      %5902 = vmatprep.subr.bf16.mxu0 0
      %5903 = vmatpush1.bf16.msra.mxu0 %v5890
      %5904 = vmatprep.subr.bf16.mxu0 0
      %5905 = vmatpush1.bf16.msra.mxu0 %v5891
      %5906 = vmatprep.subr.bf16.mxu0 0
      %5907 = vmatpush1.bf16.msra.mxu0 %v5892
      %5908 = vmatprep.subr.bf16.mxu0 0
      %5909 = vmatpush1.bf16.msra.mxu0 0
      %5910 = vmatprep.subr.bf16.mxu0 0
      %5911 = vmatpush1.bf16.msra.mxu0 0
      %5912 = vmatprep.subr.bf16.mxu0 0
      %5913 = vmatpush1.bf16.msra.mxu0 0
      %5914 = vmatprep.subr.bf16.mxu0 0
      %5915 = vmatpush1.bf16.msra.mxu0 0
      %5916 = vmatprep.subr.bf16.mxu0 0
      %5917 = vmatpush1.bf16.msra.mxu0 0
      %5918 = vmatprep.subr.bf16.mxu0 0
      %5919 = vmatpush1.bf16.msra.mxu0 0
      %5920 = vmatprep.subr.bf16.mxu0 0
      %5921 = vmatpush1.bf16.msra.mxu0 0
      %5922 = vmatprep.subr.bf16.mxu0 0
      %5923 = vmatpush1.bf16.msra.mxu0 0
      %5924 = vmatprep.subr.bf16.mxu0 0
      %5925 = vmatpush1.bf16.msra.mxu0 0
      %5926 = vmatprep.subr.bf16.mxu0 0
      %5927 = vmatpush1.bf16.msra.mxu0 0
      %5928 = vmatprep.subr.bf16.mxu0 0
      %5929 = vmatpush1.bf16.msra.mxu0 0
      %5930 = vmatprep.subr.bf16.mxu0 0
      %5931 = vmatpush1.bf16.msra.mxu0 0
      %5932 = vmatprep.mubr.bf16.mxu0 0
      %5933 = vmatmul.mubr.bf16.gmra.mrb[0].mxu0 %v5898
      %v5934 = vpop.f32.mrb[0].mxu0
      %v5935 = vadd.f32 0.0, %v5934
      %v5936 = vpop.f32.mrb[0].mxu0
      %v5937 = vpop.f32.mrb[0].mxu0
      %v5938 = vpop.f32.mrb[0].mxu0
      %5939 = vdwg.mxu0
      %v5940 = vadd.f32 %v5861, %v5935
      %s5941 = scalar_lea.vmem %s9, 192
      %v5942 = vld [vmem:[%s5941] sm:$0xf]
      %v5943 = vld [vmem:[%s5941 + $0x4] sm:$0xf]
      %v5944 = vld [vmem:[%s5941 + $0x8] sm:$0xf]
      %v5945 = vld [vmem:[%s5941 + $0xc] sm:$0xf]
      %v5946 = vld [vmem:[%s5941 + $0x10] sm:$0xf]
      %v5947 = vld [vmem:[%s5941 + $0x14] sm:$0xf]
      %v5948 = vld [vmem:[%s5941 + $0x18] sm:$0xf]
      %v5949 = vld [vmem:[%s5941 + $0x1c] sm:$0xf]
      %v5951 = vrot.slane %v5784, 1
      %v5960 = vunpack.c.l.b16 %v5942
      %v5961 = vunpack.c.l.b16 %v5943
      %v5962 = vunpack.c.l.b16 %v5944
      %v5963 = vunpack.c.l.b16 %v5945
      %v5964 = vunpack.c.l.b16 %v5946
      %v5965 = vunpack.c.l.b16 %v5947
      %v5966 = vunpack.c.l.b16 %v5948
      %v5967 = vunpack.c.l.b16 %v5949
      %v5968 = vpack.c.b16 %v5961, %v5960
      %v5969 = vpack.c.b16 %v5963, %v5962
      %v5970 = vpack.c.b16 %v5965, %v5964
      %v5971 = vpack.c.b16 %v5967, %v5966
      %v5977 = vsel %vm1687, %v5951, 0
      %5979 = vmatprep.subr.bf16.mxu0 0
      %5980 = vmatpush1.bf16.msra.mxu0 %v5968
      %5981 = vmatprep.subr.bf16.mxu0 0
      %5982 = vmatpush1.bf16.msra.mxu0 %v5969
      %5983 = vmatprep.subr.bf16.mxu0 0
      %5984 = vmatpush1.bf16.msra.mxu0 %v5970
      %5985 = vmatprep.subr.bf16.mxu0 0
      %5986 = vmatpush1.bf16.msra.mxu0 %v5971
      %5987 = vmatprep.subr.bf16.mxu0 0
      %5988 = vmatpush1.bf16.msra.mxu0 0
      %5989 = vmatprep.subr.bf16.mxu0 0
      %5990 = vmatpush1.bf16.msra.mxu0 0
      %5991 = vmatprep.subr.bf16.mxu0 0
      %5992 = vmatpush1.bf16.msra.mxu0 0
      %5993 = vmatprep.subr.bf16.mxu0 0
      %5994 = vmatpush1.bf16.msra.mxu0 0
      %5995 = vmatprep.subr.bf16.mxu0 0
      %5996 = vmatpush1.bf16.msra.mxu0 0
      %5997 = vmatprep.subr.bf16.mxu0 0
      %5998 = vmatpush1.bf16.msra.mxu0 0
      %5999 = vmatprep.subr.bf16.mxu0 0
      %6000 = vmatpush1.bf16.msra.mxu0 0
      %6001 = vmatprep.subr.bf16.mxu0 0
      %6002 = vmatpush1.bf16.msra.mxu0 0
      %6003 = vmatprep.subr.bf16.mxu0 0
      %6004 = vmatpush1.bf16.msra.mxu0 0
      %6005 = vmatprep.subr.bf16.mxu0 0
      %6006 = vmatpush1.bf16.msra.mxu0 0
      %6007 = vmatprep.subr.bf16.mxu0 0
      %6008 = vmatpush1.bf16.msra.mxu0 0
      %6009 = vmatprep.subr.bf16.mxu0 0
      %6010 = vmatpush1.bf16.msra.mxu0 0
      %6011 = vmatprep.mubr.bf16.mxu0 0
      %6012 = vmatmul.mubr.bf16.gmra.mrb[0].mxu0 %v5977
      %v6013 = vpop.f32.mrb[0].mxu0
      %v6014 = vadd.f32 0.0, %v6013
      %v6015 = vpop.f32.mrb[0].mxu0
      %v6016 = vpop.f32.mrb[0].mxu0
      %v6017 = vpop.f32.mrb[0].mxu0
      %6018 = vdwg.mxu0
      %v6019 = vadd.f32 %v5940, %v6014
      %s6020 = scalar_lea.vmem %s9, 224
      %v6021 = vld [vmem:[%s6020] sm:$0xf]
      %v6022 = vld [vmem:[%s6020 + $0x4] sm:$0xf]
      %v6023 = vld [vmem:[%s6020 + $0x8] sm:$0xf]
      %v6024 = vld [vmem:[%s6020 + $0xc] sm:$0xf]
      %v6025 = vld [vmem:[%s6020 + $0x10] sm:$0xf]
      %v6026 = vld [vmem:[%s6020 + $0x14] sm:$0xf]
      %v6027 = vld [vmem:[%s6020 + $0x18] sm:$0xf]
      %v6028 = vld [vmem:[%s6020 + $0x1c] sm:$0xf]
      %v6029 = vrot.slane %v5871, 1
      %v6038 = vunpack.c.l.b16 %v6021
      %v6039 = vunpack.c.l.b16 %v6022
      %v6040 = vunpack.c.l.b16 %v6023
      %v6041 = vunpack.c.l.b16 %v6024
      %v6042 = vunpack.c.l.b16 %v6025
      %v6043 = vunpack.c.l.b16 %v6026
      %v6044 = vunpack.c.l.b16 %v6027
      %v6045 = vunpack.c.l.b16 %v6028
      %v6046 = vpack.c.b16 %v6039, %v6038
      %v6047 = vpack.c.b16 %v6041, %v6040
      %v6048 = vpack.c.b16 %v6043, %v6042
      %v6049 = vpack.c.b16 %v6045, %v6044
      %v6055 = vsel %vm1687, %v6029, 0
      %6057 = vmatprep.subr.bf16.mxu0 0
      %6058 = vmatpush1.bf16.msra.mxu0 %v6046
      %6059 = vmatprep.subr.bf16.mxu0 0
      %6060 = vmatpush1.bf16.msra.mxu0 %v6047
      %6061 = vmatprep.subr.bf16.mxu0 0
      %6062 = vmatpush1.bf16.msra.mxu0 %v6048
      %6063 = vmatprep.subr.bf16.mxu0 0
      %6064 = vmatpush1.bf16.msra.mxu0 %v6049
      %6065 = vmatprep.subr.bf16.mxu0 0
      %6066 = vmatpush1.bf16.msra.mxu0 0
      %6067 = vmatprep.subr.bf16.mxu0 0
      %6068 = vmatpush1.bf16.msra.mxu0 0
      %6069 = vmatprep.subr.bf16.mxu0 0
      %6070 = vmatpush1.bf16.msra.mxu0 0
      %6071 = vmatprep.subr.bf16.mxu0 0
      %6072 = vmatpush1.bf16.msra.mxu0 0
      %6073 = vmatprep.subr.bf16.mxu0 0
      %6074 = vmatpush1.bf16.msra.mxu0 0
      %6075 = vmatprep.subr.bf16.mxu0 0
      %6076 = vmatpush1.bf16.msra.mxu0 0
      %6077 = vmatprep.subr.bf16.mxu0 0
      %6078 = vmatpush1.bf16.msra.mxu0 0
      %6079 = vmatprep.subr.bf16.mxu0 0
      %6080 = vmatpush1.bf16.msra.mxu0 0
      %6081 = vmatprep.subr.bf16.mxu0 0
      %6082 = vmatpush1.bf16.msra.mxu0 0
      %6083 = vmatprep.subr.bf16.mxu0 0
      %6084 = vmatpush1.bf16.msra.mxu0 0
      %6085 = vmatprep.subr.bf16.mxu0 0
      %6086 = vmatpush1.bf16.msra.mxu0 0
      %6087 = vmatprep.subr.bf16.mxu0 0
      %6088 = vmatpush1.bf16.msra.mxu0 0
      %6089 = vmatprep.mubr.bf16.mxu0 0
      %6090 = vmatmul.mubr.bf16.gmra.mrb[0].mxu0 %v6055
      %v6091 = vpop.f32.mrb[0].mxu0
      %v6092 = vadd.f32 0.0, %v6091
      %v6093 = vpop.f32.mrb[0].mxu0
      %v6094 = vpop.f32.mrb[0].mxu0
      %v6095 = vpop.f32.mrb[0].mxu0
      %6096 = vdwg.mxu0
      %v6097 = vadd.f32 %v6019, %v6092
      %v6098 = vpack.c.bf16 %v5469, %v5469
      %s6099 = scalar_lea.vmem %s9, 256
      %v6100 = vld [vmem:[%s6099] sm:$0xf]
      %v6101 = vld [vmem:[%s6099 + $0x4] sm:$0xf]
      %v6102 = vld [vmem:[%s6099 + $0x8] sm:$0xf]
      %v6103 = vld [vmem:[%s6099 + $0xc] sm:$0xf]
      %v6104 = vld [vmem:[%s6099 + $0x10] sm:$0xf]
      %v6105 = vld [vmem:[%s6099 + $0x14] sm:$0xf]
      %v6106 = vld [vmem:[%s6099 + $0x18] sm:$0xf]
      %v6107 = vld [vmem:[%s6099 + $0x1c] sm:$0xf]
      %v6116 = vunpack.c.l.b16 %v6100
      %v6117 = vunpack.c.l.b16 %v6101
      %v6118 = vunpack.c.l.b16 %v6102
      %v6119 = vunpack.c.l.b16 %v6103
      %v6120 = vunpack.c.l.b16 %v6104
      %v6121 = vunpack.c.l.b16 %v6105
      %v6122 = vunpack.c.l.b16 %v6106
      %v6123 = vunpack.c.l.b16 %v6107
      %v6124 = vpack.c.b16 %v6117, %v6116
      %v6125 = vpack.c.b16 %v6119, %v6118
      %v6126 = vpack.c.b16 %v6121, %v6120
      %v6127 = vpack.c.b16 %v6123, %v6122
      %v6133 = vsel %vm1687, %v6098, 0
      %6135 = vmatprep.subr.bf16.mxu0 0
      %6136 = vmatpush1.bf16.msra.mxu0 %v6124
      %6137 = vmatprep.subr.bf16.mxu0 0
      %6138 = vmatpush1.bf16.msra.mxu0 %v6125
      %6139 = vmatprep.subr.bf16.mxu0 0
      %6140 = vmatpush1.bf16.msra.mxu0 %v6126
      %6141 = vmatprep.subr.bf16.mxu0 0
      %6142 = vmatpush1.bf16.msra.mxu0 %v6127
      %6143 = vmatprep.subr.bf16.mxu0 0
      %6144 = vmatpush1.bf16.msra.mxu0 0
      %6145 = vmatprep.subr.bf16.mxu0 0
      %6146 = vmatpush1.bf16.msra.mxu0 0
      %6147 = vmatprep.subr.bf16.mxu0 0
      %6148 = vmatpush1.bf16.msra.mxu0 0
      %6149 = vmatprep.subr.bf16.mxu0 0
      %6150 = vmatpush1.bf16.msra.mxu0 0
      %6151 = vmatprep.subr.bf16.mxu0 0
      %6152 = vmatpush1.bf16.msra.mxu0 0
      %6153 = vmatprep.subr.bf16.mxu0 0
      %6154 = vmatpush1.bf16.msra.mxu0 0
      %6155 = vmatprep.subr.bf16.mxu0 0
      %6156 = vmatpush1.bf16.msra.mxu0 0
      %6157 = vmatprep.subr.bf16.mxu0 0
      %6158 = vmatpush1.bf16.msra.mxu0 0
      %6159 = vmatprep.subr.bf16.mxu0 0
      %6160 = vmatpush1.bf16.msra.mxu0 0
      %6161 = vmatprep.subr.bf16.mxu0 0
      %6162 = vmatpush1.bf16.msra.mxu0 0
      %6163 = vmatprep.subr.bf16.mxu0 0
      %6164 = vmatpush1.bf16.msra.mxu0 0
      %6165 = vmatprep.subr.bf16.mxu0 0
      %6166 = vmatpush1.bf16.msra.mxu0 0
      %6167 = vmatprep.mubr.bf16.mxu0 0
      %6168 = vmatmul.mubr.bf16.gmra.mrb[0].mxu0 %v6133
      %v6169 = vpop.f32.mrb[0].mxu0
      %v6170 = vadd.f32 0.0, %v6169
      %v6171 = vpop.f32.mrb[0].mxu0
      %v6172 = vpop.f32.mrb[0].mxu0
      %v6173 = vpop.f32.mrb[0].mxu0
      %6174 = vdwg.mxu0
      %v6175 = vadd.f32 %v6097, %v6170
      %s6176 = scalar_lea.vmem %s9, 288
      %v6177 = vld [vmem:[%s6176] sm:$0xf]
      %v6178 = vld [vmem:[%s6176 + $0x4] sm:$0xf]
      %v6179 = vld [vmem:[%s6176 + $0x8] sm:$0xf]
      %v6180 = vld [vmem:[%s6176 + $0xc] sm:$0xf]
      %v6181 = vld [vmem:[%s6176 + $0x10] sm:$0xf]
      %v6182 = vld [vmem:[%s6176 + $0x14] sm:$0xf]
      %v6183 = vld [vmem:[%s6176 + $0x18] sm:$0xf]
      %v6184 = vld [vmem:[%s6176 + $0x1c] sm:$0xf]
      %v6185 = vshrl.u32 %v6098, 16
      %v6195 = vunpack.c.l.b16 %v6177
      %v6196 = vunpack.c.l.b16 %v6178
      %v6197 = vunpack.c.l.b16 %v6179
      %v6198 = vunpack.c.l.b16 %v6180
      %v6199 = vunpack.c.l.b16 %v6181
      %v6200 = vunpack.c.l.b16 %v6182
      %v6201 = vunpack.c.l.b16 %v6183
      %v6202 = vunpack.c.l.b16 %v6184
      %v6203 = vpack.c.b16 %v6196, %v6195
      %v6204 = vpack.c.b16 %v6198, %v6197
      %v6205 = vpack.c.b16 %v6200, %v6199
      %v6206 = vpack.c.b16 %v6202, %v6201
      %v6212 = vsel %vm1687, %v6185, 0
      %6214 = vmatprep.subr.bf16.mxu0 0
      %6215 = vmatpush1.bf16.msra.mxu0 %v6203
      %6216 = vmatprep.subr.bf16.mxu0 0
      %6217 = vmatpush1.bf16.msra.mxu0 %v6204
      %6218 = vmatprep.subr.bf16.mxu0 0
      %6219 = vmatpush1.bf16.msra.mxu0 %v6205
      %6220 = vmatprep.subr.bf16.mxu0 0
      %6221 = vmatpush1.bf16.msra.mxu0 %v6206
      %6222 = vmatprep.subr.bf16.mxu0 0
      %6223 = vmatpush1.bf16.msra.mxu0 0
      %6224 = vmatprep.subr.bf16.mxu0 0
      %6225 = vmatpush1.bf16.msra.mxu0 0
      %6226 = vmatprep.subr.bf16.mxu0 0
      %6227 = vmatpush1.bf16.msra.mxu0 0
      %6228 = vmatprep.subr.bf16.mxu0 0
      %6229 = vmatpush1.bf16.msra.mxu0 0
      %6230 = vmatprep.subr.bf16.mxu0 0
      %6231 = vmatpush1.bf16.msra.mxu0 0
      %6232 = vmatprep.subr.bf16.mxu0 0
      %6233 = vmatpush1.bf16.msra.mxu0 0
      %6234 = vmatprep.subr.bf16.mxu0 0
      %6235 = vmatpush1.bf16.msra.mxu0 0
      %6236 = vmatprep.subr.bf16.mxu0 0
      %6237 = vmatpush1.bf16.msra.mxu0 0
      %6238 = vmatprep.subr.bf16.mxu0 0
      %6239 = vmatpush1.bf16.msra.mxu0 0
      %6240 = vmatprep.subr.bf16.mxu0 0
      %6241 = vmatpush1.bf16.msra.mxu0 0
      %6242 = vmatprep.subr.bf16.mxu0 0
      %6243 = vmatpush1.bf16.msra.mxu0 0
      %6244 = vmatprep.subr.bf16.mxu0 0
      %6245 = vmatpush1.bf16.msra.mxu0 0
      %6246 = vmatprep.mubr.bf16.mxu0 0
      %6247 = vmatmul.mubr.bf16.gmra.mrb[0].mxu0 %v6212
      %v6248 = vpop.f32.mrb[0].mxu0
      %v6249 = vadd.f32 0.0, %v6248
      %v6250 = vpop.f32.mrb[0].mxu0
      %v6251 = vpop.f32.mrb[0].mxu0
      %v6252 = vpop.f32.mrb[0].mxu0
      %6253 = vdwg.mxu0
      %v6254 = vadd.f32 %v6175, %v6249
      %s6255 = scalar_lea.vmem %s9, 320
      %v6256 = vld [vmem:[%s6255] sm:$0xf]
      %v6257 = vld [vmem:[%s6255 + $0x4] sm:$0xf]
      %v6258 = vld [vmem:[%s6255 + $0x8] sm:$0xf]
      %v6259 = vld [vmem:[%s6255 + $0xc] sm:$0xf]
      %v6260 = vld [vmem:[%s6255 + $0x10] sm:$0xf]
      %v6261 = vld [vmem:[%s6255 + $0x14] sm:$0xf]
      %v6262 = vld [vmem:[%s6255 + $0x18] sm:$0xf]
      %v6263 = vld [vmem:[%s6255 + $0x1c] sm:$0xf]
      %v6265 = vrot.slane %v6098, 1
      %v6274 = vunpack.c.l.b16 %v6256
      %v6275 = vunpack.c.l.b16 %v6257
      %v6276 = vunpack.c.l.b16 %v6258
      %v6277 = vunpack.c.l.b16 %v6259
      %v6278 = vunpack.c.l.b16 %v6260
      %v6279 = vunpack.c.l.b16 %v6261
      %v6280 = vunpack.c.l.b16 %v6262
      %v6281 = vunpack.c.l.b16 %v6263
      %v6282 = vpack.c.b16 %v6275, %v6274
      %v6283 = vpack.c.b16 %v6277, %v6276
      %v6284 = vpack.c.b16 %v6279, %v6278
      %v6285 = vpack.c.b16 %v6281, %v6280
      %v6291 = vsel %vm1687, %v6265, 0
      %6293 = vmatprep.subr.bf16.mxu0 0
      %6294 = vmatpush1.bf16.msra.mxu0 %v6282
      %6295 = vmatprep.subr.bf16.mxu0 0
      %6296 = vmatpush1.bf16.msra.mxu0 %v6283
      %6297 = vmatprep.subr.bf16.mxu0 0
      %6298 = vmatpush1.bf16.msra.mxu0 %v6284
      %6299 = vmatprep.subr.bf16.mxu0 0
      %6300 = vmatpush1.bf16.msra.mxu0 %v6285
      %6301 = vmatprep.subr.bf16.mxu0 0
      %6302 = vmatpush1.bf16.msra.mxu0 0
      %6303 = vmatprep.subr.bf16.mxu0 0
      %6304 = vmatpush1.bf16.msra.mxu0 0
      %6305 = vmatprep.subr.bf16.mxu0 0
      %6306 = vmatpush1.bf16.msra.mxu0 0
      %6307 = vmatprep.subr.bf16.mxu0 0
      %6308 = vmatpush1.bf16.msra.mxu0 0
      %6309 = vmatprep.subr.bf16.mxu0 0
      %6310 = vmatpush1.bf16.msra.mxu0 0
      %6311 = vmatprep.subr.bf16.mxu0 0
      %6312 = vmatpush1.bf16.msra.mxu0 0
      %6313 = vmatprep.subr.bf16.mxu0 0
      %6314 = vmatpush1.bf16.msra.mxu0 0
      %6315 = vmatprep.subr.bf16.mxu0 0
      %6316 = vmatpush1.bf16.msra.mxu0 0
      %6317 = vmatprep.subr.bf16.mxu0 0
      %6318 = vmatpush1.bf16.msra.mxu0 0
      %6319 = vmatprep.subr.bf16.mxu0 0
      %6320 = vmatpush1.bf16.msra.mxu0 0
      %6321 = vmatprep.subr.bf16.mxu0 0
      %6322 = vmatpush1.bf16.msra.mxu0 0
      %6323 = vmatprep.subr.bf16.mxu0 0
      %6324 = vmatpush1.bf16.msra.mxu0 0
      %6325 = vmatprep.mubr.bf16.mxu0 0
      %6326 = vmatmul.mubr.bf16.gmra.mrb[0].mxu0 %v6291
      %v6327 = vpop.f32.mrb[0].mxu0
      %v6328 = vadd.f32 0.0, %v6327
      %v6329 = vpop.f32.mrb[0].mxu0
      %v6330 = vpop.f32.mrb[0].mxu0
      %v6331 = vpop.f32.mrb[0].mxu0
      %6332 = vdwg.mxu0
      %v6333 = vadd.f32 %v6254, %v6328
      %s6334 = scalar_lea.vmem %s9, 352
      %v6335 = vld [vmem:[%s6334] sm:$0xf]
      %v6336 = vld [vmem:[%s6334 + $0x4] sm:$0xf]
      %v6337 = vld [vmem:[%s6334 + $0x8] sm:$0xf]
      %v6338 = vld [vmem:[%s6334 + $0xc] sm:$0xf]
      %v6339 = vld [vmem:[%s6334 + $0x10] sm:$0xf]
      %v6340 = vld [vmem:[%s6334 + $0x14] sm:$0xf]
      %v6341 = vld [vmem:[%s6334 + $0x18] sm:$0xf]
      %v6342 = vld [vmem:[%s6334 + $0x1c] sm:$0xf]
      %v6343 = vrot.slane %v6185, 1
      %v6352 = vunpack.c.l.b16 %v6335
      %v6353 = vunpack.c.l.b16 %v6336
      %v6354 = vunpack.c.l.b16 %v6337
      %v6355 = vunpack.c.l.b16 %v6338
      %v6356 = vunpack.c.l.b16 %v6339
      %v6357 = vunpack.c.l.b16 %v6340
      %v6358 = vunpack.c.l.b16 %v6341
      %v6359 = vunpack.c.l.b16 %v6342
      %v6360 = vpack.c.b16 %v6353, %v6352
      %v6361 = vpack.c.b16 %v6355, %v6354
      %v6362 = vpack.c.b16 %v6357, %v6356
      %v6363 = vpack.c.b16 %v6359, %v6358
      %v6369 = vsel %vm1687, %v6343, 0
      %6371 = vmatprep.subr.bf16.mxu0 0
      %6372 = vmatpush1.bf16.msra.mxu0 %v6360
      %6373 = vmatprep.subr.bf16.mxu0 0
      %6374 = vmatpush1.bf16.msra.mxu0 %v6361
      %6375 = vmatprep.subr.bf16.mxu0 0
      %6376 = vmatpush1.bf16.msra.mxu0 %v6362
      %6377 = vmatprep.subr.bf16.mxu0 0
      %6378 = vmatpush1.bf16.msra.mxu0 %v6363
      %6379 = vmatprep.subr.bf16.mxu0 0
      %6380 = vmatpush1.bf16.msra.mxu0 0
      %6381 = vmatprep.subr.bf16.mxu0 0
      %6382 = vmatpush1.bf16.msra.mxu0 0
      %6383 = vmatprep.subr.bf16.mxu0 0
      %6384 = vmatpush1.bf16.msra.mxu0 0
      %6385 = vmatprep.subr.bf16.mxu0 0
      %6386 = vmatpush1.bf16.msra.mxu0 0
      %6387 = vmatprep.subr.bf16.mxu0 0
      %6388 = vmatpush1.bf16.msra.mxu0 0
      %6389 = vmatprep.subr.bf16.mxu0 0
      %6390 = vmatpush1.bf16.msra.mxu0 0
      %6391 = vmatprep.subr.bf16.mxu0 0
      %6392 = vmatpush1.bf16.msra.mxu0 0
      %6393 = vmatprep.subr.bf16.mxu0 0
      %6394 = vmatpush1.bf16.msra.mxu0 0
      %6395 = vmatprep.subr.bf16.mxu0 0
      %6396 = vmatpush1.bf16.msra.mxu0 0
      %6397 = vmatprep.subr.bf16.mxu0 0
      %6398 = vmatpush1.bf16.msra.mxu0 0
      %6399 = vmatprep.subr.bf16.mxu0 0
      %6400 = vmatpush1.bf16.msra.mxu0 0
      %6401 = vmatprep.subr.bf16.mxu0 0
      %6402 = vmatpush1.bf16.msra.mxu0 0
      %6403 = vmatprep.mubr.bf16.mxu0 0
      %6404 = vmatmul.mubr.bf16.gmra.mrb[0].mxu0 %v6369
      %v6405 = vpop.f32.mrb[0].mxu0
      %v6406 = vadd.f32 0.0, %v6405
      %v6407 = vpop.f32.mrb[0].mxu0
      %v6408 = vpop.f32.mrb[0].mxu0
      %v6409 = vpop.f32.mrb[0].mxu0
      %6410 = vdwg.mxu0
      %v6411 = vadd.f32 %v6333, %v6406
      %v6412 = vpack.c.bf16 %v5470, %v5470
      %s6413 = scalar_lea.vmem %s9, 384
      %v6414 = vld [vmem:[%s6413] sm:$0xf]
      %v6415 = vld [vmem:[%s6413 + $0x4] sm:$0xf]
      %v6416 = vld [vmem:[%s6413 + $0x8] sm:$0xf]
      %v6417 = vld [vmem:[%s6413 + $0xc] sm:$0xf]
      %v6418 = vld [vmem:[%s6413 + $0x10] sm:$0xf]
      %v6419 = vld [vmem:[%s6413 + $0x14] sm:$0xf]
      %v6420 = vld [vmem:[%s6413 + $0x18] sm:$0xf]
      %v6421 = vld [vmem:[%s6413 + $0x1c] sm:$0xf]
      %v6430 = vunpack.c.l.b16 %v6414
      %v6431 = vunpack.c.l.b16 %v6415
      %v6432 = vunpack.c.l.b16 %v6416
      %v6433 = vunpack.c.l.b16 %v6417
      %v6434 = vunpack.c.l.b16 %v6418
      %v6435 = vunpack.c.l.b16 %v6419
      %v6436 = vunpack.c.l.b16 %v6420
      %v6437 = vunpack.c.l.b16 %v6421
      %v6438 = vpack.c.b16 %v6431, %v6430
      %v6439 = vpack.c.b16 %v6433, %v6432
      %v6440 = vpack.c.b16 %v6435, %v6434
      %v6441 = vpack.c.b16 %v6437, %v6436
      %v6447 = vsel %vm1687, %v6412, 0
      %6449 = vmatprep.subr.bf16.mxu0 0
      %6450 = vmatpush1.bf16.msra.mxu0 %v6438
      %6451 = vmatprep.subr.bf16.mxu0 0
      %6452 = vmatpush1.bf16.msra.mxu0 %v6439
      %6453 = vmatprep.subr.bf16.mxu0 0
      %6454 = vmatpush1.bf16.msra.mxu0 %v6440
      %6455 = vmatprep.subr.bf16.mxu0 0
      %6456 = vmatpush1.bf16.msra.mxu0 %v6441
      %6457 = vmatprep.subr.bf16.mxu0 0
      %6458 = vmatpush1.bf16.msra.mxu0 0
      %6459 = vmatprep.subr.bf16.mxu0 0
      %6460 = vmatpush1.bf16.msra.mxu0 0
      %6461 = vmatprep.subr.bf16.mxu0 0
      %6462 = vmatpush1.bf16.msra.mxu0 0
      %6463 = vmatprep.subr.bf16.mxu0 0
      %6464 = vmatpush1.bf16.msra.mxu0 0
      %6465 = vmatprep.subr.bf16.mxu0 0
      %6466 = vmatpush1.bf16.msra.mxu0 0
      %6467 = vmatprep.subr.bf16.mxu0 0
      %6468 = vmatpush1.bf16.msra.mxu0 0
      %6469 = vmatprep.subr.bf16.mxu0 0
      %6470 = vmatpush1.bf16.msra.mxu0 0
      %6471 = vmatprep.subr.bf16.mxu0 0
      %6472 = vmatpush1.bf16.msra.mxu0 0
      %6473 = vmatprep.subr.bf16.mxu0 0
      %6474 = vmatpush1.bf16.msra.mxu0 0
      %6475 = vmatprep.subr.bf16.mxu0 0
      %6476 = vmatpush1.bf16.msra.mxu0 0
      %6477 = vmatprep.subr.bf16.mxu0 0
      %6478 = vmatpush1.bf16.msra.mxu0 0
      %6479 = vmatprep.subr.bf16.mxu0 0
      %6480 = vmatpush1.bf16.msra.mxu0 0
      %6481 = vmatprep.mubr.bf16.mxu0 0
      %6482 = vmatmul.mubr.bf16.gmra.mrb[0].mxu0 %v6447
      %v6483 = vpop.f32.mrb[0].mxu0
      %v6484 = vadd.f32 0.0, %v6483
      %v6485 = vpop.f32.mrb[0].mxu0
      %v6486 = vpop.f32.mrb[0].mxu0
      %v6487 = vpop.f32.mrb[0].mxu0
      %6488 = vdwg.mxu0
      %v6489 = vadd.f32 %v6411, %v6484
      %s6490 = scalar_lea.vmem %s9, 416
      %v6491 = vld [vmem:[%s6490] sm:$0xf]
      %v6492 = vld [vmem:[%s6490 + $0x4] sm:$0xf]
      %v6493 = vld [vmem:[%s6490 + $0x8] sm:$0xf]
      %v6494 = vld [vmem:[%s6490 + $0xc] sm:$0xf]
      %v6495 = vld [vmem:[%s6490 + $0x10] sm:$0xf]
      %v6496 = vld [vmem:[%s6490 + $0x14] sm:$0xf]
      %v6497 = vld [vmem:[%s6490 + $0x18] sm:$0xf]
      %v6498 = vld [vmem:[%s6490 + $0x1c] sm:$0xf]
      %v6499 = vshrl.u32 %v6412, 16
      %v6509 = vunpack.c.l.b16 %v6491
      %v6510 = vunpack.c.l.b16 %v6492
      %v6511 = vunpack.c.l.b16 %v6493
      %v6512 = vunpack.c.l.b16 %v6494
      %v6513 = vunpack.c.l.b16 %v6495
      %v6514 = vunpack.c.l.b16 %v6496
      %v6515 = vunpack.c.l.b16 %v6497
      %v6516 = vunpack.c.l.b16 %v6498
      %v6517 = vpack.c.b16 %v6510, %v6509
      %v6518 = vpack.c.b16 %v6512, %v6511
      %v6519 = vpack.c.b16 %v6514, %v6513
      %v6520 = vpack.c.b16 %v6516, %v6515
      %v6526 = vsel %vm1687, %v6499, 0
      %6528 = vmatprep.subr.bf16.mxu0 0
      %6529 = vmatpush1.bf16.msra.mxu0 %v6517
      %6530 = vmatprep.subr.bf16.mxu0 0
      %6531 = vmatpush1.bf16.msra.mxu0 %v6518
      %6532 = vmatprep.subr.bf16.mxu0 0
      %6533 = vmatpush1.bf16.msra.mxu0 %v6519
      %6534 = vmatprep.subr.bf16.mxu0 0
      %6535 = vmatpush1.bf16.msra.mxu0 %v6520
      %6536 = vmatprep.subr.bf16.mxu0 0
      %6537 = vmatpush1.bf16.msra.mxu0 0
      %6538 = vmatprep.subr.bf16.mxu0 0
      %6539 = vmatpush1.bf16.msra.mxu0 0
      %6540 = vmatprep.subr.bf16.mxu0 0
      %6541 = vmatpush1.bf16.msra.mxu0 0
      %6542 = vmatprep.subr.bf16.mxu0 0
      %6543 = vmatpush1.bf16.msra.mxu0 0
      %6544 = vmatprep.subr.bf16.mxu0 0
      %6545 = vmatpush1.bf16.msra.mxu0 0
      %6546 = vmatprep.subr.bf16.mxu0 0
      %6547 = vmatpush1.bf16.msra.mxu0 0
      %6548 = vmatprep.subr.bf16.mxu0 0
      %6549 = vmatpush1.bf16.msra.mxu0 0
      %6550 = vmatprep.subr.bf16.mxu0 0
      %6551 = vmatpush1.bf16.msra.mxu0 0
      %6552 = vmatprep.subr.bf16.mxu0 0
      %6553 = vmatpush1.bf16.msra.mxu0 0
      %6554 = vmatprep.subr.bf16.mxu0 0
      %6555 = vmatpush1.bf16.msra.mxu0 0
      %6556 = vmatprep.subr.bf16.mxu0 0
      %6557 = vmatpush1.bf16.msra.mxu0 0
      %6558 = vmatprep.subr.bf16.mxu0 0
      %6559 = vmatpush1.bf16.msra.mxu0 0
      %6560 = vmatprep.mubr.bf16.mxu0 0
      %6561 = vmatmul.mubr.bf16.gmra.mrb[0].mxu0 %v6526
      %v6562 = vpop.f32.mrb[0].mxu0
      %v6563 = vadd.f32 0.0, %v6562
      %v6564 = vpop.f32.mrb[0].mxu0
      %v6565 = vpop.f32.mrb[0].mxu0
      %v6566 = vpop.f32.mrb[0].mxu0
      %6567 = vdwg.mxu0
      %v6568 = vadd.f32 %v6489, %v6563
      %s6569 = scalar_lea.vmem %s9, 448
      %v6570 = vld [vmem:[%s6569] sm:$0xf]
      %v6571 = vld [vmem:[%s6569 + $0x4] sm:$0xf]
      %v6572 = vld [vmem:[%s6569 + $0x8] sm:$0xf]
      %v6573 = vld [vmem:[%s6569 + $0xc] sm:$0xf]
      %v6574 = vld [vmem:[%s6569 + $0x10] sm:$0xf]
      %v6575 = vld [vmem:[%s6569 + $0x14] sm:$0xf]
      %v6576 = vld [vmem:[%s6569 + $0x18] sm:$0xf]
      %v6577 = vld [vmem:[%s6569 + $0x1c] sm:$0xf]
      %v6579 = vrot.slane %v6412, 1
      %v6588 = vunpack.c.l.b16 %v6570
      %v6589 = vunpack.c.l.b16 %v6571
      %v6590 = vunpack.c.l.b16 %v6572
      %v6591 = vunpack.c.l.b16 %v6573
      %v6592 = vunpack.c.l.b16 %v6574
      %v6593 = vunpack.c.l.b16 %v6575
      %v6594 = vunpack.c.l.b16 %v6576
      %v6595 = vunpack.c.l.b16 %v6577
      %v6596 = vpack.c.b16 %v6589, %v6588
      %v6597 = vpack.c.b16 %v6591, %v6590
      %v6598 = vpack.c.b16 %v6593, %v6592
      %v6599 = vpack.c.b16 %v6595, %v6594
      %v6605 = vsel %vm1687, %v6579, 0
      %6607 = vmatprep.subr.bf16.mxu0 0
      %6608 = vmatpush1.bf16.msra.mxu0 %v6596
      %6609 = vmatprep.subr.bf16.mxu0 0
      %6610 = vmatpush1.bf16.msra.mxu0 %v6597
      %6611 = vmatprep.subr.bf16.mxu0 0
      %6612 = vmatpush1.bf16.msra.mxu0 %v6598
      %6613 = vmatprep.subr.bf16.mxu0 0
      %6614 = vmatpush1.bf16.msra.mxu0 %v6599
      %6615 = vmatprep.subr.bf16.mxu0 0
      %6616 = vmatpush1.bf16.msra.mxu0 0
      %6617 = vmatprep.subr.bf16.mxu0 0
      %6618 = vmatpush1.bf16.msra.mxu0 0
      %6619 = vmatprep.subr.bf16.mxu0 0
      %6620 = vmatpush1.bf16.msra.mxu0 0
      %6621 = vmatprep.subr.bf16.mxu0 0
      %6622 = vmatpush1.bf16.msra.mxu0 0
      %6623 = vmatprep.subr.bf16.mxu0 0
      %6624 = vmatpush1.bf16.msra.mxu0 0
      %6625 = vmatprep.subr.bf16.mxu0 0
      %6626 = vmatpush1.bf16.msra.mxu0 0
      %6627 = vmatprep.subr.bf16.mxu0 0
      %6628 = vmatpush1.bf16.msra.mxu0 0
      %6629 = vmatprep.subr.bf16.mxu0 0
      %6630 = vmatpush1.bf16.msra.mxu0 0
      %6631 = vmatprep.subr.bf16.mxu0 0
      %6632 = vmatpush1.bf16.msra.mxu0 0
      %6633 = vmatprep.subr.bf16.mxu0 0
      %6634 = vmatpush1.bf16.msra.mxu0 0
      %6635 = vmatprep.subr.bf16.mxu0 0
      %6636 = vmatpush1.bf16.msra.mxu0 0
      %6637 = vmatprep.subr.bf16.mxu0 0
      %6638 = vmatpush1.bf16.msra.mxu0 0
      %6639 = vmatprep.mubr.bf16.mxu0 0
      %6640 = vmatmul.mubr.bf16.gmra.mrb[0].mxu0 %v6605
      %v6641 = vpop.f32.mrb[0].mxu0
      %v6642 = vadd.f32 0.0, %v6641
      %v6643 = vpop.f32.mrb[0].mxu0
      %v6644 = vpop.f32.mrb[0].mxu0
      %v6645 = vpop.f32.mrb[0].mxu0
      %6646 = vdwg.mxu0
      %v6647 = vadd.f32 %v6568, %v6642
      %s6648 = scalar_lea.vmem %s9, 480
      %v6649 = vld [vmem:[%s6648] sm:$0xf]
      %v6650 = vld [vmem:[%s6648 + $0x4] sm:$0xf]
      %v6651 = vld [vmem:[%s6648 + $0x8] sm:$0xf]
      %v6652 = vld [vmem:[%s6648 + $0xc] sm:$0xf]
      %v6653 = vld [vmem:[%s6648 + $0x10] sm:$0xf]
      %v6654 = vld [vmem:[%s6648 + $0x14] sm:$0xf]
      %v6655 = vld [vmem:[%s6648 + $0x18] sm:$0xf]
      %v6656 = vld [vmem:[%s6648 + $0x1c] sm:$0xf]
      %v6657 = vrot.slane %v6499, 1
      %v6666 = vunpack.c.l.b16 %v6649
      %v6667 = vunpack.c.l.b16 %v6650
      %v6668 = vunpack.c.l.b16 %v6651
      %v6669 = vunpack.c.l.b16 %v6652
      %v6670 = vunpack.c.l.b16 %v6653
      %v6671 = vunpack.c.l.b16 %v6654
      %v6672 = vunpack.c.l.b16 %v6655
      %v6673 = vunpack.c.l.b16 %v6656
      %v6674 = vpack.c.b16 %v6667, %v6666
      %v6675 = vpack.c.b16 %v6669, %v6668
      %v6676 = vpack.c.b16 %v6671, %v6670
      %v6677 = vpack.c.b16 %v6673, %v6672
      %v6683 = vsel %vm1687, %v6657, 0
      %6685 = vmatprep.subr.bf16.mxu0 0
      %6686 = vmatpush1.bf16.msra.mxu0 %v6674
      %6687 = vmatprep.subr.bf16.mxu0 0
      %6688 = vmatpush1.bf16.msra.mxu0 %v6675
      %6689 = vmatprep.subr.bf16.mxu0 0
      %6690 = vmatpush1.bf16.msra.mxu0 %v6676
      %6691 = vmatprep.subr.bf16.mxu0 0
      %6692 = vmatpush1.bf16.msra.mxu0 %v6677
      %6693 = vmatprep.subr.bf16.mxu0 0
      %6694 = vmatpush1.bf16.msra.mxu0 0
      %6695 = vmatprep.subr.bf16.mxu0 0
      %6696 = vmatpush1.bf16.msra.mxu0 0
      %6697 = vmatprep.subr.bf16.mxu0 0
      %6698 = vmatpush1.bf16.msra.mxu0 0
      %6699 = vmatprep.subr.bf16.mxu0 0
      %6700 = vmatpush1.bf16.msra.mxu0 0
      %6701 = vmatprep.subr.bf16.mxu0 0
      %6702 = vmatpush1.bf16.msra.mxu0 0
      %6703 = vmatprep.subr.bf16.mxu0 0
      %6704 = vmatpush1.bf16.msra.mxu0 0
      %6705 = vmatprep.subr.bf16.mxu0 0
      %6706 = vmatpush1.bf16.msra.mxu0 0
      %6707 = vmatprep.subr.bf16.mxu0 0
      %6708 = vmatpush1.bf16.msra.mxu0 0
      %6709 = vmatprep.subr.bf16.mxu0 0
      %6710 = vmatpush1.bf16.msra.mxu0 0
      %6711 = vmatprep.subr.bf16.mxu0 0
      %6712 = vmatpush1.bf16.msra.mxu0 0
      %6713 = vmatprep.subr.bf16.mxu0 0
      %6714 = vmatpush1.bf16.msra.mxu0 0
      %6715 = vmatprep.subr.bf16.mxu0 0
      %6716 = vmatpush1.bf16.msra.mxu0 0
      %6717 = vmatprep.mubr.bf16.mxu0 0
      %6718 = vmatmul.mubr.bf16.gmra.mrb[0].mxu0 %v6683
      %v6719 = vpop.f32.mrb[0].mxu0
      %v6720 = vadd.f32 0.0, %v6719
      %v6721 = vpop.f32.mrb[0].mxu0
      %v6722 = vpop.f32.mrb[0].mxu0
      %v6723 = vpop.f32.mrb[0].mxu0
      %6724 = vdwg.mxu0
      %v6725 = vadd.f32 %v6647, %v6720
      %v6726 = vmax.f32 %v6725, 0.0
      %v6727 = vpack.c.bf16 %v6726, %v6726
      %v6728 = vld [vmem:[%s11] sm:$0xf]
      %v6729 = vld [vmem:[%s11 + $0x8] sm:$0xf]
      %v6730 = vld [vmem:[%s11 + $0x10] sm:$0xf]
      %v6731 = vld [vmem:[%s11 + $0x18] sm:$0xf]
      %v6732 = vld [vmem:[%s12] sm:$0x1]
      %v6737 = vunpack.c.l.b16 %v6728
      %v6738 = vunpack.c.l.b16 %v6729
      %v6739 = vunpack.c.l.b16 %v6730
      %v6740 = vunpack.c.l.b16 %v6731
      %v6741 = vpack.c.b16 %v6738, %v6737
      %v6742 = vpack.c.b16 %v6740, %v6739
      %v6746 = vsel %vm529, %v6727, 0
      %6748 = vmatprep.subr.bf16.mxu0 0
      %6749 = vmatpush1.bf16.msra.mxu0 %v6741
      %6750 = vmatprep.subr.bf16.mxu0 0
      %6751 = vmatpush1.bf16.msra.mxu0 %v6742
      %6752 = vmatprep.subr.bf16.mxu0 0
      %6753 = vmatpush1.bf16.msra.mxu0 0
      %6754 = vmatprep.subr.bf16.mxu0 0
      %6755 = vmatpush1.bf16.msra.mxu0 0
      %6756 = vmatprep.subr.bf16.mxu0 0
      %6757 = vmatpush1.bf16.msra.mxu0 0
      %6758 = vmatprep.subr.bf16.mxu0 0
      %6759 = vmatpush1.bf16.msra.mxu0 0
      %6760 = vmatprep.subr.bf16.mxu0 0
      %6761 = vmatpush1.bf16.msra.mxu0 0
      %6762 = vmatprep.subr.bf16.mxu0 0
      %6763 = vmatpush1.bf16.msra.mxu0 0
      %6764 = vmatprep.subr.bf16.mxu0 0
      %6765 = vmatpush1.bf16.msra.mxu0 0
      %6766 = vmatprep.subr.bf16.mxu0 0
      %6767 = vmatpush1.bf16.msra.mxu0 0
      %6768 = vmatprep.subr.bf16.mxu0 0
      %6769 = vmatpush1.bf16.msra.mxu0 0
      %6770 = vmatprep.subr.bf16.mxu0 0
      %6771 = vmatpush1.bf16.msra.mxu0 0
      %6772 = vmatprep.subr.bf16.mxu0 0
      %6773 = vmatpush1.bf16.msra.mxu0 0
      %6774 = vmatprep.subr.bf16.mxu0 0
      %6775 = vmatpush1.bf16.msra.mxu0 0
      %6776 = vmatprep.subr.bf16.mxu0 0
      %6777 = vmatpush1.bf16.msra.mxu0 0
      %6778 = vmatprep.subr.bf16.mxu0 0
      %6779 = vmatpush1.bf16.msra.mxu0 0
      %6780 = vmatprep.mubr.bf16.mxu0 0
      %6781 = vmatmul.mubr.bf16.gmra.mrb[0].mxu0 %v6746
      %v6782 = vpop.f32.mrb[0].mxu0
      %v6783 = vadd.f32 %v6732, %v6782
      %v6784 = vpop.f32.mrb[0].mxu0
      %v6785 = vpop.f32.mrb[0].mxu0
      %v6786 = vpop.f32.mrb[0].mxu0
      %6787 = vdwg.mxu0
      %vm6788 = vcmask 253952
      %6789 = vst.msk [vmem:[#allocation6] sm:$0x1] %vm6788, %v6783
      %v6790 = vld [vmem:[%s11] sm:$0xf]
      %v6791 = vld [vmem:[%s11 + $0x8] sm:$0xf]
      %v6792 = vld [vmem:[%s11 + $0x10] sm:$0xf]
      %v6793 = vld [vmem:[%s11 + $0x18] sm:$0xf]
      %v6794 = vld [vmem:[%s12] sm:$0x1]
      %v6799 = vunpack.c.l.b16 %v6790
      %v6800 = vunpack.c.l.b16 %v6791
      %v6801 = vunpack.c.l.b16 %v6792
      %v6802 = vunpack.c.l.b16 %v6793
      %v6803 = vpack.c.b16 %v6800, %v6799
      %v6804 = vpack.c.b16 %v6802, %v6801
      %6805 = vrot.lane.b32.xlu0 %v6803, 96
      %v6806 = vpop.permute.xlu0 %6805
      %6807 = vrot.lane.b32.xlu0 %v6804, 96
      %v6808 = vpop.permute.xlu0 %6807
      %v6812 = vlaneseq
      %v6813 = vshrl.u32 %v6812, 7
      %v6814 = vsub.s32 0, %v6813
      %v6815 = vrot.slane %v6794, %v6814
      %6816 = vrot.lane.b32.xlu0 %v6815, 96
      %v6817 = vpop.permute.xlu0 %6816
      %6819 = vmatprep.subr.bf16.mxu0 0
      %6820 = vmatpush1.bf16.msra.mxu0 %v6806
      %6821 = vmatprep.subr.bf16.mxu0 0
      %6822 = vmatpush1.bf16.msra.mxu0 %v6808
      %6823 = vmatprep.subr.bf16.mxu0 0
      %6824 = vmatpush1.bf16.msra.mxu0 0
      %6825 = vmatprep.subr.bf16.mxu0 0
      %6826 = vmatpush1.bf16.msra.mxu0 0
      %6827 = vmatprep.subr.bf16.mxu0 0
      %6828 = vmatpush1.bf16.msra.mxu0 0
      %6829 = vmatprep.subr.bf16.mxu0 0
      %6830 = vmatpush1.bf16.msra.mxu0 0
      %6831 = vmatprep.subr.bf16.mxu0 0
      %6832 = vmatpush1.bf16.msra.mxu0 0
      %6833 = vmatprep.subr.bf16.mxu0 0
      %6834 = vmatpush1.bf16.msra.mxu0 0
      %6835 = vmatprep.subr.bf16.mxu0 0
      %6836 = vmatpush1.bf16.msra.mxu0 0
      %6837 = vmatprep.subr.bf16.mxu0 0
      %6838 = vmatpush1.bf16.msra.mxu0 0
      %6839 = vmatprep.subr.bf16.mxu0 0
      %6840 = vmatpush1.bf16.msra.mxu0 0
      %6841 = vmatprep.subr.bf16.mxu0 0
      %6842 = vmatpush1.bf16.msra.mxu0 0
      %6843 = vmatprep.subr.bf16.mxu0 0
      %6844 = vmatpush1.bf16.msra.mxu0 0
      %6845 = vmatprep.subr.bf16.mxu0 0
      %6846 = vmatpush1.bf16.msra.mxu0 0
      %6847 = vmatprep.subr.bf16.mxu0 0
      %6848 = vmatpush1.bf16.msra.mxu0 0
      %6849 = vmatprep.subr.bf16.mxu0 0
      %6850 = vmatpush1.bf16.msra.mxu0 0
      %6851 = vmatprep.mubr.bf16.mxu0 0
      %6852 = vmatmul.mubr.bf16.gmra.mrb[0].mxu0 %v6746
      %v6853 = vpop.f32.mrb[0].mxu0
      %v6854 = vadd.f32 %v6817, %v6853
      %v6855 = vpop.f32.mrb[0].mxu0
      %v6856 = vpop.f32.mrb[0].mxu0
      %v6857 = vpop.f32.mrb[0].mxu0
      %6858 = vdwg.mxu0
      %6859 = vst.msk [vmem:[#allocation6 + $0x1] sm:$0x1] %vm6788, %v6854
      %v6860 = vld [vmem:[%s11] sm:$0xf]
      %v6861 = vld [vmem:[%s11 + $0x8] sm:$0xf]
      %v6862 = vld [vmem:[%s11 + $0x10] sm:$0xf]
      %v6863 = vld [vmem:[%s11 + $0x18] sm:$0xf]
      %v6864 = vld [vmem:[%s12] sm:$0x1]
      %v6869 = vunpack.c.l.b16 %v6860
      %v6870 = vunpack.c.l.b16 %v6861
      %v6871 = vunpack.c.l.b16 %v6862
      %v6872 = vunpack.c.l.b16 %v6863
      %v6873 = vpack.c.b16 %v6870, %v6869
      %v6874 = vpack.c.b16 %v6872, %v6871
      %6875 = vrot.lane.b32.xlu0 %v6873, 64
      %v6876 = vpop.permute.xlu0 %6875
      %6877 = vrot.lane.b32.xlu0 %v6874, 64
      %v6878 = vpop.permute.xlu0 %6877
      %v6882 = vlaneseq
      %v6883 = vshrl.u32 %v6882, 7
      %v6884 = vsub.s32 0, %v6883
      %v6885 = vrot.slane %v6864, %v6884
      %6886 = vrot.lane.b32.xlu0 %v6885, 64
      %v6887 = vpop.permute.xlu0 %6886
      %6889 = vmatprep.subr.bf16.mxu0 0
      %6890 = vmatpush1.bf16.msra.mxu0 %v6876
      %6891 = vmatprep.subr.bf16.mxu0 0
      %6892 = vmatpush1.bf16.msra.mxu0 %v6878
      %6893 = vmatprep.subr.bf16.mxu0 0
      %6894 = vmatpush1.bf16.msra.mxu0 0
      %6895 = vmatprep.subr.bf16.mxu0 0
      %6896 = vmatpush1.bf16.msra.mxu0 0
      %6897 = vmatprep.subr.bf16.mxu0 0
      %6898 = vmatpush1.bf16.msra.mxu0 0
      %6899 = vmatprep.subr.bf16.mxu0 0
      %6900 = vmatpush1.bf16.msra.mxu0 0
      %6901 = vmatprep.subr.bf16.mxu0 0
      %6902 = vmatpush1.bf16.msra.mxu0 0
      %6903 = vmatprep.subr.bf16.mxu0 0
      %6904 = vmatpush1.bf16.msra.mxu0 0
      %6905 = vmatprep.subr.bf16.mxu0 0
      %6906 = vmatpush1.bf16.msra.mxu0 0
      %6907 = vmatprep.subr.bf16.mxu0 0
      %6908 = vmatpush1.bf16.msra.mxu0 0
      %6909 = vmatprep.subr.bf16.mxu0 0
      %6910 = vmatpush1.bf16.msra.mxu0 0
      %6911 = vmatprep.subr.bf16.mxu0 0
      %6912 = vmatpush1.bf16.msra.mxu0 0
      %6913 = vmatprep.subr.bf16.mxu0 0
      %6914 = vmatpush1.bf16.msra.mxu0 0
      %6915 = vmatprep.subr.bf16.mxu0 0
      %6916 = vmatpush1.bf16.msra.mxu0 0
      %6917 = vmatprep.subr.bf16.mxu0 0
      %6918 = vmatpush1.bf16.msra.mxu0 0
      %6919 = vmatprep.subr.bf16.mxu0 0
      %6920 = vmatpush1.bf16.msra.mxu0 0
      %6921 = vmatprep.mubr.bf16.mxu0 0
      %6922 = vmatmul.mubr.bf16.gmra.mrb[0].mxu0 %v6746
      %v6923 = vpop.f32.mrb[0].mxu0
      %v6924 = vadd.f32 %v6887, %v6923
      %v6925 = vpop.f32.mrb[0].mxu0
      %v6926 = vpop.f32.mrb[0].mxu0
      %v6927 = vpop.f32.mrb[0].mxu0
      %6928 = vdwg.mxu0
      %6929 = vst.msk [vmem:[#allocation6 + $0x2] sm:$0x1] %vm6788, %v6924
      %v6930 = vld [vmem:[%s11] sm:$0xf]
      %v6931 = vld [vmem:[%s11 + $0x8] sm:$0xf]
      %v6932 = vld [vmem:[%s11 + $0x10] sm:$0xf]
      %v6933 = vld [vmem:[%s11 + $0x18] sm:$0xf]
      %v6934 = vld [vmem:[%s12] sm:$0x1]
      %v6939 = vunpack.c.l.b16 %v6930
      %v6940 = vunpack.c.l.b16 %v6931
      %v6941 = vunpack.c.l.b16 %v6932
      %v6942 = vunpack.c.l.b16 %v6933
      %v6943 = vpack.c.b16 %v6940, %v6939
      %v6944 = vpack.c.b16 %v6942, %v6941
      %6945 = vrot.lane.b32.xlu0 %v6943, 32
      %v6946 = vpop.permute.xlu0 %6945
      %6947 = vrot.lane.b32.xlu0 %v6944, 32
      %v6948 = vpop.permute.xlu0 %6947
      %v6952 = vlaneseq
      %v6953 = vshrl.u32 %v6952, 7
      %v6954 = vsub.s32 0, %v6953
      %v6955 = vrot.slane %v6934, %v6954
      %6956 = vrot.lane.b32.xlu0 %v6955, 32
      %v6957 = vpop.permute.xlu0 %6956
      %6959 = vmatprep.subr.bf16.mxu0 0
      %6960 = vmatpush1.bf16.msra.mxu0 %v6946
      %6961 = vmatprep.subr.bf16.mxu0 0
      %6962 = vmatpush1.bf16.msra.mxu0 %v6948
      %6963 = vmatprep.subr.bf16.mxu0 0
      %6964 = vmatpush1.bf16.msra.mxu0 0
      %6965 = vmatprep.subr.bf16.mxu0 0
      %6966 = vmatpush1.bf16.msra.mxu0 0
      %6967 = vmatprep.subr.bf16.mxu0 0
      %6968 = vmatpush1.bf16.msra.mxu0 0
      %6969 = vmatprep.subr.bf16.mxu0 0
      %6970 = vmatpush1.bf16.msra.mxu0 0
      %6971 = vmatprep.subr.bf16.mxu0 0
      %6972 = vmatpush1.bf16.msra.mxu0 0
      %6973 = vmatprep.subr.bf16.mxu0 0
      %6974 = vmatpush1.bf16.msra.mxu0 0
      %6975 = vmatprep.subr.bf16.mxu0 0
      %6976 = vmatpush1.bf16.msra.mxu0 0
      %6977 = vmatprep.subr.bf16.mxu0 0
      %6978 = vmatpush1.bf16.msra.mxu0 0
      %6979 = vmatprep.subr.bf16.mxu0 0
      %6980 = vmatpush1.bf16.msra.mxu0 0
      %6981 = vmatprep.subr.bf16.mxu0 0
      %6982 = vmatpush1.bf16.msra.mxu0 0
      %6983 = vmatprep.subr.bf16.mxu0 0
      %6984 = vmatpush1.bf16.msra.mxu0 0
      %6985 = vmatprep.subr.bf16.mxu0 0
      %6986 = vmatpush1.bf16.msra.mxu0 0
      %6987 = vmatprep.subr.bf16.mxu0 0
      %6988 = vmatpush1.bf16.msra.mxu0 0
      %6989 = vmatprep.subr.bf16.mxu0 0
      %6990 = vmatpush1.bf16.msra.mxu0 0
      %6991 = vmatprep.mubr.bf16.mxu0 0
      %6992 = vmatmul.mubr.bf16.gmra.mrb[0].mxu0 %v6746
      %v6993 = vpop.f32.mrb[0].mxu0
      %v6994 = vadd.f32 %v6957, %v6993
      %v6995 = vpop.f32.mrb[0].mxu0
      %v6996 = vpop.f32.mrb[0].mxu0
      %v6997 = vpop.f32.mrb[0].mxu0
      %6998 = vdwg.mxu0
      %6999 = vst.msk [vmem:[#allocation6 + $0x3] sm:$0x1] %vm6788, %v6994
      %v7000 = vld [vmem:[%s11 + $0x4] sm:$0xf]
      %v7001 = vld [vmem:[%s11 + $0xc] sm:$0xf]
      %v7002 = vld [vmem:[%s11 + $0x14] sm:$0xf]
      %v7003 = vld [vmem:[%s11 + $0x1c] sm:$0xf]
      %v7004 = vld [vmem:[%s12 + $0x1] sm:$0x1]
      %v7009 = vunpack.c.l.b16 %v7000
      %v7010 = vunpack.c.l.b16 %v7001
      %v7011 = vunpack.c.l.b16 %v7002
      %v7012 = vunpack.c.l.b16 %v7003
      %v7013 = vpack.c.b16 %v7010, %v7009
      %v7014 = vpack.c.b16 %v7012, %v7011
      %7017 = vmatprep.subr.bf16.mxu0 0
      %7018 = vmatpush1.bf16.msra.mxu0 %v7013
      %7019 = vmatprep.subr.bf16.mxu0 0
      %7020 = vmatpush1.bf16.msra.mxu0 %v7014
      %7021 = vmatprep.subr.bf16.mxu0 0
      %7022 = vmatpush1.bf16.msra.mxu0 0
      %7023 = vmatprep.subr.bf16.mxu0 0
      %7024 = vmatpush1.bf16.msra.mxu0 0
      %7025 = vmatprep.subr.bf16.mxu0 0
      %7026 = vmatpush1.bf16.msra.mxu0 0
      %7027 = vmatprep.subr.bf16.mxu0 0
      %7028 = vmatpush1.bf16.msra.mxu0 0
      %7029 = vmatprep.subr.bf16.mxu0 0
      %7030 = vmatpush1.bf16.msra.mxu0 0
      %7031 = vmatprep.subr.bf16.mxu0 0
      %7032 = vmatpush1.bf16.msra.mxu0 0
      %7033 = vmatprep.subr.bf16.mxu0 0
      %7034 = vmatpush1.bf16.msra.mxu0 0
      %7035 = vmatprep.subr.bf16.mxu0 0
      %7036 = vmatpush1.bf16.msra.mxu0 0
      %7037 = vmatprep.subr.bf16.mxu0 0
      %7038 = vmatpush1.bf16.msra.mxu0 0
      %7039 = vmatprep.subr.bf16.mxu0 0
      %7040 = vmatpush1.bf16.msra.mxu0 0
      %7041 = vmatprep.subr.bf16.mxu0 0
      %7042 = vmatpush1.bf16.msra.mxu0 0
      %7043 = vmatprep.subr.bf16.mxu0 0
      %7044 = vmatpush1.bf16.msra.mxu0 0
      %7045 = vmatprep.subr.bf16.mxu0 0
      %7046 = vmatpush1.bf16.msra.mxu0 0
      %7047 = vmatprep.subr.bf16.mxu0 0
      %7048 = vmatpush1.bf16.msra.mxu0 0
      %7049 = vmatprep.mubr.bf16.mxu0 0
      %7050 = vmatmul.mubr.bf16.gmra.mrb[0].mxu0 %v6746
      %v7051 = vpop.f32.mrb[0].mxu0
      %v7052 = vadd.f32 %v7004, %v7051
      %v7053 = vpop.f32.mrb[0].mxu0
      %v7054 = vpop.f32.mrb[0].mxu0
      %v7055 = vpop.f32.mrb[0].mxu0
      %7056 = vdwg.mxu0
      %7057 = vst.msk [vmem:[#allocation6 + $0x4] sm:$0x1] %vm6788, %v7052
      %v7058 = vld [vmem:[%s11 + $0x4] sm:$0xf]
      %v7059 = vld [vmem:[%s11 + $0xc] sm:$0xf]
      %v7060 = vld [vmem:[%s11 + $0x14] sm:$0xf]
      %v7061 = vld [vmem:[%s11 + $0x1c] sm:$0xf]
      %v7062 = vld [vmem:[%s12 + $0x1] sm:$0x1]
      %v7067 = vunpack.c.l.b16 %v7058
      %v7068 = vunpack.c.l.b16 %v7059
      %v7069 = vunpack.c.l.b16 %v7060
      %v7070 = vunpack.c.l.b16 %v7061
      %v7071 = vpack.c.b16 %v7068, %v7067
      %v7072 = vpack.c.b16 %v7070, %v7069
      %7073 = vrot.lane.b32.xlu0 %v7071, 96
      %v7074 = vpop.permute.xlu0 %7073
      %7075 = vrot.lane.b32.xlu0 %v7072, 96
      %v7076 = vpop.permute.xlu0 %7075
      %v7080 = vlaneseq
      %v7081 = vshrl.u32 %v7080, 7
      %v7082 = vsub.s32 0, %v7081
      %v7083 = vrot.slane %v7062, %v7082
      %7084 = vrot.lane.b32.xlu0 %v7083, 96
      %v7085 = vpop.permute.xlu0 %7084
      %7087 = vmatprep.subr.bf16.mxu0 0
      %7088 = vmatpush1.bf16.msra.mxu0 %v7074
      %7089 = vmatprep.subr.bf16.mxu0 0
      %7090 = vmatpush1.bf16.msra.mxu0 %v7076
      %7091 = vmatprep.subr.bf16.mxu0 0
      %7092 = vmatpush1.bf16.msra.mxu0 0
      %7093 = vmatprep.subr.bf16.mxu0 0
      %7094 = vmatpush1.bf16.msra.mxu0 0
      %7095 = vmatprep.subr.bf16.mxu0 0
      %7096 = vmatpush1.bf16.msra.mxu0 0
      %7097 = vmatprep.subr.bf16.mxu0 0
      %7098 = vmatpush1.bf16.msra.mxu0 0
      %7099 = vmatprep.subr.bf16.mxu0 0
      %7100 = vmatpush1.bf16.msra.mxu0 0
      %7101 = vmatprep.subr.bf16.mxu0 0
      %7102 = vmatpush1.bf16.msra.mxu0 0
      %7103 = vmatprep.subr.bf16.mxu0 0
      %7104 = vmatpush1.bf16.msra.mxu0 0
      %7105 = vmatprep.subr.bf16.mxu0 0
      %7106 = vmatpush1.bf16.msra.mxu0 0
      %7107 = vmatprep.subr.bf16.mxu0 0
      %7108 = vmatpush1.bf16.msra.mxu0 0
      %7109 = vmatprep.subr.bf16.mxu0 0
      %7110 = vmatpush1.bf16.msra.mxu0 0
      %7111 = vmatprep.subr.bf16.mxu0 0
      %7112 = vmatpush1.bf16.msra.mxu0 0
      %7113 = vmatprep.subr.bf16.mxu0 0
      %7114 = vmatpush1.bf16.msra.mxu0 0
      %7115 = vmatprep.subr.bf16.mxu0 0
      %7116 = vmatpush1.bf16.msra.mxu0 0
      %7117 = vmatprep.subr.bf16.mxu0 0
      %7118 = vmatpush1.bf16.msra.mxu0 0
      %7119 = vmatprep.mubr.bf16.mxu0 0
      %7120 = vmatmul.mubr.bf16.gmra.mrb[0].mxu0 %v6746
      %v7121 = vpop.f32.mrb[0].mxu0
      %v7122 = vadd.f32 %v7085, %v7121
      %v7123 = vpop.f32.mrb[0].mxu0
      %v7124 = vpop.f32.mrb[0].mxu0
      %v7125 = vpop.f32.mrb[0].mxu0
      %7126 = vdwg.mxu0
      %7127 = vst.msk [vmem:[#allocation6 + $0x5] sm:$0x1] %vm6788, %v7122
      %v7128 = vld [vmem:[%s11 + $0x4] sm:$0xf]
      %v7129 = vld [vmem:[%s11 + $0xc] sm:$0xf]
      %v7130 = vld [vmem:[%s11 + $0x14] sm:$0xf]
      %v7131 = vld [vmem:[%s11 + $0x1c] sm:$0xf]
      %v7132 = vld [vmem:[%s12 + $0x1] sm:$0x1]
      %v7137 = vunpack.c.l.b16 %v7128
      %v7138 = vunpack.c.l.b16 %v7129
      %v7139 = vunpack.c.l.b16 %v7130
      %v7140 = vunpack.c.l.b16 %v7131
      %v7141 = vpack.c.b16 %v7138, %v7137
      %v7142 = vpack.c.b16 %v7140, %v7139
      %7143 = vrot.lane.b32.xlu0 %v7141, 64
      %v7144 = vpop.permute.xlu0 %7143
      %7145 = vrot.lane.b32.xlu0 %v7142, 64
      %v7146 = vpop.permute.xlu0 %7145
      %v7150 = vlaneseq
      %v7151 = vshrl.u32 %v7150, 7
      %v7152 = vsub.s32 0, %v7151
      %v7153 = vrot.slane %v7132, %v7152
      %7154 = vrot.lane.b32.xlu0 %v7153, 64
      %v7155 = vpop.permute.xlu0 %7154
      %7157 = vmatprep.subr.bf16.mxu0 0
      %7158 = vmatpush1.bf16.msra.mxu0 %v7144
      %7159 = vmatprep.subr.bf16.mxu0 0
      %7160 = vmatpush1.bf16.msra.mxu0 %v7146
      %7161 = vmatprep.subr.bf16.mxu0 0
      %7162 = vmatpush1.bf16.msra.mxu0 0
      %7163 = vmatprep.subr.bf16.mxu0 0
      %7164 = vmatpush1.bf16.msra.mxu0 0
      %7165 = vmatprep.subr.bf16.mxu0 0
      %7166 = vmatpush1.bf16.msra.mxu0 0
      %7167 = vmatprep.subr.bf16.mxu0 0
      %7168 = vmatpush1.bf16.msra.mxu0 0
      %7169 = vmatprep.subr.bf16.mxu0 0
      %7170 = vmatpush1.bf16.msra.mxu0 0
      %7171 = vmatprep.subr.bf16.mxu0 0
      %7172 = vmatpush1.bf16.msra.mxu0 0
      %7173 = vmatprep.subr.bf16.mxu0 0
      %7174 = vmatpush1.bf16.msra.mxu0 0
      %7175 = vmatprep.subr.bf16.mxu0 0
      %7176 = vmatpush1.bf16.msra.mxu0 0
      %7177 = vmatprep.subr.bf16.mxu0 0
      %7178 = vmatpush1.bf16.msra.mxu0 0
      %7179 = vmatprep.subr.bf16.mxu0 0
      %7180 = vmatpush1.bf16.msra.mxu0 0
      %7181 = vmatprep.subr.bf16.mxu0 0
      %7182 = vmatpush1.bf16.msra.mxu0 0
      %7183 = vmatprep.subr.bf16.mxu0 0
      %7184 = vmatpush1.bf16.msra.mxu0 0
      %7185 = vmatprep.subr.bf16.mxu0 0
      %7186 = vmatpush1.bf16.msra.mxu0 0
      %7187 = vmatprep.subr.bf16.mxu0 0
      %7188 = vmatpush1.bf16.msra.mxu0 0
      %7189 = vmatprep.mubr.bf16.mxu0 0
      %7190 = vmatmul.mubr.bf16.gmra.mrb[0].mxu0 %v6746
      %v7191 = vpop.f32.mrb[0].mxu0
      %v7192 = vadd.f32 %v7155, %v7191
      %v7193 = vpop.f32.mrb[0].mxu0
      %v7194 = vpop.f32.mrb[0].mxu0
      %v7195 = vpop.f32.mrb[0].mxu0
      %7196 = vdwg.mxu0
      %7197 = vst.msk [vmem:[#allocation6 + $0x6] sm:$0x1] %vm6788, %v7192
      %v7198 = vld [vmem:[%s11 + $0x4] sm:$0xf]
      %v7199 = vld [vmem:[%s11 + $0xc] sm:$0xf]
      %v7200 = vld [vmem:[%s11 + $0x14] sm:$0xf]
      %v7201 = vld [vmem:[%s11 + $0x1c] sm:$0xf]
      %v7202 = vld [vmem:[%s12 + $0x1] sm:$0x1]
      %v7207 = vunpack.c.l.b16 %v7198
      %v7208 = vunpack.c.l.b16 %v7199
      %v7209 = vunpack.c.l.b16 %v7200
      %v7210 = vunpack.c.l.b16 %v7201
      %v7211 = vpack.c.b16 %v7208, %v7207
      %v7212 = vpack.c.b16 %v7210, %v7209
      %7213 = vrot.lane.b32.xlu0 %v7211, 32
      %v7214 = vpop.permute.xlu0 %7213
      %7215 = vrot.lane.b32.xlu0 %v7212, 32
      %v7216 = vpop.permute.xlu0 %7215
      %v7220 = vlaneseq
      %v7221 = vshrl.u32 %v7220, 7
      %v7222 = vsub.s32 0, %v7221
      %v7223 = vrot.slane %v7202, %v7222
      %7224 = vrot.lane.b32.xlu0 %v7223, 32
      %v7225 = vpop.permute.xlu0 %7224
      %7227 = vmatprep.subr.bf16.mxu0 0
      %7228 = vmatpush1.bf16.msra.mxu0 %v7214
      %7229 = vmatprep.subr.bf16.mxu0 0
      %7230 = vmatpush1.bf16.msra.mxu0 %v7216
      %7231 = vmatprep.subr.bf16.mxu0 0
      %7232 = vmatpush1.bf16.msra.mxu0 0
      %7233 = vmatprep.subr.bf16.mxu0 0
      %7234 = vmatpush1.bf16.msra.mxu0 0
      %7235 = vmatprep.subr.bf16.mxu0 0
      %7236 = vmatpush1.bf16.msra.mxu0 0
      %7237 = vmatprep.subr.bf16.mxu0 0
      %7238 = vmatpush1.bf16.msra.mxu0 0
      %7239 = vmatprep.subr.bf16.mxu0 0
      %7240 = vmatpush1.bf16.msra.mxu0 0
      %7241 = vmatprep.subr.bf16.mxu0 0
      %7242 = vmatpush1.bf16.msra.mxu0 0
      %7243 = vmatprep.subr.bf16.mxu0 0
      %7244 = vmatpush1.bf16.msra.mxu0 0
      %7245 = vmatprep.subr.bf16.mxu0 0
      %7246 = vmatpush1.bf16.msra.mxu0 0
      %7247 = vmatprep.subr.bf16.mxu0 0
      %7248 = vmatpush1.bf16.msra.mxu0 0
      %7249 = vmatprep.subr.bf16.mxu0 0
      %7250 = vmatpush1.bf16.msra.mxu0 0
      %7251 = vmatprep.subr.bf16.mxu0 0
      %7252 = vmatpush1.bf16.msra.mxu0 0
      %7253 = vmatprep.subr.bf16.mxu0 0
      %7254 = vmatpush1.bf16.msra.mxu0 0
      %7255 = vmatprep.subr.bf16.mxu0 0
      %7256 = vmatpush1.bf16.msra.mxu0 0
      %7257 = vmatprep.subr.bf16.mxu0 0
      %7258 = vmatpush1.bf16.msra.mxu0 0
      %7259 = vmatprep.mubr.bf16.mxu0 0
      %7260 = vmatmul.mubr.bf16.gmra.mrb[0].mxu0 %v6746
      %v7261 = vpop.f32.mrb[0].mxu0
      %v7262 = vadd.f32 %v7225, %v7261
      %v7263 = vpop.f32.mrb[0].mxu0
      %v7264 = vpop.f32.mrb[0].mxu0
      %v7265 = vpop.f32.mrb[0].mxu0
      %7266 = vdwg.mxu0
      %7267 = vst.msk [vmem:[#allocation6 + $0x7] sm:$0x1] %vm6788, %v7262
      %v7268 = vld [vmem:[#allocation6] sm:$0xff]
      %v7269 = vpack.c.bf16 %v7268, %v7268
      %v7270 = vld [vmem:[%s13] sm:$0xf]
      %v7271 = vld [vmem:[%s13 + $0x4] sm:$0xf]
      %v7272 = vld [vmem:[%s13 + $0x8] sm:$0xf]
      %v7273 = vld [vmem:[%s13 + $0xc] sm:$0xf]
      %v7274 = vld [vmem:[%s14] sm:$0x1]
      %v7276 = vlaneseq
      %v7277 = vshrl.u32 %v7276, 7
      %v7278 = vsub.s32 0, %v7277
      %v7279 = vrot.slane %v7274, %v7278
      %v7285 = vunpack.c.l.b16 %v7270
      %v7286 = vunpack.c.l.b16 %v7271
      %v7287 = vunpack.c.l.b16 %v7272
      %v7288 = vunpack.c.l.b16 %v7273
      %v7289 = vpack.c.b16 %v7286, %v7285
      %v7290 = vpack.c.b16 %v7288, %v7287
      %v7294 = vsel %vm529, %v7269, 0
      %7296 = vmatprep.subr.bf16.mxu0 0
      %7297 = vmatpush1.bf16.msra.mxu0 %v7289
      %7298 = vmatprep.subr.bf16.mxu0 0
      %7299 = vmatpush1.bf16.msra.mxu0 %v7290
      %7300 = vmatprep.subr.bf16.mxu0 0
      %7301 = vmatpush1.bf16.msra.mxu0 0
      %7302 = vmatprep.subr.bf16.mxu0 0
      %7303 = vmatpush1.bf16.msra.mxu0 0
      %7304 = vmatprep.subr.bf16.mxu0 0
      %7305 = vmatpush1.bf16.msra.mxu0 0
      %7306 = vmatprep.subr.bf16.mxu0 0
      %7307 = vmatpush1.bf16.msra.mxu0 0
      %7308 = vmatprep.subr.bf16.mxu0 0
      %7309 = vmatpush1.bf16.msra.mxu0 0
      %7310 = vmatprep.subr.bf16.mxu0 0
      %7311 = vmatpush1.bf16.msra.mxu0 0
      %7312 = vmatprep.subr.bf16.mxu0 0
      %7313 = vmatpush1.bf16.msra.mxu0 0
      %7314 = vmatprep.subr.bf16.mxu0 0
      %7315 = vmatpush1.bf16.msra.mxu0 0
      %7316 = vmatprep.subr.bf16.mxu0 0
      %7317 = vmatpush1.bf16.msra.mxu0 0
      %7318 = vmatprep.subr.bf16.mxu0 0
      %7319 = vmatpush1.bf16.msra.mxu0 0
      %7320 = vmatprep.subr.bf16.mxu0 0
      %7321 = vmatpush1.bf16.msra.mxu0 0
      %7322 = vmatprep.subr.bf16.mxu0 0
      %7323 = vmatpush1.bf16.msra.mxu0 0
      %7324 = vmatprep.subr.bf16.mxu0 0
      %7325 = vmatpush1.bf16.msra.mxu0 0
      %7326 = vmatprep.subr.bf16.mxu0 0
      %7327 = vmatpush1.bf16.msra.mxu0 0
      %7328 = vmatprep.mubr.bf16.mxu0 0
      %7329 = vmatmul.mubr.bf16.gmra.mrb[0].mxu0 %v7294
      %v7330 = vpop.f32.mrb[0].mxu0
      %v7331 = vadd.f32 %v7279, %v7330
      %v7332 = vpop.f32.mrb[0].mxu0
      %v7333 = vpop.f32.mrb[0].mxu0
      %v7334 = vpop.f32.mrb[0].mxu0
      %7335 = vdwg.mxu0
      %vm7336 = vcmask 588800
      %7337 = vst.msk [vmem:[%s492] sm:$0xff] %vm7336, %v7331
      %p7338 = scmp.lt.s32.totalorder %s26, 1
      %s7339 = scalar_select %p7338, %s26, 1
      %s7340 = smul.addr %s7339, 8
      %s7341 = scalar_lea.vmem %s15, %s7340
      // Predicated region
      $region81: #{weight_regressor_forward.1} parent=79 // pred_check
        %p7342 = pneg %p364
      $region82: #{weight_regressor_forward.1} parent=79 // pred_check_branch
        %7344 = sbr.rel (%p7342) target = $region84
      $region83: #{weight_regressor_forward.1} parent=79 // pred_region
        _
      $region84: #{weight_regressor_forward.1} parent=79 // pred_fallthru
        _
    $region80: #{weight_regressor_forward.1} parent=5 // pred_fallthru
      _
    %p7345 = scmp.le.s32.totalorder 2, %s21
    // Predicated region
    $region85: #{weight_regressor_forward.1} parent=5 // pred_check
      %p7346 = pneg %p7345
    $region86: #{weight_regressor_forward.1} parent=5 // pred_check_branch
      %7348 = sbr.rel (%p7346) target = $region88
    $region87: #{weight_regressor_forward.1} parent=5 // pred_region
      %s7349 = ssub.s32 %s21, 2
      // Predicated region
      $region89: #{weight_regressor_forward.1} parent=87 // pred_check
        %p7350 = pneg %p370
      $region90: #{weight_regressor_forward.1} parent=87 // pred_check_branch
        %7352 = sbr.rel (%p7350) target = $region92
      $region91: #{weight_regressor_forward.1} parent=87 // pred_region
        %p7353 = scmp.lt.s32.totalorder %s27, 1
        %s7354 = scalar_select %p7353, %s27, 1
        %s7355 = smul.addr %s7354, 8
        %s7356 = scalar_lea.vmem %s15, %s7355
      $region92: #{weight_regressor_forward.1} parent=87 // pred_fallthru
        _
    $region88: #{weight_regressor_forward.1} parent=5 // pred_fallthru
      _
  $region6: #{weight_regressor_forward.1} parent=0 // loop_footer
    %s25 = sadd.s32 1, %s21
  $region7: #{weight_regressor_forward.1} parent=0 // loop_footer_branch
    %20 = sbr.rel target = $region3
  $region8: #{weight_regressor_forward.1} parent=0 // loop_exit
    _

</llo_original>
